<compile_context>
chip_gen: v5e
topology: v5e:2x2
jax: 0.10.0
libtpu: 0.0.40
codegen_flags: <defaults>
</compile_context>

<pallas_src>
import math

import jax
import jax.numpy as jnp
from jax.experimental import pallas as pl
from jax.experimental.pallas import tpu as pltpu


# ----------------------------------------------------------------------------
# Pallas kernel: one fused transformer block applied to a slab of Sb windows
# (Sb * N tokens) per grid step.  All matmuls (qkv / attention / out-proj /
# mlp) live here.
# ----------------------------------------------------------------------------
def make_block_kernel(num_heads, num_windows, tokens_per_window, channels):
    d = channels // num_heads
    scale = float(d) ** -0.5
    rows = num_windows * tokens_per_window                     # Mb

    def kernel(x_ref,
               bn1_s_ref, bn1_b_ref,
               wq_ref, bq_ref, wk_ref, bk_ref, wv_ref, bv_ref,
               wo_ref, bo_ref,
               bn2_s_ref, bn2_b_ref,
               w1_ref, b1_ref, w2_ref, b2_ref,
               o_ref):
        x = x_ref[...]                                         # (Mb, C) f32

        # --- pre-norm 1: BatchNorm2d (eval) folded to per-channel affine ---
        xn = x * bn1_s_ref[...] + bn1_b_ref[...]
        xn_bf = xn.astype(jnp.bfloat16)                        # MXU input

        # --- qkv projections on the full slab (large-M matmuls) ---
        q = jnp.dot(xn_bf, wq_ref[...],
                    preferred_element_type=jnp.float32) + bq_ref[...]
        k = jnp.dot(xn_bf, wk_ref[...],
                    preferred_element_type=jnp.float32) + bk_ref[...]
        v = jnp.dot(xn_bf, wv_ref[...],
                    preferred_element_type=jnp.float32) + bv_ref[...]
        q = q * scale                                          # fold scale once

        # split rows into per-window batches (leading-dim reshape only)
        q3 = q.astype(jnp.bfloat16).reshape(num_windows, tokens_per_window, channels)
        k3 = k.astype(jnp.bfloat16).reshape(num_windows, tokens_per_window, channels)
        v3 = v.astype(jnp.bfloat16).reshape(num_windows, tokens_per_window, channels)

        wo = wo_ref[...]                                       # (C, C) bf16, loaded once
        attn = jnp.zeros((rows, channels), jnp.float32)

        # tiny static head loop (2-4 heads); windows are batched in the einsum
        for h in range(num_heads):
            qh = q3[:, :, h * d:(h + 1) * d]                   # (Sb, N, d)
            kh = k3[:, :, h * d:(h + 1) * d]
            vh = v3[:, :, h * d:(h + 1) * d]

            s = jnp.einsum('bnd,bmd->bnm', qh, kh,
                           preferred_element_type=jnp.float32)  # (Sb, N, N) f32
            s = s - jnp.max(s, axis=-1, keepdims=True)
            p = jnp.exp(s)
            p = p * pl.reciprocal(jnp.sum(p, axis=-1, keepdims=True), approx=True)

            ctx = jnp.einsum('bnm,bmd->bnd', p.astype(jnp.bfloat16), vh,
                             preferred_element_type=jnp.float32)  # (Sb, N, d)
            ctx2 = ctx.reshape(rows, d).astype(jnp.bfloat16)
            # accumulate this head through its slice of the output projection
            # (replaces per-head concat + one big out-proj)
            attn = attn + jnp.dot(ctx2, wo[h * d:(h + 1) * d, :],
                                  preferred_element_type=jnp.float32)

        x = x + attn + bo_ref[...]                             # residual (f32)

        # --- pre-norm 2 + MLP ---
        xn2 = x * bn2_s_ref[...] + bn2_b_ref[...]
        h1 = jnp.dot(xn2.astype(jnp.bfloat16), w1_ref[...],
                     preferred_element_type=jnp.float32) + b1_ref[...]
        h1 = jnp.maximum(h1, 0.0)
        h2 = jnp.dot(h1.astype(jnp.bfloat16), w2_ref[...],
                     preferred_element_type=jnp.float32) + b2_ref[...]
        o_ref[...] = (x + h2).astype(o_ref.dtype)              # residual

    return kernel


_PARAM_ORDER = ("bn1_s", "bn1_b", "wq", "bq", "wk", "bk", "wv", "bv",
                "wo", "bo", "bn2_s", "bn2_b", "w1", "b1", "w2", "b2")


def _pick_window_batch(num_windows, tokens_per_window, target_rows=512):
    """Largest divisor Sb of S with Sb*N <= target_rows, keeping >=2 grid steps."""
    best = 1
    for cand in range(1, num_windows + 1):
        if num_windows % cand:
            continue
        steps = num_windows // cand
        if steps < 2 and num_windows >= 2:
            continue                      # keep >=2 steps for megacore / v7x 2-TC
        if cand == 1 or cand * tokens_per_window <= target_rows:
            best = max(best, cand)
    return best


def _const_spec(p):
    zeros = (0,) * p.ndim
    return pl.BlockSpec(p.shape, lambda i: zeros)   # resident full-array block


def run_transformer_block(tokens, params, num_heads):
    """tokens: (S, N, C) float32 -> (S, N, C) float32."""
    S, N, C = tokens.shape
    Sb = _pick_window_batch(S, N)
    grid = (S // Sb,)
    Mb = Sb * N

    x2d = tokens.reshape(S * N, C)

    # Weights go to bf16 (MXU-native); BN params / biases stay f32.
    plist = []
    for name in _PARAM_ORDER:
        p = params[name]
        if name.startswith("w"):
            p = p.astype(jnp.bfloat16)
        else:
            p = p.astype(jnp.float32)
        plist.append(p)

    in_specs = [pl.BlockSpec((Mb, C), lambda i: (i, 0))]
    in_specs += [_const_spec(p) for p in plist]
    out_specs = pl.BlockSpec((Mb, C), lambda i: (i, 0))

    kernel = make_block_kernel(num_heads, Sb, N, C)
    out = pl.pallas_call(
        kernel,
        out_shape=jax.ShapeDtypeStruct((S * N, C), tokens.dtype),
        grid=grid,
        in_specs=in_specs,
        out_specs=out_specs,
        compiler_params=pltpu.CompilerParams(
            dimension_semantics=("parallel",),
            vmem_limit_bytes=32 * 1024 * 1024,
        ),
    )(x2d, *plist)
    return out.reshape(S, N, C)


# ----------------------------------------------------------------------------
# Plain-JAX glue: NCHW <-> token layouts
# ----------------------------------------------------------------------------
def window_partition(x_nchw, p):
    B, C, H, W = x_nchw.shape
    x = x_nchw.reshape(B, C, H // p, p, W // p, p)
    x = jnp.transpose(x, (0, 2, 4, 3, 5, 1))          # B, H/p, W/p, p, p, C
    return x.reshape(B * (H // p) * (W // p), p * p, C)


def window_reverse(tokens, p, B, C, H, W):
    x = tokens.reshape(B, H // p, W // p, p, p, C)
    x = jnp.transpose(x, (0, 5, 1, 3, 2, 4))          # B, C, H/p, p, W/p, p
    return x.reshape(B, C, H, W)


def to_global_tokens(x_nchw):
    B, C, H, W = x_nchw.shape
    return jnp.transpose(x_nchw, (0, 2, 3, 1)).reshape(B, H * W, C)


def from_global_tokens(tok, H, W):
    B, N, C = tok.shape
    return jnp.transpose(tok.reshape(B, H, W, C), (0, 3, 1, 2))


# ----------------------------------------------------------------------------
# Deterministic parameter init (shapes follow the module __init__)
# ----------------------------------------------------------------------------
def init_block_params(key, channels, mlp_ratio):
    hidden = channels * mlp_ratio
    ks = jax.random.split(key, 6)
    eps = 1e-5

    def lin(k, fi, fo):
        return jax.random.normal(k, (fi, fo), jnp.float32) / math.sqrt(fi)

    # BatchNorm2d eval-mode: gamma=1, beta=0, running_mean=0, running_var=1
    bn_scale = jnp.full((1, channels), 1.0 / math.sqrt(1.0 + eps), jnp.float32)
    bn_shift = jnp.zeros((1, channels), jnp.float32)
    return {
        "bn1_s": bn_scale, "bn1_b": bn_shift,
        "wq": lin(ks[0], channels, channels), "bq": jnp.zeros((1, channels), jnp.float32),
        "wk": lin(ks[1], channels, channels), "bk": jnp.zeros((1, channels), jnp.float32),
        "wv": lin(ks[2], channels, channels), "bv": jnp.zeros((1, channels), jnp.float32),
        "wo": lin(ks[3], channels, channels), "bo": jnp.zeros((1, channels), jnp.float32),
        "bn2_s": bn_scale, "bn2_b": bn_shift,
        "w1": lin(ks[4], channels, hidden), "b1": jnp.zeros((1, hidden), jnp.float32),
        "w2": lin(ks[5], hidden, channels), "b2": jnp.zeros((1, channels), jnp.float32),
    }


def init_mhca_encoder_params(key, dim, num_path, mlp_ratio):
    keys = jax.random.split(key, num_path + 1)
    return {
        "block": [init_block_params(keys[i], dim // num_path, mlp_ratio)
                  for i in range(num_path)],
        "grid": init_block_params(keys[-1], dim, mlp_ratio),
    }


# ----------------------------------------------------------------------------
# MHCAEncoder.forward
# ----------------------------------------------------------------------------
def mhca_encoder_forward(x_list, size, params, *, num_path, num_heads, patchsize):
    H, W = size
    B, dim, _, _ = x_list.shape
    cpath = dim // num_path

    chunks = jnp.split(x_list, num_path, axis=1)          # torch.chunk(dim=1)
    res = []
    for idx, xc in enumerate(chunks):                     # block_transformer path
        p = patchsize[idx]
        tok = window_partition(xc, p)                     # (B*nw, p*p, cpath)
        out = run_transformer_block(tok, params["block"][idx], num_heads)
        res.append(window_reverse(out, p, B, cpath, H, W))
    res = jnp.concatenate(res, axis=1)                    # torch.cat(dim=1)

    tok = to_global_tokens(res)                           # grid_transformer
    out = run_transformer_block(tok, params["grid"], num_path)
    return from_global_tokens(out, H, W)


if __name__ == "__main__":
    B, dim, H, W = 2, 32, 16, 16
    num_path, num_heads, mlp_ratio = 2, 4, 3
    patchsize = [4, 8]

    key = jax.random.PRNGKey(0)
    kx, kp = jax.random.split(key)
    x = jax.random.normal(kx, (B, dim, H, W), jnp.float32)
    params = init_mhca_encoder_params(kp, dim, num_path, mlp_ratio)

    out = mhca_encoder_forward(x, (H, W), params,
                               num_path=num_path, num_heads=num_heads,
                               patchsize=patchsize)
    out = jax.block_until_ready(out)
    assert out.shape == (B, dim, H, W), out.shape
    assert bool(jnp.all(jnp.isfinite(out)))
    print("KERNEL_OK")
</pallas_src>

<mosaic_0001>
module attributes {stable_mosaic.version = 11 : i64} {
  func.func @kernel(%arg0: i32, %arg1: memref<256x16xf32, #tpu.memory_space<vmem>>, %arg2: memref<1x16xf32, #tpu.memory_space<vmem>>, %arg3: memref<1x16xf32, #tpu.memory_space<vmem>>, %arg4: memref<16x16xbf16, #tpu.memory_space<vmem>>, %arg5: memref<1x16xf32, #tpu.memory_space<vmem>>, %arg6: memref<16x16xbf16, #tpu.memory_space<vmem>>, %arg7: memref<1x16xf32, #tpu.memory_space<vmem>>, %arg8: memref<16x16xbf16, #tpu.memory_space<vmem>>, %arg9: memref<1x16xf32, #tpu.memory_space<vmem>>, %arg10: memref<16x16xbf16, #tpu.memory_space<vmem>>, %arg11: memref<1x16xf32, #tpu.memory_space<vmem>>, %arg12: memref<1x16xf32, #tpu.memory_space<vmem>>, %arg13: memref<1x16xf32, #tpu.memory_space<vmem>>, %arg14: memref<16x48xbf16, #tpu.memory_space<vmem>>, %arg15: memref<1x48xf32, #tpu.memory_space<vmem>>, %arg16: memref<48x16xbf16, #tpu.memory_space<vmem>>, %arg17: memref<1x16xf32, #tpu.memory_space<vmem>>, %arg18: memref<256x16xf32, #tpu.memory_space<vmem>>) attributes {dimension_semantics = [#tpu.dimension_semantics<parallel>], iteration_bounds = array<i64: 2>, scalar_prefetch = 0 : i64, scratch_operands = 0 : i64, tpu.core_type = #tpu.core_type<tc>, window_params = [{transform_indices = @transform_0, window_bounds = array<i64: 256, 16>}, {pipeline_mode = #tpu.pipeline_mode<synchronous>, transform_indices = @transform_1, window_bounds = array<i64: 1, 16>}, {pipeline_mode = #tpu.pipeline_mode<synchronous>, transform_indices = @transform_2, window_bounds = array<i64: 1, 16>}, {pipeline_mode = #tpu.pipeline_mode<synchronous>, transform_indices = @transform_3, window_bounds = array<i64: 16, 16>}, {pipeline_mode = #tpu.pipeline_mode<synchronous>, transform_indices = @transform_4, window_bounds = array<i64: 1, 16>}, {pipeline_mode = #tpu.pipeline_mode<synchronous>, transform_indices = @transform_5, window_bounds = array<i64: 16, 16>}, {pipeline_mode = #tpu.pipeline_mode<synchronous>, transform_indices = @transform_6, window_bounds = array<i64: 1, 16>}, {pipeline_mode = #tpu.pipeline_mode<synchronous>, transform_indices = @transform_7, window_bounds = array<i64: 16, 16>}, {pipeline_mode = #tpu.pipeline_mode<synchronous>, transform_indices = @transform_8, window_bounds = array<i64: 1, 16>}, {pipeline_mode = #tpu.pipeline_mode<synchronous>, transform_indices = @transform_9, window_bounds = array<i64: 16, 16>}, {pipeline_mode = #tpu.pipeline_mode<synchronous>, transform_indices = @transform_10, window_bounds = array<i64: 1, 16>}, {pipeline_mode = #tpu.pipeline_mode<synchronous>, transform_indices = @transform_11, window_bounds = array<i64: 1, 16>}, {pipeline_mode = #tpu.pipeline_mode<synchronous>, transform_indices = @transform_12, window_bounds = array<i64: 1, 16>}, {pipeline_mode = #tpu.pipeline_mode<synchronous>, transform_indices = @transform_13, window_bounds = array<i64: 16, 48>}, {pipeline_mode = #tpu.pipeline_mode<synchronous>, transform_indices = @transform_14, window_bounds = array<i64: 1, 48>}, {pipeline_mode = #tpu.pipeline_mode<synchronous>, transform_indices = @transform_15, window_bounds = array<i64: 48, 16>}, {pipeline_mode = #tpu.pipeline_mode<synchronous>, transform_indices = @transform_16, window_bounds = array<i64: 1, 16>}, {transform_indices = @transform_17, window_bounds = array<i64: 256, 16>}]} {
    %c0 = arith.constant 0 : index
    %c0_0 = arith.constant 0 : index
    %0 = vector.load %arg1[%c0, %c0_0] : memref<256x16xf32, #tpu.memory_space<vmem>>, vector<256x16xf32>
    %c0_1 = arith.constant 0 : index
    %c0_2 = arith.constant 0 : index
    %1 = vector.load %arg2[%c0_1, %c0_2] : memref<1x16xf32, #tpu.memory_space<vmem>>, vector<1x16xf32>
    %2 = vector.broadcast %1 : vector<1x16xf32> to vector<256x16xf32>
    %3 = arith.mulf %0, %2 : vector<256x16xf32>
    %c0_3 = arith.constant 0 : index
    %c0_4 = arith.constant 0 : index
    %4 = vector.load %arg3[%c0_3, %c0_4] : memref<1x16xf32, #tpu.memory_space<vmem>>, vector<1x16xf32>
    %5 = vector.broadcast %4 : vector<1x16xf32> to vector<256x16xf32>
    %6 = arith.addf %3, %5 : vector<256x16xf32>
    %7 = arith.truncf %6 : vector<256x16xf32> to vector<256x16xbf16>
    %c0_5 = arith.constant 0 : index
    %c0_6 = arith.constant 0 : index
    %8 = vector.load %arg4[%c0_5, %c0_6] : memref<16x16xbf16, #tpu.memory_space<vmem>>, vector<16x16xbf16>
    %cst = arith.constant dense<0.000000e+00> : vector<256x16xf32>
    %9 = tpu.matmul %7, %8, %cst {dimension_numbers = #tpu.dot_dimension_numbers<[1], [0], [0], [1], [0, 0, 1, 1], [], []>} : vector<256x16xbf16>, vector<16x16xbf16>, vector<256x16xf32> -> vector<256x16xf32>
    %c0_7 = arith.constant 0 : index
    %c0_8 = arith.constant 0 : index
    %10 = vector.load %arg5[%c0_7, %c0_8] : memref<1x16xf32, #tpu.memory_space<vmem>>, vector<1x16xf32>
    %11 = vector.broadcast %10 : vector<1x16xf32> to vector<256x16xf32>
    %12 = arith.addf %9, %11 : vector<256x16xf32>
    %c0_9 = arith.constant 0 : index
    %c0_10 = arith.constant 0 : index
    %13 = vector.load %arg6[%c0_9, %c0_10] : memref<16x16xbf16, #tpu.memory_space<vmem>>, vector<16x16xbf16>
    %cst_11 = arith.constant dense<0.000000e+00> : vector<256x16xf32>
    %14 = tpu.matmul %7, %13, %cst_11 {dimension_numbers = #tpu.dot_dimension_numbers<[1], [0], [0], [1], [0, 0, 1, 1], [], []>} : vector<256x16xbf16>, vector<16x16xbf16>, vector<256x16xf32> -> vector<256x16xf32>
    %c0_12 = arith.constant 0 : index
    %c0_13 = arith.constant 0 : index
    %15 = vector.load %arg7[%c0_12, %c0_13] : memref<1x16xf32, #tpu.memory_space<vmem>>, vector<1x16xf32>
    %16 = vector.broadcast %15 : vector<1x16xf32> to vector<256x16xf32>
    %17 = arith.addf %14, %16 : vector<256x16xf32>
    %c0_14 = arith.constant 0 : index
    %c0_15 = arith.constant 0 : index
    %18 = vector.load %arg8[%c0_14, %c0_15] : memref<16x16xbf16, #tpu.memory_space<vmem>>, vector<16x16xbf16>
    %cst_16 = arith.constant dense<0.000000e+00> : vector<256x16xf32>
    %19 = tpu.matmul %7, %18, %cst_16 {dimension_numbers = #tpu.dot_dimension_numbers<[1], [0], [0], [1], [0, 0, 1, 1], [], []>} : vector<256x16xbf16>, vector<16x16xbf16>, vector<256x16xf32> -> vector<256x16xf32>
    %c0_17 = arith.constant 0 : index
    %c0_18 = arith.constant 0 : index
    %20 = vector.load %arg9[%c0_17, %c0_18] : memref<1x16xf32, #tpu.memory_space<vmem>>, vector<1x16xf32>
    %21 = vector.broadcast %20 : vector<1x16xf32> to vector<256x16xf32>
    %22 = arith.addf %19, %21 : vector<256x16xf32>
    %cst_19 = arith.constant 5.000000e-01 : f32
    %23 = vector.broadcast %cst_19 : f32 to vector<256x16xf32>
    %24 = arith.mulf %12, %23 : vector<256x16xf32>
    %25 = arith.truncf %24 : vector<256x16xf32> to vector<256x16xbf16>
    %26 = vector.shape_cast %25 : vector<256x16xbf16> to vector<16x16x16xbf16>
    %27 = arith.truncf %17 : vector<256x16xf32> to vector<256x16xbf16>
    %28 = vector.shape_cast %27 : vector<256x16xbf16> to vector<16x16x16xbf16>
    %29 = arith.truncf %22 : vector<256x16xf32> to vector<256x16xbf16>
    %30 = vector.shape_cast %29 : vector<256x16xbf16> to vector<16x16x16xbf16>
    %c0_20 = arith.constant 0 : index
    %c0_21 = arith.constant 0 : index
    %31 = vector.load %arg10[%c0_20, %c0_21] : memref<16x16xbf16, #tpu.memory_space<vmem>>, vector<16x16xbf16>
    %cst_22 = arith.constant 0.000000e+00 : f32
    %32 = vector.broadcast %cst_22 : f32 to vector<256x16xf32>
    %33 = vector.extract_strided_slice %26 {offsets = [0, 0, 0], sizes = [16, 16, 4], strides = [1, 1, 1]} : vector<16x16x16xbf16> to vector<16x16x4xbf16>
    %34 = vector.extract_strided_slice %28 {offsets = [0, 0, 0], sizes = [16, 16, 4], strides = [1, 1, 1]} : vector<16x16x16xbf16> to vector<16x16x4xbf16>
    %35 = vector.extract_strided_slice %30 {offsets = [0, 0, 0], sizes = [16, 16, 4], strides = [1, 1, 1]} : vector<16x16x16xbf16> to vector<16x16x4xbf16>
    "tpu.trace_start"() <{level = 10 : i32, message = "bnd,bmd->bnm"}> : () -> ()
    %cst_23 = arith.constant dense<0.000000e+00> : vector<16x16x16xf32>
    %36 = tpu.matmul %33, %34, %cst_23 {dimension_numbers = #tpu.dot_dimension_numbers<[2], [2], [1], [1], [0, 0, 0, 1, 1, 1], [0], [0]>} : vector<16x16x4xbf16>, vector<16x16x4xbf16>, vector<16x16x16xf32> -> vector<16x16x16xf32>
    "tpu.trace_stop"() : () -> ()
    %cst_24 = arith.constant dense<0xFF800000> : vector<16x16xf32>
    %37 = vector.multi_reduction <maximumf>, %36, %cst_24 [2] : vector<16x16x16xf32> to vector<16x16xf32>
    %38 = vector.shape_cast %37 : vector<16x16xf32> to vector<16x16x1xf32>
    %39 = vector.broadcast %38 : vector<16x16x1xf32> to vector<16x16x16xf32>
    %40 = arith.subf %36, %39 : vector<16x16x16xf32>
    %41 = math.exp %40 : vector<16x16x16xf32>
    %cst_25 = arith.constant dense<0.000000e+00> : vector<16x16xf32>
    %42 = vector.multi_reduction <add>, %41, %cst_25 [2] : vector<16x16x16xf32> to vector<16x16xf32>
    %43 = vector.shape_cast %42 : vector<16x16xf32> to vector<16x16x1xf32>
    %44 = tpu.reciprocal %43 {approx = true} : vector<16x16x1xf32> -> vector<16x16x1xf32>
    %45 = vector.broadcast %44 : vector<16x16x1xf32> to vector<16x16x16xf32>
    %46 = arith.mulf %41, %45 : vector<16x16x16xf32>
    %47 = arith.truncf %46 : vector<16x16x16xf32> to vector<16x16x16xbf16>
    "tpu.trace_start"() <{level = 10 : i32, message = "bnm,bmd->bnd"}> : () -> ()
    %cst_26 = arith.constant dense<0.000000e+00> : vector<16x16x4xf32>
    %48 = tpu.matmul %47, %35, %cst_26 {dimension_numbers = #tpu.dot_dimension_numbers<[2], [1], [1], [2], [0, 0, 0, 1, 1, 2], [0], [0]>} : vector<16x16x16xbf16>, vector<16x16x4xbf16>, vector<16x16x4xf32> -> vector<16x16x4xf32>
    "tpu.trace_stop"() : () -> ()
    %49 = vector.shape_cast %48 : vector<16x16x4xf32> to vector<256x4xf32>
    %50 = arith.truncf %49 : vector<256x4xf32> to vector<256x4xbf16>
    %51 = vector.extract_strided_slice %31 {offsets = [0, 0], sizes = [4, 16], strides = [1, 1]} : vector<16x16xbf16> to vector<4x16xbf16>
    %cst_27 = arith.constant dense<0.000000e+00> : vector<256x16xf32>
    %52 = tpu.matmul %50, %51, %cst_27 {dimension_numbers = #tpu.dot_dimension_numbers<[1], [0], [0], [1], [0, 0, 1, 1], [], []>} : vector<256x4xbf16>, vector<4x16xbf16>, vector<256x16xf32> -> vector<256x16xf32>
    %53 = arith.addf %32, %52 : vector<256x16xf32>
    %54 = vector.extract_strided_slice %26 {offsets = [0, 0, 4], sizes = [16, 16, 4], strides = [1, 1, 1]} : vector<16x16x16xbf16> to vector<16x16x4xbf16>
    %55 = vector.extract_strided_slice %28 {offsets = [0, 0, 4], sizes = [16, 16, 4], strides = [1, 1, 1]} : vector<16x16x16xbf16> to vector<16x16x4xbf16>
    %56 = vector.extract_strided_slice %30 {offsets = [0, 0, 4], sizes = [16, 16, 4], strides = [1, 1, 1]} : vector<16x16x16xbf16> to vector<16x16x4xbf16>
    "tpu.trace_start"() <{level = 10 : i32, message = "bnd,bmd->bnm"}> : () -> ()
    %cst_28 = arith.constant dense<0.000000e+00> : vector<16x16x16xf32>
    %57 = tpu.matmul %54, %55, %cst_28 {dimension_numbers = #tpu.dot_dimension_numbers<[2], [2], [1], [1], [0, 0, 0, 1, 1, 1], [0], [0]>} : vector<16x16x4xbf16>, vector<16x16x4xbf16>, vector<16x16x16xf32> -> vector<16x16x16xf32>
    "tpu.trace_stop"() : () -> ()
    %cst_29 = arith.constant dense<0xFF800000> : vector<16x16xf32>
    %58 = vector.multi_reduction <maximumf>, %57, %cst_29 [2] : vector<16x16x16xf32> to vector<16x16xf32>
    %59 = vector.shape_cast %58 : vector<16x16xf32> to vector<16x16x1xf32>
    %60 = vector.broadcast %59 : vector<16x16x1xf32> to vector<16x16x16xf32>
    %61 = arith.subf %57, %60 : vector<16x16x16xf32>
    %62 = math.exp %61 : vector<16x16x16xf32>
    %cst_30 = arith.constant dense<0.000000e+00> : vector<16x16xf32>
    %63 = vector.multi_reduction <add>, %62, %cst_30 [2] : vector<16x16x16xf32> to vector<16x16xf32>
    %64 = vector.shape_cast %63 : vector<16x16xf32> to vector<16x16x1xf32>
    %65 = tpu.reciprocal %64 {approx = true} : vector<16x16x1xf32> -> vector<16x16x1xf32>
    %66 = vector.broadcast %65 : vector<16x16x1xf32> to vector<16x16x16xf32>
    %67 = arith.mulf %62, %66 : vector<16x16x16xf32>
    %68 = arith.truncf %67 : vector<16x16x16xf32> to vector<16x16x16xbf16>
    "tpu.trace_start"() <{level = 10 : i32, message = "bnm,bmd->bnd"}> : () -> ()
    %cst_31 = arith.constant dense<0.000000e+00> : vector<16x16x4xf32>
    %69 = tpu.matmul %68, %56, %cst_31 {dimension_numbers = #tpu.dot_dimension_numbers<[2], [1], [1], [2], [0, 0, 0, 1, 1, 2], [0], [0]>} : vector<16x16x16xbf16>, vector<16x16x4xbf16>, vector<16x16x4xf32> -> vector<16x16x4xf32>
    "tpu.trace_stop"() : () -> ()
    %70 = vector.shape_cast %69 : vector<16x16x4xf32> to vector<256x4xf32>
    %71 = arith.truncf %70 : vector<256x4xf32> to vector<256x4xbf16>
    %72 = vector.extract_strided_slice %31 {offsets = [4, 0], sizes = [4, 16], strides = [1, 1]} : vector<16x16xbf16> to vector<4x16xbf16>
    %cst_32 = arith.constant dense<0.000000e+00> : vector<256x16xf32>
    %73 = tpu.matmul %71, %72, %cst_32 {dimension_numbers = #tpu.dot_dimension_numbers<[1], [0], [0], [1], [0, 0, 1, 1], [], []>} : vector<256x4xbf16>, vector<4x16xbf16>, vector<256x16xf32> -> vector<256x16xf32>
    %74 = arith.addf %53, %73 : vector<256x16xf32>
    %75 = vector.extract_strided_slice %26 {offsets = [0, 0, 8], sizes = [16, 16, 4], strides = [1, 1, 1]} : vector<16x16x16xbf16> to vector<16x16x4xbf16>
    %76 = vector.extract_strided_slice %28 {offsets = [0, 0, 8], sizes = [16, 16, 4], strides = [1, 1, 1]} : vector<16x16x16xbf16> to vector<16x16x4xbf16>
    %77 = vector.extract_strided_slice %30 {offsets = [0, 0, 8], sizes = [16, 16, 4], strides = [1, 1, 1]} : vector<16x16x16xbf16> to vector<16x16x4xbf16>
    "tpu.trace_start"() <{level = 10 : i32, message = "bnd,bmd->bnm"}> : () -> ()
    %cst_33 = arith.constant dense<0.000000e+00> : vector<16x16x16xf32>
    %78 = tpu.matmul %75, %76, %cst_33 {dimension_numbers = #tpu.dot_dimension_numbers<[2], [2], [1], [1], [0, 0, 0, 1, 1, 1], [0], [0]>} : vector<16x16x4xbf16>, vector<16x16x4xbf16>, vector<16x16x16xf32> -> vector<16x16x16xf32>
    "tpu.trace_stop"() : () -> ()
    %cst_34 = arith.constant dense<0xFF800000> : vector<16x16xf32>
    %79 = vector.multi_reduction <maximumf>, %78, %cst_34 [2] : vector<16x16x16xf32> to vector<16x16xf32>
    %80 = vector.shape_cast %79 : vector<16x16xf32> to vector<16x16x1xf32>
    %81 = vector.broadcast %80 : vector<16x16x1xf32> to vector<16x16x16xf32>
    %82 = arith.subf %78, %81 : vector<16x16x16xf32>
    %83 = math.exp %82 : vector<16x16x16xf32>
    %cst_35 = arith.constant dense<0.000000e+00> : vector<16x16xf32>
    %84 = vector.multi_reduction <add>, %83, %cst_35 [2] : vector<16x16x16xf32> to vector<16x16xf32>
    %85 = vector.shape_cast %84 : vector<16x16xf32> to vector<16x16x1xf32>
    %86 = tpu.reciprocal %85 {approx = true} : vector<16x16x1xf32> -> vector<16x16x1xf32>
    %87 = vector.broadcast %86 : vector<16x16x1xf32> to vector<16x16x16xf32>
    %88 = arith.mulf %83, %87 : vector<16x16x16xf32>
    %89 = arith.truncf %88 : vector<16x16x16xf32> to vector<16x16x16xbf16>
    "tpu.trace_start"() <{level = 10 : i32, message = "bnm,bmd->bnd"}> : () -> ()
    %cst_36 = arith.constant dense<0.000000e+00> : vector<16x16x4xf32>
    %90 = tpu.matmul %89, %77, %cst_36 {dimension_numbers = #tpu.dot_dimension_numbers<[2], [1], [1], [2], [0, 0, 0, 1, 1, 2], [0], [0]>} : vector<16x16x16xbf16>, vector<16x16x4xbf16>, vector<16x16x4xf32> -> vector<16x16x4xf32>
    "tpu.trace_stop"() : () -> ()
    %91 = vector.shape_cast %90 : vector<16x16x4xf32> to vector<256x4xf32>
    %92 = arith.truncf %91 : vector<256x4xf32> to vector<256x4xbf16>
    %93 = vector.extract_strided_slice %31 {offsets = [8, 0], sizes = [4, 16], strides = [1, 1]} : vector<16x16xbf16> to vector<4x16xbf16>
    %cst_37 = arith.constant dense<0.000000e+00> : vector<256x16xf32>
    %94 = tpu.matmul %92, %93, %cst_37 {dimension_numbers = #tpu.dot_dimension_numbers<[1], [0], [0], [1], [0, 0, 1, 1], [], []>} : vector<256x4xbf16>, vector<4x16xbf16>, vector<256x16xf32> -> vector<256x16xf32>
    %95 = arith.addf %74, %94 : vector<256x16xf32>
    %96 = vector.extract_strided_slice %26 {offsets = [0, 0, 12], sizes = [16, 16, 4], strides = [1, 1, 1]} : vector<16x16x16xbf16> to vector<16x16x4xbf16>
    %97 = vector.extract_strided_slice %28 {offsets = [0, 0, 12], sizes = [16, 16, 4], strides = [1, 1, 1]} : vector<16x16x16xbf16> to vector<16x16x4xbf16>
    %98 = vector.extract_strided_slice %30 {offsets = [0, 0, 12], sizes = [16, 16, 4], strides = [1, 1, 1]} : vector<16x16x16xbf16> to vector<16x16x4xbf16>
    "tpu.trace_start"() <{level = 10 : i32, message = "bnd,bmd->bnm"}> : () -> ()
    %cst_38 = arith.constant dense<0.000000e+00> : vector<16x16x16xf32>
    %99 = tpu.matmul %96, %97, %cst_38 {dimension_numbers = #tpu.dot_dimension_numbers<[2], [2], [1], [1], [0, 0, 0, 1, 1, 1], [0], [0]>} : vector<16x16x4xbf16>, vector<16x16x4xbf16>, vector<16x16x16xf32> -> vector<16x16x16xf32>
    "tpu.trace_stop"() : () -> ()
    %cst_39 = arith.constant dense<0xFF800000> : vector<16x16xf32>
    %100 = vector.multi_reduction <maximumf>, %99, %cst_39 [2] : vector<16x16x16xf32> to vector<16x16xf32>
    %101 = vector.shape_cast %100 : vector<16x16xf32> to vector<16x16x1xf32>
    %102 = vector.broadcast %101 : vector<16x16x1xf32> to vector<16x16x16xf32>
    %103 = arith.subf %99, %102 : vector<16x16x16xf32>
    %104 = math.exp %103 : vector<16x16x16xf32>
    %cst_40 = arith.constant dense<0.000000e+00> : vector<16x16xf32>
    %105 = vector.multi_reduction <add>, %104, %cst_40 [2] : vector<16x16x16xf32> to vector<16x16xf32>
    %106 = vector.shape_cast %105 : vector<16x16xf32> to vector<16x16x1xf32>
    %107 = tpu.reciprocal %106 {approx = true} : vector<16x16x1xf32> -> vector<16x16x1xf32>
    %108 = vector.broadcast %107 : vector<16x16x1xf32> to vector<16x16x16xf32>
    %109 = arith.mulf %104, %108 : vector<16x16x16xf32>
    %110 = arith.truncf %109 : vector<16x16x16xf32> to vector<16x16x16xbf16>
    "tpu.trace_start"() <{level = 10 : i32, message = "bnm,bmd->bnd"}> : () -> ()
    %cst_41 = arith.constant dense<0.000000e+00> : vector<16x16x4xf32>
    %111 = tpu.matmul %110, %98, %cst_41 {dimension_numbers = #tpu.dot_dimension_numbers<[2], [1], [1], [2], [0, 0, 0, 1, 1, 2], [0], [0]>} : vector<16x16x16xbf16>, vector<16x16x4xbf16>, vector<16x16x4xf32> -> vector<16x16x4xf32>
    "tpu.trace_stop"() : () -> ()
    %112 = vector.shape_cast %111 : vector<16x16x4xf32> to vector<256x4xf32>
    %113 = arith.truncf %112 : vector<256x4xf32> to vector<256x4xbf16>
    %114 = vector.extract_strided_slice %31 {offsets = [12, 0], sizes = [4, 16], strides = [1, 1]} : vector<16x16xbf16> to vector<4x16xbf16>
    %cst_42 = arith.constant dense<0.000000e+00> : vector<256x16xf32>
    %115 = tpu.matmul %113, %114, %cst_42 {dimension_numbers = #tpu.dot_dimension_numbers<[1], [0], [0], [1], [0, 0, 1, 1], [], []>} : vector<256x4xbf16>, vector<4x16xbf16>, vector<256x16xf32> -> vector<256x16xf32>
    %116 = arith.addf %95, %115 : vector<256x16xf32>
    %117 = arith.addf %0, %116 : vector<256x16xf32>
    %c0_43 = arith.constant 0 : index
    %c0_44 = arith.constant 0 : index
    %118 = vector.load %arg11[%c0_43, %c0_44] : memref<1x16xf32, #tpu.memory_space<vmem>>, vector<1x16xf32>
    %119 = vector.broadcast %118 : vector<1x16xf32> to vector<256x16xf32>
    %120 = arith.addf %117, %119 : vector<256x16xf32>
    %c0_45 = arith.constant 0 : index
    %c0_46 = arith.constant 0 : index
    %121 = vector.load %arg12[%c0_45, %c0_46] : memref<1x16xf32, #tpu.memory_space<vmem>>, vector<1x16xf32>
    %122 = vector.broadcast %121 : vector<1x16xf32> to vector<256x16xf32>
    %123 = arith.mulf %120, %122 : vector<256x16xf32>
    %c0_47 = arith.constant 0 : index
    %c0_48 = arith.constant 0 : index
    %124 = vector.load %arg13[%c0_47, %c0_48] : memref<1x16xf32, #tpu.memory_space<vmem>>, vector<1x16xf32>
    %125 = vector.broadcast %124 : vector<1x16xf32> to vector<256x16xf32>
    %126 = arith.addf %123, %125 : vector<256x16xf32>
    %127 = arith.truncf %126 : vector<256x16xf32> to vector<256x16xbf16>
    %c0_49 = arith.constant 0 : index
    %c0_50 = arith.constant 0 : index
    %128 = vector.load %arg14[%c0_49, %c0_50] : memref<16x48xbf16, #tpu.memory_space<vmem>>, vector<16x48xbf16>
    %cst_51 = arith.constant dense<0.000000e+00> : vector<256x48xf32>
    %129 = tpu.matmul %127, %128, %cst_51 {dimension_numbers = #tpu.dot_dimension_numbers<[1], [0], [0], [1], [0, 0, 1, 1], [], []>} : vector<256x16xbf16>, vector<16x48xbf16>, vector<256x48xf32> -> vector<256x48xf32>
    %c0_52 = arith.constant 0 : index
    %c0_53 = arith.constant 0 : index
    %130 = vector.load %arg15[%c0_52, %c0_53] : memref<1x48xf32, #tpu.memory_space<vmem>>, vector<1x48xf32>
    %131 = vector.broadcast %130 : vector<1x48xf32> to vector<256x48xf32>
    %132 = arith.addf %129, %131 : vector<256x48xf32>
    %cst_54 = arith.constant 0.000000e+00 : f32
    %133 = vector.broadcast %cst_54 : f32 to vector<256x48xf32>
    %134 = arith.maximumf %132, %133 : vector<256x48xf32>
    %135 = arith.truncf %134 : vector<256x48xf32> to vector<256x48xbf16>
    %c0_55 = arith.constant 0 : index
    %c0_56 = arith.constant 0 : index
    %136 = vector.load %arg16[%c0_55, %c0_56] : memref<48x16xbf16, #tpu.memory_space<vmem>>, vector<48x16xbf16>
    %cst_57 = arith.constant dense<0.000000e+00> : vector<256x16xf32>
    %137 = tpu.matmul %135, %136, %cst_57 {dimension_numbers = #tpu.dot_dimension_numbers<[1], [0], [0], [1], [0, 0, 1, 1], [], []>} : vector<256x48xbf16>, vector<48x16xbf16>, vector<256x16xf32> -> vector<256x16xf32>
    %c0_58 = arith.constant 0 : index
    %c0_59 = arith.constant 0 : index
    %138 = vector.load %arg17[%c0_58, %c0_59] : memref<1x16xf32, #tpu.memory_space<vmem>>, vector<1x16xf32>
    %139 = vector.broadcast %138 : vector<1x16xf32> to vector<256x16xf32>
    %140 = arith.addf %137, %139 : vector<256x16xf32>
    %141 = arith.addf %120, %140 : vector<256x16xf32>
    %c0_60 = arith.constant 0 : index
    %c0_61 = arith.constant 0 : index
    %142 = vector.load %arg18[%c0_60, %c0_61] : memref<256x16xf32, #tpu.memory_space<vmem>>, vector<256x16xf32>
    tpu.vector_store %arg18[%c0_60, %c0_61], %141 {strides = array<i32>} : memref<256x16xf32, #tpu.memory_space<vmem>>, vector<256x16xf32>,
    return
  }
  func.func @transform_0(%arg0: i32) -> (i32, i32) {
    %c0_i32 = arith.constant 0 : i32
    %c0_i32_0 = arith.constant 0 : i32
    return %arg0, %c0_i32 : i32, i32
  }
  func.func @transform_1(%arg0: i32) -> (i32, i32) {
    %c0_i32 = arith.constant 0 : i32
    %c0_i32_0 = arith.constant 0 : i32
    %c0_i32_1 = arith.constant 0 : i32
    return %c0_i32, %c0_i32_0 : i32, i32
  }
  func.func @transform_2(%arg0: i32) -> (i32, i32) {
    %c0_i32 = arith.constant 0 : i32
    %c0_i32_0 = arith.constant 0 : i32
    %c0_i32_1 = arith.constant 0 : i32
    return %c0_i32, %c0_i32_0 : i32, i32
  }
  func.func @transform_3(%arg0: i32) -> (i32, i32) {
    %c0_i32 = arith.constant 0 : i32
    %c0_i32_0 = arith.constant 0 : i32
    %c0_i32_1 = arith.constant 0 : i32
    return %c0_i32, %c0_i32_0 : i32, i32
  }
  func.func @transform_4(%arg0: i32) -> (i32, i32) {
    %c0_i32 = arith.constant 0 : i32
    %c0_i32_0 = arith.constant 0 : i32
    %c0_i32_1 = arith.constant 0 : i32
    return %c0_i32, %c0_i32_0 : i32, i32
  }
  func.func @transform_5(%arg0: i32) -> (i32, i32) {
    %c0_i32 = arith.constant 0 : i32
    %c0_i32_0 = arith.constant 0 : i32
    %c0_i32_1 = arith.constant 0 : i32
    return %c0_i32, %c0_i32_0 : i32, i32
  }
  func.func @transform_6(%arg0: i32) -> (i32, i32) {
    %c0_i32 = arith.constant 0 : i32
    %c0_i32_0 = arith.constant 0 : i32
    %c0_i32_1 = arith.constant 0 : i32
    return %c0_i32, %c0_i32_0 : i32, i32
  }
  func.func @transform_7(%arg0: i32) -> (i32, i32) {
    %c0_i32 = arith.constant 0 : i32
    %c0_i32_0 = arith.constant 0 : i32
    %c0_i32_1 = arith.constant 0 : i32
    return %c0_i32, %c0_i32_0 : i32, i32
  }
  func.func @transform_8(%arg0: i32) -> (i32, i32) {
    %c0_i32 = arith.constant 0 : i32
    %c0_i32_0 = arith.constant 0 : i32
    %c0_i32_1 = arith.constant 0 : i32
    return %c0_i32, %c0_i32_0 : i32, i32
  }
  func.func @transform_9(%arg0: i32) -> (i32, i32) {
    %c0_i32 = arith.constant 0 : i32
    %c0_i32_0 = arith.constant 0 : i32
    %c0_i32_1 = arith.constant 0 : i32
    return %c0_i32, %c0_i32_0 : i32, i32
  }
  func.func @transform_10(%arg0: i32) -> (i32, i32) {
    %c0_i32 = arith.constant 0 : i32
    %c0_i32_0 = arith.constant 0 : i32
    %c0_i32_1 = arith.constant 0 : i32
    return %c0_i32, %c0_i32_0 : i32, i32
  }
  func.func @transform_11(%arg0: i32) -> (i32, i32) {
    %c0_i32 = arith.constant 0 : i32
    %c0_i32_0 = arith.constant 0 : i32
    %c0_i32_1 = arith.constant 0 : i32
    return %c0_i32, %c0_i32_0 : i32, i32
  }
  func.func @transform_12(%arg0: i32) -> (i32, i32) {
    %c0_i32 = arith.constant 0 : i32
    %c0_i32_0 = arith.constant 0 : i32
    %c0_i32_1 = arith.constant 0 : i32
    return %c0_i32, %c0_i32_0 : i32, i32
  }
  func.func @transform_13(%arg0: i32) -> (i32, i32) {
    %c0_i32 = arith.constant 0 : i32
    %c0_i32_0 = arith.constant 0 : i32
    %c0_i32_1 = arith.constant 0 : i32
    return %c0_i32, %c0_i32_0 : i32, i32
  }
  func.func @transform_14(%arg0: i32) -> (i32, i32) {
    %c0_i32 = arith.constant 0 : i32
    %c0_i32_0 = arith.constant 0 : i32
    %c0_i32_1 = arith.constant 0 : i32
    return %c0_i32, %c0_i32_0 : i32, i32
  }
  func.func @transform_15(%arg0: i32) -> (i32, i32) {
    %c0_i32 = arith.constant 0 : i32
    %c0_i32_0 = arith.constant 0 : i32
    %c0_i32_1 = arith.constant 0 : i32
    return %c0_i32, %c0_i32_0 : i32, i32
  }
  func.func @transform_16(%arg0: i32) -> (i32, i32) {
    %c0_i32 = arith.constant 0 : i32
    %c0_i32_0 = arith.constant 0 : i32
    %c0_i32_1 = arith.constant 0 : i32
    return %c0_i32, %c0_i32_0 : i32, i32
  }
  func.func @transform_17(%arg0: i32) -> (i32, i32) {
    %c0_i32 = arith.constant 0 : i32
    %c0_i32_0 = arith.constant 0 : i32
    return %arg0, %c0_i32 : i32, i32
  }
}

</mosaic_0001>

<llo_original>
// kernel: tpu_custom_call.1
$region0: #{tpu_custom_call.1}
  #allocation0 [shape = 'u32[]', space=smem, size = 0x4, offset = 0x4, fixed_abs, tag = 'smem constant byte address 0x4 - core index']
  #allocation1 [shape = 'u32[72,128]{1,0:T(1,128)}', space=vmem, size = 0x9000, scoped, tag = 'internal scratch']
  %s0 = inlined_call_operand.vmem [shape: f32[512,16], index: 0, kind: input, shape index: {}]
  %s1 = inlined_call_operand.vmem [shape: f32[1,16], index: 1, kind: input, shape index: {}]
  %s2 = inlined_call_operand.vmem [shape: f32[1,16], index: 2, kind: input, shape index: {}]
  %s3 = inlined_call_operand.vmem [shape: bf16[16,16], index: 3, kind: input, shape index: {}]
  %s4 = inlined_call_operand.vmem [shape: f32[1,16], index: 4, kind: input, shape index: {}]
  %s5 = inlined_call_operand.vmem [shape: bf16[16,16], index: 5, kind: input, shape index: {}]
  %s6 = inlined_call_operand.vmem [shape: f32[1,16], index: 6, kind: input, shape index: {}]
  %s7 = inlined_call_operand.vmem [shape: bf16[16,16], index: 7, kind: input, shape index: {}]
  %s8 = inlined_call_operand.vmem [shape: f32[1,16], index: 8, kind: input, shape index: {}]
  %s9 = inlined_call_operand.vmem [shape: bf16[16,16], index: 9, kind: input, shape index: {}]
  %s10 = inlined_call_operand.vmem [shape: f32[1,16], index: 10, kind: input, shape index: {}]
  %s11 = inlined_call_operand.vmem [shape: f32[1,16], index: 11, kind: input, shape index: {}]
  %s12 = inlined_call_operand.vmem [shape: f32[1,16], index: 12, kind: input, shape index: {}]
  %s13 = inlined_call_operand.vmem [shape: bf16[16,48], index: 13, kind: input, shape index: {}]
  %s14 = inlined_call_operand.vmem [shape: f32[1,48], index: 14, kind: input, shape index: {}]
  %s15 = inlined_call_operand.vmem [shape: bf16[48,16], index: 15, kind: input, shape index: {}]
  %s16 = inlined_call_operand.vmem [shape: f32[1,16], index: 16, kind: input, shape index: {}]
  %s17 = inlined_call_operand.vmem [shape: f32[512,16], index: 17, kind: output, shape index: {}]
  %s18 = sld [smem:[#allocation0]]
  $region101: #{tpu_custom_call.1} parent=0
    _
  %s20 = ssub.s32 1, %s18
  %s21 = scalar_select 0, %s20, %s18
  loop: start=0, step=1, limit=4
  $region2: #{tpu_custom_call.1} parent=0 // loop_pre_header
    _
  $region3: #{tpu_custom_call.1} parent=0 // loop_header
    %s23 = sphi 0, %s27
    %p24 = scmp.ge.s32.totalorder %s23, 4
    %s33 = sphi 0, %s35
    %s36 = sphi 0, %s33
    %s37 = sphi 0, %s36
    %s53 = sphi 0, %s37
    %s57 = sphi 0, %s57
    %s59 = sphi 0, %s57
    %s60 = sphi 0, %s59
    %s74 = sphi 0, %s60
    %s78 = sphi 0, %s78
    %s80 = sphi 0, %s78
    %s81 = sphi 0, %s80
    %s95 = sphi 0, %s81
    %s99 = sphi 0, %s99
    %s101 = sphi 0, %s99
    %s102 = sphi 0, %s101
    %s116 = sphi 0, %s102
    %s120 = sphi 0, %s120
    %s122 = sphi 0, %s120
    %s123 = sphi 0, %s122
    %s137 = sphi 0, %s123
    %s141 = sphi 0, %s141
    %s143 = sphi 0, %s141
    %s144 = sphi 0, %s143
    %s158 = sphi 0, %s144
    %s162 = sphi 0, %s162
    %s164 = sphi 0, %s162
    %s165 = sphi 0, %s164
    %s179 = sphi 0, %s165
    %s183 = sphi 0, %s183
    %s185 = sphi 0, %s183
    %s186 = sphi 0, %s185
    %s200 = sphi 0, %s186
    %s204 = sphi 0, %s204
    %s206 = sphi 0, %s204
    %s207 = sphi 0, %s206
    %s221 = sphi 0, %s207
    %s225 = sphi 0, %s225
    %s227 = sphi 0, %s225
    %s228 = sphi 0, %s227
    %s242 = sphi 0, %s228
    %s246 = sphi 0, %s246
    %s248 = sphi 0, %s246
    %s249 = sphi 0, %s248
    %s263 = sphi 0, %s249
    %s267 = sphi 0, %s267
    %s269 = sphi 0, %s267
    %s270 = sphi 0, %s269
    %s284 = sphi 0, %s270
    %s288 = sphi 0, %s288
    %s290 = sphi 0, %s288
    %s291 = sphi 0, %s290
    %s305 = sphi 0, %s291
    %s309 = sphi 0, %s309
    %s311 = sphi 0, %s309
    %s312 = sphi 0, %s311
    %s326 = sphi 0, %s312
    %s330 = sphi 0, %s330
    %s332 = sphi 0, %s330
    %s333 = sphi 0, %s332
    %s347 = sphi 0, %s333
    %s351 = sphi 0, %s351
    %s353 = sphi 0, %s351
    %s354 = sphi 0, %s353
    %s368 = sphi 0, %s354
    %s372 = sphi 0, %s372
    %s374 = sphi 0, %s372
    %s375 = sphi 0, %s374
    %s389 = sphi 0, %s375
    %s395 = sphi 0, %s397
    %s398 = sphi 0, %s395
    %s399 = sphi 0, %s398
    %s415 = sphi 0, %s399
  $region4: #{tpu_custom_call.1} parent=0 // loop_header_branch
    %26 = sbr.rel (%p24) target = $region8
  $region5: #{tpu_custom_call.1} parent=0 // loop_body
    %s28 = ssub.s32 %s23, 1
    %s29 = ssub.s32 %s23, 2
    %s30 = sadd.s32 %s23, 1
    %s31 = ssub.s32 %s23, %s30
    %p32 = scmp.eq.s32.totalorder %s31, 0
    %s34 = sadd.s32 %s33, 1
    %s35 = scalar_select %p32, %s33, %s34
    %p38 = pneg %p32
    %p39 = scmp.eq.s32.totalorder %s23, 1
    %p40 = por %p38, %p39
    %p41 = scmp.ne.s32.totalorder %s33, %s36
    %p42 = scmp.eq.s32.totalorder %s23, 0
    %p43 = por %p41, %p42
    %p44 = scmp.ne.s32.totalorder %s33, %s36
    %p45 = scmp.eq.s32.totalorder %s28, 1
    %p46 = por %p44, %p45
    %p47 = scmp.ne.s32.totalorder %s36, %s37
    %p48 = scmp.eq.s32.totalorder %s28, 0
    %p49 = por %p47, %p48
    %p50 = scmp.ne.s32.totalorder %s36, %s37
    %p51 = scmp.eq.s32.totalorder %s29, 1
    %p52 = por %p50, %p51
    %p54 = scmp.ne.s32.totalorder %s37, %s53
    %p55 = scmp.eq.s32.totalorder %s29, 0
    %p56 = por %p54, %p55
    %s58 = sadd.s32 %s57, 1
    %p61 = scmp.eq.s32.totalorder %s23, 1
    %p62 = scmp.ne.s32.totalorder %s57, %s59
    %p63 = scmp.eq.s32.totalorder %s23, 0
    %p64 = por %p62, %p63
    %p65 = scmp.ne.s32.totalorder %s57, %s59
    %p66 = scmp.eq.s32.totalorder %s28, 1
    %p67 = por %p65, %p66
    %p68 = scmp.ne.s32.totalorder %s59, %s60
    %p69 = scmp.eq.s32.totalorder %s28, 0
    %p70 = por %p68, %p69
    %p71 = scmp.ne.s32.totalorder %s59, %s60
    %p72 = scmp.eq.s32.totalorder %s29, 1
    %p73 = por %p71, %p72
    %p75 = scmp.ne.s32.totalorder %s60, %s74
    %p76 = scmp.eq.s32.totalorder %s29, 0
    %p77 = por %p75, %p76
    %s79 = sadd.s32 %s78, 1
    %p82 = scmp.eq.s32.totalorder %s23, 1
    %p83 = scmp.ne.s32.totalorder %s78, %s80
    %p84 = scmp.eq.s32.totalorder %s23, 0
    %p85 = por %p83, %p84
    %p86 = scmp.ne.s32.totalorder %s78, %s80
    %p87 = scmp.eq.s32.totalorder %s28, 1
    %p88 = por %p86, %p87
    %p89 = scmp.ne.s32.totalorder %s80, %s81
    %p90 = scmp.eq.s32.totalorder %s28, 0
    %p91 = por %p89, %p90
    %p92 = scmp.ne.s32.totalorder %s80, %s81
    %p93 = scmp.eq.s32.totalorder %s29, 1
    %p94 = por %p92, %p93
    %p96 = scmp.ne.s32.totalorder %s81, %s95
    %p97 = scmp.eq.s32.totalorder %s29, 0
    %p98 = por %p96, %p97
    %s100 = sadd.s32 %s99, 1
    %p103 = scmp.eq.s32.totalorder %s23, 1
    %p104 = scmp.ne.s32.totalorder %s99, %s101
    %p105 = scmp.eq.s32.totalorder %s23, 0
    %p106 = por %p104, %p105
    %p107 = scmp.ne.s32.totalorder %s99, %s101
    %p108 = scmp.eq.s32.totalorder %s28, 1
    %p109 = por %p107, %p108
    %p110 = scmp.ne.s32.totalorder %s101, %s102
    %p111 = scmp.eq.s32.totalorder %s28, 0
    %p112 = por %p110, %p111
    %p113 = scmp.ne.s32.totalorder %s101, %s102
    %p114 = scmp.eq.s32.totalorder %s29, 1
    %p115 = por %p113, %p114
    %p117 = scmp.ne.s32.totalorder %s102, %s116
    %p118 = scmp.eq.s32.totalorder %s29, 0
    %p119 = por %p117, %p118
    %s121 = sadd.s32 %s120, 1
    %p124 = scmp.eq.s32.totalorder %s23, 1
    %p125 = scmp.ne.s32.totalorder %s120, %s122
    %p126 = scmp.eq.s32.totalorder %s23, 0
    %p127 = por %p125, %p126
    %p128 = scmp.ne.s32.totalorder %s120, %s122
    %p129 = scmp.eq.s32.totalorder %s28, 1
    %p130 = por %p128, %p129
    %p131 = scmp.ne.s32.totalorder %s122, %s123
    %p132 = scmp.eq.s32.totalorder %s28, 0
    %p133 = por %p131, %p132
    %p134 = scmp.ne.s32.totalorder %s122, %s123
    %p135 = scmp.eq.s32.totalorder %s29, 1
    %p136 = por %p134, %p135
    %p138 = scmp.ne.s32.totalorder %s123, %s137
    %p139 = scmp.eq.s32.totalorder %s29, 0
    %p140 = por %p138, %p139
    %s142 = sadd.s32 %s141, 1
    %p145 = scmp.eq.s32.totalorder %s23, 1
    %p146 = scmp.ne.s32.totalorder %s141, %s143
    %p147 = scmp.eq.s32.totalorder %s23, 0
    %p148 = por %p146, %p147
    %p149 = scmp.ne.s32.totalorder %s141, %s143
    %p150 = scmp.eq.s32.totalorder %s28, 1
    %p151 = por %p149, %p150
    %p152 = scmp.ne.s32.totalorder %s143, %s144
    %p153 = scmp.eq.s32.totalorder %s28, 0
    %p154 = por %p152, %p153
    %p155 = scmp.ne.s32.totalorder %s143, %s144
    %p156 = scmp.eq.s32.totalorder %s29, 1
    %p157 = por %p155, %p156
    %p159 = scmp.ne.s32.totalorder %s144, %s158
    %p160 = scmp.eq.s32.totalorder %s29, 0
    %p161 = por %p159, %p160
    %s163 = sadd.s32 %s162, 1
    %p166 = scmp.eq.s32.totalorder %s23, 1
    %p167 = scmp.ne.s32.totalorder %s162, %s164
    %p168 = scmp.eq.s32.totalorder %s23, 0
    %p169 = por %p167, %p168
    %p170 = scmp.ne.s32.totalorder %s162, %s164
    %p171 = scmp.eq.s32.totalorder %s28, 1
    %p172 = por %p170, %p171
    %p173 = scmp.ne.s32.totalorder %s164, %s165
    %p174 = scmp.eq.s32.totalorder %s28, 0
    %p175 = por %p173, %p174
    %p176 = scmp.ne.s32.totalorder %s164, %s165
    %p177 = scmp.eq.s32.totalorder %s29, 1
    %p178 = por %p176, %p177
    %p180 = scmp.ne.s32.totalorder %s165, %s179
    %p181 = scmp.eq.s32.totalorder %s29, 0
    %p182 = por %p180, %p181
    %s184 = sadd.s32 %s183, 1
    %p187 = scmp.eq.s32.totalorder %s23, 1
    %p188 = scmp.ne.s32.totalorder %s183, %s185
    %p189 = scmp.eq.s32.totalorder %s23, 0
    %p190 = por %p188, %p189
    %p191 = scmp.ne.s32.totalorder %s183, %s185
    %p192 = scmp.eq.s32.totalorder %s28, 1
    %p193 = por %p191, %p192
    %p194 = scmp.ne.s32.totalorder %s185, %s186
    %p195 = scmp.eq.s32.totalorder %s28, 0
    %p196 = por %p194, %p195
    %p197 = scmp.ne.s32.totalorder %s185, %s186
    %p198 = scmp.eq.s32.totalorder %s29, 1
    %p199 = por %p197, %p198
    %p201 = scmp.ne.s32.totalorder %s186, %s200
    %p202 = scmp.eq.s32.totalorder %s29, 0
    %p203 = por %p201, %p202
    %s205 = sadd.s32 %s204, 1
    %p208 = scmp.eq.s32.totalorder %s23, 1
    %p209 = scmp.ne.s32.totalorder %s204, %s206
    %p210 = scmp.eq.s32.totalorder %s23, 0
    %p211 = por %p209, %p210
    %p212 = scmp.ne.s32.totalorder %s204, %s206
    %p213 = scmp.eq.s32.totalorder %s28, 1
    %p214 = por %p212, %p213
    %p215 = scmp.ne.s32.totalorder %s206, %s207
    %p216 = scmp.eq.s32.totalorder %s28, 0
    %p217 = por %p215, %p216
    %p218 = scmp.ne.s32.totalorder %s206, %s207
    %p219 = scmp.eq.s32.totalorder %s29, 1
    %p220 = por %p218, %p219
    %p222 = scmp.ne.s32.totalorder %s207, %s221
    %p223 = scmp.eq.s32.totalorder %s29, 0
    %p224 = por %p222, %p223
    %s226 = sadd.s32 %s225, 1
    %p229 = scmp.eq.s32.totalorder %s23, 1
    %p230 = scmp.ne.s32.totalorder %s225, %s227
    %p231 = scmp.eq.s32.totalorder %s23, 0
    %p232 = por %p230, %p231
    %p233 = scmp.ne.s32.totalorder %s225, %s227
    %p234 = scmp.eq.s32.totalorder %s28, 1
    %p235 = por %p233, %p234
    %p236 = scmp.ne.s32.totalorder %s227, %s228
    %p237 = scmp.eq.s32.totalorder %s28, 0
    %p238 = por %p236, %p237
    %p239 = scmp.ne.s32.totalorder %s227, %s228
    %p240 = scmp.eq.s32.totalorder %s29, 1
    %p241 = por %p239, %p240
    %p243 = scmp.ne.s32.totalorder %s228, %s242
    %p244 = scmp.eq.s32.totalorder %s29, 0
    %p245 = por %p243, %p244
    %s247 = sadd.s32 %s246, 1
    %p250 = scmp.eq.s32.totalorder %s23, 1
    %p251 = scmp.ne.s32.totalorder %s246, %s248
    %p252 = scmp.eq.s32.totalorder %s23, 0
    %p253 = por %p251, %p252
    %p254 = scmp.ne.s32.totalorder %s246, %s248
    %p255 = scmp.eq.s32.totalorder %s28, 1
    %p256 = por %p254, %p255
    %p257 = scmp.ne.s32.totalorder %s248, %s249
    %p258 = scmp.eq.s32.totalorder %s28, 0
    %p259 = por %p257, %p258
    %p260 = scmp.ne.s32.totalorder %s248, %s249
    %p261 = scmp.eq.s32.totalorder %s29, 1
    %p262 = por %p260, %p261
    %p264 = scmp.ne.s32.totalorder %s249, %s263
    %p265 = scmp.eq.s32.totalorder %s29, 0
    %p266 = por %p264, %p265
    %s268 = sadd.s32 %s267, 1
    %p271 = scmp.eq.s32.totalorder %s23, 1
    %p272 = scmp.ne.s32.totalorder %s267, %s269
    %p273 = scmp.eq.s32.totalorder %s23, 0
    %p274 = por %p272, %p273
    %p275 = scmp.ne.s32.totalorder %s267, %s269
    %p276 = scmp.eq.s32.totalorder %s28, 1
    %p277 = por %p275, %p276
    %p278 = scmp.ne.s32.totalorder %s269, %s270
    %p279 = scmp.eq.s32.totalorder %s28, 0
    %p280 = por %p278, %p279
    %p281 = scmp.ne.s32.totalorder %s269, %s270
    %p282 = scmp.eq.s32.totalorder %s29, 1
    %p283 = por %p281, %p282
    %p285 = scmp.ne.s32.totalorder %s270, %s284
    %p286 = scmp.eq.s32.totalorder %s29, 0
    %p287 = por %p285, %p286
    %s289 = sadd.s32 %s288, 1
    %p292 = scmp.eq.s32.totalorder %s23, 1
    %p293 = scmp.ne.s32.totalorder %s288, %s290
    %p294 = scmp.eq.s32.totalorder %s23, 0
    %p295 = por %p293, %p294
    %p296 = scmp.ne.s32.totalorder %s288, %s290
    %p297 = scmp.eq.s32.totalorder %s28, 1
    %p298 = por %p296, %p297
    %p299 = scmp.ne.s32.totalorder %s290, %s291
    %p300 = scmp.eq.s32.totalorder %s28, 0
    %p301 = por %p299, %p300
    %p302 = scmp.ne.s32.totalorder %s290, %s291
    %p303 = scmp.eq.s32.totalorder %s29, 1
    %p304 = por %p302, %p303
    %p306 = scmp.ne.s32.totalorder %s291, %s305
    %p307 = scmp.eq.s32.totalorder %s29, 0
    %p308 = por %p306, %p307
    %s310 = sadd.s32 %s309, 1
    %p313 = scmp.eq.s32.totalorder %s23, 1
    %p314 = scmp.ne.s32.totalorder %s309, %s311
    %p315 = scmp.eq.s32.totalorder %s23, 0
    %p316 = por %p314, %p315
    %p317 = scmp.ne.s32.totalorder %s309, %s311
    %p318 = scmp.eq.s32.totalorder %s28, 1
    %p319 = por %p317, %p318
    %p320 = scmp.ne.s32.totalorder %s311, %s312
    %p321 = scmp.eq.s32.totalorder %s28, 0
    %p322 = por %p320, %p321
    %p323 = scmp.ne.s32.totalorder %s311, %s312
    %p324 = scmp.eq.s32.totalorder %s29, 1
    %p325 = por %p323, %p324
    %p327 = scmp.ne.s32.totalorder %s312, %s326
    %p328 = scmp.eq.s32.totalorder %s29, 0
    %p329 = por %p327, %p328
    %s331 = sadd.s32 %s330, 1
    %p334 = scmp.eq.s32.totalorder %s23, 1
    %p335 = scmp.ne.s32.totalorder %s330, %s332
    %p336 = scmp.eq.s32.totalorder %s23, 0
    %p337 = por %p335, %p336
    %p338 = scmp.ne.s32.totalorder %s330, %s332
    %p339 = scmp.eq.s32.totalorder %s28, 1
    %p340 = por %p338, %p339
    %p341 = scmp.ne.s32.totalorder %s332, %s333
    %p342 = scmp.eq.s32.totalorder %s28, 0
    %p343 = por %p341, %p342
    %p344 = scmp.ne.s32.totalorder %s332, %s333
    %p345 = scmp.eq.s32.totalorder %s29, 1
    %p346 = por %p344, %p345
    %p348 = scmp.ne.s32.totalorder %s333, %s347
    %p349 = scmp.eq.s32.totalorder %s29, 0
    %p350 = por %p348, %p349
    %s352 = sadd.s32 %s351, 1
    %p355 = scmp.eq.s32.totalorder %s23, 1
    %p356 = scmp.ne.s32.totalorder %s351, %s353
    %p357 = scmp.eq.s32.totalorder %s23, 0
    %p358 = por %p356, %p357
    %p359 = scmp.ne.s32.totalorder %s351, %s353
    %p360 = scmp.eq.s32.totalorder %s28, 1
    %p361 = por %p359, %p360
    %p362 = scmp.ne.s32.totalorder %s353, %s354
    %p363 = scmp.eq.s32.totalorder %s28, 0
    %p364 = por %p362, %p363
    %p365 = scmp.ne.s32.totalorder %s353, %s354
    %p366 = scmp.eq.s32.totalorder %s29, 1
    %p367 = por %p365, %p366
    %p369 = scmp.ne.s32.totalorder %s354, %s368
    %p370 = scmp.eq.s32.totalorder %s29, 0
    %p371 = por %p369, %p370
    %s373 = sadd.s32 %s372, 1
    %p376 = scmp.eq.s32.totalorder %s23, 1
    %p377 = scmp.ne.s32.totalorder %s372, %s374
    %p378 = scmp.eq.s32.totalorder %s23, 0
    %p379 = por %p377, %p378
    %p380 = scmp.ne.s32.totalorder %s372, %s374
    %p381 = scmp.eq.s32.totalorder %s28, 1
    %p382 = por %p380, %p381
    %p383 = scmp.ne.s32.totalorder %s374, %s375
    %p384 = scmp.eq.s32.totalorder %s28, 0
    %p385 = por %p383, %p384
    %p386 = scmp.ne.s32.totalorder %s374, %s375
    %p387 = scmp.eq.s32.totalorder %s29, 1
    %p388 = por %p386, %p387
    %p390 = scmp.ne.s32.totalorder %s375, %s389
    %p391 = scmp.eq.s32.totalorder %s29, 0
    %p392 = por %p390, %p391
    %s393 = ssub.s32 %s23, %s30
    %p394 = scmp.eq.s32.totalorder %s393, 0
    %s396 = sadd.s32 %s395, 1
    %s397 = scalar_select %p394, %s395, %s396
    %p400 = pneg %p394
    %p401 = scmp.eq.s32.totalorder %s23, 1
    %p402 = por %p400, %p401
    %p403 = scmp.ne.s32.totalorder %s395, %s398
    %p404 = scmp.eq.s32.totalorder %s23, 0
    %p405 = por %p403, %p404
    %p406 = scmp.ne.s32.totalorder %s395, %s398
    %p407 = scmp.eq.s32.totalorder %s28, 1
    %p408 = por %p406, %p407
    %p409 = scmp.ne.s32.totalorder %s398, %s399
    %p410 = scmp.eq.s32.totalorder %s28, 0
    %p411 = por %p409, %p410
    %p412 = scmp.ne.s32.totalorder %s398, %s399
    %p413 = scmp.eq.s32.totalorder %s29, 1
    %p414 = por %p412, %p413
    %p416 = scmp.ne.s32.totalorder %s399, %s415
    %p417 = scmp.eq.s32.totalorder %s29, 0
    %p418 = por %p416, %p417
    %p419 = scmp.le.s32.totalorder 1, %s23
    %p420 = scmp.lt.s32.totalorder %s23, 3
    %p421 = pnand %p419, %p420
    %p422 = pneg %p421
    // Predicated region
    $region9: #{tpu_custom_call.1} parent=5 // pred_check
      _
    $region10: #{tpu_custom_call.1} parent=5 // pred_check_branch
      %424 = sbr.rel (%p421) target = $region12
    $region11: #{tpu_custom_call.1} parent=5 // pred_region
      %s425 = ssub.s32 %s23, 1
      // Predicated region
      $region13: #{tpu_custom_call.1} parent=11 // pred_check
        %p426 = pneg %p70
      $region14: #{tpu_custom_call.1} parent=11 // pred_check_branch
        %428 = sbr.rel (%p426) target = $region16
      $region15: #{tpu_custom_call.1} parent=11 // pred_region
        _
      $region16: #{tpu_custom_call.1} parent=11 // pred_fallthru
        _
      // Predicated region
      $region17: #{tpu_custom_call.1} parent=11 // pred_check
        %p429 = pneg %p91
      $region18: #{tpu_custom_call.1} parent=11 // pred_check_branch
        %431 = sbr.rel (%p429) target = $region20
      $region19: #{tpu_custom_call.1} parent=11 // pred_region
        _
      $region20: #{tpu_custom_call.1} parent=11 // pred_fallthru
        _
      // Predicated region
      $region21: #{tpu_custom_call.1} parent=11 // pred_check
        %p432 = pneg %p112
      $region22: #{tpu_custom_call.1} parent=11 // pred_check_branch
        %434 = sbr.rel (%p432) target = $region24
      $region23: #{tpu_custom_call.1} parent=11 // pred_region
        _
      $region24: #{tpu_custom_call.1} parent=11 // pred_fallthru
        _
      // Predicated region
      $region25: #{tpu_custom_call.1} parent=11 // pred_check
        %p435 = pneg %p133
      $region26: #{tpu_custom_call.1} parent=11 // pred_check_branch
        %437 = sbr.rel (%p435) target = $region28
      $region27: #{tpu_custom_call.1} parent=11 // pred_region
        _
      $region28: #{tpu_custom_call.1} parent=11 // pred_fallthru
        _
      // Predicated region
      $region29: #{tpu_custom_call.1} parent=11 // pred_check
        %p438 = pneg %p154
      $region30: #{tpu_custom_call.1} parent=11 // pred_check_branch
        %440 = sbr.rel (%p438) target = $region32
      $region31: #{tpu_custom_call.1} parent=11 // pred_region
        _
      $region32: #{tpu_custom_call.1} parent=11 // pred_fallthru
        _
      // Predicated region
      $region33: #{tpu_custom_call.1} parent=11 // pred_check
        %p441 = pneg %p175
      $region34: #{tpu_custom_call.1} parent=11 // pred_check_branch
        %443 = sbr.rel (%p441) target = $region36
      $region35: #{tpu_custom_call.1} parent=11 // pred_region
        _
      $region36: #{tpu_custom_call.1} parent=11 // pred_fallthru
        _
      // Predicated region
      $region37: #{tpu_custom_call.1} parent=11 // pred_check
        %p444 = pneg %p196
      $region38: #{tpu_custom_call.1} parent=11 // pred_check_branch
        %446 = sbr.rel (%p444) target = $region40
      $region39: #{tpu_custom_call.1} parent=11 // pred_region
        _
      $region40: #{tpu_custom_call.1} parent=11 // pred_fallthru
        _
      // Predicated region
      $region41: #{tpu_custom_call.1} parent=11 // pred_check
        %p447 = pneg %p217
      $region42: #{tpu_custom_call.1} parent=11 // pred_check_branch
        %449 = sbr.rel (%p447) target = $region44
      $region43: #{tpu_custom_call.1} parent=11 // pred_region
        _
      $region44: #{tpu_custom_call.1} parent=11 // pred_fallthru
        _
      // Predicated region
      $region45: #{tpu_custom_call.1} parent=11 // pred_check
        %p450 = pneg %p238
      $region46: #{tpu_custom_call.1} parent=11 // pred_check_branch
        %452 = sbr.rel (%p450) target = $region48
      $region47: #{tpu_custom_call.1} parent=11 // pred_region
        _
      $region48: #{tpu_custom_call.1} parent=11 // pred_fallthru
        _
      // Predicated region
      $region49: #{tpu_custom_call.1} parent=11 // pred_check
        %p453 = pneg %p259
      $region50: #{tpu_custom_call.1} parent=11 // pred_check_branch
        %455 = sbr.rel (%p453) target = $region52
      $region51: #{tpu_custom_call.1} parent=11 // pred_region
        _
      $region52: #{tpu_custom_call.1} parent=11 // pred_fallthru
        _
      // Predicated region
      $region53: #{tpu_custom_call.1} parent=11 // pred_check
        %p456 = pneg %p280
      $region54: #{tpu_custom_call.1} parent=11 // pred_check_branch
        %458 = sbr.rel (%p456) target = $region56
      $region55: #{tpu_custom_call.1} parent=11 // pred_region
        _
      $region56: #{tpu_custom_call.1} parent=11 // pred_fallthru
        _
      // Predicated region
      $region57: #{tpu_custom_call.1} parent=11 // pred_check
        %p459 = pneg %p301
      $region58: #{tpu_custom_call.1} parent=11 // pred_check_branch
        %461 = sbr.rel (%p459) target = $region60
      $region59: #{tpu_custom_call.1} parent=11 // pred_region
        _
      $region60: #{tpu_custom_call.1} parent=11 // pred_fallthru
        _
      // Predicated region
      $region61: #{tpu_custom_call.1} parent=11 // pred_check
        %p462 = pneg %p322
      $region62: #{tpu_custom_call.1} parent=11 // pred_check_branch
        %464 = sbr.rel (%p462) target = $region64
      $region63: #{tpu_custom_call.1} parent=11 // pred_region
        _
      $region64: #{tpu_custom_call.1} parent=11 // pred_fallthru
        _
      // Predicated region
      $region65: #{tpu_custom_call.1} parent=11 // pred_check
        %p465 = pneg %p343
      $region66: #{tpu_custom_call.1} parent=11 // pred_check_branch
        %467 = sbr.rel (%p465) target = $region68
      $region67: #{tpu_custom_call.1} parent=11 // pred_region
        _
      $region68: #{tpu_custom_call.1} parent=11 // pred_fallthru
        _
      // Predicated region
      $region69: #{tpu_custom_call.1} parent=11 // pred_check
        %p468 = pneg %p364
      $region70: #{tpu_custom_call.1} parent=11 // pred_check_branch
        %470 = sbr.rel (%p468) target = $region72
      $region71: #{tpu_custom_call.1} parent=11 // pred_region
        _
      $region72: #{tpu_custom_call.1} parent=11 // pred_fallthru
        _
      // Predicated region
      $region73: #{tpu_custom_call.1} parent=11 // pred_check
        %p471 = pneg %p385
      $region74: #{tpu_custom_call.1} parent=11 // pred_check_branch
        %473 = sbr.rel (%p471) target = $region76
      $region75: #{tpu_custom_call.1} parent=11 // pred_region
        _
      $region76: #{tpu_custom_call.1} parent=11 // pred_fallthru
        _
    $region12: #{tpu_custom_call.1} parent=5 // pred_fallthru
      _
    %p474 = scmp.lt.s32.totalorder %s23, 2
    // Predicated region
    $region77: #{tpu_custom_call.1} parent=5 // pred_check
      %p475 = pneg %p474
    $region78: #{tpu_custom_call.1} parent=5 // pred_check_branch
      %477 = sbr.rel (%p475) target = $region80
    $region79: #{tpu_custom_call.1} parent=5 // pred_region
      // Predicated region
      $region81: #{tpu_custom_call.1} parent=79 // pred_check
        %p478 = pneg %p43
      $region82: #{tpu_custom_call.1} parent=79 // pred_check_branch
        %480 = sbr.rel (%p478) target = $region84
      $region83: #{tpu_custom_call.1} parent=79 // pred_region
        %s481 = smul.u32 32, %s23
        %p482 = scmp.lt.s32.totalorder %s481, 63
        %s483 = scalar_select %p482, %s481, 63
        %s484 = smul.addr %s483, 8
        %s485 = scalar_lea.vmem %s0, %s484
        %s486 = smul.u32 32, %s23
      $region84: #{tpu_custom_call.1} parent=79 // pred_fallthru
        _
    $region80: #{tpu_custom_call.1} parent=5 // pred_fallthru
      _
    %p487 = scmp.le.s32.totalorder 1, %s23
    %p488 = scmp.lt.s32.totalorder %s23, 3
    %p489 = pnand %p487, %p488
    %p490 = pneg %p489
    // Predicated region
    $region85: #{tpu_custom_call.1} parent=5 // pred_check
      _
    $region86: #{tpu_custom_call.1} parent=5 // pred_check_branch
      %492 = sbr.rel (%p489) target = $region88
    $region87: #{tpu_custom_call.1} parent=5 // pred_region
      %s493 = ssub.s32 %s23, 1
      %s494 = smul.u32 32, %s28
      %p495 = scmp.lt.s32.totalorder %s494, 63
      %s496 = scalar_select %p495, %s494, 63
      %s497 = smul.addr %s496, 8
      %s498 = scalar_lea.vmem %s0, %s497
      %p499 = pneg %p49
      %p500 = pneg %p46
      %p501 = pneg %p70
      %p502 = pneg %p67
      %p503 = pneg %p91
      %p504 = pneg %p88
      %p505 = pneg %p112
      %p506 = pneg %p109
      %p507 = pneg %p133
      %p508 = pneg %p130
      %p509 = pneg %p154
      %p510 = pneg %p151
      %p511 = pneg %p175
      %p512 = pneg %p172
      %p513 = pneg %p196
      %p514 = pneg %p193
      %p515 = pneg %p217
      %p516 = pneg %p214
      %p517 = pneg %p238
      %p518 = pneg %p235
      %p519 = pneg %p259
      %p520 = pneg %p256
      %p521 = pneg %p280
      %p522 = pneg %p277
      %p523 = pneg %p301
      %p524 = pneg %p298
      %p525 = pneg %p322
      %p526 = pneg %p319
      %p527 = pneg %p343
      %p528 = pneg %p340
      %p529 = pneg %p364
      %p530 = pneg %p361
      %p531 = pneg %p385
      %p532 = pneg %p382
      %p533 = pneg %p411
      %p534 = pneg %p408
      %s535 = smul.u32 32, %s28
      %p536 = scmp.lt.s32.totalorder %s535, 63
      %s537 = scalar_select %p536, %s535, 63
      %s538 = smul.addr %s537, 8
      %s539 = scalar_lea.vmem %s17, %s538
      %s540 = smul.u32 32, %s28
      %p541 = scmp.lt.s32.totalorder %s540, 63
      %s542 = scalar_select %p541, %s540, 63
      %s543 = smul.addr %s542, 8
      %s544 = scalar_lea.vmem %s0, %s543
      %s545 = smul.u32 32, %s28
      %s546 = smul.u32 32, %s28
      %p547 = scmp.lt.s32.totalorder %s546, 63
      %s548 = scalar_select %p547, %s546, 63
      %s549 = smul.addr %s548, 8
      %s550 = scalar_lea.vmem %s17, %s549
      %s551 = smul.u32 32, %s28
      %v553 = vld [vmem:[%s544] sm:$0xff]
      %v554 = vld [vmem:[%s544 + $0x8] sm:$0xff]
      %v555 = vld [vmem:[%s544 + $0x10] sm:$0xff]
      %v556 = vld [vmem:[%s544 + $0x18] sm:$0xff]
      %v557 = vld [vmem:[%s544 + $0x20] sm:$0xff]
      %v558 = vld [vmem:[%s544 + $0x28] sm:$0xff]
      %v559 = vld [vmem:[%s544 + $0x30] sm:$0xff]
      %v560 = vld [vmem:[%s544 + $0x38] sm:$0xff]
      %v561 = vld [vmem:[%s544 + $0x40] sm:$0xff]
      %v562 = vld [vmem:[%s544 + $0x48] sm:$0xff]
      %v563 = vld [vmem:[%s544 + $0x50] sm:$0xff]
      %v564 = vld [vmem:[%s544 + $0x58] sm:$0xff]
      %v565 = vld [vmem:[%s544 + $0x60] sm:$0xff]
      %v566 = vld [vmem:[%s544 + $0x68] sm:$0xff]
      %v567 = vld [vmem:[%s544 + $0x70] sm:$0xff]
      %v568 = vld [vmem:[%s544 + $0x78] sm:$0xff]
      %v569 = vld [vmem:[%s544 + $0x80] sm:$0xff]
      %v570 = vld [vmem:[%s544 + $0x88] sm:$0xff]
      %v571 = vld [vmem:[%s544 + $0x90] sm:$0xff]
      %v572 = vld [vmem:[%s544 + $0x98] sm:$0xff]
      %v573 = vld [vmem:[%s544 + $0xa0] sm:$0xff]
      %v574 = vld [vmem:[%s544 + $0xa8] sm:$0xff]
      %v575 = vld [vmem:[%s544 + $0xb0] sm:$0xff]
      %v576 = vld [vmem:[%s544 + $0xb8] sm:$0xff]
      %v577 = vld [vmem:[%s544 + $0xc0] sm:$0xff]
      %v578 = vld [vmem:[%s544 + $0xc8] sm:$0xff]
      %v579 = vld [vmem:[%s544 + $0xd0] sm:$0xff]
      %v580 = vld [vmem:[%s544 + $0xd8] sm:$0xff]
      %v581 = vld [vmem:[%s544 + $0xe0] sm:$0xff]
      %v582 = vld [vmem:[%s544 + $0xe8] sm:$0xff]
      %v583 = vld [vmem:[%s544 + $0xf0] sm:$0xff]
      %v584 = vld [vmem:[%s544 + $0xf8] sm:$0xff]
      %v585 = vld [vmem:[%s1] sm:$0x1]
      %v587 = vperm.slane %v585, 0
      %v589 = vmul.f32 %v553, %v587
      %v590 = vmul.f32 %v554, %v587
      %v591 = vmul.f32 %v555, %v587
      %v592 = vmul.f32 %v556, %v587
      %v593 = vmul.f32 %v557, %v587
      %v594 = vmul.f32 %v558, %v587
      %v595 = vmul.f32 %v559, %v587
      %v596 = vmul.f32 %v560, %v587
      %v597 = vmul.f32 %v561, %v587
      %v598 = vmul.f32 %v562, %v587
      %v599 = vmul.f32 %v563, %v587
      %v600 = vmul.f32 %v564, %v587
      %v601 = vmul.f32 %v565, %v587
      %v602 = vmul.f32 %v566, %v587
      %v603 = vmul.f32 %v567, %v587
      %v604 = vmul.f32 %v568, %v587
      %v605 = vmul.f32 %v569, %v587
      %v606 = vmul.f32 %v570, %v587
      %v607 = vmul.f32 %v571, %v587
      %v608 = vmul.f32 %v572, %v587
      %v609 = vmul.f32 %v573, %v587
      %v610 = vmul.f32 %v574, %v587
      %v611 = vmul.f32 %v575, %v587
      %v612 = vmul.f32 %v576, %v587
      %v613 = vmul.f32 %v577, %v587
      %v614 = vmul.f32 %v578, %v587
      %v615 = vmul.f32 %v579, %v587
      %v616 = vmul.f32 %v580, %v587
      %v617 = vmul.f32 %v581, %v587
      %v618 = vmul.f32 %v582, %v587
      %v619 = vmul.f32 %v583, %v587
      %v620 = vmul.f32 %v584, %v587
      %v621 = vld [vmem:[%s2] sm:$0x1]
      %v623 = vperm.slane %v621, 0
      %v625 = vadd.f32 %v589, %v623
      %v626 = vadd.f32 %v590, %v623
      %v627 = vadd.f32 %v591, %v623
      %v628 = vadd.f32 %v592, %v623
      %v629 = vadd.f32 %v593, %v623
      %v630 = vadd.f32 %v594, %v623
      %v631 = vadd.f32 %v595, %v623
      %v632 = vadd.f32 %v596, %v623
      %v633 = vadd.f32 %v597, %v623
      %v634 = vadd.f32 %v598, %v623
      %v635 = vadd.f32 %v599, %v623
      %v636 = vadd.f32 %v600, %v623
      %v637 = vadd.f32 %v601, %v623
      %v638 = vadd.f32 %v602, %v623
      %v639 = vadd.f32 %v603, %v623
      %v640 = vadd.f32 %v604, %v623
      %v641 = vadd.f32 %v605, %v623
      %v642 = vadd.f32 %v606, %v623
      %v643 = vadd.f32 %v607, %v623
      %v644 = vadd.f32 %v608, %v623
      %v645 = vadd.f32 %v609, %v623
      %v646 = vadd.f32 %v610, %v623
      %v647 = vadd.f32 %v611, %v623
      %v648 = vadd.f32 %v612, %v623
      %v649 = vadd.f32 %v613, %v623
      %v650 = vadd.f32 %v614, %v623
      %v651 = vadd.f32 %v615, %v623
      %v652 = vadd.f32 %v616, %v623
      %v653 = vadd.f32 %v617, %v623
      %v654 = vadd.f32 %v618, %v623
      %v655 = vadd.f32 %v619, %v623
      %v656 = vadd.f32 %v620, %v623
      %v657 = vpack.c.bf16 %v626, %v625
      %v658 = vpack.c.bf16 %v628, %v627
      %v659 = vpack.c.bf16 %v630, %v629
      %v660 = vpack.c.bf16 %v632, %v631
      %v661 = vpack.c.bf16 %v634, %v633
      %v662 = vpack.c.bf16 %v636, %v635
      %v663 = vpack.c.bf16 %v638, %v637
      %v664 = vpack.c.bf16 %v640, %v639
      %v665 = vpack.c.bf16 %v642, %v641
      %v666 = vpack.c.bf16 %v644, %v643
      %v667 = vpack.c.bf16 %v646, %v645
      %v668 = vpack.c.bf16 %v648, %v647
      %v669 = vpack.c.bf16 %v650, %v649
      %v670 = vpack.c.bf16 %v652, %v651
      %v671 = vpack.c.bf16 %v654, %v653
      %v672 = vpack.c.bf16 %v656, %v655
      %v673 = vld [vmem:[%s3] sm:$0xf]
      %v674 = vld [vmem:[%s3 + $0x4] sm:$0xf]
      %v675 = vld [vmem:[%s4] sm:$0x1]
      %v677 = vperm.slane %v675, 0
      %v681 = vunpack.c.l.b16 %v673
      %v682 = vunpack.c.l.b16 %v674
      %v683 = vpack.c.b16 %v682, %v681
      %vm685 = vcmask 130048
      %v687 = vsel %vm685, %v657, 0
      %v690 = vsel %vm685, %v658, 0
      %v693 = vsel %vm685, %v659, 0
      %v696 = vsel %vm685, %v660, 0
      %v699 = vsel %vm685, %v661, 0
      %v702 = vsel %vm685, %v662, 0
      %v705 = vsel %vm685, %v663, 0
      %v708 = vsel %vm685, %v664, 0
      %v711 = vsel %vm685, %v665, 0
      %v714 = vsel %vm685, %v666, 0
      %v717 = vsel %vm685, %v667, 0
      %v720 = vsel %vm685, %v668, 0
      %v723 = vsel %vm685, %v669, 0
      %v726 = vsel %vm685, %v670, 0
      %v729 = vsel %vm685, %v671, 0
      %v732 = vsel %vm685, %v672, 0
      %734 = vmatpush.bf16.msra.mxu0 0
      %735 = vmatpush.bf16.msra.mxu0 0
      %736 = vmatpush.bf16.msra.mxu0 0
      %737 = vmatpush.bf16.msra.mxu0 0
      %738 = vmatpush.bf16.msra.mxu0 0
      %739 = vmatpush.bf16.msra.mxu0 0
      %740 = vmatpush.bf16.msra.mxu0 0
      %741 = vmatpush.bf16.msra.mxu0 %v683
      %742 = vmatmul.bf16.gmra.mxu0 %v687
      %v743 = vpop.f32.mrf.mxu0
      %v744 = vadd.f32 %v677, %v743
      %v745 = vpop.f32.mrf.mxu0
      %v746 = vadd.f32 %v677, %v745
      %747 = vmatmul.bf16.gmra.mxu0 %v690
      %v748 = vpop.f32.mrf.mxu0
      %v749 = vadd.f32 %v677, %v748
      %v750 = vpop.f32.mrf.mxu0
      %v751 = vadd.f32 %v677, %v750
      %752 = vmatmul.bf16.gmra.mxu0 %v693
      %v753 = vpop.f32.mrf.mxu0
      %v754 = vadd.f32 %v677, %v753
      %v755 = vpop.f32.mrf.mxu0
      %v756 = vadd.f32 %v677, %v755
      %757 = vmatmul.bf16.gmra.mxu0 %v696
      %v758 = vpop.f32.mrf.mxu0
      %v759 = vadd.f32 %v677, %v758
      %v760 = vpop.f32.mrf.mxu0
      %v761 = vadd.f32 %v677, %v760
      %762 = vmatmul.bf16.gmra.mxu0 %v699
      %v763 = vpop.f32.mrf.mxu0
      %v764 = vadd.f32 %v677, %v763
      %v765 = vpop.f32.mrf.mxu0
      %v766 = vadd.f32 %v677, %v765
      %767 = vmatmul.bf16.gmra.mxu0 %v702
      %v768 = vpop.f32.mrf.mxu0
      %v769 = vadd.f32 %v677, %v768
      %v770 = vpop.f32.mrf.mxu0
      %v771 = vadd.f32 %v677, %v770
      %772 = vmatmul.bf16.gmra.mxu0 %v705
      %v773 = vpop.f32.mrf.mxu0
      %v774 = vadd.f32 %v677, %v773
      %v775 = vpop.f32.mrf.mxu0
      %v776 = vadd.f32 %v677, %v775
      %777 = vmatmul.bf16.gmra.mxu0 %v708
      %v778 = vpop.f32.mrf.mxu0
      %v779 = vadd.f32 %v677, %v778
      %v780 = vpop.f32.mrf.mxu0
      %v781 = vadd.f32 %v677, %v780
      %782 = vmatmul.bf16.gmra.mxu0 %v711
      %v783 = vpop.f32.mrf.mxu0
      %v784 = vadd.f32 %v677, %v783
      %v785 = vpop.f32.mrf.mxu0
      %v786 = vadd.f32 %v677, %v785
      %787 = vmatmul.bf16.gmra.mxu0 %v714
      %v788 = vpop.f32.mrf.mxu0
      %v789 = vadd.f32 %v677, %v788
      %v790 = vpop.f32.mrf.mxu0
      %v791 = vadd.f32 %v677, %v790
      %792 = vmatmul.bf16.gmra.mxu0 %v717
      %v793 = vpop.f32.mrf.mxu0
      %v794 = vadd.f32 %v677, %v793
      %v795 = vpop.f32.mrf.mxu0
      %v796 = vadd.f32 %v677, %v795
      %797 = vmatmul.bf16.gmra.mxu0 %v720
      %v798 = vpop.f32.mrf.mxu0
      %v799 = vadd.f32 %v677, %v798
      %v800 = vpop.f32.mrf.mxu0
      %v801 = vadd.f32 %v677, %v800
      %802 = vmatmul.bf16.gmra.mxu0 %v723
      %v803 = vpop.f32.mrf.mxu0
      %v804 = vadd.f32 %v677, %v803
      %v805 = vpop.f32.mrf.mxu0
      %v806 = vadd.f32 %v677, %v805
      %807 = vmatmul.bf16.gmra.mxu0 %v726
      %v808 = vpop.f32.mrf.mxu0
      %v809 = vadd.f32 %v677, %v808
      %v810 = vpop.f32.mrf.mxu0
      %v811 = vadd.f32 %v677, %v810
      %812 = vmatmul.bf16.gmra.mxu0 %v729
      %v813 = vpop.f32.mrf.mxu0
      %v814 = vadd.f32 %v677, %v813
      %v815 = vpop.f32.mrf.mxu0
      %v816 = vadd.f32 %v677, %v815
      %817 = vmatmul.bf16.gmra.mxu0 %v732
      %v818 = vpop.f32.mrf.mxu0
      %v819 = vadd.f32 %v677, %v818
      %v820 = vpop.f32.mrf.mxu0
      %v821 = vadd.f32 %v677, %v820
      %822 = vdwg.mxu0
      %v823 = vld [vmem:[%s5] sm:$0xf]
      %v824 = vld [vmem:[%s5 + $0x4] sm:$0xf]
      %v825 = vld [vmem:[%s6] sm:$0x1]
      %v827 = vperm.slane %v825, 0
      %v831 = vunpack.c.l.b16 %v823
      %v832 = vunpack.c.l.b16 %v824
      %v833 = vpack.c.b16 %v832, %v831
      %835 = vmatpush.bf16.msra.mxu0 0
      %836 = vmatpush.bf16.msra.mxu0 0
      %837 = vmatpush.bf16.msra.mxu0 0
      %838 = vmatpush.bf16.msra.mxu0 0
      %839 = vmatpush.bf16.msra.mxu0 0
      %840 = vmatpush.bf16.msra.mxu0 0
      %841 = vmatpush.bf16.msra.mxu0 0
      %842 = vmatpush.bf16.msra.mxu0 %v833
      %843 = vmatmul.bf16.gmra.mxu0 %v687
      %v844 = vpop.f32.mrf.mxu0
      %v845 = vadd.f32 %v827, %v844
      %v846 = vpop.f32.mrf.mxu0
      %v847 = vadd.f32 %v827, %v846
      %848 = vmatmul.bf16.gmra.mxu0 %v690
      %v849 = vpop.f32.mrf.mxu0
      %v850 = vadd.f32 %v827, %v849
      %v851 = vpop.f32.mrf.mxu0
      %v852 = vadd.f32 %v827, %v851
      %853 = vmatmul.bf16.gmra.mxu0 %v693
      %v854 = vpop.f32.mrf.mxu0
      %v855 = vadd.f32 %v827, %v854
      %v856 = vpop.f32.mrf.mxu0
      %v857 = vadd.f32 %v827, %v856
      %858 = vmatmul.bf16.gmra.mxu0 %v696
      %v859 = vpop.f32.mrf.mxu0
      %v860 = vadd.f32 %v827, %v859
      %v861 = vpop.f32.mrf.mxu0
      %v862 = vadd.f32 %v827, %v861
      %863 = vmatmul.bf16.gmra.mxu0 %v699
      %v864 = vpop.f32.mrf.mxu0
      %v865 = vadd.f32 %v827, %v864
      %v866 = vpop.f32.mrf.mxu0
      %v867 = vadd.f32 %v827, %v866
      %868 = vmatmul.bf16.gmra.mxu0 %v702
      %v869 = vpop.f32.mrf.mxu0
      %v870 = vadd.f32 %v827, %v869
      %v871 = vpop.f32.mrf.mxu0
      %v872 = vadd.f32 %v827, %v871
      %873 = vmatmul.bf16.gmra.mxu0 %v705
      %v874 = vpop.f32.mrf.mxu0
      %v875 = vadd.f32 %v827, %v874
      %v876 = vpop.f32.mrf.mxu0
      %v877 = vadd.f32 %v827, %v876
      %878 = vmatmul.bf16.gmra.mxu0 %v708
      %v879 = vpop.f32.mrf.mxu0
      %v880 = vadd.f32 %v827, %v879
      %v881 = vpop.f32.mrf.mxu0
      %v882 = vadd.f32 %v827, %v881
      %883 = vmatmul.bf16.gmra.mxu0 %v711
      %v884 = vpop.f32.mrf.mxu0
      %v885 = vadd.f32 %v827, %v884
      %v886 = vpop.f32.mrf.mxu0
      %v887 = vadd.f32 %v827, %v886
      %888 = vmatmul.bf16.gmra.mxu0 %v714
      %v889 = vpop.f32.mrf.mxu0
      %v890 = vadd.f32 %v827, %v889
      %v891 = vpop.f32.mrf.mxu0
      %v892 = vadd.f32 %v827, %v891
      %893 = vmatmul.bf16.gmra.mxu0 %v717
      %v894 = vpop.f32.mrf.mxu0
      %v895 = vadd.f32 %v827, %v894
      %v896 = vpop.f32.mrf.mxu0
      %v897 = vadd.f32 %v827, %v896
      %898 = vmatmul.bf16.gmra.mxu0 %v720
      %v899 = vpop.f32.mrf.mxu0
      %v900 = vadd.f32 %v827, %v899
      %v901 = vpop.f32.mrf.mxu0
      %v902 = vadd.f32 %v827, %v901
      %903 = vmatmul.bf16.gmra.mxu0 %v723
      %v904 = vpop.f32.mrf.mxu0
      %v905 = vadd.f32 %v827, %v904
      %v906 = vpop.f32.mrf.mxu0
      %v907 = vadd.f32 %v827, %v906
      %908 = vmatmul.bf16.gmra.mxu0 %v726
      %v909 = vpop.f32.mrf.mxu0
      %v910 = vadd.f32 %v827, %v909
      %v911 = vpop.f32.mrf.mxu0
      %v912 = vadd.f32 %v827, %v911
      %913 = vmatmul.bf16.gmra.mxu0 %v729
      %v914 = vpop.f32.mrf.mxu0
      %v915 = vadd.f32 %v827, %v914
      %v916 = vpop.f32.mrf.mxu0
      %v917 = vadd.f32 %v827, %v916
      %918 = vmatmul.bf16.gmra.mxu0 %v732
      %v919 = vpop.f32.mrf.mxu0
      %v920 = vadd.f32 %v827, %v919
      %v921 = vpop.f32.mrf.mxu0
      %v922 = vadd.f32 %v827, %v921
      %923 = vdwg.mxu0
      %v924 = vld [vmem:[%s7] sm:$0xf]
      %v925 = vld [vmem:[%s7 + $0x4] sm:$0xf]
      %v926 = vld [vmem:[%s8] sm:$0x1]
      %v928 = vperm.slane %v926, 0
      %v932 = vunpack.c.l.b16 %v924
      %v933 = vunpack.c.l.b16 %v925
      %v934 = vpack.c.b16 %v933, %v932
      %936 = vmatpush.bf16.msra.mxu0 0
      %937 = vmatpush.bf16.msra.mxu0 0
      %938 = vmatpush.bf16.msra.mxu0 0
      %939 = vmatpush.bf16.msra.mxu0 0
      %940 = vmatpush.bf16.msra.mxu0 0
      %941 = vmatpush.bf16.msra.mxu0 0
      %942 = vmatpush.bf16.msra.mxu0 0
      %943 = vmatpush.bf16.msra.mxu0 %v934
      %944 = vmatmul.bf16.gmra.mxu0 %v687
      %v945 = vpop.f32.mrf.mxu0
      %v946 = vadd.f32 %v928, %v945
      %v947 = vpop.f32.mrf.mxu0
      %v948 = vadd.f32 %v928, %v947
      %949 = vmatmul.bf16.gmra.mxu0 %v690
      %v950 = vpop.f32.mrf.mxu0
      %v951 = vadd.f32 %v928, %v950
      %v952 = vpop.f32.mrf.mxu0
      %v953 = vadd.f32 %v928, %v952
      %954 = vmatmul.bf16.gmra.mxu0 %v693
      %v955 = vpop.f32.mrf.mxu0
      %v956 = vadd.f32 %v928, %v955
      %v957 = vpop.f32.mrf.mxu0
      %v958 = vadd.f32 %v928, %v957
      %959 = vmatmul.bf16.gmra.mxu0 %v696
      %v960 = vpop.f32.mrf.mxu0
      %v961 = vadd.f32 %v928, %v960
      %v962 = vpop.f32.mrf.mxu0
      %v963 = vadd.f32 %v928, %v962
      %964 = vmatmul.bf16.gmra.mxu0 %v699
      %v965 = vpop.f32.mrf.mxu0
      %v966 = vadd.f32 %v928, %v965
      %v967 = vpop.f32.mrf.mxu0
      %v968 = vadd.f32 %v928, %v967
      %969 = vmatmul.bf16.gmra.mxu0 %v702
      %v970 = vpop.f32.mrf.mxu0
      %v971 = vadd.f32 %v928, %v970
      %v972 = vpop.f32.mrf.mxu0
      %v973 = vadd.f32 %v928, %v972
      %974 = vmatmul.bf16.gmra.mxu0 %v705
      %v975 = vpop.f32.mrf.mxu0
      %v976 = vadd.f32 %v928, %v975
      %v977 = vpop.f32.mrf.mxu0
      %v978 = vadd.f32 %v928, %v977
      %979 = vmatmul.bf16.gmra.mxu0 %v708
      %v980 = vpop.f32.mrf.mxu0
      %v981 = vadd.f32 %v928, %v980
      %v982 = vpop.f32.mrf.mxu0
      %v983 = vadd.f32 %v928, %v982
      %984 = vmatmul.bf16.gmra.mxu0 %v711
      %v985 = vpop.f32.mrf.mxu0
      %v986 = vadd.f32 %v928, %v985
      %v987 = vpop.f32.mrf.mxu0
      %v988 = vadd.f32 %v928, %v987
      %989 = vmatmul.bf16.gmra.mxu0 %v714
      %v990 = vpop.f32.mrf.mxu0
      %v991 = vadd.f32 %v928, %v990
      %v992 = vpop.f32.mrf.mxu0
      %v993 = vadd.f32 %v928, %v992
      %994 = vmatmul.bf16.gmra.mxu0 %v717
      %v995 = vpop.f32.mrf.mxu0
      %v996 = vadd.f32 %v928, %v995
      %v997 = vpop.f32.mrf.mxu0
      %v998 = vadd.f32 %v928, %v997
      %999 = vmatmul.bf16.gmra.mxu0 %v720
      %v1000 = vpop.f32.mrf.mxu0
      %v1001 = vadd.f32 %v928, %v1000
      %v1002 = vpop.f32.mrf.mxu0
      %v1003 = vadd.f32 %v928, %v1002
      %1004 = vmatmul.bf16.gmra.mxu0 %v723
      %v1005 = vpop.f32.mrf.mxu0
      %v1006 = vadd.f32 %v928, %v1005
      %v1007 = vpop.f32.mrf.mxu0
      %v1008 = vadd.f32 %v928, %v1007
      %1009 = vmatmul.bf16.gmra.mxu0 %v726
      %v1010 = vpop.f32.mrf.mxu0
      %v1011 = vadd.f32 %v928, %v1010
      %v1012 = vpop.f32.mrf.mxu0
      %v1013 = vadd.f32 %v928, %v1012
      %1014 = vmatmul.bf16.gmra.mxu0 %v729
      %v1015 = vpop.f32.mrf.mxu0
      %v1016 = vadd.f32 %v928, %v1015
      %v1017 = vpop.f32.mrf.mxu0
      %v1018 = vadd.f32 %v928, %v1017
      %1019 = vmatmul.bf16.gmra.mxu0 %v732
      %v1020 = vpop.f32.mrf.mxu0
      %v1021 = vadd.f32 %v928, %v1020
      %v1022 = vpop.f32.mrf.mxu0
      %v1023 = vadd.f32 %v928, %v1022
      %1024 = vdwg.mxu0
      %v1025 = vmul.f32 %v744, 0.5
      %v1026 = vmul.f32 %v746, 0.5
      %v1027 = vmul.f32 %v749, 0.5
      %v1028 = vmul.f32 %v751, 0.5
      %v1029 = vmul.f32 %v754, 0.5
      %v1030 = vmul.f32 %v756, 0.5
      %v1031 = vmul.f32 %v759, 0.5
      %v1032 = vmul.f32 %v761, 0.5
      %v1033 = vmul.f32 %v764, 0.5
      %v1034 = vmul.f32 %v766, 0.5
      %v1035 = vmul.f32 %v769, 0.5
      %v1036 = vmul.f32 %v771, 0.5
      %v1037 = vmul.f32 %v774, 0.5
      %v1038 = vmul.f32 %v776, 0.5
      %v1039 = vmul.f32 %v779, 0.5
      %v1040 = vmul.f32 %v781, 0.5
      %v1041 = vmul.f32 %v784, 0.5
      %v1042 = vmul.f32 %v786, 0.5
      %v1043 = vmul.f32 %v789, 0.5
      %v1044 = vmul.f32 %v791, 0.5
      %v1045 = vmul.f32 %v794, 0.5
      %v1046 = vmul.f32 %v796, 0.5
      %v1047 = vmul.f32 %v799, 0.5
      %v1048 = vmul.f32 %v801, 0.5
      %v1049 = vmul.f32 %v804, 0.5
      %v1050 = vmul.f32 %v806, 0.5
      %v1051 = vmul.f32 %v809, 0.5
      %v1052 = vmul.f32 %v811, 0.5
      %v1053 = vmul.f32 %v814, 0.5
      %v1054 = vmul.f32 %v816, 0.5
      %v1055 = vmul.f32 %v819, 0.5
      %v1056 = vmul.f32 %v821, 0.5
      %v1057 = vpack.c.bf16 %v1025, %v1025
      %v1058 = vpack.c.bf16 %v1026, %v1026
      %v1059 = vpack.c.bf16 %v1027, %v1027
      %v1060 = vpack.c.bf16 %v1028, %v1028
      %v1061 = vpack.c.bf16 %v1029, %v1029
      %v1062 = vpack.c.bf16 %v1030, %v1030
      %v1063 = vpack.c.bf16 %v1031, %v1031
      %v1064 = vpack.c.bf16 %v1032, %v1032
      %v1065 = vpack.c.bf16 %v1033, %v1033
      %v1066 = vpack.c.bf16 %v1034, %v1034
      %v1067 = vpack.c.bf16 %v1035, %v1035
      %v1068 = vpack.c.bf16 %v1036, %v1036
      %v1069 = vpack.c.bf16 %v1037, %v1037
      %v1070 = vpack.c.bf16 %v1038, %v1038
      %v1071 = vpack.c.bf16 %v1039, %v1039
      %v1072 = vpack.c.bf16 %v1040, %v1040
      %v1073 = vpack.c.bf16 %v1041, %v1041
      %v1074 = vpack.c.bf16 %v1042, %v1042
      %v1075 = vpack.c.bf16 %v1043, %v1043
      %v1076 = vpack.c.bf16 %v1044, %v1044
      %v1077 = vpack.c.bf16 %v1045, %v1045
      %v1078 = vpack.c.bf16 %v1046, %v1046
      %v1079 = vpack.c.bf16 %v1047, %v1047
      %v1080 = vpack.c.bf16 %v1048, %v1048
      %v1081 = vpack.c.bf16 %v1049, %v1049
      %v1082 = vpack.c.bf16 %v1050, %v1050
      %v1083 = vpack.c.bf16 %v1051, %v1051
      %v1084 = vpack.c.bf16 %v1052, %v1052
      %v1085 = vpack.c.bf16 %v1053, %v1053
      %v1086 = vpack.c.bf16 %v1054, %v1054
      %v1087 = vpack.c.bf16 %v1055, %v1055
      %v1088 = vpack.c.bf16 %v1056, %v1056
      %v1089 = vpack.c.bf16 %v845, %v845
      %v1090 = vpack.c.bf16 %v847, %v847
      %v1091 = vpack.c.bf16 %v850, %v850
      %v1092 = vpack.c.bf16 %v852, %v852
      %v1093 = vpack.c.bf16 %v855, %v855
      %v1094 = vpack.c.bf16 %v857, %v857
      %v1095 = vpack.c.bf16 %v860, %v860
      %v1096 = vpack.c.bf16 %v862, %v862
      %v1097 = vpack.c.bf16 %v865, %v865
      %v1098 = vpack.c.bf16 %v867, %v867
      %v1099 = vpack.c.bf16 %v870, %v870
      %v1100 = vpack.c.bf16 %v872, %v872
      %v1101 = vpack.c.bf16 %v875, %v875
      %v1102 = vpack.c.bf16 %v877, %v877
      %v1103 = vpack.c.bf16 %v880, %v880
      %v1104 = vpack.c.bf16 %v882, %v882
      %v1105 = vpack.c.bf16 %v885, %v885
      %v1106 = vpack.c.bf16 %v887, %v887
      %v1107 = vpack.c.bf16 %v890, %v890
      %v1108 = vpack.c.bf16 %v892, %v892
      %v1109 = vpack.c.bf16 %v895, %v895
      %v1110 = vpack.c.bf16 %v897, %v897
      %v1111 = vpack.c.bf16 %v900, %v900
      %v1112 = vpack.c.bf16 %v902, %v902
      %v1113 = vpack.c.bf16 %v905, %v905
      %v1114 = vpack.c.bf16 %v907, %v907
      %v1115 = vpack.c.bf16 %v910, %v910
      %v1116 = vpack.c.bf16 %v912, %v912
      %v1117 = vpack.c.bf16 %v915, %v915
      %v1118 = vpack.c.bf16 %v917, %v917
      %v1119 = vpack.c.bf16 %v920, %v920
      %v1120 = vpack.c.bf16 %v922, %v922
      %v1121 = vpack.c.bf16 %v946, %v946
      %v1122 = vpack.c.bf16 %v948, %v948
      %v1123 = vpack.c.bf16 %v951, %v951
      %v1124 = vpack.c.bf16 %v953, %v953
      %v1125 = vpack.c.bf16 %v956, %v956
      %v1126 = vpack.c.bf16 %v958, %v958
      %v1127 = vpack.c.bf16 %v961, %v961
      %v1128 = vpack.c.bf16 %v963, %v963
      %v1129 = vpack.c.bf16 %v966, %v966
      %v1130 = vpack.c.bf16 %v968, %v968
      %v1131 = vpack.c.bf16 %v971, %v971
      %v1132 = vpack.c.bf16 %v973, %v973
      %v1133 = vpack.c.bf16 %v976, %v976
      %v1134 = vpack.c.bf16 %v978, %v978
      %v1135 = vpack.c.bf16 %v981, %v981
      %v1136 = vpack.c.bf16 %v983, %v983
      %v1137 = vpack.c.bf16 %v986, %v986
      %v1138 = vpack.c.bf16 %v988, %v988
      %v1139 = vpack.c.bf16 %v991, %v991
      %v1140 = vpack.c.bf16 %v993, %v993
      %v1141 = vpack.c.bf16 %v996, %v996
      %v1142 = vpack.c.bf16 %v998, %v998
      %v1143 = vpack.c.bf16 %v1001, %v1001
      %v1144 = vpack.c.bf16 %v1003, %v1003
      %v1145 = vpack.c.bf16 %v1006, %v1006
      %v1146 = vpack.c.bf16 %v1008, %v1008
      %v1147 = vpack.c.bf16 %v1011, %v1011
      %v1148 = vpack.c.bf16 %v1013, %v1013
      %v1149 = vpack.c.bf16 %v1016, %v1016
      %v1150 = vpack.c.bf16 %v1018, %v1018
      %v1151 = vpack.c.bf16 %v1021, %v1021
      %v1152 = vpack.c.bf16 %v1023, %v1023
      %v1153 = vld [vmem:[%s9] sm:$0xf]
      %v1154 = vld [vmem:[%s9 + $0x4] sm:$0xf]
      %v1157 = vunpack.c.l.b16 %v1057
      %v1158 = vunpack.c.l.b16 %v1058
      %v1159 = vpack.c.b16 %v1158, %v1157
      %v1162 = vunpack.c.l.b16 %v1089
      %v1163 = vunpack.c.l.b16 %v1090
      %v1164 = vpack.c.b16 %v1163, %v1162
      %vm1165 = vcmask 31744
      %v1167 = vsel %vm1165, %v1159, 0
      %v1170 = vsel %vm1165, %v1164, 0
      %1172 = vmatpush.bf16.xpose.msra.mxu0 0
      %1173 = vmatpush.bf16.xpose.msra.mxu0 0
      %1174 = vmatpush.bf16.xpose.msra.mxu0 0
      %1175 = vmatpush.bf16.xpose.msra.mxu0 0
      %1176 = vmatpush.bf16.xpose.msra.mxu0 0
      %1177 = vmatpush.bf16.xpose.msra.mxu0 0
      %1178 = vmatpush.bf16.xpose.msra.mxu0 0
      %1179 = vmatpush.bf16.xpose.msra.mxu0 %v1170
      %1180 = vmatmul.bf16.gmra.mxu0 %v1167
      %v1181 = vpop.f32.mrf.mxu0
      %v1182 = vadd.f32 0.0, %v1181
      %v1183 = vpop.f32.mrf.mxu0
      %v1184 = vadd.f32 0.0, %v1183
      %1185 = vdwg.mxu0
      %v1188 = vunpack.c.l.b16 %v1059
      %v1189 = vunpack.c.l.b16 %v1060
      %v1190 = vpack.c.b16 %v1189, %v1188
      %v1193 = vunpack.c.l.b16 %v1091
      %v1194 = vunpack.c.l.b16 %v1092
      %v1195 = vpack.c.b16 %v1194, %v1193
      %v1197 = vsel %vm1165, %v1190, 0
      %v1200 = vsel %vm1165, %v1195, 0
      %1202 = vmatpush.bf16.xpose.msra.mxu0 0
      %1203 = vmatpush.bf16.xpose.msra.mxu0 0
      %1204 = vmatpush.bf16.xpose.msra.mxu0 0
      %1205 = vmatpush.bf16.xpose.msra.mxu0 0
      %1206 = vmatpush.bf16.xpose.msra.mxu0 0
      %1207 = vmatpush.bf16.xpose.msra.mxu0 0
      %1208 = vmatpush.bf16.xpose.msra.mxu0 0
      %1209 = vmatpush.bf16.xpose.msra.mxu0 %v1200
      %1210 = vmatmul.bf16.gmra.mxu0 %v1197
      %v1211 = vpop.f32.mrf.mxu0
      %v1212 = vadd.f32 0.0, %v1211
      %v1213 = vpop.f32.mrf.mxu0
      %v1214 = vadd.f32 0.0, %v1213
      %1215 = vdwg.mxu0
      %v1218 = vunpack.c.l.b16 %v1061
      %v1219 = vunpack.c.l.b16 %v1062
      %v1220 = vpack.c.b16 %v1219, %v1218
      %v1223 = vunpack.c.l.b16 %v1093
      %v1224 = vunpack.c.l.b16 %v1094
      %v1225 = vpack.c.b16 %v1224, %v1223
      %v1227 = vsel %vm1165, %v1220, 0
      %v1230 = vsel %vm1165, %v1225, 0
      %1232 = vmatpush.bf16.xpose.msra.mxu0 0
      %1233 = vmatpush.bf16.xpose.msra.mxu0 0
      %1234 = vmatpush.bf16.xpose.msra.mxu0 0
      %1235 = vmatpush.bf16.xpose.msra.mxu0 0
      %1236 = vmatpush.bf16.xpose.msra.mxu0 0
      %1237 = vmatpush.bf16.xpose.msra.mxu0 0
      %1238 = vmatpush.bf16.xpose.msra.mxu0 0
      %1239 = vmatpush.bf16.xpose.msra.mxu0 %v1230
      %1240 = vmatmul.bf16.gmra.mxu0 %v1227
      %v1241 = vpop.f32.mrf.mxu0
      %v1242 = vadd.f32 0.0, %v1241
      %v1243 = vpop.f32.mrf.mxu0
      %v1244 = vadd.f32 0.0, %v1243
      %1245 = vdwg.mxu0
      %v1248 = vunpack.c.l.b16 %v1063
      %v1249 = vunpack.c.l.b16 %v1064
      %v1250 = vpack.c.b16 %v1249, %v1248
      %v1253 = vunpack.c.l.b16 %v1095
      %v1254 = vunpack.c.l.b16 %v1096
      %v1255 = vpack.c.b16 %v1254, %v1253
      %v1257 = vsel %vm1165, %v1250, 0
      %v1260 = vsel %vm1165, %v1255, 0
      %1262 = vmatpush.bf16.xpose.msra.mxu0 0
      %1263 = vmatpush.bf16.xpose.msra.mxu0 0
      %1264 = vmatpush.bf16.xpose.msra.mxu0 0
      %1265 = vmatpush.bf16.xpose.msra.mxu0 0
      %1266 = vmatpush.bf16.xpose.msra.mxu0 0
      %1267 = vmatpush.bf16.xpose.msra.mxu0 0
      %1268 = vmatpush.bf16.xpose.msra.mxu0 0
      %1269 = vmatpush.bf16.xpose.msra.mxu0 %v1260
      %1270 = vmatmul.bf16.gmra.mxu0 %v1257
      %v1271 = vpop.f32.mrf.mxu0
      %v1272 = vadd.f32 0.0, %v1271
      %v1273 = vpop.f32.mrf.mxu0
      %v1274 = vadd.f32 0.0, %v1273
      %1275 = vdwg.mxu0
      %v1278 = vunpack.c.l.b16 %v1065
      %v1279 = vunpack.c.l.b16 %v1066
      %v1280 = vpack.c.b16 %v1279, %v1278
      %v1283 = vunpack.c.l.b16 %v1097
      %v1284 = vunpack.c.l.b16 %v1098
      %v1285 = vpack.c.b16 %v1284, %v1283
      %v1287 = vsel %vm1165, %v1280, 0
      %v1290 = vsel %vm1165, %v1285, 0
      %1292 = vmatpush.bf16.xpose.msra.mxu0 0
      %1293 = vmatpush.bf16.xpose.msra.mxu0 0
      %1294 = vmatpush.bf16.xpose.msra.mxu0 0
      %1295 = vmatpush.bf16.xpose.msra.mxu0 0
      %1296 = vmatpush.bf16.xpose.msra.mxu0 0
      %1297 = vmatpush.bf16.xpose.msra.mxu0 0
      %1298 = vmatpush.bf16.xpose.msra.mxu0 0
      %1299 = vmatpush.bf16.xpose.msra.mxu0 %v1290
      %1300 = vmatmul.bf16.gmra.mxu0 %v1287
      %v1301 = vpop.f32.mrf.mxu0
      %v1302 = vadd.f32 0.0, %v1301
      %v1303 = vpop.f32.mrf.mxu0
      %v1304 = vadd.f32 0.0, %v1303
      %1305 = vdwg.mxu0
      %v1308 = vunpack.c.l.b16 %v1067
      %v1309 = vunpack.c.l.b16 %v1068
      %v1310 = vpack.c.b16 %v1309, %v1308
      %v1313 = vunpack.c.l.b16 %v1099
      %v1314 = vunpack.c.l.b16 %v1100
      %v1315 = vpack.c.b16 %v1314, %v1313
      %v1317 = vsel %vm1165, %v1310, 0
      %v1320 = vsel %vm1165, %v1315, 0
      %1322 = vmatpush.bf16.xpose.msra.mxu0 0
      %1323 = vmatpush.bf16.xpose.msra.mxu0 0
      %1324 = vmatpush.bf16.xpose.msra.mxu0 0
      %1325 = vmatpush.bf16.xpose.msra.mxu0 0
      %1326 = vmatpush.bf16.xpose.msra.mxu0 0
      %1327 = vmatpush.bf16.xpose.msra.mxu0 0
      %1328 = vmatpush.bf16.xpose.msra.mxu0 0
      %1329 = vmatpush.bf16.xpose.msra.mxu0 %v1320
      %1330 = vmatmul.bf16.gmra.mxu0 %v1317
      %v1331 = vpop.f32.mrf.mxu0
      %v1332 = vadd.f32 0.0, %v1331
      %v1333 = vpop.f32.mrf.mxu0
      %v1334 = vadd.f32 0.0, %v1333
      %1335 = vdwg.mxu0
      %v1338 = vunpack.c.l.b16 %v1069
      %v1339 = vunpack.c.l.b16 %v1070
      %v1340 = vpack.c.b16 %v1339, %v1338
      %v1343 = vunpack.c.l.b16 %v1101
      %v1344 = vunpack.c.l.b16 %v1102
      %v1345 = vpack.c.b16 %v1344, %v1343
      %v1347 = vsel %vm1165, %v1340, 0
      %v1350 = vsel %vm1165, %v1345, 0
      %1352 = vmatpush.bf16.xpose.msra.mxu0 0
      %1353 = vmatpush.bf16.xpose.msra.mxu0 0
      %1354 = vmatpush.bf16.xpose.msra.mxu0 0
      %1355 = vmatpush.bf16.xpose.msra.mxu0 0
      %1356 = vmatpush.bf16.xpose.msra.mxu0 0
      %1357 = vmatpush.bf16.xpose.msra.mxu0 0
      %1358 = vmatpush.bf16.xpose.msra.mxu0 0
      %1359 = vmatpush.bf16.xpose.msra.mxu0 %v1350
      %1360 = vmatmul.bf16.gmra.mxu0 %v1347
      %v1361 = vpop.f32.mrf.mxu0
      %v1362 = vadd.f32 0.0, %v1361
      %v1363 = vpop.f32.mrf.mxu0
      %v1364 = vadd.f32 0.0, %v1363
      %1365 = vdwg.mxu0
      %v1368 = vunpack.c.l.b16 %v1071
      %v1369 = vunpack.c.l.b16 %v1072
      %v1370 = vpack.c.b16 %v1369, %v1368
      %v1373 = vunpack.c.l.b16 %v1103
      %v1374 = vunpack.c.l.b16 %v1104
      %v1375 = vpack.c.b16 %v1374, %v1373
      %v1377 = vsel %vm1165, %v1370, 0
      %v1380 = vsel %vm1165, %v1375, 0
      %1382 = vmatpush.bf16.xpose.msra.mxu0 0
      %1383 = vmatpush.bf16.xpose.msra.mxu0 0
      %1384 = vmatpush.bf16.xpose.msra.mxu0 0
      %1385 = vmatpush.bf16.xpose.msra.mxu0 0
      %1386 = vmatpush.bf16.xpose.msra.mxu0 0
      %1387 = vmatpush.bf16.xpose.msra.mxu0 0
      %1388 = vmatpush.bf16.xpose.msra.mxu0 0
      %1389 = vmatpush.bf16.xpose.msra.mxu0 %v1380
      %1390 = vmatmul.bf16.gmra.mxu0 %v1377
      %v1391 = vpop.f32.mrf.mxu0
      %v1392 = vadd.f32 0.0, %v1391
      %v1393 = vpop.f32.mrf.mxu0
      %v1394 = vadd.f32 0.0, %v1393
      %1395 = vdwg.mxu0
      %v1398 = vunpack.c.l.b16 %v1073
      %v1399 = vunpack.c.l.b16 %v1074
      %v1400 = vpack.c.b16 %v1399, %v1398
      %v1403 = vunpack.c.l.b16 %v1105
      %v1404 = vunpack.c.l.b16 %v1106
      %v1405 = vpack.c.b16 %v1404, %v1403
      %v1407 = vsel %vm1165, %v1400, 0
      %v1410 = vsel %vm1165, %v1405, 0
      %1412 = vmatpush.bf16.xpose.msra.mxu0 0
      %1413 = vmatpush.bf16.xpose.msra.mxu0 0
      %1414 = vmatpush.bf16.xpose.msra.mxu0 0
      %1415 = vmatpush.bf16.xpose.msra.mxu0 0
      %1416 = vmatpush.bf16.xpose.msra.mxu0 0
      %1417 = vmatpush.bf16.xpose.msra.mxu0 0
      %1418 = vmatpush.bf16.xpose.msra.mxu0 0
      %1419 = vmatpush.bf16.xpose.msra.mxu0 %v1410
      %1420 = vmatmul.bf16.gmra.mxu0 %v1407
      %v1421 = vpop.f32.mrf.mxu0
      %v1422 = vadd.f32 0.0, %v1421
      %v1423 = vpop.f32.mrf.mxu0
      %v1424 = vadd.f32 0.0, %v1423
      %1425 = vdwg.mxu0
      %v1428 = vunpack.c.l.b16 %v1075
      %v1429 = vunpack.c.l.b16 %v1076
      %v1430 = vpack.c.b16 %v1429, %v1428
      %v1433 = vunpack.c.l.b16 %v1107
      %v1434 = vunpack.c.l.b16 %v1108
      %v1435 = vpack.c.b16 %v1434, %v1433
      %v1437 = vsel %vm1165, %v1430, 0
      %v1440 = vsel %vm1165, %v1435, 0
      %1442 = vmatpush.bf16.xpose.msra.mxu0 0
      %1443 = vmatpush.bf16.xpose.msra.mxu0 0
      %1444 = vmatpush.bf16.xpose.msra.mxu0 0
      %1445 = vmatpush.bf16.xpose.msra.mxu0 0
      %1446 = vmatpush.bf16.xpose.msra.mxu0 0
      %1447 = vmatpush.bf16.xpose.msra.mxu0 0
      %1448 = vmatpush.bf16.xpose.msra.mxu0 0
      %1449 = vmatpush.bf16.xpose.msra.mxu0 %v1440
      %1450 = vmatmul.bf16.gmra.mxu0 %v1437
      %v1451 = vpop.f32.mrf.mxu0
      %v1452 = vadd.f32 0.0, %v1451
      %v1453 = vpop.f32.mrf.mxu0
      %v1454 = vadd.f32 0.0, %v1453
      %1455 = vdwg.mxu0
      %v1458 = vunpack.c.l.b16 %v1077
      %v1459 = vunpack.c.l.b16 %v1078
      %v1460 = vpack.c.b16 %v1459, %v1458
      %v1463 = vunpack.c.l.b16 %v1109
      %v1464 = vunpack.c.l.b16 %v1110
      %v1465 = vpack.c.b16 %v1464, %v1463
      %v1467 = vsel %vm1165, %v1460, 0
      %v1470 = vsel %vm1165, %v1465, 0
      %1472 = vmatpush.bf16.xpose.msra.mxu0 0
      %1473 = vmatpush.bf16.xpose.msra.mxu0 0
      %1474 = vmatpush.bf16.xpose.msra.mxu0 0
      %1475 = vmatpush.bf16.xpose.msra.mxu0 0
      %1476 = vmatpush.bf16.xpose.msra.mxu0 0
      %1477 = vmatpush.bf16.xpose.msra.mxu0 0
      %1478 = vmatpush.bf16.xpose.msra.mxu0 0
      %1479 = vmatpush.bf16.xpose.msra.mxu0 %v1470
      %1480 = vmatmul.bf16.gmra.mxu0 %v1467
      %v1481 = vpop.f32.mrf.mxu0
      %v1482 = vadd.f32 0.0, %v1481
      %v1483 = vpop.f32.mrf.mxu0
      %v1484 = vadd.f32 0.0, %v1483
      %1485 = vdwg.mxu0
      %v1488 = vunpack.c.l.b16 %v1079
      %v1489 = vunpack.c.l.b16 %v1080
      %v1490 = vpack.c.b16 %v1489, %v1488
      %v1493 = vunpack.c.l.b16 %v1111
      %v1494 = vunpack.c.l.b16 %v1112
      %v1495 = vpack.c.b16 %v1494, %v1493
      %v1497 = vsel %vm1165, %v1490, 0
      %v1500 = vsel %vm1165, %v1495, 0
      %1502 = vmatpush.bf16.xpose.msra.mxu0 0
      %1503 = vmatpush.bf16.xpose.msra.mxu0 0
      %1504 = vmatpush.bf16.xpose.msra.mxu0 0
      %1505 = vmatpush.bf16.xpose.msra.mxu0 0
      %1506 = vmatpush.bf16.xpose.msra.mxu0 0
      %1507 = vmatpush.bf16.xpose.msra.mxu0 0
      %1508 = vmatpush.bf16.xpose.msra.mxu0 0
      %1509 = vmatpush.bf16.xpose.msra.mxu0 %v1500
      %1510 = vmatmul.bf16.gmra.mxu0 %v1497
      %v1511 = vpop.f32.mrf.mxu0
      %v1512 = vadd.f32 0.0, %v1511
      %v1513 = vpop.f32.mrf.mxu0
      %v1514 = vadd.f32 0.0, %v1513
      %1515 = vdwg.mxu0
      %v1518 = vunpack.c.l.b16 %v1081
      %v1519 = vunpack.c.l.b16 %v1082
      %v1520 = vpack.c.b16 %v1519, %v1518
      %v1523 = vunpack.c.l.b16 %v1113
      %v1524 = vunpack.c.l.b16 %v1114
      %v1525 = vpack.c.b16 %v1524, %v1523
      %v1527 = vsel %vm1165, %v1520, 0
      %v1530 = vsel %vm1165, %v1525, 0
      %1532 = vmatpush.bf16.xpose.msra.mxu0 0
      %1533 = vmatpush.bf16.xpose.msra.mxu0 0
      %1534 = vmatpush.bf16.xpose.msra.mxu0 0
      %1535 = vmatpush.bf16.xpose.msra.mxu0 0
      %1536 = vmatpush.bf16.xpose.msra.mxu0 0
      %1537 = vmatpush.bf16.xpose.msra.mxu0 0
      %1538 = vmatpush.bf16.xpose.msra.mxu0 0
      %1539 = vmatpush.bf16.xpose.msra.mxu0 %v1530
      %1540 = vmatmul.bf16.gmra.mxu0 %v1527
      %v1541 = vpop.f32.mrf.mxu0
      %v1542 = vadd.f32 0.0, %v1541
      %v1543 = vpop.f32.mrf.mxu0
      %v1544 = vadd.f32 0.0, %v1543
      %1545 = vdwg.mxu0
      %v1548 = vunpack.c.l.b16 %v1083
      %v1549 = vunpack.c.l.b16 %v1084
      %v1550 = vpack.c.b16 %v1549, %v1548
      %v1553 = vunpack.c.l.b16 %v1115
      %v1554 = vunpack.c.l.b16 %v1116
      %v1555 = vpack.c.b16 %v1554, %v1553
      %v1557 = vsel %vm1165, %v1550, 0
      %v1560 = vsel %vm1165, %v1555, 0
      %1562 = vmatpush.bf16.xpose.msra.mxu0 0
      %1563 = vmatpush.bf16.xpose.msra.mxu0 0
      %1564 = vmatpush.bf16.xpose.msra.mxu0 0
      %1565 = vmatpush.bf16.xpose.msra.mxu0 0
      %1566 = vmatpush.bf16.xpose.msra.mxu0 0
      %1567 = vmatpush.bf16.xpose.msra.mxu0 0
      %1568 = vmatpush.bf16.xpose.msra.mxu0 0
      %1569 = vmatpush.bf16.xpose.msra.mxu0 %v1560
      %1570 = vmatmul.bf16.gmra.mxu0 %v1557
      %v1571 = vpop.f32.mrf.mxu0
      %v1572 = vadd.f32 0.0, %v1571
      %v1573 = vpop.f32.mrf.mxu0
      %v1574 = vadd.f32 0.0, %v1573
      %1575 = vdwg.mxu0
      %v1578 = vunpack.c.l.b16 %v1085
      %v1579 = vunpack.c.l.b16 %v1086
      %v1580 = vpack.c.b16 %v1579, %v1578
      %v1583 = vunpack.c.l.b16 %v1117
      %v1584 = vunpack.c.l.b16 %v1118
      %v1585 = vpack.c.b16 %v1584, %v1583
      %v1587 = vsel %vm1165, %v1580, 0
      %v1590 = vsel %vm1165, %v1585, 0
      %1592 = vmatpush.bf16.xpose.msra.mxu0 0
      %1593 = vmatpush.bf16.xpose.msra.mxu0 0
      %1594 = vmatpush.bf16.xpose.msra.mxu0 0
      %1595 = vmatpush.bf16.xpose.msra.mxu0 0
      %1596 = vmatpush.bf16.xpose.msra.mxu0 0
      %1597 = vmatpush.bf16.xpose.msra.mxu0 0
      %1598 = vmatpush.bf16.xpose.msra.mxu0 0
      %1599 = vmatpush.bf16.xpose.msra.mxu0 %v1590
      %1600 = vmatmul.bf16.gmra.mxu0 %v1587
      %v1601 = vpop.f32.mrf.mxu0
      %v1602 = vadd.f32 0.0, %v1601
      %v1603 = vpop.f32.mrf.mxu0
      %v1604 = vadd.f32 0.0, %v1603
      %1605 = vdwg.mxu0
      %v1608 = vunpack.c.l.b16 %v1087
      %v1609 = vunpack.c.l.b16 %v1088
      %v1610 = vpack.c.b16 %v1609, %v1608
      %v1613 = vunpack.c.l.b16 %v1119
      %v1614 = vunpack.c.l.b16 %v1120
      %v1615 = vpack.c.b16 %v1614, %v1613
      %v1617 = vsel %vm1165, %v1610, 0
      %v1620 = vsel %vm1165, %v1615, 0
      %1622 = vmatpush.bf16.xpose.msra.mxu0 0
      %1623 = vmatpush.bf16.xpose.msra.mxu0 0
      %1624 = vmatpush.bf16.xpose.msra.mxu0 0
      %1625 = vmatpush.bf16.xpose.msra.mxu0 0
      %1626 = vmatpush.bf16.xpose.msra.mxu0 0
      %1627 = vmatpush.bf16.xpose.msra.mxu0 0
      %1628 = vmatpush.bf16.xpose.msra.mxu0 0
      %1629 = vmatpush.bf16.xpose.msra.mxu0 %v1620
      %1630 = vmatmul.bf16.gmra.mxu0 %v1617
      %v1631 = vpop.f32.mrf.mxu0
      %v1632 = vadd.f32 0.0, %v1631
      %v1633 = vpop.f32.mrf.mxu0
      %v1634 = vadd.f32 0.0, %v1633
      %1635 = vdwg.mxu0
      %v1636 = vsel %vm685, %v1182, -inf
      %1637 = vmax.xlane.f32.xlu0 %v1636
      %v1638 = vpop.xlane.xlu0 %1637
      %v1639 = vsel %vm685, %v1184, -inf
      %1640 = vmax.xlane.f32.xlu0 %v1639
      %v1641 = vpop.xlane.xlu0 %1640
      %v1642 = vsel %vm685, %v1212, -inf
      %1643 = vmax.xlane.f32.xlu0 %v1642
      %v1644 = vpop.xlane.xlu0 %1643
      %v1645 = vsel %vm685, %v1214, -inf
      %1646 = vmax.xlane.f32.xlu0 %v1645
      %v1647 = vpop.xlane.xlu0 %1646
      %v1648 = vsel %vm685, %v1242, -inf
      %1649 = vmax.xlane.f32.xlu0 %v1648
      %v1650 = vpop.xlane.xlu0 %1649
      %v1651 = vsel %vm685, %v1244, -inf
      %1652 = vmax.xlane.f32.xlu0 %v1651
      %v1653 = vpop.xlane.xlu0 %1652
      %v1654 = vsel %vm685, %v1272, -inf
      %1655 = vmax.xlane.f32.xlu0 %v1654
      %v1656 = vpop.xlane.xlu0 %1655
      %v1657 = vsel %vm685, %v1274, -inf
      %1658 = vmax.xlane.f32.xlu0 %v1657
      %v1659 = vpop.xlane.xlu0 %1658
      %v1660 = vsel %vm685, %v1302, -inf
      %1661 = vmax.xlane.f32.xlu0 %v1660
      %v1662 = vpop.xlane.xlu0 %1661
      %v1663 = vsel %vm685, %v1304, -inf
      %1664 = vmax.xlane.f32.xlu0 %v1663
      %v1665 = vpop.xlane.xlu0 %1664
      %v1666 = vsel %vm685, %v1332, -inf
      %1667 = vmax.xlane.f32.xlu0 %v1666
      %v1668 = vpop.xlane.xlu0 %1667
      %v1669 = vsel %vm685, %v1334, -inf
      %1670 = vmax.xlane.f32.xlu0 %v1669
      %v1671 = vpop.xlane.xlu0 %1670
      %v1672 = vsel %vm685, %v1362, -inf
      %1673 = vmax.xlane.f32.xlu0 %v1672
      %v1674 = vpop.xlane.xlu0 %1673
      %v1675 = vsel %vm685, %v1364, -inf
      %1676 = vmax.xlane.f32.xlu0 %v1675
      %v1677 = vpop.xlane.xlu0 %1676
      %v1678 = vsel %vm685, %v1392, -inf
      %1679 = vmax.xlane.f32.xlu0 %v1678
      %v1680 = vpop.xlane.xlu0 %1679
      %v1681 = vsel %vm685, %v1394, -inf
      %1682 = vmax.xlane.f32.xlu0 %v1681
      %v1683 = vpop.xlane.xlu0 %1682
      %v1684 = vsel %vm685, %v1422, -inf
      %1685 = vmax.xlane.f32.xlu0 %v1684
      %v1686 = vpop.xlane.xlu0 %1685
      %v1687 = vsel %vm685, %v1424, -inf
      %1688 = vmax.xlane.f32.xlu0 %v1687
      %v1689 = vpop.xlane.xlu0 %1688
      %v1690 = vsel %vm685, %v1452, -inf
      %1691 = vmax.xlane.f32.xlu0 %v1690
      %v1692 = vpop.xlane.xlu0 %1691
      %v1693 = vsel %vm685, %v1454, -inf
      %1694 = vmax.xlane.f32.xlu0 %v1693
      %v1695 = vpop.xlane.xlu0 %1694
      %v1696 = vsel %vm685, %v1482, -inf
      %1697 = vmax.xlane.f32.xlu0 %v1696
      %v1698 = vpop.xlane.xlu0 %1697
      %v1699 = vsel %vm685, %v1484, -inf
      %1700 = vmax.xlane.f32.xlu0 %v1699
      %v1701 = vpop.xlane.xlu0 %1700
      %v1702 = vsel %vm685, %v1512, -inf
      %1703 = vmax.xlane.f32.xlu0 %v1702
      %v1704 = vpop.xlane.xlu0 %1703
      %v1705 = vsel %vm685, %v1514, -inf
      %1706 = vmax.xlane.f32.xlu0 %v1705
      %v1707 = vpop.xlane.xlu0 %1706
      %v1708 = vsel %vm685, %v1542, -inf
      %1709 = vmax.xlane.f32.xlu0 %v1708
      %v1710 = vpop.xlane.xlu0 %1709
      %v1711 = vsel %vm685, %v1544, -inf
      %1712 = vmax.xlane.f32.xlu0 %v1711
      %v1713 = vpop.xlane.xlu0 %1712
      %v1714 = vsel %vm685, %v1572, -inf
      %1715 = vmax.xlane.f32.xlu0 %v1714
      %v1716 = vpop.xlane.xlu0 %1715
      %v1717 = vsel %vm685, %v1574, -inf
      %1718 = vmax.xlane.f32.xlu0 %v1717
      %v1719 = vpop.xlane.xlu0 %1718
      %v1720 = vsel %vm685, %v1602, -inf
      %1721 = vmax.xlane.f32.xlu0 %v1720
      %v1722 = vpop.xlane.xlu0 %1721
      %v1723 = vsel %vm685, %v1604, -inf
      %1724 = vmax.xlane.f32.xlu0 %v1723
      %v1725 = vpop.xlane.xlu0 %1724
      %v1726 = vsel %vm685, %v1632, -inf
      %1727 = vmax.xlane.f32.xlu0 %v1726
      %v1728 = vpop.xlane.xlu0 %1727
      %v1729 = vsel %vm685, %v1634, -inf
      %1730 = vmax.xlane.f32.xlu0 %v1729
      %v1731 = vpop.xlane.xlu0 %1730
      %v1732 = vsub.f32 %v1182, %v1638
      %v1733 = vsub.f32 %v1184, %v1641
      %v1734 = vsub.f32 %v1212, %v1644
      %v1735 = vsub.f32 %v1214, %v1647
      %v1736 = vsub.f32 %v1242, %v1650
      %v1737 = vsub.f32 %v1244, %v1653
      %v1738 = vsub.f32 %v1272, %v1656
      %v1739 = vsub.f32 %v1274, %v1659
      %v1740 = vsub.f32 %v1302, %v1662
      %v1741 = vsub.f32 %v1304, %v1665
      %v1742 = vsub.f32 %v1332, %v1668
      %v1743 = vsub.f32 %v1334, %v1671
      %v1744 = vsub.f32 %v1362, %v1674
      %v1745 = vsub.f32 %v1364, %v1677
      %v1746 = vsub.f32 %v1392, %v1680
      %v1747 = vsub.f32 %v1394, %v1683
      %v1748 = vsub.f32 %v1422, %v1686
      %v1749 = vsub.f32 %v1424, %v1689
      %v1750 = vsub.f32 %v1452, %v1692
      %v1751 = vsub.f32 %v1454, %v1695
      %v1752 = vsub.f32 %v1482, %v1698
      %v1753 = vsub.f32 %v1484, %v1701
      %v1754 = vsub.f32 %v1512, %v1704
      %v1755 = vsub.f32 %v1514, %v1707
      %v1756 = vsub.f32 %v1542, %v1710
      %v1757 = vsub.f32 %v1544, %v1713
      %v1758 = vsub.f32 %v1572, %v1716
      %v1759 = vsub.f32 %v1574, %v1719
      %v1760 = vsub.f32 %v1602, %v1722
      %v1761 = vsub.f32 %v1604, %v1725
      %v1762 = vsub.f32 %v1632, %v1728
      %v1763 = vsub.f32 %v1634, %v1731
      %v1764 = vmul.f32 %v1732, 1.442695
      %v1765 = vpow.pop %v1764
      %v1766 = vmul.f32 %v1733, 1.442695
      %v1767 = vpow.pop %v1766
      %v1768 = vmul.f32 %v1734, 1.442695
      %v1769 = vpow.pop %v1768
      %v1770 = vmul.f32 %v1735, 1.442695
      %v1771 = vpow.pop %v1770
      %v1772 = vmul.f32 %v1736, 1.442695
      %v1773 = vpow.pop %v1772
      %v1774 = vmul.f32 %v1737, 1.442695
      %v1775 = vpow.pop %v1774
      %v1776 = vmul.f32 %v1738, 1.442695
      %v1777 = vpow.pop %v1776
      %v1778 = vmul.f32 %v1739, 1.442695
      %v1779 = vpow.pop %v1778
      %v1780 = vmul.f32 %v1740, 1.442695
      %v1781 = vpow.pop %v1780
      %v1782 = vmul.f32 %v1741, 1.442695
      %v1783 = vpow.pop %v1782
      %v1784 = vmul.f32 %v1742, 1.442695
      %v1785 = vpow.pop %v1784
      %v1786 = vmul.f32 %v1743, 1.442695
      %v1787 = vpow.pop %v1786
      %v1788 = vmul.f32 %v1744, 1.442695
      %v1789 = vpow.pop %v1788
      %v1790 = vmul.f32 %v1745, 1.442695
      %v1791 = vpow.pop %v1790
      %v1792 = vmul.f32 %v1746, 1.442695
      %v1793 = vpow.pop %v1792
      %v1794 = vmul.f32 %v1747, 1.442695
      %v1795 = vpow.pop %v1794
      %v1796 = vmul.f32 %v1748, 1.442695
      %v1797 = vpow.pop %v1796
      %v1798 = vmul.f32 %v1749, 1.442695
      %v1799 = vpow.pop %v1798
      %v1800 = vmul.f32 %v1750, 1.442695
      %v1801 = vpow.pop %v1800
      %v1802 = vmul.f32 %v1751, 1.442695
      %v1803 = vpow.pop %v1802
      %v1804 = vmul.f32 %v1752, 1.442695
      %v1805 = vpow.pop %v1804
      %v1806 = vmul.f32 %v1753, 1.442695
      %v1807 = vpow.pop %v1806
      %v1808 = vmul.f32 %v1754, 1.442695
      %v1809 = vpow.pop %v1808
      %v1810 = vmul.f32 %v1755, 1.442695
      %v1811 = vpow.pop %v1810
      %v1812 = vmul.f32 %v1756, 1.442695
      %v1813 = vpow.pop %v1812
      %v1814 = vmul.f32 %v1757, 1.442695
      %v1815 = vpow.pop %v1814
      %v1816 = vmul.f32 %v1758, 1.442695
      %v1817 = vpow.pop %v1816
      %v1818 = vmul.f32 %v1759, 1.442695
      %v1819 = vpow.pop %v1818
      %v1820 = vmul.f32 %v1760, 1.442695
      %v1821 = vpow.pop %v1820
      %v1822 = vmul.f32 %v1761, 1.442695
      %v1823 = vpow.pop %v1822
      %v1824 = vmul.f32 %v1762, 1.442695
      %v1825 = vpow.pop %v1824
      %v1826 = vmul.f32 %v1763, 1.442695
      %v1827 = vpow.pop %v1826
      %v1828 = vsel %vm685, %v1765, 0.0
      %1829 = vadd.xlane.f32.xlu0 %v1828
      %v1830 = vpop.xlane.xlu0 %1829
      %v1831 = vsel %vm685, %v1767, 0.0
      %1832 = vadd.xlane.f32.xlu0 %v1831
      %v1833 = vpop.xlane.xlu0 %1832
      %v1834 = vsel %vm685, %v1769, 0.0
      %1835 = vadd.xlane.f32.xlu0 %v1834
      %v1836 = vpop.xlane.xlu0 %1835
      %v1837 = vsel %vm685, %v1771, 0.0
      %1838 = vadd.xlane.f32.xlu0 %v1837
      %v1839 = vpop.xlane.xlu0 %1838
      %v1840 = vsel %vm685, %v1773, 0.0
      %1841 = vadd.xlane.f32.xlu0 %v1840
      %v1842 = vpop.xlane.xlu0 %1841
      %v1843 = vsel %vm685, %v1775, 0.0
      %1844 = vadd.xlane.f32.xlu0 %v1843
      %v1845 = vpop.xlane.xlu0 %1844
      %v1846 = vsel %vm685, %v1777, 0.0
      %1847 = vadd.xlane.f32.xlu0 %v1846
      %v1848 = vpop.xlane.xlu0 %1847
      %v1849 = vsel %vm685, %v1779, 0.0
      %1850 = vadd.xlane.f32.xlu0 %v1849
      %v1851 = vpop.xlane.xlu0 %1850
      %v1852 = vsel %vm685, %v1781, 0.0
      %1853 = vadd.xlane.f32.xlu0 %v1852
      %v1854 = vpop.xlane.xlu0 %1853
      %v1855 = vsel %vm685, %v1783, 0.0
      %1856 = vadd.xlane.f32.xlu0 %v1855
      %v1857 = vpop.xlane.xlu0 %1856
      %v1858 = vsel %vm685, %v1785, 0.0
      %1859 = vadd.xlane.f32.xlu0 %v1858
      %v1860 = vpop.xlane.xlu0 %1859
      %v1861 = vsel %vm685, %v1787, 0.0
      %1862 = vadd.xlane.f32.xlu0 %v1861
      %v1863 = vpop.xlane.xlu0 %1862
      %v1864 = vsel %vm685, %v1789, 0.0
      %1865 = vadd.xlane.f32.xlu0 %v1864
      %v1866 = vpop.xlane.xlu0 %1865
      %v1867 = vsel %vm685, %v1791, 0.0
      %1868 = vadd.xlane.f32.xlu0 %v1867
      %v1869 = vpop.xlane.xlu0 %1868
      %v1870 = vsel %vm685, %v1793, 0.0
      %1871 = vadd.xlane.f32.xlu0 %v1870
      %v1872 = vpop.xlane.xlu0 %1871
      %v1873 = vsel %vm685, %v1795, 0.0
      %1874 = vadd.xlane.f32.xlu0 %v1873
      %v1875 = vpop.xlane.xlu0 %1874
      %v1876 = vsel %vm685, %v1797, 0.0
      %1877 = vadd.xlane.f32.xlu0 %v1876
      %v1878 = vpop.xlane.xlu0 %1877
      %v1879 = vsel %vm685, %v1799, 0.0
      %1880 = vadd.xlane.f32.xlu0 %v1879
      %v1881 = vpop.xlane.xlu0 %1880
      %v1882 = vsel %vm685, %v1801, 0.0
      %1883 = vadd.xlane.f32.xlu0 %v1882
      %v1884 = vpop.xlane.xlu0 %1883
      %v1885 = vsel %vm685, %v1803, 0.0
      %1886 = vadd.xlane.f32.xlu0 %v1885
      %v1887 = vpop.xlane.xlu0 %1886
      %v1888 = vsel %vm685, %v1805, 0.0
      %1889 = vadd.xlane.f32.xlu0 %v1888
      %v1890 = vpop.xlane.xlu0 %1889
      %v1891 = vsel %vm685, %v1807, 0.0
      %1892 = vadd.xlane.f32.xlu0 %v1891
      %v1893 = vpop.xlane.xlu0 %1892
      %v1894 = vsel %vm685, %v1809, 0.0
      %1895 = vadd.xlane.f32.xlu0 %v1894
      %v1896 = vpop.xlane.xlu0 %1895
      %v1897 = vsel %vm685, %v1811, 0.0
      %1898 = vadd.xlane.f32.xlu0 %v1897
      %v1899 = vpop.xlane.xlu0 %1898
      %v1900 = vsel %vm685, %v1813, 0.0
      %1901 = vadd.xlane.f32.xlu0 %v1900
      %v1902 = vpop.xlane.xlu0 %1901
      %v1903 = vsel %vm685, %v1815, 0.0
      %1904 = vadd.xlane.f32.xlu0 %v1903
      %v1905 = vpop.xlane.xlu0 %1904
      %v1906 = vsel %vm685, %v1817, 0.0
      %1907 = vadd.xlane.f32.xlu0 %v1906
      %v1908 = vpop.xlane.xlu0 %1907
      %v1909 = vsel %vm685, %v1819, 0.0
      %1910 = vadd.xlane.f32.xlu0 %v1909
      %v1911 = vpop.xlane.xlu0 %1910
      %v1912 = vsel %vm685, %v1821, 0.0
      %1913 = vadd.xlane.f32.xlu0 %v1912
      %v1914 = vpop.xlane.xlu0 %1913
      %v1915 = vsel %vm685, %v1823, 0.0
      %1916 = vadd.xlane.f32.xlu0 %v1915
      %v1917 = vpop.xlane.xlu0 %1916
      %v1918 = vsel %vm685, %v1825, 0.0
      %1919 = vadd.xlane.f32.xlu0 %v1918
      %v1920 = vpop.xlane.xlu0 %1919
      %v1921 = vsel %vm685, %v1827, 0.0
      %1922 = vadd.xlane.f32.xlu0 %v1921
      %v1923 = vpop.xlane.xlu0 %1922
      %v1924 = vrcp.pop %v1830
      %v1925 = vrcp.pop %v1833
      %v1926 = vrcp.pop %v1836
      %v1927 = vrcp.pop %v1839
      %v1928 = vrcp.pop %v1842
      %v1929 = vrcp.pop %v1845
      %v1930 = vrcp.pop %v1848
      %v1931 = vrcp.pop %v1851
      %v1932 = vrcp.pop %v1854
      %v1933 = vrcp.pop %v1857
      %v1934 = vrcp.pop %v1860
      %v1935 = vrcp.pop %v1863
      %v1936 = vrcp.pop %v1866
      %v1937 = vrcp.pop %v1869
      %v1938 = vrcp.pop %v1872
      %v1939 = vrcp.pop %v1875
      %v1940 = vrcp.pop %v1878
      %v1941 = vrcp.pop %v1881
      %v1942 = vrcp.pop %v1884
      %v1943 = vrcp.pop %v1887
      %v1944 = vrcp.pop %v1890
      %v1945 = vrcp.pop %v1893
      %v1946 = vrcp.pop %v1896
      %v1947 = vrcp.pop %v1899
      %v1948 = vrcp.pop %v1902
      %v1949 = vrcp.pop %v1905
      %v1950 = vrcp.pop %v1908
      %v1951 = vrcp.pop %v1911
      %v1952 = vrcp.pop %v1914
      %v1953 = vrcp.pop %v1917
      %v1954 = vrcp.pop %v1920
      %v1955 = vrcp.pop %v1923
      %v1956 = vmul.f32 %v1765, %v1924
      %v1957 = vmul.f32 %v1767, %v1925
      %v1958 = vmul.f32 %v1769, %v1926
      %v1959 = vmul.f32 %v1771, %v1927
      %v1960 = vmul.f32 %v1773, %v1928
      %v1961 = vmul.f32 %v1775, %v1929
      %v1962 = vmul.f32 %v1777, %v1930
      %v1963 = vmul.f32 %v1779, %v1931
      %v1964 = vmul.f32 %v1781, %v1932
      %v1965 = vmul.f32 %v1783, %v1933
      %v1966 = vmul.f32 %v1785, %v1934
      %v1967 = vmul.f32 %v1787, %v1935
      %v1968 = vmul.f32 %v1789, %v1936
      %v1969 = vmul.f32 %v1791, %v1937
      %v1970 = vmul.f32 %v1793, %v1938
      %v1971 = vmul.f32 %v1795, %v1939
      %v1972 = vmul.f32 %v1797, %v1940
      %v1973 = vmul.f32 %v1799, %v1941
      %v1974 = vmul.f32 %v1801, %v1942
      %v1975 = vmul.f32 %v1803, %v1943
      %v1976 = vmul.f32 %v1805, %v1944
      %v1977 = vmul.f32 %v1807, %v1945
      %v1978 = vmul.f32 %v1809, %v1946
      %v1979 = vmul.f32 %v1811, %v1947
      %v1980 = vmul.f32 %v1813, %v1948
      %v1981 = vmul.f32 %v1815, %v1949
      %v1982 = vmul.f32 %v1817, %v1950
      %v1983 = vmul.f32 %v1819, %v1951
      %v1984 = vmul.f32 %v1821, %v1952
      %v1985 = vmul.f32 %v1823, %v1953
      %v1986 = vmul.f32 %v1825, %v1954
      %v1987 = vmul.f32 %v1827, %v1955
      %v1988 = vpack.c.bf16 %v1956, %v1956
      %v1989 = vpack.c.bf16 %v1957, %v1957
      %v1990 = vpack.c.bf16 %v1958, %v1958
      %v1991 = vpack.c.bf16 %v1959, %v1959
      %v1992 = vpack.c.bf16 %v1960, %v1960
      %v1993 = vpack.c.bf16 %v1961, %v1961
      %v1994 = vpack.c.bf16 %v1962, %v1962
      %v1995 = vpack.c.bf16 %v1963, %v1963
      %v1996 = vpack.c.bf16 %v1964, %v1964
      %v1997 = vpack.c.bf16 %v1965, %v1965
      %v1998 = vpack.c.bf16 %v1966, %v1966
      %v1999 = vpack.c.bf16 %v1967, %v1967
      %v2000 = vpack.c.bf16 %v1968, %v1968
      %v2001 = vpack.c.bf16 %v1969, %v1969
      %v2002 = vpack.c.bf16 %v1970, %v1970
      %v2003 = vpack.c.bf16 %v1971, %v1971
      %v2004 = vpack.c.bf16 %v1972, %v1972
      %v2005 = vpack.c.bf16 %v1973, %v1973
      %v2006 = vpack.c.bf16 %v1974, %v1974
      %v2007 = vpack.c.bf16 %v1975, %v1975
      %v2008 = vpack.c.bf16 %v1976, %v1976
      %v2009 = vpack.c.bf16 %v1977, %v1977
      %v2010 = vpack.c.bf16 %v1978, %v1978
      %v2011 = vpack.c.bf16 %v1979, %v1979
      %v2012 = vpack.c.bf16 %v1980, %v1980
      %v2013 = vpack.c.bf16 %v1981, %v1981
      %v2014 = vpack.c.bf16 %v1982, %v1982
      %v2015 = vpack.c.bf16 %v1983, %v1983
      %v2016 = vpack.c.bf16 %v1984, %v1984
      %v2017 = vpack.c.bf16 %v1985, %v1985
      %v2018 = vpack.c.bf16 %v1986, %v1986
      %v2019 = vpack.c.bf16 %v1987, %v1987
      %v2022 = vunpack.c.l.b16 %v1988
      %v2023 = vunpack.c.l.b16 %v1989
      %v2024 = vpack.c.b16 %v2023, %v2022
      %v2027 = vunpack.c.l.b16 %v1121
      %v2028 = vunpack.c.l.b16 %v1122
      %v2029 = vpack.c.b16 %v2028, %v2027
      %v2032 = vsel %vm685, %v2024, 0
      %2034 = vmatpush.bf16.msra.mxu0 0
      %2035 = vmatpush.bf16.msra.mxu0 0
      %2036 = vmatpush.bf16.msra.mxu0 0
      %2037 = vmatpush.bf16.msra.mxu0 0
      %2038 = vmatpush.bf16.msra.mxu0 0
      %2039 = vmatpush.bf16.msra.mxu0 0
      %2040 = vmatpush.bf16.msra.mxu0 0
      %2041 = vmatpush.bf16.msra.mxu0 %v2029
      %2042 = vmatmul.bf16.gmra.mxu0 %v2032
      %v2043 = vpop.f32.mrf.mxu0
      %v2044 = vadd.f32 0.0, %v2043
      %v2045 = vpop.f32.mrf.mxu0
      %v2046 = vadd.f32 0.0, %v2045
      %2047 = vdwg.mxu0
      %v2050 = vunpack.c.l.b16 %v1990
      %v2051 = vunpack.c.l.b16 %v1991
      %v2052 = vpack.c.b16 %v2051, %v2050
      %v2055 = vunpack.c.l.b16 %v1123
      %v2056 = vunpack.c.l.b16 %v1124
      %v2057 = vpack.c.b16 %v2056, %v2055
      %v2060 = vsel %vm685, %v2052, 0
      %2062 = vmatpush.bf16.msra.mxu0 0
      %2063 = vmatpush.bf16.msra.mxu0 0
      %2064 = vmatpush.bf16.msra.mxu0 0
      %2065 = vmatpush.bf16.msra.mxu0 0
      %2066 = vmatpush.bf16.msra.mxu0 0
      %2067 = vmatpush.bf16.msra.mxu0 0
      %2068 = vmatpush.bf16.msra.mxu0 0
      %2069 = vmatpush.bf16.msra.mxu0 %v2057
      %2070 = vmatmul.bf16.gmra.mxu0 %v2060
      %v2071 = vpop.f32.mrf.mxu0
      %v2072 = vadd.f32 0.0, %v2071
      %v2073 = vpop.f32.mrf.mxu0
      %v2074 = vadd.f32 0.0, %v2073
      %2075 = vdwg.mxu0
      %v2078 = vunpack.c.l.b16 %v1992
      %v2079 = vunpack.c.l.b16 %v1993
      %v2080 = vpack.c.b16 %v2079, %v2078
      %v2083 = vunpack.c.l.b16 %v1125
      %v2084 = vunpack.c.l.b16 %v1126
      %v2085 = vpack.c.b16 %v2084, %v2083
      %v2088 = vsel %vm685, %v2080, 0
      %2090 = vmatpush.bf16.msra.mxu0 0
      %2091 = vmatpush.bf16.msra.mxu0 0
      %2092 = vmatpush.bf16.msra.mxu0 0
      %2093 = vmatpush.bf16.msra.mxu0 0
      %2094 = vmatpush.bf16.msra.mxu0 0
      %2095 = vmatpush.bf16.msra.mxu0 0
      %2096 = vmatpush.bf16.msra.mxu0 0
      %2097 = vmatpush.bf16.msra.mxu0 %v2085
      %2098 = vmatmul.bf16.gmra.mxu0 %v2088
      %v2099 = vpop.f32.mrf.mxu0
      %v2100 = vadd.f32 0.0, %v2099
      %v2101 = vpop.f32.mrf.mxu0
      %v2102 = vadd.f32 0.0, %v2101
      %2103 = vdwg.mxu0
      %v2106 = vunpack.c.l.b16 %v1994
      %v2107 = vunpack.c.l.b16 %v1995
      %v2108 = vpack.c.b16 %v2107, %v2106
      %v2111 = vunpack.c.l.b16 %v1127
      %v2112 = vunpack.c.l.b16 %v1128
      %v2113 = vpack.c.b16 %v2112, %v2111
      %v2116 = vsel %vm685, %v2108, 0
      %2118 = vmatpush.bf16.msra.mxu0 0
      %2119 = vmatpush.bf16.msra.mxu0 0
      %2120 = vmatpush.bf16.msra.mxu0 0
      %2121 = vmatpush.bf16.msra.mxu0 0
      %2122 = vmatpush.bf16.msra.mxu0 0
      %2123 = vmatpush.bf16.msra.mxu0 0
      %2124 = vmatpush.bf16.msra.mxu0 0
      %2125 = vmatpush.bf16.msra.mxu0 %v2113
      %2126 = vmatmul.bf16.gmra.mxu0 %v2116
      %v2127 = vpop.f32.mrf.mxu0
      %v2128 = vadd.f32 0.0, %v2127
      %v2129 = vpop.f32.mrf.mxu0
      %v2130 = vadd.f32 0.0, %v2129
      %2131 = vdwg.mxu0
      %v2134 = vunpack.c.l.b16 %v1996
      %v2135 = vunpack.c.l.b16 %v1997
      %v2136 = vpack.c.b16 %v2135, %v2134
      %v2139 = vunpack.c.l.b16 %v1129
      %v2140 = vunpack.c.l.b16 %v1130
      %v2141 = vpack.c.b16 %v2140, %v2139
      %v2144 = vsel %vm685, %v2136, 0
      %2146 = vmatpush.bf16.msra.mxu0 0
      %2147 = vmatpush.bf16.msra.mxu0 0
      %2148 = vmatpush.bf16.msra.mxu0 0
      %2149 = vmatpush.bf16.msra.mxu0 0
      %2150 = vmatpush.bf16.msra.mxu0 0
      %2151 = vmatpush.bf16.msra.mxu0 0
      %2152 = vmatpush.bf16.msra.mxu0 0
      %2153 = vmatpush.bf16.msra.mxu0 %v2141
      %2154 = vmatmul.bf16.gmra.mxu0 %v2144
      %v2155 = vpop.f32.mrf.mxu0
      %v2156 = vadd.f32 0.0, %v2155
      %v2157 = vpop.f32.mrf.mxu0
      %v2158 = vadd.f32 0.0, %v2157
      %2159 = vdwg.mxu0
      %v2162 = vunpack.c.l.b16 %v1998
      %v2163 = vunpack.c.l.b16 %v1999
      %v2164 = vpack.c.b16 %v2163, %v2162
      %v2167 = vunpack.c.l.b16 %v1131
      %v2168 = vunpack.c.l.b16 %v1132
      %v2169 = vpack.c.b16 %v2168, %v2167
      %v2172 = vsel %vm685, %v2164, 0
      %2174 = vmatpush.bf16.msra.mxu0 0
      %2175 = vmatpush.bf16.msra.mxu0 0
      %2176 = vmatpush.bf16.msra.mxu0 0
      %2177 = vmatpush.bf16.msra.mxu0 0
      %2178 = vmatpush.bf16.msra.mxu0 0
      %2179 = vmatpush.bf16.msra.mxu0 0
      %2180 = vmatpush.bf16.msra.mxu0 0
      %2181 = vmatpush.bf16.msra.mxu0 %v2169
      %2182 = vmatmul.bf16.gmra.mxu0 %v2172
      %v2183 = vpop.f32.mrf.mxu0
      %v2184 = vadd.f32 0.0, %v2183
      %v2185 = vpop.f32.mrf.mxu0
      %v2186 = vadd.f32 0.0, %v2185
      %2187 = vdwg.mxu0
      %v2190 = vunpack.c.l.b16 %v2000
      %v2191 = vunpack.c.l.b16 %v2001
      %v2192 = vpack.c.b16 %v2191, %v2190
      %v2195 = vunpack.c.l.b16 %v1133
      %v2196 = vunpack.c.l.b16 %v1134
      %v2197 = vpack.c.b16 %v2196, %v2195
      %v2200 = vsel %vm685, %v2192, 0
      %2202 = vmatpush.bf16.msra.mxu0 0
      %2203 = vmatpush.bf16.msra.mxu0 0
      %2204 = vmatpush.bf16.msra.mxu0 0
      %2205 = vmatpush.bf16.msra.mxu0 0
      %2206 = vmatpush.bf16.msra.mxu0 0
      %2207 = vmatpush.bf16.msra.mxu0 0
      %2208 = vmatpush.bf16.msra.mxu0 0
      %2209 = vmatpush.bf16.msra.mxu0 %v2197
      %2210 = vmatmul.bf16.gmra.mxu0 %v2200
      %v2211 = vpop.f32.mrf.mxu0
      %v2212 = vadd.f32 0.0, %v2211
      %v2213 = vpop.f32.mrf.mxu0
      %v2214 = vadd.f32 0.0, %v2213
      %2215 = vdwg.mxu0
      %v2218 = vunpack.c.l.b16 %v2002
      %v2219 = vunpack.c.l.b16 %v2003
      %v2220 = vpack.c.b16 %v2219, %v2218
      %v2223 = vunpack.c.l.b16 %v1135
      %v2224 = vunpack.c.l.b16 %v1136
      %v2225 = vpack.c.b16 %v2224, %v2223
      %v2228 = vsel %vm685, %v2220, 0
      %2230 = vmatpush.bf16.msra.mxu0 0
      %2231 = vmatpush.bf16.msra.mxu0 0
      %2232 = vmatpush.bf16.msra.mxu0 0
      %2233 = vmatpush.bf16.msra.mxu0 0
      %2234 = vmatpush.bf16.msra.mxu0 0
      %2235 = vmatpush.bf16.msra.mxu0 0
      %2236 = vmatpush.bf16.msra.mxu0 0
      %2237 = vmatpush.bf16.msra.mxu0 %v2225
      %2238 = vmatmul.bf16.gmra.mxu0 %v2228
      %v2239 = vpop.f32.mrf.mxu0
      %v2240 = vadd.f32 0.0, %v2239
      %v2241 = vpop.f32.mrf.mxu0
      %v2242 = vadd.f32 0.0, %v2241
      %2243 = vdwg.mxu0
      %v2246 = vunpack.c.l.b16 %v2004
      %v2247 = vunpack.c.l.b16 %v2005
      %v2248 = vpack.c.b16 %v2247, %v2246
      %v2251 = vunpack.c.l.b16 %v1137
      %v2252 = vunpack.c.l.b16 %v1138
      %v2253 = vpack.c.b16 %v2252, %v2251
      %v2256 = vsel %vm685, %v2248, 0
      %2258 = vmatpush.bf16.msra.mxu0 0
      %2259 = vmatpush.bf16.msra.mxu0 0
      %2260 = vmatpush.bf16.msra.mxu0 0
      %2261 = vmatpush.bf16.msra.mxu0 0
      %2262 = vmatpush.bf16.msra.mxu0 0
      %2263 = vmatpush.bf16.msra.mxu0 0
      %2264 = vmatpush.bf16.msra.mxu0 0
      %2265 = vmatpush.bf16.msra.mxu0 %v2253
      %2266 = vmatmul.bf16.gmra.mxu0 %v2256
      %v2267 = vpop.f32.mrf.mxu0
      %v2268 = vadd.f32 0.0, %v2267
      %v2269 = vpop.f32.mrf.mxu0
      %v2270 = vadd.f32 0.0, %v2269
      %2271 = vdwg.mxu0
      %v2274 = vunpack.c.l.b16 %v2006
      %v2275 = vunpack.c.l.b16 %v2007
      %v2276 = vpack.c.b16 %v2275, %v2274
      %v2279 = vunpack.c.l.b16 %v1139
      %v2280 = vunpack.c.l.b16 %v1140
      %v2281 = vpack.c.b16 %v2280, %v2279
      %v2284 = vsel %vm685, %v2276, 0
      %2286 = vmatpush.bf16.msra.mxu0 0
      %2287 = vmatpush.bf16.msra.mxu0 0
      %2288 = vmatpush.bf16.msra.mxu0 0
      %2289 = vmatpush.bf16.msra.mxu0 0
      %2290 = vmatpush.bf16.msra.mxu0 0
      %2291 = vmatpush.bf16.msra.mxu0 0
      %2292 = vmatpush.bf16.msra.mxu0 0
      %2293 = vmatpush.bf16.msra.mxu0 %v2281
      %2294 = vmatmul.bf16.gmra.mxu0 %v2284
      %v2295 = vpop.f32.mrf.mxu0
      %v2296 = vadd.f32 0.0, %v2295
      %v2297 = vpop.f32.mrf.mxu0
      %v2298 = vadd.f32 0.0, %v2297
      %2299 = vdwg.mxu0
      %v2302 = vunpack.c.l.b16 %v2008
      %v2303 = vunpack.c.l.b16 %v2009
      %v2304 = vpack.c.b16 %v2303, %v2302
      %v2307 = vunpack.c.l.b16 %v1141
      %v2308 = vunpack.c.l.b16 %v1142
      %v2309 = vpack.c.b16 %v2308, %v2307
      %v2312 = vsel %vm685, %v2304, 0
      %2314 = vmatpush.bf16.msra.mxu0 0
      %2315 = vmatpush.bf16.msra.mxu0 0
      %2316 = vmatpush.bf16.msra.mxu0 0
      %2317 = vmatpush.bf16.msra.mxu0 0
      %2318 = vmatpush.bf16.msra.mxu0 0
      %2319 = vmatpush.bf16.msra.mxu0 0
      %2320 = vmatpush.bf16.msra.mxu0 0
      %2321 = vmatpush.bf16.msra.mxu0 %v2309
      %2322 = vmatmul.bf16.gmra.mxu0 %v2312
      %v2323 = vpop.f32.mrf.mxu0
      %v2324 = vadd.f32 0.0, %v2323
      %v2325 = vpop.f32.mrf.mxu0
      %v2326 = vadd.f32 0.0, %v2325
      %2327 = vdwg.mxu0
      %v2330 = vunpack.c.l.b16 %v2010
      %v2331 = vunpack.c.l.b16 %v2011
      %v2332 = vpack.c.b16 %v2331, %v2330
      %v2335 = vunpack.c.l.b16 %v1143
      %v2336 = vunpack.c.l.b16 %v1144
      %v2337 = vpack.c.b16 %v2336, %v2335
      %v2340 = vsel %vm685, %v2332, 0
      %2342 = vmatpush.bf16.msra.mxu0 0
      %2343 = vmatpush.bf16.msra.mxu0 0
      %2344 = vmatpush.bf16.msra.mxu0 0
      %2345 = vmatpush.bf16.msra.mxu0 0
      %2346 = vmatpush.bf16.msra.mxu0 0
      %2347 = vmatpush.bf16.msra.mxu0 0
      %2348 = vmatpush.bf16.msra.mxu0 0
      %2349 = vmatpush.bf16.msra.mxu0 %v2337
      %2350 = vmatmul.bf16.gmra.mxu0 %v2340
      %v2351 = vpop.f32.mrf.mxu0
      %v2352 = vadd.f32 0.0, %v2351
      %v2353 = vpop.f32.mrf.mxu0
      %v2354 = vadd.f32 0.0, %v2353
      %2355 = vdwg.mxu0
      %v2358 = vunpack.c.l.b16 %v2012
      %v2359 = vunpack.c.l.b16 %v2013
      %v2360 = vpack.c.b16 %v2359, %v2358
      %v2363 = vunpack.c.l.b16 %v1145
      %v2364 = vunpack.c.l.b16 %v1146
      %v2365 = vpack.c.b16 %v2364, %v2363
      %v2368 = vsel %vm685, %v2360, 0
      %2370 = vmatpush.bf16.msra.mxu0 0
      %2371 = vmatpush.bf16.msra.mxu0 0
      %2372 = vmatpush.bf16.msra.mxu0 0
      %2373 = vmatpush.bf16.msra.mxu0 0
      %2374 = vmatpush.bf16.msra.mxu0 0
      %2375 = vmatpush.bf16.msra.mxu0 0
      %2376 = vmatpush.bf16.msra.mxu0 0
      %2377 = vmatpush.bf16.msra.mxu0 %v2365
      %2378 = vmatmul.bf16.gmra.mxu0 %v2368
      %v2379 = vpop.f32.mrf.mxu0
      %v2380 = vadd.f32 0.0, %v2379
      %v2381 = vpop.f32.mrf.mxu0
      %v2382 = vadd.f32 0.0, %v2381
      %2383 = vdwg.mxu0
      %v2386 = vunpack.c.l.b16 %v2014
      %v2387 = vunpack.c.l.b16 %v2015
      %v2388 = vpack.c.b16 %v2387, %v2386
      %v2391 = vunpack.c.l.b16 %v1147
      %v2392 = vunpack.c.l.b16 %v1148
      %v2393 = vpack.c.b16 %v2392, %v2391
      %v2396 = vsel %vm685, %v2388, 0
      %2398 = vmatpush.bf16.msra.mxu0 0
      %2399 = vmatpush.bf16.msra.mxu0 0
      %2400 = vmatpush.bf16.msra.mxu0 0
      %2401 = vmatpush.bf16.msra.mxu0 0
      %2402 = vmatpush.bf16.msra.mxu0 0
      %2403 = vmatpush.bf16.msra.mxu0 0
      %2404 = vmatpush.bf16.msra.mxu0 0
      %2405 = vmatpush.bf16.msra.mxu0 %v2393
      %2406 = vmatmul.bf16.gmra.mxu0 %v2396
      %v2407 = vpop.f32.mrf.mxu0
      %v2408 = vadd.f32 0.0, %v2407
      %v2409 = vpop.f32.mrf.mxu0
      %v2410 = vadd.f32 0.0, %v2409
      %2411 = vdwg.mxu0
      %v2414 = vunpack.c.l.b16 %v2016
      %v2415 = vunpack.c.l.b16 %v2017
      %v2416 = vpack.c.b16 %v2415, %v2414
      %v2419 = vunpack.c.l.b16 %v1149
      %v2420 = vunpack.c.l.b16 %v1150
      %v2421 = vpack.c.b16 %v2420, %v2419
      %v2424 = vsel %vm685, %v2416, 0
      %2426 = vmatpush.bf16.msra.mxu0 0
      %2427 = vmatpush.bf16.msra.mxu0 0
      %2428 = vmatpush.bf16.msra.mxu0 0
      %2429 = vmatpush.bf16.msra.mxu0 0
      %2430 = vmatpush.bf16.msra.mxu0 0
      %2431 = vmatpush.bf16.msra.mxu0 0
      %2432 = vmatpush.bf16.msra.mxu0 0
      %2433 = vmatpush.bf16.msra.mxu0 %v2421
      %2434 = vmatmul.bf16.gmra.mxu0 %v2424
      %v2435 = vpop.f32.mrf.mxu0
      %v2436 = vadd.f32 0.0, %v2435
      %v2437 = vpop.f32.mrf.mxu0
      %v2438 = vadd.f32 0.0, %v2437
      %2439 = vdwg.mxu0
      %v2442 = vunpack.c.l.b16 %v2018
      %v2443 = vunpack.c.l.b16 %v2019
      %v2444 = vpack.c.b16 %v2443, %v2442
      %v2447 = vunpack.c.l.b16 %v1151
      %v2448 = vunpack.c.l.b16 %v1152
      %v2449 = vpack.c.b16 %v2448, %v2447
      %v2452 = vsel %vm685, %v2444, 0
      %2454 = vmatpush.bf16.msra.mxu0 0
      %2455 = vmatpush.bf16.msra.mxu0 0
      %2456 = vmatpush.bf16.msra.mxu0 0
      %2457 = vmatpush.bf16.msra.mxu0 0
      %2458 = vmatpush.bf16.msra.mxu0 0
      %2459 = vmatpush.bf16.msra.mxu0 0
      %2460 = vmatpush.bf16.msra.mxu0 0
      %2461 = vmatpush.bf16.msra.mxu0 %v2449
      %2462 = vmatmul.bf16.gmra.mxu0 %v2452
      %v2463 = vpop.f32.mrf.mxu0
      %v2464 = vadd.f32 0.0, %v2463
      %v2465 = vpop.f32.mrf.mxu0
      %v2466 = vadd.f32 0.0, %v2465
      %2467 = vdwg.mxu0
      %v2468 = vpack.c.bf16 %v2046, %v2044
      %v2469 = vpack.c.bf16 %v2074, %v2072
      %v2470 = vpack.c.bf16 %v2102, %v2100
      %v2471 = vpack.c.bf16 %v2130, %v2128
      %v2472 = vpack.c.bf16 %v2158, %v2156
      %v2473 = vpack.c.bf16 %v2186, %v2184
      %v2474 = vpack.c.bf16 %v2214, %v2212
      %v2475 = vpack.c.bf16 %v2242, %v2240
      %v2476 = vpack.c.bf16 %v2270, %v2268
      %v2477 = vpack.c.bf16 %v2298, %v2296
      %v2478 = vpack.c.bf16 %v2326, %v2324
      %v2479 = vpack.c.bf16 %v2354, %v2352
      %v2480 = vpack.c.bf16 %v2382, %v2380
      %v2481 = vpack.c.bf16 %v2410, %v2408
      %v2482 = vpack.c.bf16 %v2438, %v2436
      %v2483 = vpack.c.bf16 %v2466, %v2464
      %2484 = vrot.lane.b32.xlu0 %v1159, 124
      %v2485 = vpop.permute.xlu0 %2484
      %2486 = vrot.lane.b32.xlu0 %v1164, 124
      %v2487 = vpop.permute.xlu0 %2486
      %v2489 = vsel %vm1165, %v2485, 0
      %v2492 = vsel %vm1165, %v2487, 0
      %2494 = vmatpush.bf16.xpose.msra.mxu0 0
      %2495 = vmatpush.bf16.xpose.msra.mxu0 0
      %2496 = vmatpush.bf16.xpose.msra.mxu0 0
      %2497 = vmatpush.bf16.xpose.msra.mxu0 0
      %2498 = vmatpush.bf16.xpose.msra.mxu0 0
      %2499 = vmatpush.bf16.xpose.msra.mxu0 0
      %2500 = vmatpush.bf16.xpose.msra.mxu0 0
      %2501 = vmatpush.bf16.xpose.msra.mxu0 %v2492
      %2502 = vmatmul.bf16.gmra.mxu0 %v2489
      %v2503 = vpop.f32.mrf.mxu0
      %v2504 = vadd.f32 0.0, %v2503
      %v2505 = vpop.f32.mrf.mxu0
      %v2506 = vadd.f32 0.0, %v2505
      %2507 = vdwg.mxu0
      %2508 = vrot.lane.b32.xlu0 %v1190, 124
      %v2509 = vpop.permute.xlu0 %2508
      %2510 = vrot.lane.b32.xlu0 %v1195, 124
      %v2511 = vpop.permute.xlu0 %2510
      %v2513 = vsel %vm1165, %v2509, 0
      %v2516 = vsel %vm1165, %v2511, 0
      %2518 = vmatpush.bf16.xpose.msra.mxu0 0
      %2519 = vmatpush.bf16.xpose.msra.mxu0 0
      %2520 = vmatpush.bf16.xpose.msra.mxu0 0
      %2521 = vmatpush.bf16.xpose.msra.mxu0 0
      %2522 = vmatpush.bf16.xpose.msra.mxu0 0
      %2523 = vmatpush.bf16.xpose.msra.mxu0 0
      %2524 = vmatpush.bf16.xpose.msra.mxu0 0
      %2525 = vmatpush.bf16.xpose.msra.mxu0 %v2516
      %2526 = vmatmul.bf16.gmra.mxu0 %v2513
      %v2527 = vpop.f32.mrf.mxu0
      %v2528 = vadd.f32 0.0, %v2527
      %v2529 = vpop.f32.mrf.mxu0
      %v2530 = vadd.f32 0.0, %v2529
      %2531 = vdwg.mxu0
      %2532 = vrot.lane.b32.xlu0 %v1220, 124
      %v2533 = vpop.permute.xlu0 %2532
      %2534 = vrot.lane.b32.xlu0 %v1225, 124
      %v2535 = vpop.permute.xlu0 %2534
      %v2537 = vsel %vm1165, %v2533, 0
      %v2540 = vsel %vm1165, %v2535, 0
      %2542 = vmatpush.bf16.xpose.msra.mxu0 0
      %2543 = vmatpush.bf16.xpose.msra.mxu0 0
      %2544 = vmatpush.bf16.xpose.msra.mxu0 0
      %2545 = vmatpush.bf16.xpose.msra.mxu0 0
      %2546 = vmatpush.bf16.xpose.msra.mxu0 0
      %2547 = vmatpush.bf16.xpose.msra.mxu0 0
      %2548 = vmatpush.bf16.xpose.msra.mxu0 0
      %2549 = vmatpush.bf16.xpose.msra.mxu0 %v2540
      %2550 = vmatmul.bf16.gmra.mxu0 %v2537
      %v2551 = vpop.f32.mrf.mxu0
      %v2552 = vadd.f32 0.0, %v2551
      %v2553 = vpop.f32.mrf.mxu0
      %v2554 = vadd.f32 0.0, %v2553
      %2555 = vdwg.mxu0
      %2556 = vrot.lane.b32.xlu0 %v1250, 124
      %v2557 = vpop.permute.xlu0 %2556
      %2558 = vrot.lane.b32.xlu0 %v1255, 124
      %v2559 = vpop.permute.xlu0 %2558
      %v2561 = vsel %vm1165, %v2557, 0
      %v2564 = vsel %vm1165, %v2559, 0
      %2566 = vmatpush.bf16.xpose.msra.mxu0 0
      %2567 = vmatpush.bf16.xpose.msra.mxu0 0
      %2568 = vmatpush.bf16.xpose.msra.mxu0 0
      %2569 = vmatpush.bf16.xpose.msra.mxu0 0
      %2570 = vmatpush.bf16.xpose.msra.mxu0 0
      %2571 = vmatpush.bf16.xpose.msra.mxu0 0
      %2572 = vmatpush.bf16.xpose.msra.mxu0 0
      %2573 = vmatpush.bf16.xpose.msra.mxu0 %v2564
      %2574 = vmatmul.bf16.gmra.mxu0 %v2561
      %v2575 = vpop.f32.mrf.mxu0
      %v2576 = vadd.f32 0.0, %v2575
      %v2577 = vpop.f32.mrf.mxu0
      %v2578 = vadd.f32 0.0, %v2577
      %2579 = vdwg.mxu0
      %2580 = vrot.lane.b32.xlu0 %v1280, 124
      %v2581 = vpop.permute.xlu0 %2580
      %2582 = vrot.lane.b32.xlu0 %v1285, 124
      %v2583 = vpop.permute.xlu0 %2582
      %v2585 = vsel %vm1165, %v2581, 0
      %v2588 = vsel %vm1165, %v2583, 0
      %2590 = vmatpush.bf16.xpose.msra.mxu0 0
      %2591 = vmatpush.bf16.xpose.msra.mxu0 0
      %2592 = vmatpush.bf16.xpose.msra.mxu0 0
      %2593 = vmatpush.bf16.xpose.msra.mxu0 0
      %2594 = vmatpush.bf16.xpose.msra.mxu0 0
      %2595 = vmatpush.bf16.xpose.msra.mxu0 0
      %2596 = vmatpush.bf16.xpose.msra.mxu0 0
      %2597 = vmatpush.bf16.xpose.msra.mxu0 %v2588
      %2598 = vmatmul.bf16.gmra.mxu0 %v2585
      %v2599 = vpop.f32.mrf.mxu0
      %v2600 = vadd.f32 0.0, %v2599
      %v2601 = vpop.f32.mrf.mxu0
      %v2602 = vadd.f32 0.0, %v2601
      %2603 = vdwg.mxu0
      %2604 = vrot.lane.b32.xlu0 %v1310, 124
      %v2605 = vpop.permute.xlu0 %2604
      %2606 = vrot.lane.b32.xlu0 %v1315, 124
      %v2607 = vpop.permute.xlu0 %2606
      %v2609 = vsel %vm1165, %v2605, 0
      %v2612 = vsel %vm1165, %v2607, 0
      %2614 = vmatpush.bf16.xpose.msra.mxu0 0
      %2615 = vmatpush.bf16.xpose.msra.mxu0 0
      %2616 = vmatpush.bf16.xpose.msra.mxu0 0
      %2617 = vmatpush.bf16.xpose.msra.mxu0 0
      %2618 = vmatpush.bf16.xpose.msra.mxu0 0
      %2619 = vmatpush.bf16.xpose.msra.mxu0 0
      %2620 = vmatpush.bf16.xpose.msra.mxu0 0
      %2621 = vmatpush.bf16.xpose.msra.mxu0 %v2612
      %2622 = vmatmul.bf16.gmra.mxu0 %v2609
      %v2623 = vpop.f32.mrf.mxu0
      %v2624 = vadd.f32 0.0, %v2623
      %v2625 = vpop.f32.mrf.mxu0
      %v2626 = vadd.f32 0.0, %v2625
      %2627 = vdwg.mxu0
      %2628 = vrot.lane.b32.xlu0 %v1340, 124
      %v2629 = vpop.permute.xlu0 %2628
      %2630 = vrot.lane.b32.xlu0 %v1345, 124
      %v2631 = vpop.permute.xlu0 %2630
      %v2633 = vsel %vm1165, %v2629, 0
      %v2636 = vsel %vm1165, %v2631, 0
      %2638 = vmatpush.bf16.xpose.msra.mxu0 0
      %2639 = vmatpush.bf16.xpose.msra.mxu0 0
      %2640 = vmatpush.bf16.xpose.msra.mxu0 0
      %2641 = vmatpush.bf16.xpose.msra.mxu0 0
      %2642 = vmatpush.bf16.xpose.msra.mxu0 0
      %2643 = vmatpush.bf16.xpose.msra.mxu0 0
      %2644 = vmatpush.bf16.xpose.msra.mxu0 0
      %2645 = vmatpush.bf16.xpose.msra.mxu0 %v2636
      %2646 = vmatmul.bf16.gmra.mxu0 %v2633
      %v2647 = vpop.f32.mrf.mxu0
      %v2648 = vadd.f32 0.0, %v2647
      %v2649 = vpop.f32.mrf.mxu0
      %v2650 = vadd.f32 0.0, %v2649
      %2651 = vdwg.mxu0
      %2652 = vrot.lane.b32.xlu0 %v1370, 124
      %v2653 = vpop.permute.xlu0 %2652
      %2654 = vrot.lane.b32.xlu0 %v1375, 124
      %v2655 = vpop.permute.xlu0 %2654
      %v2657 = vsel %vm1165, %v2653, 0
      %v2660 = vsel %vm1165, %v2655, 0
      %2662 = vmatpush.bf16.xpose.msra.mxu0 0
      %2663 = vmatpush.bf16.xpose.msra.mxu0 0
      %2664 = vmatpush.bf16.xpose.msra.mxu0 0
      %2665 = vmatpush.bf16.xpose.msra.mxu0 0
      %2666 = vmatpush.bf16.xpose.msra.mxu0 0
      %2667 = vmatpush.bf16.xpose.msra.mxu0 0
      %2668 = vmatpush.bf16.xpose.msra.mxu0 0
      %2669 = vmatpush.bf16.xpose.msra.mxu0 %v2660
      %2670 = vmatmul.bf16.gmra.mxu0 %v2657
      %v2671 = vpop.f32.mrf.mxu0
      %v2672 = vadd.f32 0.0, %v2671
      %v2673 = vpop.f32.mrf.mxu0
      %v2674 = vadd.f32 0.0, %v2673
      %2675 = vdwg.mxu0
      %2676 = vrot.lane.b32.xlu0 %v1400, 124
      %v2677 = vpop.permute.xlu0 %2676
      %2678 = vrot.lane.b32.xlu0 %v1405, 124
      %v2679 = vpop.permute.xlu0 %2678
      %v2681 = vsel %vm1165, %v2677, 0
      %v2684 = vsel %vm1165, %v2679, 0
      %2686 = vmatpush.bf16.xpose.msra.mxu0 0
      %2687 = vmatpush.bf16.xpose.msra.mxu0 0
      %2688 = vmatpush.bf16.xpose.msra.mxu0 0
      %2689 = vmatpush.bf16.xpose.msra.mxu0 0
      %2690 = vmatpush.bf16.xpose.msra.mxu0 0
      %2691 = vmatpush.bf16.xpose.msra.mxu0 0
      %2692 = vmatpush.bf16.xpose.msra.mxu0 0
      %2693 = vmatpush.bf16.xpose.msra.mxu0 %v2684
      %2694 = vmatmul.bf16.gmra.mxu0 %v2681
      %v2695 = vpop.f32.mrf.mxu0
      %v2696 = vadd.f32 0.0, %v2695
      %v2697 = vpop.f32.mrf.mxu0
      %v2698 = vadd.f32 0.0, %v2697
      %2699 = vdwg.mxu0
      %2700 = vrot.lane.b32.xlu0 %v1430, 124
      %v2701 = vpop.permute.xlu0 %2700
      %2702 = vrot.lane.b32.xlu0 %v1435, 124
      %v2703 = vpop.permute.xlu0 %2702
      %v2705 = vsel %vm1165, %v2701, 0
      %v2708 = vsel %vm1165, %v2703, 0
      %2710 = vmatpush.bf16.xpose.msra.mxu0 0
      %2711 = vmatpush.bf16.xpose.msra.mxu0 0
      %2712 = vmatpush.bf16.xpose.msra.mxu0 0
      %2713 = vmatpush.bf16.xpose.msra.mxu0 0
      %2714 = vmatpush.bf16.xpose.msra.mxu0 0
      %2715 = vmatpush.bf16.xpose.msra.mxu0 0
      %2716 = vmatpush.bf16.xpose.msra.mxu0 0
      %2717 = vmatpush.bf16.xpose.msra.mxu0 %v2708
      %2718 = vmatmul.bf16.gmra.mxu0 %v2705
      %v2719 = vpop.f32.mrf.mxu0
      %v2720 = vadd.f32 0.0, %v2719
      %v2721 = vpop.f32.mrf.mxu0
      %v2722 = vadd.f32 0.0, %v2721
      %2723 = vdwg.mxu0
      %2724 = vrot.lane.b32.xlu0 %v1460, 124
      %v2725 = vpop.permute.xlu0 %2724
      %2726 = vrot.lane.b32.xlu0 %v1465, 124
      %v2727 = vpop.permute.xlu0 %2726
      %v2729 = vsel %vm1165, %v2725, 0
      %v2732 = vsel %vm1165, %v2727, 0
      %2734 = vmatpush.bf16.xpose.msra.mxu0 0
      %2735 = vmatpush.bf16.xpose.msra.mxu0 0
      %2736 = vmatpush.bf16.xpose.msra.mxu0 0
      %2737 = vmatpush.bf16.xpose.msra.mxu0 0
      %2738 = vmatpush.bf16.xpose.msra.mxu0 0
      %2739 = vmatpush.bf16.xpose.msra.mxu0 0
      %2740 = vmatpush.bf16.xpose.msra.mxu0 0
      %2741 = vmatpush.bf16.xpose.msra.mxu0 %v2732
      %2742 = vmatmul.bf16.gmra.mxu0 %v2729
      %v2743 = vpop.f32.mrf.mxu0
      %v2744 = vadd.f32 0.0, %v2743
      %v2745 = vpop.f32.mrf.mxu0
      %v2746 = vadd.f32 0.0, %v2745
      %2747 = vdwg.mxu0
      %2748 = vrot.lane.b32.xlu0 %v1490, 124
      %v2749 = vpop.permute.xlu0 %2748
      %2750 = vrot.lane.b32.xlu0 %v1495, 124
      %v2751 = vpop.permute.xlu0 %2750
      %v2753 = vsel %vm1165, %v2749, 0
      %v2756 = vsel %vm1165, %v2751, 0
      %2758 = vmatpush.bf16.xpose.msra.mxu0 0
      %2759 = vmatpush.bf16.xpose.msra.mxu0 0
      %2760 = vmatpush.bf16.xpose.msra.mxu0 0
      %2761 = vmatpush.bf16.xpose.msra.mxu0 0
      %2762 = vmatpush.bf16.xpose.msra.mxu0 0
      %2763 = vmatpush.bf16.xpose.msra.mxu0 0
      %2764 = vmatpush.bf16.xpose.msra.mxu0 0
      %2765 = vmatpush.bf16.xpose.msra.mxu0 %v2756
      %2766 = vmatmul.bf16.gmra.mxu0 %v2753
      %v2767 = vpop.f32.mrf.mxu0
      %v2768 = vadd.f32 0.0, %v2767
      %v2769 = vpop.f32.mrf.mxu0
      %v2770 = vadd.f32 0.0, %v2769
      %2771 = vdwg.mxu0
      %2772 = vrot.lane.b32.xlu0 %v1520, 124
      %v2773 = vpop.permute.xlu0 %2772
      %2774 = vrot.lane.b32.xlu0 %v1525, 124
      %v2775 = vpop.permute.xlu0 %2774
      %v2777 = vsel %vm1165, %v2773, 0
      %v2780 = vsel %vm1165, %v2775, 0
      %2782 = vmatpush.bf16.xpose.msra.mxu0 0
      %2783 = vmatpush.bf16.xpose.msra.mxu0 0
      %2784 = vmatpush.bf16.xpose.msra.mxu0 0
      %2785 = vmatpush.bf16.xpose.msra.mxu0 0
      %2786 = vmatpush.bf16.xpose.msra.mxu0 0
      %2787 = vmatpush.bf16.xpose.msra.mxu0 0
      %2788 = vmatpush.bf16.xpose.msra.mxu0 0
      %2789 = vmatpush.bf16.xpose.msra.mxu0 %v2780
      %2790 = vmatmul.bf16.gmra.mxu0 %v2777
      %v2791 = vpop.f32.mrf.mxu0
      %v2792 = vadd.f32 0.0, %v2791
      %v2793 = vpop.f32.mrf.mxu0
      %v2794 = vadd.f32 0.0, %v2793
      %2795 = vdwg.mxu0
      %2796 = vrot.lane.b32.xlu0 %v1550, 124
      %v2797 = vpop.permute.xlu0 %2796
      %2798 = vrot.lane.b32.xlu0 %v1555, 124
      %v2799 = vpop.permute.xlu0 %2798
      %v2801 = vsel %vm1165, %v2797, 0
      %v2804 = vsel %vm1165, %v2799, 0
      %2806 = vmatpush.bf16.xpose.msra.mxu0 0
      %2807 = vmatpush.bf16.xpose.msra.mxu0 0
      %2808 = vmatpush.bf16.xpose.msra.mxu0 0
      %2809 = vmatpush.bf16.xpose.msra.mxu0 0
      %2810 = vmatpush.bf16.xpose.msra.mxu0 0
      %2811 = vmatpush.bf16.xpose.msra.mxu0 0
      %2812 = vmatpush.bf16.xpose.msra.mxu0 0
      %2813 = vmatpush.bf16.xpose.msra.mxu0 %v2804
      %2814 = vmatmul.bf16.gmra.mxu0 %v2801
      %v2815 = vpop.f32.mrf.mxu0
      %v2816 = vadd.f32 0.0, %v2815
      %v2817 = vpop.f32.mrf.mxu0
      %v2818 = vadd.f32 0.0, %v2817
      %2819 = vdwg.mxu0
      %2820 = vrot.lane.b32.xlu0 %v1580, 124
      %v2821 = vpop.permute.xlu0 %2820
      %2822 = vrot.lane.b32.xlu0 %v1585, 124
      %v2823 = vpop.permute.xlu0 %2822
      %v2825 = vsel %vm1165, %v2821, 0
      %v2828 = vsel %vm1165, %v2823, 0
      %2830 = vmatpush.bf16.xpose.msra.mxu0 0
      %2831 = vmatpush.bf16.xpose.msra.mxu0 0
      %2832 = vmatpush.bf16.xpose.msra.mxu0 0
      %2833 = vmatpush.bf16.xpose.msra.mxu0 0
      %2834 = vmatpush.bf16.xpose.msra.mxu0 0
      %2835 = vmatpush.bf16.xpose.msra.mxu0 0
      %2836 = vmatpush.bf16.xpose.msra.mxu0 0
      %2837 = vmatpush.bf16.xpose.msra.mxu0 %v2828
      %2838 = vmatmul.bf16.gmra.mxu0 %v2825
      %v2839 = vpop.f32.mrf.mxu0
      %v2840 = vadd.f32 0.0, %v2839
      %v2841 = vpop.f32.mrf.mxu0
      %v2842 = vadd.f32 0.0, %v2841
      %2843 = vdwg.mxu0
      %2844 = vrot.lane.b32.xlu0 %v1610, 124
      %v2845 = vpop.permute.xlu0 %2844
      %2846 = vrot.lane.b32.xlu0 %v1615, 124
      %v2847 = vpop.permute.xlu0 %2846
      %v2849 = vsel %vm1165, %v2845, 0
      %v2852 = vsel %vm1165, %v2847, 0
      %2854 = vmatpush.bf16.xpose.msra.mxu0 0
      %2855 = vmatpush.bf16.xpose.msra.mxu0 0
      %2856 = vmatpush.bf16.xpose.msra.mxu0 0
      %2857 = vmatpush.bf16.xpose.msra.mxu0 0
      %2858 = vmatpush.bf16.xpose.msra.mxu0 0
      %2859 = vmatpush.bf16.xpose.msra.mxu0 0
      %2860 = vmatpush.bf16.xpose.msra.mxu0 0
      %2861 = vmatpush.bf16.xpose.msra.mxu0 %v2852
      %2862 = vmatmul.bf16.gmra.mxu0 %v2849
      %v2863 = vpop.f32.mrf.mxu0
      %v2864 = vadd.f32 0.0, %v2863
      %v2865 = vpop.f32.mrf.mxu0
      %v2866 = vadd.f32 0.0, %v2865
      %2867 = vdwg.mxu0
      %v2868 = vsel %vm685, %v2504, -inf
      %2869 = vmax.xlane.f32.xlu0 %v2868
      %v2870 = vpop.xlane.xlu0 %2869
      %v2871 = vsel %vm685, %v2506, -inf
      %2872 = vmax.xlane.f32.xlu0 %v2871
      %v2873 = vpop.xlane.xlu0 %2872
      %v2874 = vsel %vm685, %v2528, -inf
      %2875 = vmax.xlane.f32.xlu0 %v2874
      %v2876 = vpop.xlane.xlu0 %2875
      %v2877 = vsel %vm685, %v2530, -inf
      %2878 = vmax.xlane.f32.xlu0 %v2877
      %v2879 = vpop.xlane.xlu0 %2878
      %v2880 = vsel %vm685, %v2552, -inf
      %2881 = vmax.xlane.f32.xlu0 %v2880
      %v2882 = vpop.xlane.xlu0 %2881
      %v2883 = vsel %vm685, %v2554, -inf
      %2884 = vmax.xlane.f32.xlu0 %v2883
      %v2885 = vpop.xlane.xlu0 %2884
      %v2886 = vsel %vm685, %v2576, -inf
      %2887 = vmax.xlane.f32.xlu0 %v2886
      %v2888 = vpop.xlane.xlu0 %2887
      %v2889 = vsel %vm685, %v2578, -inf
      %2890 = vmax.xlane.f32.xlu0 %v2889
      %v2891 = vpop.xlane.xlu0 %2890
      %v2892 = vsel %vm685, %v2600, -inf
      %2893 = vmax.xlane.f32.xlu0 %v2892
      %v2894 = vpop.xlane.xlu0 %2893
      %v2895 = vsel %vm685, %v2602, -inf
      %2896 = vmax.xlane.f32.xlu0 %v2895
      %v2897 = vpop.xlane.xlu0 %2896
      %v2898 = vsel %vm685, %v2624, -inf
      %2899 = vmax.xlane.f32.xlu0 %v2898
      %v2900 = vpop.xlane.xlu0 %2899
      %v2901 = vsel %vm685, %v2626, -inf
      %2902 = vmax.xlane.f32.xlu0 %v2901
      %v2903 = vpop.xlane.xlu0 %2902
      %v2904 = vsel %vm685, %v2648, -inf
      %2905 = vmax.xlane.f32.xlu0 %v2904
      %v2906 = vpop.xlane.xlu0 %2905
      %v2907 = vsel %vm685, %v2650, -inf
      %2908 = vmax.xlane.f32.xlu0 %v2907
      %v2909 = vpop.xlane.xlu0 %2908
      %v2910 = vsel %vm685, %v2672, -inf
      %2911 = vmax.xlane.f32.xlu0 %v2910
      %v2912 = vpop.xlane.xlu0 %2911
      %v2913 = vsel %vm685, %v2674, -inf
      %2914 = vmax.xlane.f32.xlu0 %v2913
      %v2915 = vpop.xlane.xlu0 %2914
      %v2916 = vsel %vm685, %v2696, -inf
      %2917 = vmax.xlane.f32.xlu0 %v2916
      %v2918 = vpop.xlane.xlu0 %2917
      %v2919 = vsel %vm685, %v2698, -inf
      %2920 = vmax.xlane.f32.xlu0 %v2919
      %v2921 = vpop.xlane.xlu0 %2920
      %v2922 = vsel %vm685, %v2720, -inf
      %2923 = vmax.xlane.f32.xlu0 %v2922
      %v2924 = vpop.xlane.xlu0 %2923
      %v2925 = vsel %vm685, %v2722, -inf
      %2926 = vmax.xlane.f32.xlu0 %v2925
      %v2927 = vpop.xlane.xlu0 %2926
      %v2928 = vsel %vm685, %v2744, -inf
      %2929 = vmax.xlane.f32.xlu0 %v2928
      %v2930 = vpop.xlane.xlu0 %2929
      %v2931 = vsel %vm685, %v2746, -inf
      %2932 = vmax.xlane.f32.xlu0 %v2931
      %v2933 = vpop.xlane.xlu0 %2932
      %v2934 = vsel %vm685, %v2768, -inf
      %2935 = vmax.xlane.f32.xlu0 %v2934
      %v2936 = vpop.xlane.xlu0 %2935
      %v2937 = vsel %vm685, %v2770, -inf
      %2938 = vmax.xlane.f32.xlu0 %v2937
      %v2939 = vpop.xlane.xlu0 %2938
      %v2940 = vsel %vm685, %v2792, -inf
      %2941 = vmax.xlane.f32.xlu0 %v2940
      %v2942 = vpop.xlane.xlu0 %2941
      %v2943 = vsel %vm685, %v2794, -inf
      %2944 = vmax.xlane.f32.xlu0 %v2943
      %v2945 = vpop.xlane.xlu0 %2944
      %v2946 = vsel %vm685, %v2816, -inf
      %2947 = vmax.xlane.f32.xlu0 %v2946
      %v2948 = vpop.xlane.xlu0 %2947
      %v2949 = vsel %vm685, %v2818, -inf
      %2950 = vmax.xlane.f32.xlu0 %v2949
      %v2951 = vpop.xlane.xlu0 %2950
      %v2952 = vsel %vm685, %v2840, -inf
      %2953 = vmax.xlane.f32.xlu0 %v2952
      %v2954 = vpop.xlane.xlu0 %2953
      %v2955 = vsel %vm685, %v2842, -inf
      %2956 = vmax.xlane.f32.xlu0 %v2955
      %v2957 = vpop.xlane.xlu0 %2956
      %v2958 = vsel %vm685, %v2864, -inf
      %2959 = vmax.xlane.f32.xlu0 %v2958
      %v2960 = vpop.xlane.xlu0 %2959
      %v2961 = vsel %vm685, %v2866, -inf
      %2962 = vmax.xlane.f32.xlu0 %v2961
      %v2963 = vpop.xlane.xlu0 %2962
      %v2964 = vsub.f32 %v2504, %v2870
      %v2965 = vsub.f32 %v2506, %v2873
      %v2966 = vsub.f32 %v2528, %v2876
      %v2967 = vsub.f32 %v2530, %v2879
      %v2968 = vsub.f32 %v2552, %v2882
      %v2969 = vsub.f32 %v2554, %v2885
      %v2970 = vsub.f32 %v2576, %v2888
      %v2971 = vsub.f32 %v2578, %v2891
      %v2972 = vsub.f32 %v2600, %v2894
      %v2973 = vsub.f32 %v2602, %v2897
      %v2974 = vsub.f32 %v2624, %v2900
      %v2975 = vsub.f32 %v2626, %v2903
      %v2976 = vsub.f32 %v2648, %v2906
      %v2977 = vsub.f32 %v2650, %v2909
      %v2978 = vsub.f32 %v2672, %v2912
      %v2979 = vsub.f32 %v2674, %v2915
      %v2980 = vsub.f32 %v2696, %v2918
      %v2981 = vsub.f32 %v2698, %v2921
      %v2982 = vsub.f32 %v2720, %v2924
      %v2983 = vsub.f32 %v2722, %v2927
      %v2984 = vsub.f32 %v2744, %v2930
      %v2985 = vsub.f32 %v2746, %v2933
      %v2986 = vsub.f32 %v2768, %v2936
      %v2987 = vsub.f32 %v2770, %v2939
      %v2988 = vsub.f32 %v2792, %v2942
      %v2989 = vsub.f32 %v2794, %v2945
      %v2990 = vsub.f32 %v2816, %v2948
      %v2991 = vsub.f32 %v2818, %v2951
      %v2992 = vsub.f32 %v2840, %v2954
      %v2993 = vsub.f32 %v2842, %v2957
      %v2994 = vsub.f32 %v2864, %v2960
      %v2995 = vsub.f32 %v2866, %v2963
      %v2996 = vmul.f32 %v2964, 1.442695
      %v2997 = vpow.pop %v2996
      %v2998 = vmul.f32 %v2965, 1.442695
      %v2999 = vpow.pop %v2998
      %v3000 = vmul.f32 %v2966, 1.442695
      %v3001 = vpow.pop %v3000
      %v3002 = vmul.f32 %v2967, 1.442695
      %v3003 = vpow.pop %v3002
      %v3004 = vmul.f32 %v2968, 1.442695
      %v3005 = vpow.pop %v3004
      %v3006 = vmul.f32 %v2969, 1.442695
      %v3007 = vpow.pop %v3006
      %v3008 = vmul.f32 %v2970, 1.442695
      %v3009 = vpow.pop %v3008
      %v3010 = vmul.f32 %v2971, 1.442695
      %v3011 = vpow.pop %v3010
      %v3012 = vmul.f32 %v2972, 1.442695
      %v3013 = vpow.pop %v3012
      %v3014 = vmul.f32 %v2973, 1.442695
      %v3015 = vpow.pop %v3014
      %v3016 = vmul.f32 %v2974, 1.442695
      %v3017 = vpow.pop %v3016
      %v3018 = vmul.f32 %v2975, 1.442695
      %v3019 = vpow.pop %v3018
      %v3020 = vmul.f32 %v2976, 1.442695
      %v3021 = vpow.pop %v3020
      %v3022 = vmul.f32 %v2977, 1.442695
      %v3023 = vpow.pop %v3022
      %v3024 = vmul.f32 %v2978, 1.442695
      %v3025 = vpow.pop %v3024
      %v3026 = vmul.f32 %v2979, 1.442695
      %v3027 = vpow.pop %v3026
      %v3028 = vmul.f32 %v2980, 1.442695
      %v3029 = vpow.pop %v3028
      %v3030 = vmul.f32 %v2981, 1.442695
      %v3031 = vpow.pop %v3030
      %v3032 = vmul.f32 %v2982, 1.442695
      %v3033 = vpow.pop %v3032
      %v3034 = vmul.f32 %v2983, 1.442695
      %v3035 = vpow.pop %v3034
      %v3036 = vmul.f32 %v2984, 1.442695
      %v3037 = vpow.pop %v3036
      %v3038 = vmul.f32 %v2985, 1.442695
      %v3039 = vpow.pop %v3038
      %v3040 = vmul.f32 %v2986, 1.442695
      %v3041 = vpow.pop %v3040
      %v3042 = vmul.f32 %v2987, 1.442695
      %v3043 = vpow.pop %v3042
      %v3044 = vmul.f32 %v2988, 1.442695
      %v3045 = vpow.pop %v3044
      %v3046 = vmul.f32 %v2989, 1.442695
      %v3047 = vpow.pop %v3046
      %v3048 = vmul.f32 %v2990, 1.442695
      %v3049 = vpow.pop %v3048
      %v3050 = vmul.f32 %v2991, 1.442695
      %v3051 = vpow.pop %v3050
      %v3052 = vmul.f32 %v2992, 1.442695
      %v3053 = vpow.pop %v3052
      %v3054 = vmul.f32 %v2993, 1.442695
      %v3055 = vpow.pop %v3054
      %v3056 = vmul.f32 %v2994, 1.442695
      %v3057 = vpow.pop %v3056
      %v3058 = vmul.f32 %v2995, 1.442695
      %v3059 = vpow.pop %v3058
      %v3060 = vsel %vm685, %v2997, 0.0
      %3061 = vadd.xlane.f32.xlu0 %v3060
      %v3062 = vpop.xlane.xlu0 %3061
      %v3063 = vsel %vm685, %v2999, 0.0
      %3064 = vadd.xlane.f32.xlu0 %v3063
      %v3065 = vpop.xlane.xlu0 %3064
      %v3066 = vsel %vm685, %v3001, 0.0
      %3067 = vadd.xlane.f32.xlu0 %v3066
      %v3068 = vpop.xlane.xlu0 %3067
      %v3069 = vsel %vm685, %v3003, 0.0
      %3070 = vadd.xlane.f32.xlu0 %v3069
      %v3071 = vpop.xlane.xlu0 %3070
      %v3072 = vsel %vm685, %v3005, 0.0
      %3073 = vadd.xlane.f32.xlu0 %v3072
      %v3074 = vpop.xlane.xlu0 %3073
      %v3075 = vsel %vm685, %v3007, 0.0
      %3076 = vadd.xlane.f32.xlu0 %v3075
      %v3077 = vpop.xlane.xlu0 %3076
      %v3078 = vsel %vm685, %v3009, 0.0
      %3079 = vadd.xlane.f32.xlu0 %v3078
      %v3080 = vpop.xlane.xlu0 %3079
      %v3081 = vsel %vm685, %v3011, 0.0
      %3082 = vadd.xlane.f32.xlu0 %v3081
      %v3083 = vpop.xlane.xlu0 %3082
      %v3084 = vsel %vm685, %v3013, 0.0
      %3085 = vadd.xlane.f32.xlu0 %v3084
      %v3086 = vpop.xlane.xlu0 %3085
      %v3087 = vsel %vm685, %v3015, 0.0
      %3088 = vadd.xlane.f32.xlu0 %v3087
      %v3089 = vpop.xlane.xlu0 %3088
      %v3090 = vsel %vm685, %v3017, 0.0
      %3091 = vadd.xlane.f32.xlu0 %v3090
      %v3092 = vpop.xlane.xlu0 %3091
      %v3093 = vsel %vm685, %v3019, 0.0
      %3094 = vadd.xlane.f32.xlu0 %v3093
      %v3095 = vpop.xlane.xlu0 %3094
      %v3096 = vsel %vm685, %v3021, 0.0
      %3097 = vadd.xlane.f32.xlu0 %v3096
      %v3098 = vpop.xlane.xlu0 %3097
      %v3099 = vsel %vm685, %v3023, 0.0
      %3100 = vadd.xlane.f32.xlu0 %v3099
      %v3101 = vpop.xlane.xlu0 %3100
      %v3102 = vsel %vm685, %v3025, 0.0
      %3103 = vadd.xlane.f32.xlu0 %v3102
      %v3104 = vpop.xlane.xlu0 %3103
      %v3105 = vsel %vm685, %v3027, 0.0
      %3106 = vadd.xlane.f32.xlu0 %v3105
      %v3107 = vpop.xlane.xlu0 %3106
      %v3108 = vsel %vm685, %v3029, 0.0
      %3109 = vadd.xlane.f32.xlu0 %v3108
      %v3110 = vpop.xlane.xlu0 %3109
      %v3111 = vsel %vm685, %v3031, 0.0
      %3112 = vadd.xlane.f32.xlu0 %v3111
      %v3113 = vpop.xlane.xlu0 %3112
      %v3114 = vsel %vm685, %v3033, 0.0
      %3115 = vadd.xlane.f32.xlu0 %v3114
      %v3116 = vpop.xlane.xlu0 %3115
      %v3117 = vsel %vm685, %v3035, 0.0
      %3118 = vadd.xlane.f32.xlu0 %v3117
      %v3119 = vpop.xlane.xlu0 %3118
      %v3120 = vsel %vm685, %v3037, 0.0
      %3121 = vadd.xlane.f32.xlu0 %v3120
      %v3122 = vpop.xlane.xlu0 %3121
      %v3123 = vsel %vm685, %v3039, 0.0
      %3124 = vadd.xlane.f32.xlu0 %v3123
      %v3125 = vpop.xlane.xlu0 %3124
      %v3126 = vsel %vm685, %v3041, 0.0
      %3127 = vadd.xlane.f32.xlu0 %v3126
      %v3128 = vpop.xlane.xlu0 %3127
      %v3129 = vsel %vm685, %v3043, 0.0
      %3130 = vadd.xlane.f32.xlu0 %v3129
      %v3131 = vpop.xlane.xlu0 %3130
      %v3132 = vsel %vm685, %v3045, 0.0
      %3133 = vadd.xlane.f32.xlu0 %v3132
      %v3134 = vpop.xlane.xlu0 %3133
      %v3135 = vsel %vm685, %v3047, 0.0
      %3136 = vadd.xlane.f32.xlu0 %v3135
      %v3137 = vpop.xlane.xlu0 %3136
      %v3138 = vsel %vm685, %v3049, 0.0
      %3139 = vadd.xlane.f32.xlu0 %v3138
      %v3140 = vpop.xlane.xlu0 %3139
      %v3141 = vsel %vm685, %v3051, 0.0
      %3142 = vadd.xlane.f32.xlu0 %v3141
      %v3143 = vpop.xlane.xlu0 %3142
      %v3144 = vsel %vm685, %v3053, 0.0
      %3145 = vadd.xlane.f32.xlu0 %v3144
      %v3146 = vpop.xlane.xlu0 %3145
      %v3147 = vsel %vm685, %v3055, 0.0
      %3148 = vadd.xlane.f32.xlu0 %v3147
      %v3149 = vpop.xlane.xlu0 %3148
      %v3150 = vsel %vm685, %v3057, 0.0
      %3151 = vadd.xlane.f32.xlu0 %v3150
      %v3152 = vpop.xlane.xlu0 %3151
      %v3153 = vsel %vm685, %v3059, 0.0
      %3154 = vadd.xlane.f32.xlu0 %v3153
      %v3155 = vpop.xlane.xlu0 %3154
      %v3156 = vrcp.pop %v3062
      %v3157 = vrcp.pop %v3065
      %v3158 = vrcp.pop %v3068
      %v3159 = vrcp.pop %v3071
      %v3160 = vrcp.pop %v3074
      %v3161 = vrcp.pop %v3077
      %v3162 = vrcp.pop %v3080
      %v3163 = vrcp.pop %v3083
      %v3164 = vrcp.pop %v3086
      %v3165 = vrcp.pop %v3089
      %v3166 = vrcp.pop %v3092
      %v3167 = vrcp.pop %v3095
      %v3168 = vrcp.pop %v3098
      %v3169 = vrcp.pop %v3101
      %v3170 = vrcp.pop %v3104
      %v3171 = vrcp.pop %v3107
      %v3172 = vrcp.pop %v3110
      %v3173 = vrcp.pop %v3113
      %v3174 = vrcp.pop %v3116
      %v3175 = vrcp.pop %v3119
      %v3176 = vrcp.pop %v3122
      %v3177 = vrcp.pop %v3125
      %v3178 = vrcp.pop %v3128
      %v3179 = vrcp.pop %v3131
      %v3180 = vrcp.pop %v3134
      %v3181 = vrcp.pop %v3137
      %v3182 = vrcp.pop %v3140
      %v3183 = vrcp.pop %v3143
      %v3184 = vrcp.pop %v3146
      %v3185 = vrcp.pop %v3149
      %v3186 = vrcp.pop %v3152
      %v3187 = vrcp.pop %v3155
      %v3188 = vmul.f32 %v2997, %v3156
      %v3189 = vmul.f32 %v2999, %v3157
      %v3190 = vmul.f32 %v3001, %v3158
      %v3191 = vmul.f32 %v3003, %v3159
      %v3192 = vmul.f32 %v3005, %v3160
      %v3193 = vmul.f32 %v3007, %v3161
      %v3194 = vmul.f32 %v3009, %v3162
      %v3195 = vmul.f32 %v3011, %v3163
      %v3196 = vmul.f32 %v3013, %v3164
      %v3197 = vmul.f32 %v3015, %v3165
      %v3198 = vmul.f32 %v3017, %v3166
      %v3199 = vmul.f32 %v3019, %v3167
      %v3200 = vmul.f32 %v3021, %v3168
      %v3201 = vmul.f32 %v3023, %v3169
      %v3202 = vmul.f32 %v3025, %v3170
      %v3203 = vmul.f32 %v3027, %v3171
      %v3204 = vmul.f32 %v3029, %v3172
      %v3205 = vmul.f32 %v3031, %v3173
      %v3206 = vmul.f32 %v3033, %v3174
      %v3207 = vmul.f32 %v3035, %v3175
      %v3208 = vmul.f32 %v3037, %v3176
      %v3209 = vmul.f32 %v3039, %v3177
      %v3210 = vmul.f32 %v3041, %v3178
      %v3211 = vmul.f32 %v3043, %v3179
      %v3212 = vmul.f32 %v3045, %v3180
      %v3213 = vmul.f32 %v3047, %v3181
      %v3214 = vmul.f32 %v3049, %v3182
      %v3215 = vmul.f32 %v3051, %v3183
      %v3216 = vmul.f32 %v3053, %v3184
      %v3217 = vmul.f32 %v3055, %v3185
      %v3218 = vmul.f32 %v3057, %v3186
      %v3219 = vmul.f32 %v3059, %v3187
      %v3220 = vpack.c.bf16 %v3188, %v3188
      %v3221 = vpack.c.bf16 %v3189, %v3189
      %v3222 = vpack.c.bf16 %v3190, %v3190
      %v3223 = vpack.c.bf16 %v3191, %v3191
      %v3224 = vpack.c.bf16 %v3192, %v3192
      %v3225 = vpack.c.bf16 %v3193, %v3193
      %v3226 = vpack.c.bf16 %v3194, %v3194
      %v3227 = vpack.c.bf16 %v3195, %v3195
      %v3228 = vpack.c.bf16 %v3196, %v3196
      %v3229 = vpack.c.bf16 %v3197, %v3197
      %v3230 = vpack.c.bf16 %v3198, %v3198
      %v3231 = vpack.c.bf16 %v3199, %v3199
      %v3232 = vpack.c.bf16 %v3200, %v3200
      %v3233 = vpack.c.bf16 %v3201, %v3201
      %v3234 = vpack.c.bf16 %v3202, %v3202
      %v3235 = vpack.c.bf16 %v3203, %v3203
      %v3236 = vpack.c.bf16 %v3204, %v3204
      %v3237 = vpack.c.bf16 %v3205, %v3205
      %v3238 = vpack.c.bf16 %v3206, %v3206
      %v3239 = vpack.c.bf16 %v3207, %v3207
      %v3240 = vpack.c.bf16 %v3208, %v3208
      %v3241 = vpack.c.bf16 %v3209, %v3209
      %v3242 = vpack.c.bf16 %v3210, %v3210
      %v3243 = vpack.c.bf16 %v3211, %v3211
      %v3244 = vpack.c.bf16 %v3212, %v3212
      %v3245 = vpack.c.bf16 %v3213, %v3213
      %v3246 = vpack.c.bf16 %v3214, %v3214
      %v3247 = vpack.c.bf16 %v3215, %v3215
      %v3248 = vpack.c.bf16 %v3216, %v3216
      %v3249 = vpack.c.bf16 %v3217, %v3217
      %v3250 = vpack.c.bf16 %v3218, %v3218
      %v3251 = vpack.c.bf16 %v3219, %v3219
      %v3254 = vunpack.c.l.b16 %v3220
      %v3255 = vunpack.c.l.b16 %v3221
      %v3256 = vpack.c.b16 %v3255, %v3254
      %3257 = vrot.lane.b32.xlu0 %v2029, 124
      %v3258 = vpop.permute.xlu0 %3257
      %v3261 = vsel %vm685, %v3256, 0
      %3263 = vmatpush.bf16.msra.mxu0 0
      %3264 = vmatpush.bf16.msra.mxu0 0
      %3265 = vmatpush.bf16.msra.mxu0 0
      %3266 = vmatpush.bf16.msra.mxu0 0
      %3267 = vmatpush.bf16.msra.mxu0 0
      %3268 = vmatpush.bf16.msra.mxu0 0
      %3269 = vmatpush.bf16.msra.mxu0 0
      %3270 = vmatpush.bf16.msra.mxu0 %v3258
      %3271 = vmatmul.bf16.gmra.mxu0 %v3261
      %v3272 = vpop.f32.mrf.mxu0
      %v3273 = vadd.f32 0.0, %v3272
      %v3274 = vpop.f32.mrf.mxu0
      %v3275 = vadd.f32 0.0, %v3274
      %3276 = vdwg.mxu0
      %v3279 = vunpack.c.l.b16 %v3222
      %v3280 = vunpack.c.l.b16 %v3223
      %v3281 = vpack.c.b16 %v3280, %v3279
      %3282 = vrot.lane.b32.xlu0 %v2057, 124
      %v3283 = vpop.permute.xlu0 %3282
      %v3286 = vsel %vm685, %v3281, 0
      %3288 = vmatpush.bf16.msra.mxu0 0
      %3289 = vmatpush.bf16.msra.mxu0 0
      %3290 = vmatpush.bf16.msra.mxu0 0
      %3291 = vmatpush.bf16.msra.mxu0 0
      %3292 = vmatpush.bf16.msra.mxu0 0
      %3293 = vmatpush.bf16.msra.mxu0 0
      %3294 = vmatpush.bf16.msra.mxu0 0
      %3295 = vmatpush.bf16.msra.mxu0 %v3283
      %3296 = vmatmul.bf16.gmra.mxu0 %v3286
      %v3297 = vpop.f32.mrf.mxu0
      %v3298 = vadd.f32 0.0, %v3297
      %v3299 = vpop.f32.mrf.mxu0
      %v3300 = vadd.f32 0.0, %v3299
      %3301 = vdwg.mxu0
      %v3304 = vunpack.c.l.b16 %v3224
      %v3305 = vunpack.c.l.b16 %v3225
      %v3306 = vpack.c.b16 %v3305, %v3304
      %3307 = vrot.lane.b32.xlu0 %v2085, 124
      %v3308 = vpop.permute.xlu0 %3307
      %v3311 = vsel %vm685, %v3306, 0
      %3313 = vmatpush.bf16.msra.mxu0 0
      %3314 = vmatpush.bf16.msra.mxu0 0
      %3315 = vmatpush.bf16.msra.mxu0 0
      %3316 = vmatpush.bf16.msra.mxu0 0
      %3317 = vmatpush.bf16.msra.mxu0 0
      %3318 = vmatpush.bf16.msra.mxu0 0
      %3319 = vmatpush.bf16.msra.mxu0 0
      %3320 = vmatpush.bf16.msra.mxu0 %v3308
      %3321 = vmatmul.bf16.gmra.mxu0 %v3311
      %v3322 = vpop.f32.mrf.mxu0
      %v3323 = vadd.f32 0.0, %v3322
      %v3324 = vpop.f32.mrf.mxu0
      %v3325 = vadd.f32 0.0, %v3324
      %3326 = vdwg.mxu0
      %v3329 = vunpack.c.l.b16 %v3226
      %v3330 = vunpack.c.l.b16 %v3227
      %v3331 = vpack.c.b16 %v3330, %v3329
      %3332 = vrot.lane.b32.xlu0 %v2113, 124
      %v3333 = vpop.permute.xlu0 %3332
      %v3336 = vsel %vm685, %v3331, 0
      %3338 = vmatpush.bf16.msra.mxu0 0
      %3339 = vmatpush.bf16.msra.mxu0 0
      %3340 = vmatpush.bf16.msra.mxu0 0
      %3341 = vmatpush.bf16.msra.mxu0 0
      %3342 = vmatpush.bf16.msra.mxu0 0
      %3343 = vmatpush.bf16.msra.mxu0 0
      %3344 = vmatpush.bf16.msra.mxu0 0
      %3345 = vmatpush.bf16.msra.mxu0 %v3333
      %3346 = vmatmul.bf16.gmra.mxu0 %v3336
      %v3347 = vpop.f32.mrf.mxu0
      %v3348 = vadd.f32 0.0, %v3347
      %v3349 = vpop.f32.mrf.mxu0
      %v3350 = vadd.f32 0.0, %v3349
      %3351 = vdwg.mxu0
      %v3354 = vunpack.c.l.b16 %v3228
      %v3355 = vunpack.c.l.b16 %v3229
      %v3356 = vpack.c.b16 %v3355, %v3354
      %3357 = vrot.lane.b32.xlu0 %v2141, 124
      %v3358 = vpop.permute.xlu0 %3357
      %v3361 = vsel %vm685, %v3356, 0
      %3363 = vmatpush.bf16.msra.mxu0 0
      %3364 = vmatpush.bf16.msra.mxu0 0
      %3365 = vmatpush.bf16.msra.mxu0 0
      %3366 = vmatpush.bf16.msra.mxu0 0
      %3367 = vmatpush.bf16.msra.mxu0 0
      %3368 = vmatpush.bf16.msra.mxu0 0
      %3369 = vmatpush.bf16.msra.mxu0 0
      %3370 = vmatpush.bf16.msra.mxu0 %v3358
      %3371 = vmatmul.bf16.gmra.mxu0 %v3361
      %v3372 = vpop.f32.mrf.mxu0
      %v3373 = vadd.f32 0.0, %v3372
      %v3374 = vpop.f32.mrf.mxu0
      %v3375 = vadd.f32 0.0, %v3374
      %3376 = vdwg.mxu0
      %v3379 = vunpack.c.l.b16 %v3230
      %v3380 = vunpack.c.l.b16 %v3231
      %v3381 = vpack.c.b16 %v3380, %v3379
      %3382 = vrot.lane.b32.xlu0 %v2169, 124
      %v3383 = vpop.permute.xlu0 %3382
      %v3386 = vsel %vm685, %v3381, 0
      %3388 = vmatpush.bf16.msra.mxu0 0
      %3389 = vmatpush.bf16.msra.mxu0 0
      %3390 = vmatpush.bf16.msra.mxu0 0
      %3391 = vmatpush.bf16.msra.mxu0 0
      %3392 = vmatpush.bf16.msra.mxu0 0
      %3393 = vmatpush.bf16.msra.mxu0 0
      %3394 = vmatpush.bf16.msra.mxu0 0
      %3395 = vmatpush.bf16.msra.mxu0 %v3383
      %3396 = vmatmul.bf16.gmra.mxu0 %v3386
      %v3397 = vpop.f32.mrf.mxu0
      %v3398 = vadd.f32 0.0, %v3397
      %v3399 = vpop.f32.mrf.mxu0
      %v3400 = vadd.f32 0.0, %v3399
      %3401 = vdwg.mxu0
      %v3404 = vunpack.c.l.b16 %v3232
      %v3405 = vunpack.c.l.b16 %v3233
      %v3406 = vpack.c.b16 %v3405, %v3404
      %3407 = vrot.lane.b32.xlu0 %v2197, 124
      %v3408 = vpop.permute.xlu0 %3407
      %v3411 = vsel %vm685, %v3406, 0
      %3413 = vmatpush.bf16.msra.mxu0 0
      %3414 = vmatpush.bf16.msra.mxu0 0
      %3415 = vmatpush.bf16.msra.mxu0 0
      %3416 = vmatpush.bf16.msra.mxu0 0
      %3417 = vmatpush.bf16.msra.mxu0 0
      %3418 = vmatpush.bf16.msra.mxu0 0
      %3419 = vmatpush.bf16.msra.mxu0 0
      %3420 = vmatpush.bf16.msra.mxu0 %v3408
      %3421 = vmatmul.bf16.gmra.mxu0 %v3411
      %v3422 = vpop.f32.mrf.mxu0
      %v3423 = vadd.f32 0.0, %v3422
      %v3424 = vpop.f32.mrf.mxu0
      %v3425 = vadd.f32 0.0, %v3424
      %3426 = vdwg.mxu0
      %v3429 = vunpack.c.l.b16 %v3234
      %v3430 = vunpack.c.l.b16 %v3235
      %v3431 = vpack.c.b16 %v3430, %v3429
      %3432 = vrot.lane.b32.xlu0 %v2225, 124
      %v3433 = vpop.permute.xlu0 %3432
      %v3436 = vsel %vm685, %v3431, 0
      %3438 = vmatpush.bf16.msra.mxu0 0
      %3439 = vmatpush.bf16.msra.mxu0 0
      %3440 = vmatpush.bf16.msra.mxu0 0
      %3441 = vmatpush.bf16.msra.mxu0 0
      %3442 = vmatpush.bf16.msra.mxu0 0
      %3443 = vmatpush.bf16.msra.mxu0 0
      %3444 = vmatpush.bf16.msra.mxu0 0
      %3445 = vmatpush.bf16.msra.mxu0 %v3433
      %3446 = vmatmul.bf16.gmra.mxu0 %v3436
      %v3447 = vpop.f32.mrf.mxu0
      %v3448 = vadd.f32 0.0, %v3447
      %v3449 = vpop.f32.mrf.mxu0
      %v3450 = vadd.f32 0.0, %v3449
      %3451 = vdwg.mxu0
      %v3454 = vunpack.c.l.b16 %v3236
      %v3455 = vunpack.c.l.b16 %v3237
      %v3456 = vpack.c.b16 %v3455, %v3454
      %3457 = vrot.lane.b32.xlu0 %v2253, 124
      %v3458 = vpop.permute.xlu0 %3457
      %v3461 = vsel %vm685, %v3456, 0
      %3463 = vmatpush.bf16.msra.mxu0 0
      %3464 = vmatpush.bf16.msra.mxu0 0
      %3465 = vmatpush.bf16.msra.mxu0 0
      %3466 = vmatpush.bf16.msra.mxu0 0
      %3467 = vmatpush.bf16.msra.mxu0 0
      %3468 = vmatpush.bf16.msra.mxu0 0
      %3469 = vmatpush.bf16.msra.mxu0 0
      %3470 = vmatpush.bf16.msra.mxu0 %v3458
      %3471 = vmatmul.bf16.gmra.mxu0 %v3461
      %v3472 = vpop.f32.mrf.mxu0
      %v3473 = vadd.f32 0.0, %v3472
      %v3474 = vpop.f32.mrf.mxu0
      %v3475 = vadd.f32 0.0, %v3474
      %3476 = vdwg.mxu0
      %v3479 = vunpack.c.l.b16 %v3238
      %v3480 = vunpack.c.l.b16 %v3239
      %v3481 = vpack.c.b16 %v3480, %v3479
      %3482 = vrot.lane.b32.xlu0 %v2281, 124
      %v3483 = vpop.permute.xlu0 %3482
      %v3486 = vsel %vm685, %v3481, 0
      %3488 = vmatpush.bf16.msra.mxu0 0
      %3489 = vmatpush.bf16.msra.mxu0 0
      %3490 = vmatpush.bf16.msra.mxu0 0
      %3491 = vmatpush.bf16.msra.mxu0 0
      %3492 = vmatpush.bf16.msra.mxu0 0
      %3493 = vmatpush.bf16.msra.mxu0 0
      %3494 = vmatpush.bf16.msra.mxu0 0
      %3495 = vmatpush.bf16.msra.mxu0 %v3483
      %3496 = vmatmul.bf16.gmra.mxu0 %v3486
      %v3497 = vpop.f32.mrf.mxu0
      %v3498 = vadd.f32 0.0, %v3497
      %v3499 = vpop.f32.mrf.mxu0
      %v3500 = vadd.f32 0.0, %v3499
      %3501 = vdwg.mxu0
      %v3504 = vunpack.c.l.b16 %v3240
      %v3505 = vunpack.c.l.b16 %v3241
      %v3506 = vpack.c.b16 %v3505, %v3504
      %3507 = vrot.lane.b32.xlu0 %v2309, 124
      %v3508 = vpop.permute.xlu0 %3507
      %v3511 = vsel %vm685, %v3506, 0
      %3513 = vmatpush.bf16.msra.mxu0 0
      %3514 = vmatpush.bf16.msra.mxu0 0
      %3515 = vmatpush.bf16.msra.mxu0 0
      %3516 = vmatpush.bf16.msra.mxu0 0
      %3517 = vmatpush.bf16.msra.mxu0 0
      %3518 = vmatpush.bf16.msra.mxu0 0
      %3519 = vmatpush.bf16.msra.mxu0 0
      %3520 = vmatpush.bf16.msra.mxu0 %v3508
      %3521 = vmatmul.bf16.gmra.mxu0 %v3511
      %v3522 = vpop.f32.mrf.mxu0
      %v3523 = vadd.f32 0.0, %v3522
      %v3524 = vpop.f32.mrf.mxu0
      %v3525 = vadd.f32 0.0, %v3524
      %3526 = vdwg.mxu0
      %v3529 = vunpack.c.l.b16 %v3242
      %v3530 = vunpack.c.l.b16 %v3243
      %v3531 = vpack.c.b16 %v3530, %v3529
      %3532 = vrot.lane.b32.xlu0 %v2337, 124
      %v3533 = vpop.permute.xlu0 %3532
      %v3536 = vsel %vm685, %v3531, 0
      %3538 = vmatpush.bf16.msra.mxu0 0
      %3539 = vmatpush.bf16.msra.mxu0 0
      %3540 = vmatpush.bf16.msra.mxu0 0
      %3541 = vmatpush.bf16.msra.mxu0 0
      %3542 = vmatpush.bf16.msra.mxu0 0
      %3543 = vmatpush.bf16.msra.mxu0 0
      %3544 = vmatpush.bf16.msra.mxu0 0
      %3545 = vmatpush.bf16.msra.mxu0 %v3533
      %3546 = vmatmul.bf16.gmra.mxu0 %v3536
      %v3547 = vpop.f32.mrf.mxu0
      %v3548 = vadd.f32 0.0, %v3547
      %v3549 = vpop.f32.mrf.mxu0
      %v3550 = vadd.f32 0.0, %v3549
      %3551 = vdwg.mxu0
      %v3554 = vunpack.c.l.b16 %v3244
      %v3555 = vunpack.c.l.b16 %v3245
      %v3556 = vpack.c.b16 %v3555, %v3554
      %3557 = vrot.lane.b32.xlu0 %v2365, 124
      %v3558 = vpop.permute.xlu0 %3557
      %v3561 = vsel %vm685, %v3556, 0
      %3563 = vmatpush.bf16.msra.mxu0 0
      %3564 = vmatpush.bf16.msra.mxu0 0
      %3565 = vmatpush.bf16.msra.mxu0 0
      %3566 = vmatpush.bf16.msra.mxu0 0
      %3567 = vmatpush.bf16.msra.mxu0 0
      %3568 = vmatpush.bf16.msra.mxu0 0
      %3569 = vmatpush.bf16.msra.mxu0 0
      %3570 = vmatpush.bf16.msra.mxu0 %v3558
      %3571 = vmatmul.bf16.gmra.mxu0 %v3561
      %v3572 = vpop.f32.mrf.mxu0
      %v3573 = vadd.f32 0.0, %v3572
      %v3574 = vpop.f32.mrf.mxu0
      %v3575 = vadd.f32 0.0, %v3574
      %3576 = vdwg.mxu0
      %v3579 = vunpack.c.l.b16 %v3246
      %v3580 = vunpack.c.l.b16 %v3247
      %v3581 = vpack.c.b16 %v3580, %v3579
      %3582 = vrot.lane.b32.xlu0 %v2393, 124
      %v3583 = vpop.permute.xlu0 %3582
      %v3586 = vsel %vm685, %v3581, 0
      %3588 = vmatpush.bf16.msra.mxu0 0
      %3589 = vmatpush.bf16.msra.mxu0 0
      %3590 = vmatpush.bf16.msra.mxu0 0
      %3591 = vmatpush.bf16.msra.mxu0 0
      %3592 = vmatpush.bf16.msra.mxu0 0
      %3593 = vmatpush.bf16.msra.mxu0 0
      %3594 = vmatpush.bf16.msra.mxu0 0
      %3595 = vmatpush.bf16.msra.mxu0 %v3583
      %3596 = vmatmul.bf16.gmra.mxu0 %v3586
      %v3597 = vpop.f32.mrf.mxu0
      %v3598 = vadd.f32 0.0, %v3597
      %v3599 = vpop.f32.mrf.mxu0
      %v3600 = vadd.f32 0.0, %v3599
      %3601 = vdwg.mxu0
      %v3604 = vunpack.c.l.b16 %v3248
      %v3605 = vunpack.c.l.b16 %v3249
      %v3606 = vpack.c.b16 %v3605, %v3604
      %3607 = vrot.lane.b32.xlu0 %v2421, 124
      %v3608 = vpop.permute.xlu0 %3607
      %v3611 = vsel %vm685, %v3606, 0
      %3613 = vmatpush.bf16.msra.mxu0 0
      %3614 = vmatpush.bf16.msra.mxu0 0
      %3615 = vmatpush.bf16.msra.mxu0 0
      %3616 = vmatpush.bf16.msra.mxu0 0
      %3617 = vmatpush.bf16.msra.mxu0 0
      %3618 = vmatpush.bf16.msra.mxu0 0
      %3619 = vmatpush.bf16.msra.mxu0 0
      %3620 = vmatpush.bf16.msra.mxu0 %v3608
      %3621 = vmatmul.bf16.gmra.mxu0 %v3611
      %v3622 = vpop.f32.mrf.mxu0
      %v3623 = vadd.f32 0.0, %v3622
      %v3624 = vpop.f32.mrf.mxu0
      %v3625 = vadd.f32 0.0, %v3624
      %3626 = vdwg.mxu0
      %v3629 = vunpack.c.l.b16 %v3250
      %v3630 = vunpack.c.l.b16 %v3251
      %v3631 = vpack.c.b16 %v3630, %v3629
      %3632 = vrot.lane.b32.xlu0 %v2449, 124
      %v3633 = vpop.permute.xlu0 %3632
      %v3636 = vsel %vm685, %v3631, 0
      %3638 = vmatpush.bf16.msra.mxu0 0
      %3639 = vmatpush.bf16.msra.mxu0 0
      %3640 = vmatpush.bf16.msra.mxu0 0
      %3641 = vmatpush.bf16.msra.mxu0 0
      %3642 = vmatpush.bf16.msra.mxu0 0
      %3643 = vmatpush.bf16.msra.mxu0 0
      %3644 = vmatpush.bf16.msra.mxu0 0
      %3645 = vmatpush.bf16.msra.mxu0 %v3633
      %3646 = vmatmul.bf16.gmra.mxu0 %v3636
      %v3647 = vpop.f32.mrf.mxu0
      %v3648 = vadd.f32 0.0, %v3647
      %v3649 = vpop.f32.mrf.mxu0
      %v3650 = vadd.f32 0.0, %v3649
      %3651 = vdwg.mxu0
      %v3652 = vpack.c.bf16 %v3275, %v3273
      %v3653 = vpack.c.bf16 %v3300, %v3298
      %v3654 = vpack.c.bf16 %v3325, %v3323
      %v3655 = vpack.c.bf16 %v3350, %v3348
      %v3656 = vpack.c.bf16 %v3375, %v3373
      %v3657 = vpack.c.bf16 %v3400, %v3398
      %v3658 = vpack.c.bf16 %v3425, %v3423
      %v3659 = vpack.c.bf16 %v3450, %v3448
      %v3660 = vpack.c.bf16 %v3475, %v3473
      %v3661 = vpack.c.bf16 %v3500, %v3498
      %v3662 = vpack.c.bf16 %v3525, %v3523
      %v3663 = vpack.c.bf16 %v3550, %v3548
      %v3664 = vpack.c.bf16 %v3575, %v3573
      %v3665 = vpack.c.bf16 %v3600, %v3598
      %v3666 = vpack.c.bf16 %v3625, %v3623
      %v3667 = vpack.c.bf16 %v3650, %v3648
      %v3669 = vunpack.c.l.b16 %v1153
      %v3670 = vpack.c.b16 %v3669, %v3669
      %v3671 = vrot.slane %v3670, 2
      %v3673 = vsel %vm1165, %v3652, 0
      %v3676 = vsel %vm1165, %v3653, 0
      %v3679 = vsel %vm1165, %v3654, 0
      %v3682 = vsel %vm1165, %v3655, 0
      %v3685 = vsel %vm1165, %v3656, 0
      %v3688 = vsel %vm1165, %v3657, 0
      %v3691 = vsel %vm1165, %v3658, 0
      %v3694 = vsel %vm1165, %v3659, 0
      %v3697 = vsel %vm1165, %v3660, 0
      %v3700 = vsel %vm1165, %v3661, 0
      %v3703 = vsel %vm1165, %v3662, 0
      %v3706 = vsel %vm1165, %v3663, 0
      %v3709 = vsel %vm1165, %v3664, 0
      %v3712 = vsel %vm1165, %v3665, 0
      %v3715 = vsel %vm1165, %v3666, 0
      %v3718 = vsel %vm1165, %v3667, 0
      %vm3720 = vcmask 1041408
      %v3722 = vsel %vm3720, %v3671, 0
      %3724 = vmatpush.bf16.msra.mxu0 0
      %3725 = vmatpush.bf16.msra.mxu0 0
      %3726 = vmatpush.bf16.msra.mxu0 0
      %3727 = vmatpush.bf16.msra.mxu0 0
      %3728 = vmatpush.bf16.msra.mxu0 0
      %3729 = vmatpush.bf16.msra.mxu0 0
      %3730 = vmatpush.bf16.msra.mxu0 0
      %3731 = vmatpush.bf16.msra.mxu0 %v3722
      %3732 = vmatmul.bf16.gmra.mxu0 %v3673
      %v3733 = vpop.f32.mrf.mxu0
      %v3734 = vadd.f32 0.0, %v3733
      %v3735 = vpop.f32.mrf.mxu0
      %v3736 = vadd.f32 0.0, %v3735
      %3737 = vmatmul.bf16.gmra.mxu0 %v3676
      %v3738 = vpop.f32.mrf.mxu0
      %v3739 = vadd.f32 0.0, %v3738
      %v3740 = vpop.f32.mrf.mxu0
      %v3741 = vadd.f32 0.0, %v3740
      %3742 = vmatmul.bf16.gmra.mxu0 %v3679
      %v3743 = vpop.f32.mrf.mxu0
      %v3744 = vadd.f32 0.0, %v3743
      %v3745 = vpop.f32.mrf.mxu0
      %v3746 = vadd.f32 0.0, %v3745
      %3747 = vmatmul.bf16.gmra.mxu0 %v3682
      %v3748 = vpop.f32.mrf.mxu0
      %v3749 = vadd.f32 0.0, %v3748
      %v3750 = vpop.f32.mrf.mxu0
      %v3751 = vadd.f32 0.0, %v3750
      %3752 = vmatmul.bf16.gmra.mxu0 %v3685
      %v3753 = vpop.f32.mrf.mxu0
      %v3754 = vadd.f32 0.0, %v3753
      %v3755 = vpop.f32.mrf.mxu0
      %v3756 = vadd.f32 0.0, %v3755
      %3757 = vmatmul.bf16.gmra.mxu0 %v3688
      %v3758 = vpop.f32.mrf.mxu0
      %v3759 = vadd.f32 0.0, %v3758
      %v3760 = vpop.f32.mrf.mxu0
      %v3761 = vadd.f32 0.0, %v3760
      %3762 = vmatmul.bf16.gmra.mxu0 %v3691
      %v3763 = vpop.f32.mrf.mxu0
      %v3764 = vadd.f32 0.0, %v3763
      %v3765 = vpop.f32.mrf.mxu0
      %v3766 = vadd.f32 0.0, %v3765
      %3767 = vmatmul.bf16.gmra.mxu0 %v3694
      %v3768 = vpop.f32.mrf.mxu0
      %v3769 = vadd.f32 0.0, %v3768
      %v3770 = vpop.f32.mrf.mxu0
      %v3771 = vadd.f32 0.0, %v3770
      %3772 = vmatmul.bf16.gmra.mxu0 %v3697
      %v3773 = vpop.f32.mrf.mxu0
      %v3774 = vadd.f32 0.0, %v3773
      %v3775 = vpop.f32.mrf.mxu0
      %v3776 = vadd.f32 0.0, %v3775
      %3777 = vmatmul.bf16.gmra.mxu0 %v3700
      %v3778 = vpop.f32.mrf.mxu0
      %v3779 = vadd.f32 0.0, %v3778
      %v3780 = vpop.f32.mrf.mxu0
      %v3781 = vadd.f32 0.0, %v3780
      %3782 = vmatmul.bf16.gmra.mxu0 %v3703
      %v3783 = vpop.f32.mrf.mxu0
      %v3784 = vadd.f32 0.0, %v3783
      %v3785 = vpop.f32.mrf.mxu0
      %v3786 = vadd.f32 0.0, %v3785
      %3787 = vmatmul.bf16.gmra.mxu0 %v3706
      %v3788 = vpop.f32.mrf.mxu0
      %v3789 = vadd.f32 0.0, %v3788
      %v3790 = vpop.f32.mrf.mxu0
      %v3791 = vadd.f32 0.0, %v3790
      %3792 = vmatmul.bf16.gmra.mxu0 %v3709
      %v3793 = vpop.f32.mrf.mxu0
      %v3794 = vadd.f32 0.0, %v3793
      %v3795 = vpop.f32.mrf.mxu0
      %v3796 = vadd.f32 0.0, %v3795
      %3797 = vmatmul.bf16.gmra.mxu0 %v3712
      %v3798 = vpop.f32.mrf.mxu0
      %v3799 = vadd.f32 0.0, %v3798
      %v3800 = vpop.f32.mrf.mxu0
      %v3801 = vadd.f32 0.0, %v3800
      %3802 = vmatmul.bf16.gmra.mxu0 %v3715
      %v3803 = vpop.f32.mrf.mxu0
      %v3804 = vadd.f32 0.0, %v3803
      %v3805 = vpop.f32.mrf.mxu0
      %v3806 = vadd.f32 0.0, %v3805
      %3807 = vmatmul.bf16.gmra.mxu0 %v3718
      %v3808 = vpop.f32.mrf.mxu0
      %v3809 = vadd.f32 0.0, %v3808
      %v3810 = vpop.f32.mrf.mxu0
      %v3811 = vadd.f32 0.0, %v3810
      %3812 = vdwg.mxu0
      %v3814 = vsel %vm1165, %v2468, 0
      %v3817 = vsel %vm1165, %v2469, 0
      %v3820 = vsel %vm1165, %v2470, 0
      %v3823 = vsel %vm1165, %v2471, 0
      %v3826 = vsel %vm1165, %v2472, 0
      %v3829 = vsel %vm1165, %v2473, 0
      %v3832 = vsel %vm1165, %v2474, 0
      %v3835 = vsel %vm1165, %v2475, 0
      %v3838 = vsel %vm1165, %v2476, 0
      %v3841 = vsel %vm1165, %v2477, 0
      %v3844 = vsel %vm1165, %v2478, 0
      %v3847 = vsel %vm1165, %v2479, 0
      %v3850 = vsel %vm1165, %v2480, 0
      %v3853 = vsel %vm1165, %v2481, 0
      %v3856 = vsel %vm1165, %v2482, 0
      %v3859 = vsel %vm1165, %v2483, 0
      %v3862 = vsel %vm3720, %v1153, 0
      %3864 = vmatpush.bf16.msra.mxu0 0
      %3865 = vmatpush.bf16.msra.mxu0 0
      %3866 = vmatpush.bf16.msra.mxu0 0
      %3867 = vmatpush.bf16.msra.mxu0 0
      %3868 = vmatpush.bf16.msra.mxu0 0
      %3869 = vmatpush.bf16.msra.mxu0 0
      %3870 = vmatpush.bf16.msra.mxu0 0
      %3871 = vmatpush.bf16.msra.mxu0 %v3862
      %3872 = vmatmul.bf16.gmra.mxu0 %v3814
      %v3873 = vpop.f32.mrf.mxu0
      %v3874 = vadd.f32 %v3734, %v3873
      %v3875 = vpop.f32.mrf.mxu0
      %v3876 = vadd.f32 %v3736, %v3875
      %3877 = vmatmul.bf16.gmra.mxu0 %v3817
      %v3878 = vpop.f32.mrf.mxu0
      %v3879 = vadd.f32 %v3739, %v3878
      %v3880 = vpop.f32.mrf.mxu0
      %v3881 = vadd.f32 %v3741, %v3880
      %3882 = vmatmul.bf16.gmra.mxu0 %v3820
      %v3883 = vpop.f32.mrf.mxu0
      %v3884 = vadd.f32 %v3744, %v3883
      %v3885 = vpop.f32.mrf.mxu0
      %v3886 = vadd.f32 %v3746, %v3885
      %3887 = vmatmul.bf16.gmra.mxu0 %v3823
      %v3888 = vpop.f32.mrf.mxu0
      %v3889 = vadd.f32 %v3749, %v3888
      %v3890 = vpop.f32.mrf.mxu0
      %v3891 = vadd.f32 %v3751, %v3890
      %3892 = vmatmul.bf16.gmra.mxu0 %v3826
      %v3893 = vpop.f32.mrf.mxu0
      %v3894 = vadd.f32 %v3754, %v3893
      %v3895 = vpop.f32.mrf.mxu0
      %v3896 = vadd.f32 %v3756, %v3895
      %3897 = vmatmul.bf16.gmra.mxu0 %v3829
      %v3898 = vpop.f32.mrf.mxu0
      %v3899 = vadd.f32 %v3759, %v3898
      %v3900 = vpop.f32.mrf.mxu0
      %v3901 = vadd.f32 %v3761, %v3900
      %3902 = vmatmul.bf16.gmra.mxu0 %v3832
      %v3903 = vpop.f32.mrf.mxu0
      %v3904 = vadd.f32 %v3764, %v3903
      %v3905 = vpop.f32.mrf.mxu0
      %v3906 = vadd.f32 %v3766, %v3905
      %3907 = vmatmul.bf16.gmra.mxu0 %v3835
      %v3908 = vpop.f32.mrf.mxu0
      %v3909 = vadd.f32 %v3769, %v3908
      %v3910 = vpop.f32.mrf.mxu0
      %v3911 = vadd.f32 %v3771, %v3910
      %3912 = vmatmul.bf16.gmra.mxu0 %v3838
      %v3913 = vpop.f32.mrf.mxu0
      %v3914 = vadd.f32 %v3774, %v3913
      %v3915 = vpop.f32.mrf.mxu0
      %v3916 = vadd.f32 %v3776, %v3915
      %3917 = vmatmul.bf16.gmra.mxu0 %v3841
      %v3918 = vpop.f32.mrf.mxu0
      %v3919 = vadd.f32 %v3779, %v3918
      %v3920 = vpop.f32.mrf.mxu0
      %v3921 = vadd.f32 %v3781, %v3920
      %3922 = vmatmul.bf16.gmra.mxu0 %v3844
      %v3923 = vpop.f32.mrf.mxu0
      %v3924 = vadd.f32 %v3784, %v3923
      %v3925 = vpop.f32.mrf.mxu0
      %v3926 = vadd.f32 %v3786, %v3925
      %3927 = vmatmul.bf16.gmra.mxu0 %v3847
      %v3928 = vpop.f32.mrf.mxu0
      %v3929 = vadd.f32 %v3789, %v3928
      %v3930 = vpop.f32.mrf.mxu0
      %v3931 = vadd.f32 %v3791, %v3930
      %3932 = vmatmul.bf16.gmra.mxu0 %v3850
      %v3933 = vpop.f32.mrf.mxu0
      %v3934 = vadd.f32 %v3794, %v3933
      %v3935 = vpop.f32.mrf.mxu0
      %v3936 = vadd.f32 %v3796, %v3935
      %3937 = vmatmul.bf16.gmra.mxu0 %v3853
      %v3938 = vpop.f32.mrf.mxu0
      %v3939 = vadd.f32 %v3799, %v3938
      %v3940 = vpop.f32.mrf.mxu0
      %v3941 = vadd.f32 %v3801, %v3940
      %3942 = vmatmul.bf16.gmra.mxu0 %v3856
      %v3943 = vpop.f32.mrf.mxu0
      %v3944 = vadd.f32 %v3804, %v3943
      %v3945 = vpop.f32.mrf.mxu0
      %v3946 = vadd.f32 %v3806, %v3945
      %3947 = vmatmul.bf16.gmra.mxu0 %v3859
      %v3948 = vpop.f32.mrf.mxu0
      %v3949 = vadd.f32 %v3809, %v3948
      %v3950 = vpop.f32.mrf.mxu0
      %v3951 = vadd.f32 %v3811, %v3950
      %3952 = vdwg.mxu0
      %3953 = vrot.lane.b32.xlu0 %v1159, 120
      %v3954 = vpop.permute.xlu0 %3953
      %3955 = vrot.lane.b32.xlu0 %v1164, 120
      %v3956 = vpop.permute.xlu0 %3955
      %v3958 = vsel %vm1165, %v3954, 0
      %v3961 = vsel %vm1165, %v3956, 0
      %3963 = vmatpush.bf16.xpose.msra.mxu0 0
      %3964 = vmatpush.bf16.xpose.msra.mxu0 0
      %3965 = vmatpush.bf16.xpose.msra.mxu0 0
      %3966 = vmatpush.bf16.xpose.msra.mxu0 0
      %3967 = vmatpush.bf16.xpose.msra.mxu0 0
      %3968 = vmatpush.bf16.xpose.msra.mxu0 0
      %3969 = vmatpush.bf16.xpose.msra.mxu0 0
      %3970 = vmatpush.bf16.xpose.msra.mxu0 %v3961
      %3971 = vmatmul.bf16.gmra.mxu0 %v3958
      %v3972 = vpop.f32.mrf.mxu0
      %v3973 = vadd.f32 0.0, %v3972
      %v3974 = vpop.f32.mrf.mxu0
      %v3975 = vadd.f32 0.0, %v3974
      %3976 = vdwg.mxu0
      %3977 = vrot.lane.b32.xlu0 %v1190, 120
      %v3978 = vpop.permute.xlu0 %3977
      %3979 = vrot.lane.b32.xlu0 %v1195, 120
      %v3980 = vpop.permute.xlu0 %3979
      %v3982 = vsel %vm1165, %v3978, 0
      %v3985 = vsel %vm1165, %v3980, 0
      %3987 = vmatpush.bf16.xpose.msra.mxu0 0
      %3988 = vmatpush.bf16.xpose.msra.mxu0 0
      %3989 = vmatpush.bf16.xpose.msra.mxu0 0
      %3990 = vmatpush.bf16.xpose.msra.mxu0 0
      %3991 = vmatpush.bf16.xpose.msra.mxu0 0
      %3992 = vmatpush.bf16.xpose.msra.mxu0 0
      %3993 = vmatpush.bf16.xpose.msra.mxu0 0
      %3994 = vmatpush.bf16.xpose.msra.mxu0 %v3985
      %3995 = vmatmul.bf16.gmra.mxu0 %v3982
      %v3996 = vpop.f32.mrf.mxu0
      %v3997 = vadd.f32 0.0, %v3996
      %v3998 = vpop.f32.mrf.mxu0
      %v3999 = vadd.f32 0.0, %v3998
      %4000 = vdwg.mxu0
      %4001 = vrot.lane.b32.xlu0 %v1220, 120
      %v4002 = vpop.permute.xlu0 %4001
      %4003 = vrot.lane.b32.xlu0 %v1225, 120
      %v4004 = vpop.permute.xlu0 %4003
      %v4006 = vsel %vm1165, %v4002, 0
      %v4009 = vsel %vm1165, %v4004, 0
      %4011 = vmatpush.bf16.xpose.msra.mxu0 0
      %4012 = vmatpush.bf16.xpose.msra.mxu0 0
      %4013 = vmatpush.bf16.xpose.msra.mxu0 0
      %4014 = vmatpush.bf16.xpose.msra.mxu0 0
      %4015 = vmatpush.bf16.xpose.msra.mxu0 0
      %4016 = vmatpush.bf16.xpose.msra.mxu0 0
      %4017 = vmatpush.bf16.xpose.msra.mxu0 0
      %4018 = vmatpush.bf16.xpose.msra.mxu0 %v4009
      %4019 = vmatmul.bf16.gmra.mxu0 %v4006
      %v4020 = vpop.f32.mrf.mxu0
      %v4021 = vadd.f32 0.0, %v4020
      %v4022 = vpop.f32.mrf.mxu0
      %v4023 = vadd.f32 0.0, %v4022
      %4024 = vdwg.mxu0
      %4025 = vrot.lane.b32.xlu0 %v1250, 120
      %v4026 = vpop.permute.xlu0 %4025
      %4027 = vrot.lane.b32.xlu0 %v1255, 120
      %v4028 = vpop.permute.xlu0 %4027
      %v4030 = vsel %vm1165, %v4026, 0
      %v4033 = vsel %vm1165, %v4028, 0
      %4035 = vmatpush.bf16.xpose.msra.mxu0 0
      %4036 = vmatpush.bf16.xpose.msra.mxu0 0
      %4037 = vmatpush.bf16.xpose.msra.mxu0 0
      %4038 = vmatpush.bf16.xpose.msra.mxu0 0
      %4039 = vmatpush.bf16.xpose.msra.mxu0 0
      %4040 = vmatpush.bf16.xpose.msra.mxu0 0
      %4041 = vmatpush.bf16.xpose.msra.mxu0 0
      %4042 = vmatpush.bf16.xpose.msra.mxu0 %v4033
      %4043 = vmatmul.bf16.gmra.mxu0 %v4030
      %v4044 = vpop.f32.mrf.mxu0
      %v4045 = vadd.f32 0.0, %v4044
      %v4046 = vpop.f32.mrf.mxu0
      %v4047 = vadd.f32 0.0, %v4046
      %4048 = vdwg.mxu0
      %4049 = vrot.lane.b32.xlu0 %v1280, 120
      %v4050 = vpop.permute.xlu0 %4049
      %4051 = vrot.lane.b32.xlu0 %v1285, 120
      %v4052 = vpop.permute.xlu0 %4051
      %v4054 = vsel %vm1165, %v4050, 0
      %v4057 = vsel %vm1165, %v4052, 0
      %4059 = vmatpush.bf16.xpose.msra.mxu0 0
      %4060 = vmatpush.bf16.xpose.msra.mxu0 0
      %4061 = vmatpush.bf16.xpose.msra.mxu0 0
      %4062 = vmatpush.bf16.xpose.msra.mxu0 0
      %4063 = vmatpush.bf16.xpose.msra.mxu0 0
      %4064 = vmatpush.bf16.xpose.msra.mxu0 0
      %4065 = vmatpush.bf16.xpose.msra.mxu0 0
      %4066 = vmatpush.bf16.xpose.msra.mxu0 %v4057
      %4067 = vmatmul.bf16.gmra.mxu0 %v4054
      %v4068 = vpop.f32.mrf.mxu0
      %v4069 = vadd.f32 0.0, %v4068
      %v4070 = vpop.f32.mrf.mxu0
      %v4071 = vadd.f32 0.0, %v4070
      %4072 = vdwg.mxu0
      %4073 = vrot.lane.b32.xlu0 %v1310, 120
      %v4074 = vpop.permute.xlu0 %4073
      %4075 = vrot.lane.b32.xlu0 %v1315, 120
      %v4076 = vpop.permute.xlu0 %4075
      %v4078 = vsel %vm1165, %v4074, 0
      %v4081 = vsel %vm1165, %v4076, 0
      %4083 = vmatpush.bf16.xpose.msra.mxu0 0
      %4084 = vmatpush.bf16.xpose.msra.mxu0 0
      %4085 = vmatpush.bf16.xpose.msra.mxu0 0
      %4086 = vmatpush.bf16.xpose.msra.mxu0 0
      %4087 = vmatpush.bf16.xpose.msra.mxu0 0
      %4088 = vmatpush.bf16.xpose.msra.mxu0 0
      %4089 = vmatpush.bf16.xpose.msra.mxu0 0
      %4090 = vmatpush.bf16.xpose.msra.mxu0 %v4081
      %4091 = vmatmul.bf16.gmra.mxu0 %v4078
      %v4092 = vpop.f32.mrf.mxu0
      %v4093 = vadd.f32 0.0, %v4092
      %v4094 = vpop.f32.mrf.mxu0
      %v4095 = vadd.f32 0.0, %v4094
      %4096 = vdwg.mxu0
      %4097 = vrot.lane.b32.xlu0 %v1340, 120
      %v4098 = vpop.permute.xlu0 %4097
      %4099 = vrot.lane.b32.xlu0 %v1345, 120
      %v4100 = vpop.permute.xlu0 %4099
      %v4102 = vsel %vm1165, %v4098, 0
      %v4105 = vsel %vm1165, %v4100, 0
      %4107 = vmatpush.bf16.xpose.msra.mxu0 0
      %4108 = vmatpush.bf16.xpose.msra.mxu0 0
      %4109 = vmatpush.bf16.xpose.msra.mxu0 0
      %4110 = vmatpush.bf16.xpose.msra.mxu0 0
      %4111 = vmatpush.bf16.xpose.msra.mxu0 0
      %4112 = vmatpush.bf16.xpose.msra.mxu0 0
      %4113 = vmatpush.bf16.xpose.msra.mxu0 0
      %4114 = vmatpush.bf16.xpose.msra.mxu0 %v4105
      %4115 = vmatmul.bf16.gmra.mxu0 %v4102
      %v4116 = vpop.f32.mrf.mxu0
      %v4117 = vadd.f32 0.0, %v4116
      %v4118 = vpop.f32.mrf.mxu0
      %v4119 = vadd.f32 0.0, %v4118
      %4120 = vdwg.mxu0
      %4121 = vrot.lane.b32.xlu0 %v1370, 120
      %v4122 = vpop.permute.xlu0 %4121
      %4123 = vrot.lane.b32.xlu0 %v1375, 120
      %v4124 = vpop.permute.xlu0 %4123
      %v4126 = vsel %vm1165, %v4122, 0
      %v4129 = vsel %vm1165, %v4124, 0
      %4131 = vmatpush.bf16.xpose.msra.mxu0 0
      %4132 = vmatpush.bf16.xpose.msra.mxu0 0
      %4133 = vmatpush.bf16.xpose.msra.mxu0 0
      %4134 = vmatpush.bf16.xpose.msra.mxu0 0
      %4135 = vmatpush.bf16.xpose.msra.mxu0 0
      %4136 = vmatpush.bf16.xpose.msra.mxu0 0
      %4137 = vmatpush.bf16.xpose.msra.mxu0 0
      %4138 = vmatpush.bf16.xpose.msra.mxu0 %v4129
      %4139 = vmatmul.bf16.gmra.mxu0 %v4126
      %v4140 = vpop.f32.mrf.mxu0
      %v4141 = vadd.f32 0.0, %v4140
      %v4142 = vpop.f32.mrf.mxu0
      %v4143 = vadd.f32 0.0, %v4142
      %4144 = vdwg.mxu0
      %4145 = vrot.lane.b32.xlu0 %v1400, 120
      %v4146 = vpop.permute.xlu0 %4145
      %4147 = vrot.lane.b32.xlu0 %v1405, 120
      %v4148 = vpop.permute.xlu0 %4147
      %v4150 = vsel %vm1165, %v4146, 0
      %v4153 = vsel %vm1165, %v4148, 0
      %4155 = vmatpush.bf16.xpose.msra.mxu0 0
      %4156 = vmatpush.bf16.xpose.msra.mxu0 0
      %4157 = vmatpush.bf16.xpose.msra.mxu0 0
      %4158 = vmatpush.bf16.xpose.msra.mxu0 0
      %4159 = vmatpush.bf16.xpose.msra.mxu0 0
      %4160 = vmatpush.bf16.xpose.msra.mxu0 0
      %4161 = vmatpush.bf16.xpose.msra.mxu0 0
      %4162 = vmatpush.bf16.xpose.msra.mxu0 %v4153
      %4163 = vmatmul.bf16.gmra.mxu0 %v4150
      %v4164 = vpop.f32.mrf.mxu0
      %v4165 = vadd.f32 0.0, %v4164
      %v4166 = vpop.f32.mrf.mxu0
      %v4167 = vadd.f32 0.0, %v4166
      %4168 = vdwg.mxu0
      %4169 = vrot.lane.b32.xlu0 %v1430, 120
      %v4170 = vpop.permute.xlu0 %4169
      %4171 = vrot.lane.b32.xlu0 %v1435, 120
      %v4172 = vpop.permute.xlu0 %4171
      %v4174 = vsel %vm1165, %v4170, 0
      %v4177 = vsel %vm1165, %v4172, 0
      %4179 = vmatpush.bf16.xpose.msra.mxu0 0
      %4180 = vmatpush.bf16.xpose.msra.mxu0 0
      %4181 = vmatpush.bf16.xpose.msra.mxu0 0
      %4182 = vmatpush.bf16.xpose.msra.mxu0 0
      %4183 = vmatpush.bf16.xpose.msra.mxu0 0
      %4184 = vmatpush.bf16.xpose.msra.mxu0 0
      %4185 = vmatpush.bf16.xpose.msra.mxu0 0
      %4186 = vmatpush.bf16.xpose.msra.mxu0 %v4177
      %4187 = vmatmul.bf16.gmra.mxu0 %v4174
      %v4188 = vpop.f32.mrf.mxu0
      %v4189 = vadd.f32 0.0, %v4188
      %v4190 = vpop.f32.mrf.mxu0
      %v4191 = vadd.f32 0.0, %v4190
      %4192 = vdwg.mxu0
      %4193 = vrot.lane.b32.xlu0 %v1460, 120
      %v4194 = vpop.permute.xlu0 %4193
      %4195 = vrot.lane.b32.xlu0 %v1465, 120
      %v4196 = vpop.permute.xlu0 %4195
      %v4198 = vsel %vm1165, %v4194, 0
      %v4201 = vsel %vm1165, %v4196, 0
      %4203 = vmatpush.bf16.xpose.msra.mxu0 0
      %4204 = vmatpush.bf16.xpose.msra.mxu0 0
      %4205 = vmatpush.bf16.xpose.msra.mxu0 0
      %4206 = vmatpush.bf16.xpose.msra.mxu0 0
      %4207 = vmatpush.bf16.xpose.msra.mxu0 0
      %4208 = vmatpush.bf16.xpose.msra.mxu0 0
      %4209 = vmatpush.bf16.xpose.msra.mxu0 0
      %4210 = vmatpush.bf16.xpose.msra.mxu0 %v4201
      %4211 = vmatmul.bf16.gmra.mxu0 %v4198
      %v4212 = vpop.f32.mrf.mxu0
      %v4213 = vadd.f32 0.0, %v4212
      %v4214 = vpop.f32.mrf.mxu0
      %v4215 = vadd.f32 0.0, %v4214
      %4216 = vdwg.mxu0
      %4217 = vrot.lane.b32.xlu0 %v1490, 120
      %v4218 = vpop.permute.xlu0 %4217
      %4219 = vrot.lane.b32.xlu0 %v1495, 120
      %v4220 = vpop.permute.xlu0 %4219
      %v4222 = vsel %vm1165, %v4218, 0
      %v4225 = vsel %vm1165, %v4220, 0
      %4227 = vmatpush.bf16.xpose.msra.mxu0 0
      %4228 = vmatpush.bf16.xpose.msra.mxu0 0
      %4229 = vmatpush.bf16.xpose.msra.mxu0 0
      %4230 = vmatpush.bf16.xpose.msra.mxu0 0
      %4231 = vmatpush.bf16.xpose.msra.mxu0 0
      %4232 = vmatpush.bf16.xpose.msra.mxu0 0
      %4233 = vmatpush.bf16.xpose.msra.mxu0 0
      %4234 = vmatpush.bf16.xpose.msra.mxu0 %v4225
      %4235 = vmatmul.bf16.gmra.mxu0 %v4222
      %v4236 = vpop.f32.mrf.mxu0
      %v4237 = vadd.f32 0.0, %v4236
      %v4238 = vpop.f32.mrf.mxu0
      %v4239 = vadd.f32 0.0, %v4238
      %4240 = vdwg.mxu0
      %4241 = vrot.lane.b32.xlu0 %v1520, 120
      %v4242 = vpop.permute.xlu0 %4241
      %4243 = vrot.lane.b32.xlu0 %v1525, 120
      %v4244 = vpop.permute.xlu0 %4243
      %v4246 = vsel %vm1165, %v4242, 0
      %v4249 = vsel %vm1165, %v4244, 0
      %4251 = vmatpush.bf16.xpose.msra.mxu0 0
      %4252 = vmatpush.bf16.xpose.msra.mxu0 0
      %4253 = vmatpush.bf16.xpose.msra.mxu0 0
      %4254 = vmatpush.bf16.xpose.msra.mxu0 0
      %4255 = vmatpush.bf16.xpose.msra.mxu0 0
      %4256 = vmatpush.bf16.xpose.msra.mxu0 0
      %4257 = vmatpush.bf16.xpose.msra.mxu0 0
      %4258 = vmatpush.bf16.xpose.msra.mxu0 %v4249
      %4259 = vmatmul.bf16.gmra.mxu0 %v4246
      %v4260 = vpop.f32.mrf.mxu0
      %v4261 = vadd.f32 0.0, %v4260
      %v4262 = vpop.f32.mrf.mxu0
      %v4263 = vadd.f32 0.0, %v4262
      %4264 = vdwg.mxu0
      %4265 = vrot.lane.b32.xlu0 %v1550, 120
      %v4266 = vpop.permute.xlu0 %4265
      %4267 = vrot.lane.b32.xlu0 %v1555, 120
      %v4268 = vpop.permute.xlu0 %4267
      %v4270 = vsel %vm1165, %v4266, 0
      %v4273 = vsel %vm1165, %v4268, 0
      %4275 = vmatpush.bf16.xpose.msra.mxu0 0
      %4276 = vmatpush.bf16.xpose.msra.mxu0 0
      %4277 = vmatpush.bf16.xpose.msra.mxu0 0
      %4278 = vmatpush.bf16.xpose.msra.mxu0 0
      %4279 = vmatpush.bf16.xpose.msra.mxu0 0
      %4280 = vmatpush.bf16.xpose.msra.mxu0 0
      %4281 = vmatpush.bf16.xpose.msra.mxu0 0
      %4282 = vmatpush.bf16.xpose.msra.mxu0 %v4273
      %4283 = vmatmul.bf16.gmra.mxu0 %v4270
      %v4284 = vpop.f32.mrf.mxu0
      %v4285 = vadd.f32 0.0, %v4284
      %v4286 = vpop.f32.mrf.mxu0
      %v4287 = vadd.f32 0.0, %v4286
      %4288 = vdwg.mxu0
      %4289 = vrot.lane.b32.xlu0 %v1580, 120
      %v4290 = vpop.permute.xlu0 %4289
      %4291 = vrot.lane.b32.xlu0 %v1585, 120
      %v4292 = vpop.permute.xlu0 %4291
      %v4294 = vsel %vm1165, %v4290, 0
      %v4297 = vsel %vm1165, %v4292, 0
      %4299 = vmatpush.bf16.xpose.msra.mxu0 0
      %4300 = vmatpush.bf16.xpose.msra.mxu0 0
      %4301 = vmatpush.bf16.xpose.msra.mxu0 0
      %4302 = vmatpush.bf16.xpose.msra.mxu0 0
      %4303 = vmatpush.bf16.xpose.msra.mxu0 0
      %4304 = vmatpush.bf16.xpose.msra.mxu0 0
      %4305 = vmatpush.bf16.xpose.msra.mxu0 0
      %4306 = vmatpush.bf16.xpose.msra.mxu0 %v4297
      %4307 = vmatmul.bf16.gmra.mxu0 %v4294
      %v4308 = vpop.f32.mrf.mxu0
      %v4309 = vadd.f32 0.0, %v4308
      %v4310 = vpop.f32.mrf.mxu0
      %v4311 = vadd.f32 0.0, %v4310
      %4312 = vdwg.mxu0
      %4313 = vrot.lane.b32.xlu0 %v1610, 120
      %v4314 = vpop.permute.xlu0 %4313
      %4315 = vrot.lane.b32.xlu0 %v1615, 120
      %v4316 = vpop.permute.xlu0 %4315
      %v4318 = vsel %vm1165, %v4314, 0
      %v4321 = vsel %vm1165, %v4316, 0
      %4323 = vmatpush.bf16.xpose.msra.mxu0 0
      %4324 = vmatpush.bf16.xpose.msra.mxu0 0
      %4325 = vmatpush.bf16.xpose.msra.mxu0 0
      %4326 = vmatpush.bf16.xpose.msra.mxu0 0
      %4327 = vmatpush.bf16.xpose.msra.mxu0 0
      %4328 = vmatpush.bf16.xpose.msra.mxu0 0
      %4329 = vmatpush.bf16.xpose.msra.mxu0 0
      %4330 = vmatpush.bf16.xpose.msra.mxu0 %v4321
      %4331 = vmatmul.bf16.gmra.mxu0 %v4318
      %v4332 = vpop.f32.mrf.mxu0
      %v4333 = vadd.f32 0.0, %v4332
      %v4334 = vpop.f32.mrf.mxu0
      %v4335 = vadd.f32 0.0, %v4334
      %4336 = vdwg.mxu0
      %v4337 = vsel %vm685, %v3973, -inf
      %4338 = vmax.xlane.f32.xlu0 %v4337
      %v4339 = vpop.xlane.xlu0 %4338
      %v4340 = vsel %vm685, %v3975, -inf
      %4341 = vmax.xlane.f32.xlu0 %v4340
      %v4342 = vpop.xlane.xlu0 %4341
      %v4343 = vsel %vm685, %v3997, -inf
      %4344 = vmax.xlane.f32.xlu0 %v4343
      %v4345 = vpop.xlane.xlu0 %4344
      %v4346 = vsel %vm685, %v3999, -inf
      %4347 = vmax.xlane.f32.xlu0 %v4346
      %v4348 = vpop.xlane.xlu0 %4347
      %v4349 = vsel %vm685, %v4021, -inf
      %4350 = vmax.xlane.f32.xlu0 %v4349
      %v4351 = vpop.xlane.xlu0 %4350
      %v4352 = vsel %vm685, %v4023, -inf
      %4353 = vmax.xlane.f32.xlu0 %v4352
      %v4354 = vpop.xlane.xlu0 %4353
      %v4355 = vsel %vm685, %v4045, -inf
      %4356 = vmax.xlane.f32.xlu0 %v4355
      %v4357 = vpop.xlane.xlu0 %4356
      %v4358 = vsel %vm685, %v4047, -inf
      %4359 = vmax.xlane.f32.xlu0 %v4358
      %v4360 = vpop.xlane.xlu0 %4359
      %v4361 = vsel %vm685, %v4069, -inf
      %4362 = vmax.xlane.f32.xlu0 %v4361
      %v4363 = vpop.xlane.xlu0 %4362
      %v4364 = vsel %vm685, %v4071, -inf
      %4365 = vmax.xlane.f32.xlu0 %v4364
      %v4366 = vpop.xlane.xlu0 %4365
      %v4367 = vsel %vm685, %v4093, -inf
      %4368 = vmax.xlane.f32.xlu0 %v4367
      %v4369 = vpop.xlane.xlu0 %4368
      %v4370 = vsel %vm685, %v4095, -inf
      %4371 = vmax.xlane.f32.xlu0 %v4370
      %v4372 = vpop.xlane.xlu0 %4371
      %v4373 = vsel %vm685, %v4117, -inf
      %4374 = vmax.xlane.f32.xlu0 %v4373
      %v4375 = vpop.xlane.xlu0 %4374
      %v4376 = vsel %vm685, %v4119, -inf
      %4377 = vmax.xlane.f32.xlu0 %v4376
      %v4378 = vpop.xlane.xlu0 %4377
      %v4379 = vsel %vm685, %v4141, -inf
      %4380 = vmax.xlane.f32.xlu0 %v4379
      %v4381 = vpop.xlane.xlu0 %4380
      %v4382 = vsel %vm685, %v4143, -inf
      %4383 = vmax.xlane.f32.xlu0 %v4382
      %v4384 = vpop.xlane.xlu0 %4383
      %v4385 = vsel %vm685, %v4165, -inf
      %4386 = vmax.xlane.f32.xlu0 %v4385
      %v4387 = vpop.xlane.xlu0 %4386
      %v4388 = vsel %vm685, %v4167, -inf
      %4389 = vmax.xlane.f32.xlu0 %v4388
      %v4390 = vpop.xlane.xlu0 %4389
      %v4391 = vsel %vm685, %v4189, -inf
      %4392 = vmax.xlane.f32.xlu0 %v4391
      %v4393 = vpop.xlane.xlu0 %4392
      %v4394 = vsel %vm685, %v4191, -inf
      %4395 = vmax.xlane.f32.xlu0 %v4394
      %v4396 = vpop.xlane.xlu0 %4395
      %v4397 = vsel %vm685, %v4213, -inf
      %4398 = vmax.xlane.f32.xlu0 %v4397
      %v4399 = vpop.xlane.xlu0 %4398
      %v4400 = vsel %vm685, %v4215, -inf
      %4401 = vmax.xlane.f32.xlu0 %v4400
      %v4402 = vpop.xlane.xlu0 %4401
      %v4403 = vsel %vm685, %v4237, -inf
      %4404 = vmax.xlane.f32.xlu0 %v4403
      %v4405 = vpop.xlane.xlu0 %4404
      %v4406 = vsel %vm685, %v4239, -inf
      %4407 = vmax.xlane.f32.xlu0 %v4406
      %v4408 = vpop.xlane.xlu0 %4407
      %v4409 = vsel %vm685, %v4261, -inf
      %4410 = vmax.xlane.f32.xlu0 %v4409
      %v4411 = vpop.xlane.xlu0 %4410
      %v4412 = vsel %vm685, %v4263, -inf
      %4413 = vmax.xlane.f32.xlu0 %v4412
      %v4414 = vpop.xlane.xlu0 %4413
      %v4415 = vsel %vm685, %v4285, -inf
      %4416 = vmax.xlane.f32.xlu0 %v4415
      %v4417 = vpop.xlane.xlu0 %4416
      %v4418 = vsel %vm685, %v4287, -inf
      %4419 = vmax.xlane.f32.xlu0 %v4418
      %v4420 = vpop.xlane.xlu0 %4419
      %v4421 = vsel %vm685, %v4309, -inf
      %4422 = vmax.xlane.f32.xlu0 %v4421
      %v4423 = vpop.xlane.xlu0 %4422
      %v4424 = vsel %vm685, %v4311, -inf
      %4425 = vmax.xlane.f32.xlu0 %v4424
      %v4426 = vpop.xlane.xlu0 %4425
      %v4427 = vsel %vm685, %v4333, -inf
      %4428 = vmax.xlane.f32.xlu0 %v4427
      %v4429 = vpop.xlane.xlu0 %4428
      %v4430 = vsel %vm685, %v4335, -inf
      %4431 = vmax.xlane.f32.xlu0 %v4430
      %v4432 = vpop.xlane.xlu0 %4431
      %v4433 = vsub.f32 %v3973, %v4339
      %v4434 = vsub.f32 %v3975, %v4342
      %v4435 = vsub.f32 %v3997, %v4345
      %v4436 = vsub.f32 %v3999, %v4348
      %v4437 = vsub.f32 %v4021, %v4351
      %v4438 = vsub.f32 %v4023, %v4354
      %v4439 = vsub.f32 %v4045, %v4357
      %v4440 = vsub.f32 %v4047, %v4360
      %v4441 = vsub.f32 %v4069, %v4363
      %v4442 = vsub.f32 %v4071, %v4366
      %v4443 = vsub.f32 %v4093, %v4369
      %v4444 = vsub.f32 %v4095, %v4372
      %v4445 = vsub.f32 %v4117, %v4375
      %v4446 = vsub.f32 %v4119, %v4378
      %v4447 = vsub.f32 %v4141, %v4381
      %v4448 = vsub.f32 %v4143, %v4384
      %v4449 = vsub.f32 %v4165, %v4387
      %v4450 = vsub.f32 %v4167, %v4390
      %v4451 = vsub.f32 %v4189, %v4393
      %v4452 = vsub.f32 %v4191, %v4396
      %v4453 = vsub.f32 %v4213, %v4399
      %v4454 = vsub.f32 %v4215, %v4402
      %v4455 = vsub.f32 %v4237, %v4405
      %v4456 = vsub.f32 %v4239, %v4408
      %v4457 = vsub.f32 %v4261, %v4411
      %v4458 = vsub.f32 %v4263, %v4414
      %v4459 = vsub.f32 %v4285, %v4417
      %v4460 = vsub.f32 %v4287, %v4420
      %v4461 = vsub.f32 %v4309, %v4423
      %v4462 = vsub.f32 %v4311, %v4426
      %v4463 = vsub.f32 %v4333, %v4429
      %v4464 = vsub.f32 %v4335, %v4432
      %v4465 = vmul.f32 %v4433, 1.442695
      %v4466 = vpow.pop %v4465
      %v4467 = vmul.f32 %v4434, 1.442695
      %v4468 = vpow.pop %v4467
      %v4469 = vmul.f32 %v4435, 1.442695
      %v4470 = vpow.pop %v4469
      %v4471 = vmul.f32 %v4436, 1.442695
      %v4472 = vpow.pop %v4471
      %v4473 = vmul.f32 %v4437, 1.442695
      %v4474 = vpow.pop %v4473
      %v4475 = vmul.f32 %v4438, 1.442695
      %v4476 = vpow.pop %v4475
      %v4477 = vmul.f32 %v4439, 1.442695
      %v4478 = vpow.pop %v4477
      %v4479 = vmul.f32 %v4440, 1.442695
      %v4480 = vpow.pop %v4479
      %v4481 = vmul.f32 %v4441, 1.442695
      %v4482 = vpow.pop %v4481
      %v4483 = vmul.f32 %v4442, 1.442695
      %v4484 = vpow.pop %v4483
      %v4485 = vmul.f32 %v4443, 1.442695
      %v4486 = vpow.pop %v4485
      %v4487 = vmul.f32 %v4444, 1.442695
      %v4488 = vpow.pop %v4487
      %v4489 = vmul.f32 %v4445, 1.442695
      %v4490 = vpow.pop %v4489
      %v4491 = vmul.f32 %v4446, 1.442695
      %v4492 = vpow.pop %v4491
      %v4493 = vmul.f32 %v4447, 1.442695
      %v4494 = vpow.pop %v4493
      %v4495 = vmul.f32 %v4448, 1.442695
      %v4496 = vpow.pop %v4495
      %v4497 = vmul.f32 %v4449, 1.442695
      %v4498 = vpow.pop %v4497
      %v4499 = vmul.f32 %v4450, 1.442695
      %v4500 = vpow.pop %v4499
      %v4501 = vmul.f32 %v4451, 1.442695
      %v4502 = vpow.pop %v4501
      %v4503 = vmul.f32 %v4452, 1.442695
      %v4504 = vpow.pop %v4503
      %v4505 = vmul.f32 %v4453, 1.442695
      %v4506 = vpow.pop %v4505
      %v4507 = vmul.f32 %v4454, 1.442695
      %v4508 = vpow.pop %v4507
      %v4509 = vmul.f32 %v4455, 1.442695
      %v4510 = vpow.pop %v4509
      %v4511 = vmul.f32 %v4456, 1.442695
      %v4512 = vpow.pop %v4511
      %v4513 = vmul.f32 %v4457, 1.442695
      %v4514 = vpow.pop %v4513
      %v4515 = vmul.f32 %v4458, 1.442695
      %v4516 = vpow.pop %v4515
      %v4517 = vmul.f32 %v4459, 1.442695
      %v4518 = vpow.pop %v4517
      %v4519 = vmul.f32 %v4460, 1.442695
      %v4520 = vpow.pop %v4519
      %v4521 = vmul.f32 %v4461, 1.442695
      %v4522 = vpow.pop %v4521
      %v4523 = vmul.f32 %v4462, 1.442695
      %v4524 = vpow.pop %v4523
      %v4525 = vmul.f32 %v4463, 1.442695
      %v4526 = vpow.pop %v4525
      %v4527 = vmul.f32 %v4464, 1.442695
      %v4528 = vpow.pop %v4527
      %v4529 = vsel %vm685, %v4466, 0.0
      %4530 = vadd.xlane.f32.xlu0 %v4529
      %v4531 = vpop.xlane.xlu0 %4530
      %v4532 = vsel %vm685, %v4468, 0.0
      %4533 = vadd.xlane.f32.xlu0 %v4532
      %v4534 = vpop.xlane.xlu0 %4533
      %v4535 = vsel %vm685, %v4470, 0.0
      %4536 = vadd.xlane.f32.xlu0 %v4535
      %v4537 = vpop.xlane.xlu0 %4536
      %v4538 = vsel %vm685, %v4472, 0.0
      %4539 = vadd.xlane.f32.xlu0 %v4538
      %v4540 = vpop.xlane.xlu0 %4539
      %v4541 = vsel %vm685, %v4474, 0.0
      %4542 = vadd.xlane.f32.xlu0 %v4541
      %v4543 = vpop.xlane.xlu0 %4542
      %v4544 = vsel %vm685, %v4476, 0.0
      %4545 = vadd.xlane.f32.xlu0 %v4544
      %v4546 = vpop.xlane.xlu0 %4545
      %v4547 = vsel %vm685, %v4478, 0.0
      %4548 = vadd.xlane.f32.xlu0 %v4547
      %v4549 = vpop.xlane.xlu0 %4548
      %v4550 = vsel %vm685, %v4480, 0.0
      %4551 = vadd.xlane.f32.xlu0 %v4550
      %v4552 = vpop.xlane.xlu0 %4551
      %v4553 = vsel %vm685, %v4482, 0.0
      %4554 = vadd.xlane.f32.xlu0 %v4553
      %v4555 = vpop.xlane.xlu0 %4554
      %v4556 = vsel %vm685, %v4484, 0.0
      %4557 = vadd.xlane.f32.xlu0 %v4556
      %v4558 = vpop.xlane.xlu0 %4557
      %v4559 = vsel %vm685, %v4486, 0.0
      %4560 = vadd.xlane.f32.xlu0 %v4559
      %v4561 = vpop.xlane.xlu0 %4560
      %v4562 = vsel %vm685, %v4488, 0.0
      %4563 = vadd.xlane.f32.xlu0 %v4562
      %v4564 = vpop.xlane.xlu0 %4563
      %v4565 = vsel %vm685, %v4490, 0.0
      %4566 = vadd.xlane.f32.xlu0 %v4565
      %v4567 = vpop.xlane.xlu0 %4566
      %v4568 = vsel %vm685, %v4492, 0.0
      %4569 = vadd.xlane.f32.xlu0 %v4568
      %v4570 = vpop.xlane.xlu0 %4569
      %v4571 = vsel %vm685, %v4494, 0.0
      %4572 = vadd.xlane.f32.xlu0 %v4571
      %v4573 = vpop.xlane.xlu0 %4572
      %v4574 = vsel %vm685, %v4496, 0.0
      %4575 = vadd.xlane.f32.xlu0 %v4574
      %v4576 = vpop.xlane.xlu0 %4575
      %v4577 = vsel %vm685, %v4498, 0.0
      %4578 = vadd.xlane.f32.xlu0 %v4577
      %v4579 = vpop.xlane.xlu0 %4578
      %v4580 = vsel %vm685, %v4500, 0.0
      %4581 = vadd.xlane.f32.xlu0 %v4580
      %v4582 = vpop.xlane.xlu0 %4581
      %v4583 = vsel %vm685, %v4502, 0.0
      %4584 = vadd.xlane.f32.xlu0 %v4583
      %v4585 = vpop.xlane.xlu0 %4584
      %v4586 = vsel %vm685, %v4504, 0.0
      %4587 = vadd.xlane.f32.xlu0 %v4586
      %v4588 = vpop.xlane.xlu0 %4587
      %v4589 = vsel %vm685, %v4506, 0.0
      %4590 = vadd.xlane.f32.xlu0 %v4589
      %v4591 = vpop.xlane.xlu0 %4590
      %v4592 = vsel %vm685, %v4508, 0.0
      %4593 = vadd.xlane.f32.xlu0 %v4592
      %v4594 = vpop.xlane.xlu0 %4593
      %v4595 = vsel %vm685, %v4510, 0.0
      %4596 = vadd.xlane.f32.xlu0 %v4595
      %v4597 = vpop.xlane.xlu0 %4596
      %v4598 = vsel %vm685, %v4512, 0.0
      %4599 = vadd.xlane.f32.xlu0 %v4598
      %v4600 = vpop.xlane.xlu0 %4599
      %v4601 = vsel %vm685, %v4514, 0.0
      %4602 = vadd.xlane.f32.xlu0 %v4601
      %v4603 = vpop.xlane.xlu0 %4602
      %v4604 = vsel %vm685, %v4516, 0.0
      %4605 = vadd.xlane.f32.xlu0 %v4604
      %v4606 = vpop.xlane.xlu0 %4605
      %v4607 = vsel %vm685, %v4518, 0.0
      %4608 = vadd.xlane.f32.xlu0 %v4607
      %v4609 = vpop.xlane.xlu0 %4608
      %v4610 = vsel %vm685, %v4520, 0.0
      %4611 = vadd.xlane.f32.xlu0 %v4610
      %v4612 = vpop.xlane.xlu0 %4611
      %v4613 = vsel %vm685, %v4522, 0.0
      %4614 = vadd.xlane.f32.xlu0 %v4613
      %v4615 = vpop.xlane.xlu0 %4614
      %v4616 = vsel %vm685, %v4524, 0.0
      %4617 = vadd.xlane.f32.xlu0 %v4616
      %v4618 = vpop.xlane.xlu0 %4617
      %v4619 = vsel %vm685, %v4526, 0.0
      %4620 = vadd.xlane.f32.xlu0 %v4619
      %v4621 = vpop.xlane.xlu0 %4620
      %v4622 = vsel %vm685, %v4528, 0.0
      %4623 = vadd.xlane.f32.xlu0 %v4622
      %v4624 = vpop.xlane.xlu0 %4623
      %v4625 = vrcp.pop %v4531
      %v4626 = vrcp.pop %v4534
      %v4627 = vrcp.pop %v4537
      %v4628 = vrcp.pop %v4540
      %v4629 = vrcp.pop %v4543
      %v4630 = vrcp.pop %v4546
      %v4631 = vrcp.pop %v4549
      %v4632 = vrcp.pop %v4552
      %v4633 = vrcp.pop %v4555
      %v4634 = vrcp.pop %v4558
      %v4635 = vrcp.pop %v4561
      %v4636 = vrcp.pop %v4564
      %v4637 = vrcp.pop %v4567
      %v4638 = vrcp.pop %v4570
      %v4639 = vrcp.pop %v4573
      %v4640 = vrcp.pop %v4576
      %v4641 = vrcp.pop %v4579
      %v4642 = vrcp.pop %v4582
      %v4643 = vrcp.pop %v4585
      %v4644 = vrcp.pop %v4588
      %v4645 = vrcp.pop %v4591
      %v4646 = vrcp.pop %v4594
      %v4647 = vrcp.pop %v4597
      %v4648 = vrcp.pop %v4600
      %v4649 = vrcp.pop %v4603
      %v4650 = vrcp.pop %v4606
      %v4651 = vrcp.pop %v4609
      %v4652 = vrcp.pop %v4612
      %v4653 = vrcp.pop %v4615
      %v4654 = vrcp.pop %v4618
      %v4655 = vrcp.pop %v4621
      %v4656 = vrcp.pop %v4624
      %v4657 = vmul.f32 %v4466, %v4625
      %v4658 = vmul.f32 %v4468, %v4626
      %v4659 = vmul.f32 %v4470, %v4627
      %v4660 = vmul.f32 %v4472, %v4628
      %v4661 = vmul.f32 %v4474, %v4629
      %v4662 = vmul.f32 %v4476, %v4630
      %v4663 = vmul.f32 %v4478, %v4631
      %v4664 = vmul.f32 %v4480, %v4632
      %v4665 = vmul.f32 %v4482, %v4633
      %v4666 = vmul.f32 %v4484, %v4634
      %v4667 = vmul.f32 %v4486, %v4635
      %v4668 = vmul.f32 %v4488, %v4636
      %v4669 = vmul.f32 %v4490, %v4637
      %v4670 = vmul.f32 %v4492, %v4638
      %v4671 = vmul.f32 %v4494, %v4639
      %v4672 = vmul.f32 %v4496, %v4640
      %v4673 = vmul.f32 %v4498, %v4641
      %v4674 = vmul.f32 %v4500, %v4642
      %v4675 = vmul.f32 %v4502, %v4643
      %v4676 = vmul.f32 %v4504, %v4644
      %v4677 = vmul.f32 %v4506, %v4645
      %v4678 = vmul.f32 %v4508, %v4646
      %v4679 = vmul.f32 %v4510, %v4647
      %v4680 = vmul.f32 %v4512, %v4648
      %v4681 = vmul.f32 %v4514, %v4649
      %v4682 = vmul.f32 %v4516, %v4650
      %v4683 = vmul.f32 %v4518, %v4651
      %v4684 = vmul.f32 %v4520, %v4652
      %v4685 = vmul.f32 %v4522, %v4653
      %v4686 = vmul.f32 %v4524, %v4654
      %v4687 = vmul.f32 %v4526, %v4655
      %v4688 = vmul.f32 %v4528, %v4656
      %v4689 = vpack.c.bf16 %v4657, %v4657
      %v4690 = vpack.c.bf16 %v4658, %v4658
      %v4691 = vpack.c.bf16 %v4659, %v4659
      %v4692 = vpack.c.bf16 %v4660, %v4660
      %v4693 = vpack.c.bf16 %v4661, %v4661
      %v4694 = vpack.c.bf16 %v4662, %v4662
      %v4695 = vpack.c.bf16 %v4663, %v4663
      %v4696 = vpack.c.bf16 %v4664, %v4664
      %v4697 = vpack.c.bf16 %v4665, %v4665
      %v4698 = vpack.c.bf16 %v4666, %v4666
      %v4699 = vpack.c.bf16 %v4667, %v4667
      %v4700 = vpack.c.bf16 %v4668, %v4668
      %v4701 = vpack.c.bf16 %v4669, %v4669
      %v4702 = vpack.c.bf16 %v4670, %v4670
      %v4703 = vpack.c.bf16 %v4671, %v4671
      %v4704 = vpack.c.bf16 %v4672, %v4672
      %v4705 = vpack.c.bf16 %v4673, %v4673
      %v4706 = vpack.c.bf16 %v4674, %v4674
      %v4707 = vpack.c.bf16 %v4675, %v4675
      %v4708 = vpack.c.bf16 %v4676, %v4676
      %v4709 = vpack.c.bf16 %v4677, %v4677
      %v4710 = vpack.c.bf16 %v4678, %v4678
      %v4711 = vpack.c.bf16 %v4679, %v4679
      %v4712 = vpack.c.bf16 %v4680, %v4680
      %v4713 = vpack.c.bf16 %v4681, %v4681
      %v4714 = vpack.c.bf16 %v4682, %v4682
      %v4715 = vpack.c.bf16 %v4683, %v4683
      %v4716 = vpack.c.bf16 %v4684, %v4684
      %v4717 = vpack.c.bf16 %v4685, %v4685
      %v4718 = vpack.c.bf16 %v4686, %v4686
      %v4719 = vpack.c.bf16 %v4687, %v4687
      %v4720 = vpack.c.bf16 %v4688, %v4688
      %v4723 = vunpack.c.l.b16 %v4689
      %v4724 = vunpack.c.l.b16 %v4690
      %v4725 = vpack.c.b16 %v4724, %v4723
      %4726 = vrot.lane.b32.xlu0 %v2029, 120
      %v4727 = vpop.permute.xlu0 %4726
      %v4730 = vsel %vm685, %v4725, 0
      %4732 = vmatpush.bf16.msra.mxu0 0
      %4733 = vmatpush.bf16.msra.mxu0 0
      %4734 = vmatpush.bf16.msra.mxu0 0
      %4735 = vmatpush.bf16.msra.mxu0 0
      %4736 = vmatpush.bf16.msra.mxu0 0
      %4737 = vmatpush.bf16.msra.mxu0 0
      %4738 = vmatpush.bf16.msra.mxu0 0
      %4739 = vmatpush.bf16.msra.mxu0 %v4727
      %4740 = vmatmul.bf16.gmra.mxu0 %v4730
      %v4741 = vpop.f32.mrf.mxu0
      %v4742 = vadd.f32 0.0, %v4741
      %v4743 = vpop.f32.mrf.mxu0
      %v4744 = vadd.f32 0.0, %v4743
      %4745 = vdwg.mxu0
      %v4748 = vunpack.c.l.b16 %v4691
      %v4749 = vunpack.c.l.b16 %v4692
      %v4750 = vpack.c.b16 %v4749, %v4748
      %4751 = vrot.lane.b32.xlu0 %v2057, 120
      %v4752 = vpop.permute.xlu0 %4751
      %v4755 = vsel %vm685, %v4750, 0
      %4757 = vmatpush.bf16.msra.mxu0 0
      %4758 = vmatpush.bf16.msra.mxu0 0
      %4759 = vmatpush.bf16.msra.mxu0 0
      %4760 = vmatpush.bf16.msra.mxu0 0
      %4761 = vmatpush.bf16.msra.mxu0 0
      %4762 = vmatpush.bf16.msra.mxu0 0
      %4763 = vmatpush.bf16.msra.mxu0 0
      %4764 = vmatpush.bf16.msra.mxu0 %v4752
      %4765 = vmatmul.bf16.gmra.mxu0 %v4755
      %v4766 = vpop.f32.mrf.mxu0
      %v4767 = vadd.f32 0.0, %v4766
      %v4768 = vpop.f32.mrf.mxu0
      %v4769 = vadd.f32 0.0, %v4768
      %4770 = vdwg.mxu0
      %v4773 = vunpack.c.l.b16 %v4693
      %v4774 = vunpack.c.l.b16 %v4694
      %v4775 = vpack.c.b16 %v4774, %v4773
      %4776 = vrot.lane.b32.xlu0 %v2085, 120
      %v4777 = vpop.permute.xlu0 %4776
      %v4780 = vsel %vm685, %v4775, 0
      %4782 = vmatpush.bf16.msra.mxu0 0
      %4783 = vmatpush.bf16.msra.mxu0 0
      %4784 = vmatpush.bf16.msra.mxu0 0
      %4785 = vmatpush.bf16.msra.mxu0 0
      %4786 = vmatpush.bf16.msra.mxu0 0
      %4787 = vmatpush.bf16.msra.mxu0 0
      %4788 = vmatpush.bf16.msra.mxu0 0
      %4789 = vmatpush.bf16.msra.mxu0 %v4777
      %4790 = vmatmul.bf16.gmra.mxu0 %v4780
      %v4791 = vpop.f32.mrf.mxu0
      %v4792 = vadd.f32 0.0, %v4791
      %v4793 = vpop.f32.mrf.mxu0
      %v4794 = vadd.f32 0.0, %v4793
      %4795 = vdwg.mxu0
      %v4798 = vunpack.c.l.b16 %v4695
      %v4799 = vunpack.c.l.b16 %v4696
      %v4800 = vpack.c.b16 %v4799, %v4798
      %4801 = vrot.lane.b32.xlu0 %v2113, 120
      %v4802 = vpop.permute.xlu0 %4801
      %v4805 = vsel %vm685, %v4800, 0
      %4807 = vmatpush.bf16.msra.mxu0 0
      %4808 = vmatpush.bf16.msra.mxu0 0
      %4809 = vmatpush.bf16.msra.mxu0 0
      %4810 = vmatpush.bf16.msra.mxu0 0
      %4811 = vmatpush.bf16.msra.mxu0 0
      %4812 = vmatpush.bf16.msra.mxu0 0
      %4813 = vmatpush.bf16.msra.mxu0 0
      %4814 = vmatpush.bf16.msra.mxu0 %v4802
      %4815 = vmatmul.bf16.gmra.mxu0 %v4805
      %v4816 = vpop.f32.mrf.mxu0
      %v4817 = vadd.f32 0.0, %v4816
      %v4818 = vpop.f32.mrf.mxu0
      %v4819 = vadd.f32 0.0, %v4818
      %4820 = vdwg.mxu0
      %v4823 = vunpack.c.l.b16 %v4697
      %v4824 = vunpack.c.l.b16 %v4698
      %v4825 = vpack.c.b16 %v4824, %v4823
      %4826 = vrot.lane.b32.xlu0 %v2141, 120
      %v4827 = vpop.permute.xlu0 %4826
      %v4830 = vsel %vm685, %v4825, 0
      %4832 = vmatpush.bf16.msra.mxu0 0
      %4833 = vmatpush.bf16.msra.mxu0 0
      %4834 = vmatpush.bf16.msra.mxu0 0
      %4835 = vmatpush.bf16.msra.mxu0 0
      %4836 = vmatpush.bf16.msra.mxu0 0
      %4837 = vmatpush.bf16.msra.mxu0 0
      %4838 = vmatpush.bf16.msra.mxu0 0
      %4839 = vmatpush.bf16.msra.mxu0 %v4827
      %4840 = vmatmul.bf16.gmra.mxu0 %v4830
      %v4841 = vpop.f32.mrf.mxu0
      %v4842 = vadd.f32 0.0, %v4841
      %v4843 = vpop.f32.mrf.mxu0
      %v4844 = vadd.f32 0.0, %v4843
      %4845 = vdwg.mxu0
      %v4848 = vunpack.c.l.b16 %v4699
      %v4849 = vunpack.c.l.b16 %v4700
      %v4850 = vpack.c.b16 %v4849, %v4848
      %4851 = vrot.lane.b32.xlu0 %v2169, 120
      %v4852 = vpop.permute.xlu0 %4851
      %v4855 = vsel %vm685, %v4850, 0
      %4857 = vmatpush.bf16.msra.mxu0 0
      %4858 = vmatpush.bf16.msra.mxu0 0
      %4859 = vmatpush.bf16.msra.mxu0 0
      %4860 = vmatpush.bf16.msra.mxu0 0
      %4861 = vmatpush.bf16.msra.mxu0 0
      %4862 = vmatpush.bf16.msra.mxu0 0
      %4863 = vmatpush.bf16.msra.mxu0 0
      %4864 = vmatpush.bf16.msra.mxu0 %v4852
      %4865 = vmatmul.bf16.gmra.mxu0 %v4855
      %v4866 = vpop.f32.mrf.mxu0
      %v4867 = vadd.f32 0.0, %v4866
      %v4868 = vpop.f32.mrf.mxu0
      %v4869 = vadd.f32 0.0, %v4868
      %4870 = vdwg.mxu0
      %v4873 = vunpack.c.l.b16 %v4701
      %v4874 = vunpack.c.l.b16 %v4702
      %v4875 = vpack.c.b16 %v4874, %v4873
      %4876 = vrot.lane.b32.xlu0 %v2197, 120
      %v4877 = vpop.permute.xlu0 %4876
      %v4880 = vsel %vm685, %v4875, 0
      %4882 = vmatpush.bf16.msra.mxu0 0
      %4883 = vmatpush.bf16.msra.mxu0 0
      %4884 = vmatpush.bf16.msra.mxu0 0
      %4885 = vmatpush.bf16.msra.mxu0 0
      %4886 = vmatpush.bf16.msra.mxu0 0
      %4887 = vmatpush.bf16.msra.mxu0 0
      %4888 = vmatpush.bf16.msra.mxu0 0
      %4889 = vmatpush.bf16.msra.mxu0 %v4877
      %4890 = vmatmul.bf16.gmra.mxu0 %v4880
      %v4891 = vpop.f32.mrf.mxu0
      %v4892 = vadd.f32 0.0, %v4891
      %v4893 = vpop.f32.mrf.mxu0
      %v4894 = vadd.f32 0.0, %v4893
      %4895 = vdwg.mxu0
      %v4898 = vunpack.c.l.b16 %v4703
      %v4899 = vunpack.c.l.b16 %v4704
      %v4900 = vpack.c.b16 %v4899, %v4898
      %4901 = vrot.lane.b32.xlu0 %v2225, 120
      %v4902 = vpop.permute.xlu0 %4901
      %v4905 = vsel %vm685, %v4900, 0
      %4907 = vmatpush.bf16.msra.mxu0 0
      %4908 = vmatpush.bf16.msra.mxu0 0
      %4909 = vmatpush.bf16.msra.mxu0 0
      %4910 = vmatpush.bf16.msra.mxu0 0
      %4911 = vmatpush.bf16.msra.mxu0 0
      %4912 = vmatpush.bf16.msra.mxu0 0
      %4913 = vmatpush.bf16.msra.mxu0 0
      %4914 = vmatpush.bf16.msra.mxu0 %v4902
      %4915 = vmatmul.bf16.gmra.mxu0 %v4905
      %v4916 = vpop.f32.mrf.mxu0
      %v4917 = vadd.f32 0.0, %v4916
      %v4918 = vpop.f32.mrf.mxu0
      %v4919 = vadd.f32 0.0, %v4918
      %4920 = vdwg.mxu0
      %v4923 = vunpack.c.l.b16 %v4705
      %v4924 = vunpack.c.l.b16 %v4706
      %v4925 = vpack.c.b16 %v4924, %v4923
      %4926 = vrot.lane.b32.xlu0 %v2253, 120
      %v4927 = vpop.permute.xlu0 %4926
      %v4930 = vsel %vm685, %v4925, 0
      %4932 = vmatpush.bf16.msra.mxu0 0
      %4933 = vmatpush.bf16.msra.mxu0 0
      %4934 = vmatpush.bf16.msra.mxu0 0
      %4935 = vmatpush.bf16.msra.mxu0 0
      %4936 = vmatpush.bf16.msra.mxu0 0
      %4937 = vmatpush.bf16.msra.mxu0 0
      %4938 = vmatpush.bf16.msra.mxu0 0
      %4939 = vmatpush.bf16.msra.mxu0 %v4927
      %4940 = vmatmul.bf16.gmra.mxu0 %v4930
      %v4941 = vpop.f32.mrf.mxu0
      %v4942 = vadd.f32 0.0, %v4941
      %v4943 = vpop.f32.mrf.mxu0
      %v4944 = vadd.f32 0.0, %v4943
      %4945 = vdwg.mxu0
      %v4948 = vunpack.c.l.b16 %v4707
      %v4949 = vunpack.c.l.b16 %v4708
      %v4950 = vpack.c.b16 %v4949, %v4948
      %4951 = vrot.lane.b32.xlu0 %v2281, 120
      %v4952 = vpop.permute.xlu0 %4951
      %v4955 = vsel %vm685, %v4950, 0
      %4957 = vmatpush.bf16.msra.mxu0 0
      %4958 = vmatpush.bf16.msra.mxu0 0
      %4959 = vmatpush.bf16.msra.mxu0 0
      %4960 = vmatpush.bf16.msra.mxu0 0
      %4961 = vmatpush.bf16.msra.mxu0 0
      %4962 = vmatpush.bf16.msra.mxu0 0
      %4963 = vmatpush.bf16.msra.mxu0 0
      %4964 = vmatpush.bf16.msra.mxu0 %v4952
      %4965 = vmatmul.bf16.gmra.mxu0 %v4955
      %v4966 = vpop.f32.mrf.mxu0
      %v4967 = vadd.f32 0.0, %v4966
      %v4968 = vpop.f32.mrf.mxu0
      %v4969 = vadd.f32 0.0, %v4968
      %4970 = vdwg.mxu0
      %v4973 = vunpack.c.l.b16 %v4709
      %v4974 = vunpack.c.l.b16 %v4710
      %v4975 = vpack.c.b16 %v4974, %v4973
      %4976 = vrot.lane.b32.xlu0 %v2309, 120
      %v4977 = vpop.permute.xlu0 %4976
      %v4980 = vsel %vm685, %v4975, 0
      %4982 = vmatpush.bf16.msra.mxu0 0
      %4983 = vmatpush.bf16.msra.mxu0 0
      %4984 = vmatpush.bf16.msra.mxu0 0
      %4985 = vmatpush.bf16.msra.mxu0 0
      %4986 = vmatpush.bf16.msra.mxu0 0
      %4987 = vmatpush.bf16.msra.mxu0 0
      %4988 = vmatpush.bf16.msra.mxu0 0
      %4989 = vmatpush.bf16.msra.mxu0 %v4977
      %4990 = vmatmul.bf16.gmra.mxu0 %v4980
      %v4991 = vpop.f32.mrf.mxu0
      %v4992 = vadd.f32 0.0, %v4991
      %v4993 = vpop.f32.mrf.mxu0
      %v4994 = vadd.f32 0.0, %v4993
      %4995 = vdwg.mxu0
      %v4998 = vunpack.c.l.b16 %v4711
      %v4999 = vunpack.c.l.b16 %v4712
      %v5000 = vpack.c.b16 %v4999, %v4998
      %5001 = vrot.lane.b32.xlu0 %v2337, 120
      %v5002 = vpop.permute.xlu0 %5001
      %v5005 = vsel %vm685, %v5000, 0
      %5007 = vmatpush.bf16.msra.mxu0 0
      %5008 = vmatpush.bf16.msra.mxu0 0
      %5009 = vmatpush.bf16.msra.mxu0 0
      %5010 = vmatpush.bf16.msra.mxu0 0
      %5011 = vmatpush.bf16.msra.mxu0 0
      %5012 = vmatpush.bf16.msra.mxu0 0
      %5013 = vmatpush.bf16.msra.mxu0 0
      %5014 = vmatpush.bf16.msra.mxu0 %v5002
      %5015 = vmatmul.bf16.gmra.mxu0 %v5005
      %v5016 = vpop.f32.mrf.mxu0
      %v5017 = vadd.f32 0.0, %v5016
      %v5018 = vpop.f32.mrf.mxu0
      %v5019 = vadd.f32 0.0, %v5018
      %5020 = vdwg.mxu0
      %v5023 = vunpack.c.l.b16 %v4713
      %v5024 = vunpack.c.l.b16 %v4714
      %v5025 = vpack.c.b16 %v5024, %v5023
      %5026 = vrot.lane.b32.xlu0 %v2365, 120
      %v5027 = vpop.permute.xlu0 %5026
      %v5030 = vsel %vm685, %v5025, 0
      %5032 = vmatpush.bf16.msra.mxu0 0
      %5033 = vmatpush.bf16.msra.mxu0 0
      %5034 = vmatpush.bf16.msra.mxu0 0
      %5035 = vmatpush.bf16.msra.mxu0 0
      %5036 = vmatpush.bf16.msra.mxu0 0
      %5037 = vmatpush.bf16.msra.mxu0 0
      %5038 = vmatpush.bf16.msra.mxu0 0
      %5039 = vmatpush.bf16.msra.mxu0 %v5027
      %5040 = vmatmul.bf16.gmra.mxu0 %v5030
      %v5041 = vpop.f32.mrf.mxu0
      %v5042 = vadd.f32 0.0, %v5041
      %v5043 = vpop.f32.mrf.mxu0
      %v5044 = vadd.f32 0.0, %v5043
      %5045 = vdwg.mxu0
      %v5048 = vunpack.c.l.b16 %v4715
      %v5049 = vunpack.c.l.b16 %v4716
      %v5050 = vpack.c.b16 %v5049, %v5048
      %5051 = vrot.lane.b32.xlu0 %v2393, 120
      %v5052 = vpop.permute.xlu0 %5051
      %v5055 = vsel %vm685, %v5050, 0
      %5057 = vmatpush.bf16.msra.mxu0 0
      %5058 = vmatpush.bf16.msra.mxu0 0
      %5059 = vmatpush.bf16.msra.mxu0 0
      %5060 = vmatpush.bf16.msra.mxu0 0
      %5061 = vmatpush.bf16.msra.mxu0 0
      %5062 = vmatpush.bf16.msra.mxu0 0
      %5063 = vmatpush.bf16.msra.mxu0 0
      %5064 = vmatpush.bf16.msra.mxu0 %v5052
      %5065 = vmatmul.bf16.gmra.mxu0 %v5055
      %v5066 = vpop.f32.mrf.mxu0
      %v5067 = vadd.f32 0.0, %v5066
      %v5068 = vpop.f32.mrf.mxu0
      %v5069 = vadd.f32 0.0, %v5068
      %5070 = vdwg.mxu0
      %v5073 = vunpack.c.l.b16 %v4717
      %v5074 = vunpack.c.l.b16 %v4718
      %v5075 = vpack.c.b16 %v5074, %v5073
      %5076 = vrot.lane.b32.xlu0 %v2421, 120
      %v5077 = vpop.permute.xlu0 %5076
      %v5080 = vsel %vm685, %v5075, 0
      %5082 = vmatpush.bf16.msra.mxu0 0
      %5083 = vmatpush.bf16.msra.mxu0 0
      %5084 = vmatpush.bf16.msra.mxu0 0
      %5085 = vmatpush.bf16.msra.mxu0 0
      %5086 = vmatpush.bf16.msra.mxu0 0
      %5087 = vmatpush.bf16.msra.mxu0 0
      %5088 = vmatpush.bf16.msra.mxu0 0
      %5089 = vmatpush.bf16.msra.mxu0 %v5077
      %5090 = vmatmul.bf16.gmra.mxu0 %v5080
      %v5091 = vpop.f32.mrf.mxu0
      %v5092 = vadd.f32 0.0, %v5091
      %v5093 = vpop.f32.mrf.mxu0
      %v5094 = vadd.f32 0.0, %v5093
      %5095 = vdwg.mxu0
      %v5098 = vunpack.c.l.b16 %v4719
      %v5099 = vunpack.c.l.b16 %v4720
      %v5100 = vpack.c.b16 %v5099, %v5098
      %5101 = vrot.lane.b32.xlu0 %v2449, 120
      %v5102 = vpop.permute.xlu0 %5101
      %v5105 = vsel %vm685, %v5100, 0
      %5107 = vmatpush.bf16.msra.mxu0 0
      %5108 = vmatpush.bf16.msra.mxu0 0
      %5109 = vmatpush.bf16.msra.mxu0 0
      %5110 = vmatpush.bf16.msra.mxu0 0
      %5111 = vmatpush.bf16.msra.mxu0 0
      %5112 = vmatpush.bf16.msra.mxu0 0
      %5113 = vmatpush.bf16.msra.mxu0 0
      %5114 = vmatpush.bf16.msra.mxu0 %v5102
      %5115 = vmatmul.bf16.gmra.mxu0 %v5105
      %v5116 = vpop.f32.mrf.mxu0
      %v5117 = vadd.f32 0.0, %v5116
      %v5118 = vpop.f32.mrf.mxu0
      %v5119 = vadd.f32 0.0, %v5118
      %5120 = vdwg.mxu0
      %v5121 = vpack.c.bf16 %v4744, %v4742
      %v5122 = vpack.c.bf16 %v4769, %v4767
      %v5123 = vpack.c.bf16 %v4794, %v4792
      %v5124 = vpack.c.bf16 %v4819, %v4817
      %v5125 = vpack.c.bf16 %v4844, %v4842
      %v5126 = vpack.c.bf16 %v4869, %v4867
      %v5127 = vpack.c.bf16 %v4894, %v4892
      %v5128 = vpack.c.bf16 %v4919, %v4917
      %v5129 = vpack.c.bf16 %v4944, %v4942
      %v5130 = vpack.c.bf16 %v4969, %v4967
      %v5131 = vpack.c.bf16 %v4994, %v4992
      %v5132 = vpack.c.bf16 %v5019, %v5017
      %v5133 = vpack.c.bf16 %v5044, %v5042
      %v5134 = vpack.c.bf16 %v5069, %v5067
      %v5135 = vpack.c.bf16 %v5094, %v5092
      %v5136 = vpack.c.bf16 %v5119, %v5117
      %v5138 = vsel %vm1165, %v5121, 0
      %v5141 = vsel %vm1165, %v5122, 0
      %v5144 = vsel %vm1165, %v5123, 0
      %v5147 = vsel %vm1165, %v5124, 0
      %v5150 = vsel %vm1165, %v5125, 0
      %v5153 = vsel %vm1165, %v5126, 0
      %v5156 = vsel %vm1165, %v5127, 0
      %v5159 = vsel %vm1165, %v5128, 0
      %v5162 = vsel %vm1165, %v5129, 0
      %v5165 = vsel %vm1165, %v5130, 0
      %v5168 = vsel %vm1165, %v5131, 0
      %v5171 = vsel %vm1165, %v5132, 0
      %v5174 = vsel %vm1165, %v5133, 0
      %v5177 = vsel %vm1165, %v5134, 0
      %v5180 = vsel %vm1165, %v5135, 0
      %v5183 = vsel %vm1165, %v5136, 0
      %v5186 = vsel %vm3720, %v1154, 0
      %5188 = vmatpush.bf16.msra.mxu0 0
      %5189 = vmatpush.bf16.msra.mxu0 0
      %5190 = vmatpush.bf16.msra.mxu0 0
      %5191 = vmatpush.bf16.msra.mxu0 0
      %5192 = vmatpush.bf16.msra.mxu0 0
      %5193 = vmatpush.bf16.msra.mxu0 0
      %5194 = vmatpush.bf16.msra.mxu0 0
      %5195 = vmatpush.bf16.msra.mxu0 %v5186
      %5196 = vmatmul.bf16.gmra.mxu0 %v5138
      %v5197 = vpop.f32.mrf.mxu0
      %v5198 = vadd.f32 0.0, %v5197
      %v5199 = vpop.f32.mrf.mxu0
      %v5200 = vadd.f32 0.0, %v5199
      %5201 = vmatmul.bf16.gmra.mxu0 %v5141
      %v5202 = vpop.f32.mrf.mxu0
      %v5203 = vadd.f32 0.0, %v5202
      %v5204 = vpop.f32.mrf.mxu0
      %v5205 = vadd.f32 0.0, %v5204
      %5206 = vmatmul.bf16.gmra.mxu0 %v5144
      %v5207 = vpop.f32.mrf.mxu0
      %v5208 = vadd.f32 0.0, %v5207
      %v5209 = vpop.f32.mrf.mxu0
      %v5210 = vadd.f32 0.0, %v5209
      %5211 = vmatmul.bf16.gmra.mxu0 %v5147
      %v5212 = vpop.f32.mrf.mxu0
      %v5213 = vadd.f32 0.0, %v5212
      %v5214 = vpop.f32.mrf.mxu0
      %v5215 = vadd.f32 0.0, %v5214
      %5216 = vmatmul.bf16.gmra.mxu0 %v5150
      %v5217 = vpop.f32.mrf.mxu0
      %v5218 = vadd.f32 0.0, %v5217
      %v5219 = vpop.f32.mrf.mxu0
      %v5220 = vadd.f32 0.0, %v5219
      %5221 = vmatmul.bf16.gmra.mxu0 %v5153
      %v5222 = vpop.f32.mrf.mxu0
      %v5223 = vadd.f32 0.0, %v5222
      %v5224 = vpop.f32.mrf.mxu0
      %v5225 = vadd.f32 0.0, %v5224
      %5226 = vmatmul.bf16.gmra.mxu0 %v5156
      %v5227 = vpop.f32.mrf.mxu0
      %v5228 = vadd.f32 0.0, %v5227
      %v5229 = vpop.f32.mrf.mxu0
      %v5230 = vadd.f32 0.0, %v5229
      %5231 = vmatmul.bf16.gmra.mxu0 %v5159
      %v5232 = vpop.f32.mrf.mxu0
      %v5233 = vadd.f32 0.0, %v5232
      %v5234 = vpop.f32.mrf.mxu0
      %v5235 = vadd.f32 0.0, %v5234
      %5236 = vmatmul.bf16.gmra.mxu0 %v5162
      %v5237 = vpop.f32.mrf.mxu0
      %v5238 = vadd.f32 0.0, %v5237
      %v5239 = vpop.f32.mrf.mxu0
      %v5240 = vadd.f32 0.0, %v5239
      %5241 = vmatmul.bf16.gmra.mxu0 %v5165
      %v5242 = vpop.f32.mrf.mxu0
      %v5243 = vadd.f32 0.0, %v5242
      %v5244 = vpop.f32.mrf.mxu0
      %v5245 = vadd.f32 0.0, %v5244
      %5246 = vmatmul.bf16.gmra.mxu0 %v5168
      %v5247 = vpop.f32.mrf.mxu0
      %v5248 = vadd.f32 0.0, %v5247
      %v5249 = vpop.f32.mrf.mxu0
      %v5250 = vadd.f32 0.0, %v5249
      %5251 = vmatmul.bf16.gmra.mxu0 %v5171
      %v5252 = vpop.f32.mrf.mxu0
      %v5253 = vadd.f32 0.0, %v5252
      %v5254 = vpop.f32.mrf.mxu0
      %v5255 = vadd.f32 0.0, %v5254
      %5256 = vmatmul.bf16.gmra.mxu0 %v5174
      %v5257 = vpop.f32.mrf.mxu0
      %v5258 = vadd.f32 0.0, %v5257
      %v5259 = vpop.f32.mrf.mxu0
      %v5260 = vadd.f32 0.0, %v5259
      %5261 = vmatmul.bf16.gmra.mxu0 %v5177
      %v5262 = vpop.f32.mrf.mxu0
      %v5263 = vadd.f32 0.0, %v5262
      %v5264 = vpop.f32.mrf.mxu0
      %v5265 = vadd.f32 0.0, %v5264
      %5266 = vmatmul.bf16.gmra.mxu0 %v5180
      %v5267 = vpop.f32.mrf.mxu0
      %v5268 = vadd.f32 0.0, %v5267
      %v5269 = vpop.f32.mrf.mxu0
      %v5270 = vadd.f32 0.0, %v5269
      %5271 = vmatmul.bf16.gmra.mxu0 %v5183
      %v5272 = vpop.f32.mrf.mxu0
      %v5273 = vadd.f32 0.0, %v5272
      %v5274 = vpop.f32.mrf.mxu0
      %v5275 = vadd.f32 0.0, %v5274
      %5276 = vdwg.mxu0
      %v5277 = vadd.f32 %v3874, %v5198
      %v5278 = vadd.f32 %v3876, %v5200
      %v5279 = vadd.f32 %v3879, %v5203
      %v5280 = vadd.f32 %v3881, %v5205
      %v5281 = vadd.f32 %v3884, %v5208
      %v5282 = vadd.f32 %v3886, %v5210
      %v5283 = vadd.f32 %v3889, %v5213
      %v5284 = vadd.f32 %v3891, %v5215
      %v5285 = vadd.f32 %v3894, %v5218
      %v5286 = vadd.f32 %v3896, %v5220
      %v5287 = vadd.f32 %v3899, %v5223
      %v5288 = vadd.f32 %v3901, %v5225
      %v5289 = vadd.f32 %v3904, %v5228
      %v5290 = vadd.f32 %v3906, %v5230
      %v5291 = vadd.f32 %v3909, %v5233
      %v5292 = vadd.f32 %v3911, %v5235
      %v5293 = vadd.f32 %v3914, %v5238
      %v5294 = vadd.f32 %v3916, %v5240
      %v5295 = vadd.f32 %v3919, %v5243
      %v5296 = vadd.f32 %v3921, %v5245
      %v5297 = vadd.f32 %v3924, %v5248
      %v5298 = vadd.f32 %v3926, %v5250
      %v5299 = vadd.f32 %v3929, %v5253
      %v5300 = vadd.f32 %v3931, %v5255
      %v5301 = vadd.f32 %v3934, %v5258
      %v5302 = vadd.f32 %v3936, %v5260
      %v5303 = vadd.f32 %v3939, %v5263
      %v5304 = vadd.f32 %v3941, %v5265
      %v5305 = vadd.f32 %v3944, %v5268
      %v5306 = vadd.f32 %v3946, %v5270
      %v5307 = vadd.f32 %v3949, %v5273
      %v5308 = vadd.f32 %v3951, %v5275
      %5309 = vrot.lane.b32.xlu0 %v1159, 116
      %v5310 = vpop.permute.xlu0 %5309
      %5311 = vrot.lane.b32.xlu0 %v1164, 116
      %v5312 = vpop.permute.xlu0 %5311
      %v5314 = vsel %vm1165, %v5310, 0
      %v5317 = vsel %vm1165, %v5312, 0
      %5319 = vmatpush.bf16.xpose.msra.mxu0 0
      %5320 = vmatpush.bf16.xpose.msra.mxu0 0
      %5321 = vmatpush.bf16.xpose.msra.mxu0 0
      %5322 = vmatpush.bf16.xpose.msra.mxu0 0
      %5323 = vmatpush.bf16.xpose.msra.mxu0 0
      %5324 = vmatpush.bf16.xpose.msra.mxu0 0
      %5325 = vmatpush.bf16.xpose.msra.mxu0 0
      %5326 = vmatpush.bf16.xpose.msra.mxu0 %v5317
      %5327 = vmatmul.bf16.gmra.mxu0 %v5314
      %v5328 = vpop.f32.mrf.mxu0
      %v5329 = vadd.f32 0.0, %v5328
      %v5330 = vpop.f32.mrf.mxu0
      %v5331 = vadd.f32 0.0, %v5330
      %5332 = vdwg.mxu0
      %5333 = vrot.lane.b32.xlu0 %v1190, 116
      %v5334 = vpop.permute.xlu0 %5333
      %5335 = vrot.lane.b32.xlu0 %v1195, 116
      %v5336 = vpop.permute.xlu0 %5335
      %v5338 = vsel %vm1165, %v5334, 0
      %v5341 = vsel %vm1165, %v5336, 0
      %5343 = vmatpush.bf16.xpose.msra.mxu0 0
      %5344 = vmatpush.bf16.xpose.msra.mxu0 0
      %5345 = vmatpush.bf16.xpose.msra.mxu0 0
      %5346 = vmatpush.bf16.xpose.msra.mxu0 0
      %5347 = vmatpush.bf16.xpose.msra.mxu0 0
      %5348 = vmatpush.bf16.xpose.msra.mxu0 0
      %5349 = vmatpush.bf16.xpose.msra.mxu0 0
      %5350 = vmatpush.bf16.xpose.msra.mxu0 %v5341
      %5351 = vmatmul.bf16.gmra.mxu0 %v5338
      %v5352 = vpop.f32.mrf.mxu0
      %v5353 = vadd.f32 0.0, %v5352
      %v5354 = vpop.f32.mrf.mxu0
      %v5355 = vadd.f32 0.0, %v5354
      %5356 = vdwg.mxu0
      %5357 = vrot.lane.b32.xlu0 %v1220, 116
      %v5358 = vpop.permute.xlu0 %5357
      %5359 = vrot.lane.b32.xlu0 %v1225, 116
      %v5360 = vpop.permute.xlu0 %5359
      %v5362 = vsel %vm1165, %v5358, 0
      %v5365 = vsel %vm1165, %v5360, 0
      %5367 = vmatpush.bf16.xpose.msra.mxu0 0
      %5368 = vmatpush.bf16.xpose.msra.mxu0 0
      %5369 = vmatpush.bf16.xpose.msra.mxu0 0
      %5370 = vmatpush.bf16.xpose.msra.mxu0 0
      %5371 = vmatpush.bf16.xpose.msra.mxu0 0
      %5372 = vmatpush.bf16.xpose.msra.mxu0 0
      %5373 = vmatpush.bf16.xpose.msra.mxu0 0
      %5374 = vmatpush.bf16.xpose.msra.mxu0 %v5365
      %5375 = vmatmul.bf16.gmra.mxu0 %v5362
      %v5376 = vpop.f32.mrf.mxu0
      %v5377 = vadd.f32 0.0, %v5376
      %v5378 = vpop.f32.mrf.mxu0
      %v5379 = vadd.f32 0.0, %v5378
      %5380 = vdwg.mxu0
      %5381 = vrot.lane.b32.xlu0 %v1250, 116
      %v5382 = vpop.permute.xlu0 %5381
      %5383 = vrot.lane.b32.xlu0 %v1255, 116
      %v5384 = vpop.permute.xlu0 %5383
      %v5386 = vsel %vm1165, %v5382, 0
      %v5389 = vsel %vm1165, %v5384, 0
      %5391 = vmatpush.bf16.xpose.msra.mxu0 0
      %5392 = vmatpush.bf16.xpose.msra.mxu0 0
      %5393 = vmatpush.bf16.xpose.msra.mxu0 0
      %5394 = vmatpush.bf16.xpose.msra.mxu0 0
      %5395 = vmatpush.bf16.xpose.msra.mxu0 0
      %5396 = vmatpush.bf16.xpose.msra.mxu0 0
      %5397 = vmatpush.bf16.xpose.msra.mxu0 0
      %5398 = vmatpush.bf16.xpose.msra.mxu0 %v5389
      %5399 = vmatmul.bf16.gmra.mxu0 %v5386
      %v5400 = vpop.f32.mrf.mxu0
      %v5401 = vadd.f32 0.0, %v5400
      %v5402 = vpop.f32.mrf.mxu0
      %v5403 = vadd.f32 0.0, %v5402
      %5404 = vdwg.mxu0
      %5405 = vrot.lane.b32.xlu0 %v1280, 116
      %v5406 = vpop.permute.xlu0 %5405
      %5407 = vrot.lane.b32.xlu0 %v1285, 116
      %v5408 = vpop.permute.xlu0 %5407
      %v5410 = vsel %vm1165, %v5406, 0
      %v5413 = vsel %vm1165, %v5408, 0
      %5415 = vmatpush.bf16.xpose.msra.mxu0 0
      %5416 = vmatpush.bf16.xpose.msra.mxu0 0
      %5417 = vmatpush.bf16.xpose.msra.mxu0 0
      %5418 = vmatpush.bf16.xpose.msra.mxu0 0
      %5419 = vmatpush.bf16.xpose.msra.mxu0 0
      %5420 = vmatpush.bf16.xpose.msra.mxu0 0
      %5421 = vmatpush.bf16.xpose.msra.mxu0 0
      %5422 = vmatpush.bf16.xpose.msra.mxu0 %v5413
      %5423 = vmatmul.bf16.gmra.mxu0 %v5410
      %v5424 = vpop.f32.mrf.mxu0
      %v5425 = vadd.f32 0.0, %v5424
      %v5426 = vpop.f32.mrf.mxu0
      %v5427 = vadd.f32 0.0, %v5426
      %5428 = vdwg.mxu0
      %5429 = vrot.lane.b32.xlu0 %v1310, 116
      %v5430 = vpop.permute.xlu0 %5429
      %5431 = vrot.lane.b32.xlu0 %v1315, 116
      %v5432 = vpop.permute.xlu0 %5431
      %v5434 = vsel %vm1165, %v5430, 0
      %v5437 = vsel %vm1165, %v5432, 0
      %5439 = vmatpush.bf16.xpose.msra.mxu0 0
      %5440 = vmatpush.bf16.xpose.msra.mxu0 0
      %5441 = vmatpush.bf16.xpose.msra.mxu0 0
      %5442 = vmatpush.bf16.xpose.msra.mxu0 0
      %5443 = vmatpush.bf16.xpose.msra.mxu0 0
      %5444 = vmatpush.bf16.xpose.msra.mxu0 0
      %5445 = vmatpush.bf16.xpose.msra.mxu0 0
      %5446 = vmatpush.bf16.xpose.msra.mxu0 %v5437
      %5447 = vmatmul.bf16.gmra.mxu0 %v5434
      %v5448 = vpop.f32.mrf.mxu0
      %v5449 = vadd.f32 0.0, %v5448
      %v5450 = vpop.f32.mrf.mxu0
      %v5451 = vadd.f32 0.0, %v5450
      %5452 = vdwg.mxu0
      %5453 = vrot.lane.b32.xlu0 %v1340, 116
      %v5454 = vpop.permute.xlu0 %5453
      %5455 = vrot.lane.b32.xlu0 %v1345, 116
      %v5456 = vpop.permute.xlu0 %5455
      %v5458 = vsel %vm1165, %v5454, 0
      %v5461 = vsel %vm1165, %v5456, 0
      %5463 = vmatpush.bf16.xpose.msra.mxu0 0
      %5464 = vmatpush.bf16.xpose.msra.mxu0 0
      %5465 = vmatpush.bf16.xpose.msra.mxu0 0
      %5466 = vmatpush.bf16.xpose.msra.mxu0 0
      %5467 = vmatpush.bf16.xpose.msra.mxu0 0
      %5468 = vmatpush.bf16.xpose.msra.mxu0 0
      %5469 = vmatpush.bf16.xpose.msra.mxu0 0
      %5470 = vmatpush.bf16.xpose.msra.mxu0 %v5461
      %5471 = vmatmul.bf16.gmra.mxu0 %v5458
      %v5472 = vpop.f32.mrf.mxu0
      %v5473 = vadd.f32 0.0, %v5472
      %v5474 = vpop.f32.mrf.mxu0
      %v5475 = vadd.f32 0.0, %v5474
      %5476 = vdwg.mxu0
      %5477 = vrot.lane.b32.xlu0 %v1370, 116
      %v5478 = vpop.permute.xlu0 %5477
      %5479 = vrot.lane.b32.xlu0 %v1375, 116
      %v5480 = vpop.permute.xlu0 %5479
      %v5482 = vsel %vm1165, %v5478, 0
      %v5485 = vsel %vm1165, %v5480, 0
      %5487 = vmatpush.bf16.xpose.msra.mxu0 0
      %5488 = vmatpush.bf16.xpose.msra.mxu0 0
      %5489 = vmatpush.bf16.xpose.msra.mxu0 0
      %5490 = vmatpush.bf16.xpose.msra.mxu0 0
      %5491 = vmatpush.bf16.xpose.msra.mxu0 0
      %5492 = vmatpush.bf16.xpose.msra.mxu0 0
      %5493 = vmatpush.bf16.xpose.msra.mxu0 0
      %5494 = vmatpush.bf16.xpose.msra.mxu0 %v5485
      %5495 = vmatmul.bf16.gmra.mxu0 %v5482
      %v5496 = vpop.f32.mrf.mxu0
      %v5497 = vadd.f32 0.0, %v5496
      %v5498 = vpop.f32.mrf.mxu0
      %v5499 = vadd.f32 0.0, %v5498
      %5500 = vdwg.mxu0
      %5501 = vrot.lane.b32.xlu0 %v1400, 116
      %v5502 = vpop.permute.xlu0 %5501
      %5503 = vrot.lane.b32.xlu0 %v1405, 116
      %v5504 = vpop.permute.xlu0 %5503
      %v5506 = vsel %vm1165, %v5502, 0
      %v5509 = vsel %vm1165, %v5504, 0
      %5511 = vmatpush.bf16.xpose.msra.mxu0 0
      %5512 = vmatpush.bf16.xpose.msra.mxu0 0
      %5513 = vmatpush.bf16.xpose.msra.mxu0 0
      %5514 = vmatpush.bf16.xpose.msra.mxu0 0
      %5515 = vmatpush.bf16.xpose.msra.mxu0 0
      %5516 = vmatpush.bf16.xpose.msra.mxu0 0
      %5517 = vmatpush.bf16.xpose.msra.mxu0 0
      %5518 = vmatpush.bf16.xpose.msra.mxu0 %v5509
      %5519 = vmatmul.bf16.gmra.mxu0 %v5506
      %v5520 = vpop.f32.mrf.mxu0
      %v5521 = vadd.f32 0.0, %v5520
      %v5522 = vpop.f32.mrf.mxu0
      %v5523 = vadd.f32 0.0, %v5522
      %5524 = vdwg.mxu0
      %5525 = vrot.lane.b32.xlu0 %v1430, 116
      %v5526 = vpop.permute.xlu0 %5525
      %5527 = vrot.lane.b32.xlu0 %v1435, 116
      %v5528 = vpop.permute.xlu0 %5527
      %v5530 = vsel %vm1165, %v5526, 0
      %v5533 = vsel %vm1165, %v5528, 0
      %5535 = vmatpush.bf16.xpose.msra.mxu0 0
      %5536 = vmatpush.bf16.xpose.msra.mxu0 0
      %5537 = vmatpush.bf16.xpose.msra.mxu0 0
      %5538 = vmatpush.bf16.xpose.msra.mxu0 0
      %5539 = vmatpush.bf16.xpose.msra.mxu0 0
      %5540 = vmatpush.bf16.xpose.msra.mxu0 0
      %5541 = vmatpush.bf16.xpose.msra.mxu0 0
      %5542 = vmatpush.bf16.xpose.msra.mxu0 %v5533
      %5543 = vmatmul.bf16.gmra.mxu0 %v5530
      %v5544 = vpop.f32.mrf.mxu0
      %v5545 = vadd.f32 0.0, %v5544
      %v5546 = vpop.f32.mrf.mxu0
      %v5547 = vadd.f32 0.0, %v5546
      %5548 = vdwg.mxu0
      %5549 = vrot.lane.b32.xlu0 %v1460, 116
      %v5550 = vpop.permute.xlu0 %5549
      %5551 = vrot.lane.b32.xlu0 %v1465, 116
      %v5552 = vpop.permute.xlu0 %5551
      %v5554 = vsel %vm1165, %v5550, 0
      %v5557 = vsel %vm1165, %v5552, 0
      %5559 = vmatpush.bf16.xpose.msra.mxu0 0
      %5560 = vmatpush.bf16.xpose.msra.mxu0 0
      %5561 = vmatpush.bf16.xpose.msra.mxu0 0
      %5562 = vmatpush.bf16.xpose.msra.mxu0 0
      %5563 = vmatpush.bf16.xpose.msra.mxu0 0
      %5564 = vmatpush.bf16.xpose.msra.mxu0 0
      %5565 = vmatpush.bf16.xpose.msra.mxu0 0
      %5566 = vmatpush.bf16.xpose.msra.mxu0 %v5557
      %5567 = vmatmul.bf16.gmra.mxu0 %v5554
      %v5568 = vpop.f32.mrf.mxu0
      %v5569 = vadd.f32 0.0, %v5568
      %v5570 = vpop.f32.mrf.mxu0
      %v5571 = vadd.f32 0.0, %v5570
      %5572 = vdwg.mxu0
      %5573 = vrot.lane.b32.xlu0 %v1490, 116
      %v5574 = vpop.permute.xlu0 %5573
      %5575 = vrot.lane.b32.xlu0 %v1495, 116
      %v5576 = vpop.permute.xlu0 %5575
      %v5578 = vsel %vm1165, %v5574, 0
      %v5581 = vsel %vm1165, %v5576, 0
      %5583 = vmatpush.bf16.xpose.msra.mxu0 0
      %5584 = vmatpush.bf16.xpose.msra.mxu0 0
      %5585 = vmatpush.bf16.xpose.msra.mxu0 0
      %5586 = vmatpush.bf16.xpose.msra.mxu0 0
      %5587 = vmatpush.bf16.xpose.msra.mxu0 0
      %5588 = vmatpush.bf16.xpose.msra.mxu0 0
      %5589 = vmatpush.bf16.xpose.msra.mxu0 0
      %5590 = vmatpush.bf16.xpose.msra.mxu0 %v5581
      %5591 = vmatmul.bf16.gmra.mxu0 %v5578
      %v5592 = vpop.f32.mrf.mxu0
      %v5593 = vadd.f32 0.0, %v5592
      %v5594 = vpop.f32.mrf.mxu0
      %v5595 = vadd.f32 0.0, %v5594
      %5596 = vdwg.mxu0
      %5597 = vrot.lane.b32.xlu0 %v1520, 116
      %v5598 = vpop.permute.xlu0 %5597
      %5599 = vrot.lane.b32.xlu0 %v1525, 116
      %v5600 = vpop.permute.xlu0 %5599
      %v5602 = vsel %vm1165, %v5598, 0
      %v5605 = vsel %vm1165, %v5600, 0
      %5607 = vmatpush.bf16.xpose.msra.mxu0 0
      %5608 = vmatpush.bf16.xpose.msra.mxu0 0
      %5609 = vmatpush.bf16.xpose.msra.mxu0 0
      %5610 = vmatpush.bf16.xpose.msra.mxu0 0
      %5611 = vmatpush.bf16.xpose.msra.mxu0 0
      %5612 = vmatpush.bf16.xpose.msra.mxu0 0
      %5613 = vmatpush.bf16.xpose.msra.mxu0 0
      %5614 = vmatpush.bf16.xpose.msra.mxu0 %v5605
      %5615 = vmatmul.bf16.gmra.mxu0 %v5602
      %v5616 = vpop.f32.mrf.mxu0
      %v5617 = vadd.f32 0.0, %v5616
      %v5618 = vpop.f32.mrf.mxu0
      %v5619 = vadd.f32 0.0, %v5618
      %5620 = vdwg.mxu0
      %5621 = vrot.lane.b32.xlu0 %v1550, 116
      %v5622 = vpop.permute.xlu0 %5621
      %5623 = vrot.lane.b32.xlu0 %v1555, 116
      %v5624 = vpop.permute.xlu0 %5623
      %v5626 = vsel %vm1165, %v5622, 0
      %v5629 = vsel %vm1165, %v5624, 0
      %5631 = vmatpush.bf16.xpose.msra.mxu0 0
      %5632 = vmatpush.bf16.xpose.msra.mxu0 0
      %5633 = vmatpush.bf16.xpose.msra.mxu0 0
      %5634 = vmatpush.bf16.xpose.msra.mxu0 0
      %5635 = vmatpush.bf16.xpose.msra.mxu0 0
      %5636 = vmatpush.bf16.xpose.msra.mxu0 0
      %5637 = vmatpush.bf16.xpose.msra.mxu0 0
      %5638 = vmatpush.bf16.xpose.msra.mxu0 %v5629
      %5639 = vmatmul.bf16.gmra.mxu0 %v5626
      %v5640 = vpop.f32.mrf.mxu0
      %v5641 = vadd.f32 0.0, %v5640
      %v5642 = vpop.f32.mrf.mxu0
      %v5643 = vadd.f32 0.0, %v5642
      %5644 = vdwg.mxu0
      %5645 = vrot.lane.b32.xlu0 %v1580, 116
      %v5646 = vpop.permute.xlu0 %5645
      %5647 = vrot.lane.b32.xlu0 %v1585, 116
      %v5648 = vpop.permute.xlu0 %5647
      %v5650 = vsel %vm1165, %v5646, 0
      %v5653 = vsel %vm1165, %v5648, 0
      %5655 = vmatpush.bf16.xpose.msra.mxu0 0
      %5656 = vmatpush.bf16.xpose.msra.mxu0 0
      %5657 = vmatpush.bf16.xpose.msra.mxu0 0
      %5658 = vmatpush.bf16.xpose.msra.mxu0 0
      %5659 = vmatpush.bf16.xpose.msra.mxu0 0
      %5660 = vmatpush.bf16.xpose.msra.mxu0 0
      %5661 = vmatpush.bf16.xpose.msra.mxu0 0
      %5662 = vmatpush.bf16.xpose.msra.mxu0 %v5653
      %5663 = vmatmul.bf16.gmra.mxu0 %v5650
      %v5664 = vpop.f32.mrf.mxu0
      %v5665 = vadd.f32 0.0, %v5664
      %v5666 = vpop.f32.mrf.mxu0
      %v5667 = vadd.f32 0.0, %v5666
      %5668 = vdwg.mxu0
      %5669 = vrot.lane.b32.xlu0 %v1610, 116
      %v5670 = vpop.permute.xlu0 %5669
      %5671 = vrot.lane.b32.xlu0 %v1615, 116
      %v5672 = vpop.permute.xlu0 %5671
      %v5674 = vsel %vm1165, %v5670, 0
      %v5677 = vsel %vm1165, %v5672, 0
      %5679 = vmatpush.bf16.xpose.msra.mxu0 0
      %5680 = vmatpush.bf16.xpose.msra.mxu0 0
      %5681 = vmatpush.bf16.xpose.msra.mxu0 0
      %5682 = vmatpush.bf16.xpose.msra.mxu0 0
      %5683 = vmatpush.bf16.xpose.msra.mxu0 0
      %5684 = vmatpush.bf16.xpose.msra.mxu0 0
      %5685 = vmatpush.bf16.xpose.msra.mxu0 0
      %5686 = vmatpush.bf16.xpose.msra.mxu0 %v5677
      %5687 = vmatmul.bf16.gmra.mxu0 %v5674
      %v5688 = vpop.f32.mrf.mxu0
      %v5689 = vadd.f32 0.0, %v5688
      %v5690 = vpop.f32.mrf.mxu0
      %v5691 = vadd.f32 0.0, %v5690
      %5692 = vdwg.mxu0
      %v5693 = vsel %vm685, %v5329, -inf
      %5694 = vmax.xlane.f32.xlu0 %v5693
      %v5695 = vpop.xlane.xlu0 %5694
      %v5696 = vsel %vm685, %v5331, -inf
      %5697 = vmax.xlane.f32.xlu0 %v5696
      %v5698 = vpop.xlane.xlu0 %5697
      %v5699 = vsel %vm685, %v5353, -inf
      %5700 = vmax.xlane.f32.xlu0 %v5699
      %v5701 = vpop.xlane.xlu0 %5700
      %v5702 = vsel %vm685, %v5355, -inf
      %5703 = vmax.xlane.f32.xlu0 %v5702
      %v5704 = vpop.xlane.xlu0 %5703
      %v5705 = vsel %vm685, %v5377, -inf
      %5706 = vmax.xlane.f32.xlu0 %v5705
      %v5707 = vpop.xlane.xlu0 %5706
      %v5708 = vsel %vm685, %v5379, -inf
      %5709 = vmax.xlane.f32.xlu0 %v5708
      %v5710 = vpop.xlane.xlu0 %5709
      %v5711 = vsel %vm685, %v5401, -inf
      %5712 = vmax.xlane.f32.xlu0 %v5711
      %v5713 = vpop.xlane.xlu0 %5712
      %v5714 = vsel %vm685, %v5403, -inf
      %5715 = vmax.xlane.f32.xlu0 %v5714
      %v5716 = vpop.xlane.xlu0 %5715
      %v5717 = vsel %vm685, %v5425, -inf
      %5718 = vmax.xlane.f32.xlu0 %v5717
      %v5719 = vpop.xlane.xlu0 %5718
      %v5720 = vsel %vm685, %v5427, -inf
      %5721 = vmax.xlane.f32.xlu0 %v5720
      %v5722 = vpop.xlane.xlu0 %5721
      %v5723 = vsel %vm685, %v5449, -inf
      %5724 = vmax.xlane.f32.xlu0 %v5723
      %v5725 = vpop.xlane.xlu0 %5724
      %v5726 = vsel %vm685, %v5451, -inf
      %5727 = vmax.xlane.f32.xlu0 %v5726
      %v5728 = vpop.xlane.xlu0 %5727
      %v5729 = vsel %vm685, %v5473, -inf
      %5730 = vmax.xlane.f32.xlu0 %v5729
      %v5731 = vpop.xlane.xlu0 %5730
      %v5732 = vsel %vm685, %v5475, -inf
      %5733 = vmax.xlane.f32.xlu0 %v5732
      %v5734 = vpop.xlane.xlu0 %5733
      %v5735 = vsel %vm685, %v5497, -inf
      %5736 = vmax.xlane.f32.xlu0 %v5735
      %v5737 = vpop.xlane.xlu0 %5736
      %v5738 = vsel %vm685, %v5499, -inf
      %5739 = vmax.xlane.f32.xlu0 %v5738
      %v5740 = vpop.xlane.xlu0 %5739
      %v5741 = vsel %vm685, %v5521, -inf
      %5742 = vmax.xlane.f32.xlu0 %v5741
      %v5743 = vpop.xlane.xlu0 %5742
      %v5744 = vsel %vm685, %v5523, -inf
      %5745 = vmax.xlane.f32.xlu0 %v5744
      %v5746 = vpop.xlane.xlu0 %5745
      %v5747 = vsel %vm685, %v5545, -inf
      %5748 = vmax.xlane.f32.xlu0 %v5747
      %v5749 = vpop.xlane.xlu0 %5748
      %v5750 = vsel %vm685, %v5547, -inf
      %5751 = vmax.xlane.f32.xlu0 %v5750
      %v5752 = vpop.xlane.xlu0 %5751
      %v5753 = vsel %vm685, %v5569, -inf
      %5754 = vmax.xlane.f32.xlu0 %v5753
      %v5755 = vpop.xlane.xlu0 %5754
      %v5756 = vsel %vm685, %v5571, -inf
      %5757 = vmax.xlane.f32.xlu0 %v5756
      %v5758 = vpop.xlane.xlu0 %5757
      %v5759 = vsel %vm685, %v5593, -inf
      %5760 = vmax.xlane.f32.xlu0 %v5759
      %v5761 = vpop.xlane.xlu0 %5760
      %v5762 = vsel %vm685, %v5595, -inf
      %5763 = vmax.xlane.f32.xlu0 %v5762
      %v5764 = vpop.xlane.xlu0 %5763
      %v5765 = vsel %vm685, %v5617, -inf
      %5766 = vmax.xlane.f32.xlu0 %v5765
      %v5767 = vpop.xlane.xlu0 %5766
      %v5768 = vsel %vm685, %v5619, -inf
      %5769 = vmax.xlane.f32.xlu0 %v5768
      %v5770 = vpop.xlane.xlu0 %5769
      %v5771 = vsel %vm685, %v5641, -inf
      %5772 = vmax.xlane.f32.xlu0 %v5771
      %v5773 = vpop.xlane.xlu0 %5772
      %v5774 = vsel %vm685, %v5643, -inf
      %5775 = vmax.xlane.f32.xlu0 %v5774
      %v5776 = vpop.xlane.xlu0 %5775
      %v5777 = vsel %vm685, %v5665, -inf
      %5778 = vmax.xlane.f32.xlu0 %v5777
      %v5779 = vpop.xlane.xlu0 %5778
      %v5780 = vsel %vm685, %v5667, -inf
      %5781 = vmax.xlane.f32.xlu0 %v5780
      %v5782 = vpop.xlane.xlu0 %5781
      %v5783 = vsel %vm685, %v5689, -inf
      %5784 = vmax.xlane.f32.xlu0 %v5783
      %v5785 = vpop.xlane.xlu0 %5784
      %v5786 = vsel %vm685, %v5691, -inf
      %5787 = vmax.xlane.f32.xlu0 %v5786
      %v5788 = vpop.xlane.xlu0 %5787
      %v5789 = vsub.f32 %v5329, %v5695
      %v5790 = vsub.f32 %v5331, %v5698
      %v5791 = vsub.f32 %v5353, %v5701
      %v5792 = vsub.f32 %v5355, %v5704
      %v5793 = vsub.f32 %v5377, %v5707
      %v5794 = vsub.f32 %v5379, %v5710
      %v5795 = vsub.f32 %v5401, %v5713
      %v5796 = vsub.f32 %v5403, %v5716
      %v5797 = vsub.f32 %v5425, %v5719
      %v5798 = vsub.f32 %v5427, %v5722
      %v5799 = vsub.f32 %v5449, %v5725
      %v5800 = vsub.f32 %v5451, %v5728
      %v5801 = vsub.f32 %v5473, %v5731
      %v5802 = vsub.f32 %v5475, %v5734
      %v5803 = vsub.f32 %v5497, %v5737
      %v5804 = vsub.f32 %v5499, %v5740
      %v5805 = vsub.f32 %v5521, %v5743
      %v5806 = vsub.f32 %v5523, %v5746
      %v5807 = vsub.f32 %v5545, %v5749
      %v5808 = vsub.f32 %v5547, %v5752
      %v5809 = vsub.f32 %v5569, %v5755
      %v5810 = vsub.f32 %v5571, %v5758
      %v5811 = vsub.f32 %v5593, %v5761
      %v5812 = vsub.f32 %v5595, %v5764
      %v5813 = vsub.f32 %v5617, %v5767
      %v5814 = vsub.f32 %v5619, %v5770
      %v5815 = vsub.f32 %v5641, %v5773
      %v5816 = vsub.f32 %v5643, %v5776
      %v5817 = vsub.f32 %v5665, %v5779
      %v5818 = vsub.f32 %v5667, %v5782
      %v5819 = vsub.f32 %v5689, %v5785
      %v5820 = vsub.f32 %v5691, %v5788
      %v5821 = vmul.f32 %v5789, 1.442695
      %v5822 = vpow.pop %v5821
      %v5823 = vmul.f32 %v5790, 1.442695
      %v5824 = vpow.pop %v5823
      %v5825 = vmul.f32 %v5791, 1.442695
      %v5826 = vpow.pop %v5825
      %v5827 = vmul.f32 %v5792, 1.442695
      %v5828 = vpow.pop %v5827
      %v5829 = vmul.f32 %v5793, 1.442695
      %v5830 = vpow.pop %v5829
      %v5831 = vmul.f32 %v5794, 1.442695
      %v5832 = vpow.pop %v5831
      %v5833 = vmul.f32 %v5795, 1.442695
      %v5834 = vpow.pop %v5833
      %v5835 = vmul.f32 %v5796, 1.442695
      %v5836 = vpow.pop %v5835
      %v5837 = vmul.f32 %v5797, 1.442695
      %v5838 = vpow.pop %v5837
      %v5839 = vmul.f32 %v5798, 1.442695
      %v5840 = vpow.pop %v5839
      %v5841 = vmul.f32 %v5799, 1.442695
      %v5842 = vpow.pop %v5841
      %v5843 = vmul.f32 %v5800, 1.442695
      %v5844 = vpow.pop %v5843
      %v5845 = vmul.f32 %v5801, 1.442695
      %v5846 = vpow.pop %v5845
      %v5847 = vmul.f32 %v5802, 1.442695
      %v5848 = vpow.pop %v5847
      %v5849 = vmul.f32 %v5803, 1.442695
      %v5850 = vpow.pop %v5849
      %v5851 = vmul.f32 %v5804, 1.442695
      %v5852 = vpow.pop %v5851
      %v5853 = vmul.f32 %v5805, 1.442695
      %v5854 = vpow.pop %v5853
      %v5855 = vmul.f32 %v5806, 1.442695
      %v5856 = vpow.pop %v5855
      %v5857 = vmul.f32 %v5807, 1.442695
      %v5858 = vpow.pop %v5857
      %v5859 = vmul.f32 %v5808, 1.442695
      %v5860 = vpow.pop %v5859
      %v5861 = vmul.f32 %v5809, 1.442695
      %v5862 = vpow.pop %v5861
      %v5863 = vmul.f32 %v5810, 1.442695
      %v5864 = vpow.pop %v5863
      %v5865 = vmul.f32 %v5811, 1.442695
      %v5866 = vpow.pop %v5865
      %v5867 = vmul.f32 %v5812, 1.442695
      %v5868 = vpow.pop %v5867
      %v5869 = vmul.f32 %v5813, 1.442695
      %v5870 = vpow.pop %v5869
      %v5871 = vmul.f32 %v5814, 1.442695
      %v5872 = vpow.pop %v5871
      %v5873 = vmul.f32 %v5815, 1.442695
      %v5874 = vpow.pop %v5873
      %v5875 = vmul.f32 %v5816, 1.442695
      %v5876 = vpow.pop %v5875
      %v5877 = vmul.f32 %v5817, 1.442695
      %v5878 = vpow.pop %v5877
      %v5879 = vmul.f32 %v5818, 1.442695
      %v5880 = vpow.pop %v5879
      %v5881 = vmul.f32 %v5819, 1.442695
      %v5882 = vpow.pop %v5881
      %v5883 = vmul.f32 %v5820, 1.442695
      %v5884 = vpow.pop %v5883
      %v5885 = vsel %vm685, %v5822, 0.0
      %5886 = vadd.xlane.f32.xlu0 %v5885
      %v5887 = vpop.xlane.xlu0 %5886
      %v5888 = vsel %vm685, %v5824, 0.0
      %5889 = vadd.xlane.f32.xlu0 %v5888
      %v5890 = vpop.xlane.xlu0 %5889
      %v5891 = vsel %vm685, %v5826, 0.0
      %5892 = vadd.xlane.f32.xlu0 %v5891
      %v5893 = vpop.xlane.xlu0 %5892
      %v5894 = vsel %vm685, %v5828, 0.0
      %5895 = vadd.xlane.f32.xlu0 %v5894
      %v5896 = vpop.xlane.xlu0 %5895
      %v5897 = vsel %vm685, %v5830, 0.0
      %5898 = vadd.xlane.f32.xlu0 %v5897
      %v5899 = vpop.xlane.xlu0 %5898
      %v5900 = vsel %vm685, %v5832, 0.0
      %5901 = vadd.xlane.f32.xlu0 %v5900
      %v5902 = vpop.xlane.xlu0 %5901
      %v5903 = vsel %vm685, %v5834, 0.0
      %5904 = vadd.xlane.f32.xlu0 %v5903
      %v5905 = vpop.xlane.xlu0 %5904
      %v5906 = vsel %vm685, %v5836, 0.0
      %5907 = vadd.xlane.f32.xlu0 %v5906
      %v5908 = vpop.xlane.xlu0 %5907
      %v5909 = vsel %vm685, %v5838, 0.0
      %5910 = vadd.xlane.f32.xlu0 %v5909
      %v5911 = vpop.xlane.xlu0 %5910
      %v5912 = vsel %vm685, %v5840, 0.0
      %5913 = vadd.xlane.f32.xlu0 %v5912
      %v5914 = vpop.xlane.xlu0 %5913
      %v5915 = vsel %vm685, %v5842, 0.0
      %5916 = vadd.xlane.f32.xlu0 %v5915
      %v5917 = vpop.xlane.xlu0 %5916
      %v5918 = vsel %vm685, %v5844, 0.0
      %5919 = vadd.xlane.f32.xlu0 %v5918
      %v5920 = vpop.xlane.xlu0 %5919
      %v5921 = vsel %vm685, %v5846, 0.0
      %5922 = vadd.xlane.f32.xlu0 %v5921
      %v5923 = vpop.xlane.xlu0 %5922
      %v5924 = vsel %vm685, %v5848, 0.0
      %5925 = vadd.xlane.f32.xlu0 %v5924
      %v5926 = vpop.xlane.xlu0 %5925
      %v5927 = vsel %vm685, %v5850, 0.0
      %5928 = vadd.xlane.f32.xlu0 %v5927
      %v5929 = vpop.xlane.xlu0 %5928
      %v5930 = vsel %vm685, %v5852, 0.0
      %5931 = vadd.xlane.f32.xlu0 %v5930
      %v5932 = vpop.xlane.xlu0 %5931
      %v5933 = vsel %vm685, %v5854, 0.0
      %5934 = vadd.xlane.f32.xlu0 %v5933
      %v5935 = vpop.xlane.xlu0 %5934
      %v5936 = vsel %vm685, %v5856, 0.0
      %5937 = vadd.xlane.f32.xlu0 %v5936
      %v5938 = vpop.xlane.xlu0 %5937
      %v5939 = vsel %vm685, %v5858, 0.0
      %5940 = vadd.xlane.f32.xlu0 %v5939
      %v5941 = vpop.xlane.xlu0 %5940
      %v5942 = vsel %vm685, %v5860, 0.0
      %5943 = vadd.xlane.f32.xlu0 %v5942
      %v5944 = vpop.xlane.xlu0 %5943
      %v5945 = vsel %vm685, %v5862, 0.0
      %5946 = vadd.xlane.f32.xlu0 %v5945
      %v5947 = vpop.xlane.xlu0 %5946
      %v5948 = vsel %vm685, %v5864, 0.0
      %5949 = vadd.xlane.f32.xlu0 %v5948
      %v5950 = vpop.xlane.xlu0 %5949
      %v5951 = vsel %vm685, %v5866, 0.0
      %5952 = vadd.xlane.f32.xlu0 %v5951
      %v5953 = vpop.xlane.xlu0 %5952
      %v5954 = vsel %vm685, %v5868, 0.0
      %5955 = vadd.xlane.f32.xlu0 %v5954
      %v5956 = vpop.xlane.xlu0 %5955
      %v5957 = vsel %vm685, %v5870, 0.0
      %5958 = vadd.xlane.f32.xlu0 %v5957
      %v5959 = vpop.xlane.xlu0 %5958
      %v5960 = vsel %vm685, %v5872, 0.0
      %5961 = vadd.xlane.f32.xlu0 %v5960
      %v5962 = vpop.xlane.xlu0 %5961
      %v5963 = vsel %vm685, %v5874, 0.0
      %5964 = vadd.xlane.f32.xlu0 %v5963
      %v5965 = vpop.xlane.xlu0 %5964
      %v5966 = vsel %vm685, %v5876, 0.0
      %5967 = vadd.xlane.f32.xlu0 %v5966
      %v5968 = vpop.xlane.xlu0 %5967
      %v5969 = vsel %vm685, %v5878, 0.0
      %5970 = vadd.xlane.f32.xlu0 %v5969
      %v5971 = vpop.xlane.xlu0 %5970
      %v5972 = vsel %vm685, %v5880, 0.0
      %5973 = vadd.xlane.f32.xlu0 %v5972
      %v5974 = vpop.xlane.xlu0 %5973
      %v5975 = vsel %vm685, %v5882, 0.0
      %5976 = vadd.xlane.f32.xlu0 %v5975
      %v5977 = vpop.xlane.xlu0 %5976
      %v5978 = vsel %vm685, %v5884, 0.0
      %5979 = vadd.xlane.f32.xlu0 %v5978
      %v5980 = vpop.xlane.xlu0 %5979
      %v5981 = vrcp.pop %v5887
      %v5982 = vrcp.pop %v5890
      %v5983 = vrcp.pop %v5893
      %v5984 = vrcp.pop %v5896
      %v5985 = vrcp.pop %v5899
      %v5986 = vrcp.pop %v5902
      %v5987 = vrcp.pop %v5905
      %v5988 = vrcp.pop %v5908
      %v5989 = vrcp.pop %v5911
      %v5990 = vrcp.pop %v5914
      %v5991 = vrcp.pop %v5917
      %v5992 = vrcp.pop %v5920
      %v5993 = vrcp.pop %v5923
      %v5994 = vrcp.pop %v5926
      %v5995 = vrcp.pop %v5929
      %v5996 = vrcp.pop %v5932
      %v5997 = vrcp.pop %v5935
      %v5998 = vrcp.pop %v5938
      %v5999 = vrcp.pop %v5941
      %v6000 = vrcp.pop %v5944
      %v6001 = vrcp.pop %v5947
      %v6002 = vrcp.pop %v5950
      %v6003 = vrcp.pop %v5953
      %v6004 = vrcp.pop %v5956
      %v6005 = vrcp.pop %v5959
      %v6006 = vrcp.pop %v5962
      %v6007 = vrcp.pop %v5965
      %v6008 = vrcp.pop %v5968
      %v6009 = vrcp.pop %v5971
      %v6010 = vrcp.pop %v5974
      %v6011 = vrcp.pop %v5977
      %v6012 = vrcp.pop %v5980
      %v6013 = vmul.f32 %v5822, %v5981
      %v6014 = vmul.f32 %v5824, %v5982
      %v6015 = vmul.f32 %v5826, %v5983
      %v6016 = vmul.f32 %v5828, %v5984
      %v6017 = vmul.f32 %v5830, %v5985
      %v6018 = vmul.f32 %v5832, %v5986
      %v6019 = vmul.f32 %v5834, %v5987
      %v6020 = vmul.f32 %v5836, %v5988
      %v6021 = vmul.f32 %v5838, %v5989
      %v6022 = vmul.f32 %v5840, %v5990
      %v6023 = vmul.f32 %v5842, %v5991
      %v6024 = vmul.f32 %v5844, %v5992
      %v6025 = vmul.f32 %v5846, %v5993
      %v6026 = vmul.f32 %v5848, %v5994
      %v6027 = vmul.f32 %v5850, %v5995
      %v6028 = vmul.f32 %v5852, %v5996
      %v6029 = vmul.f32 %v5854, %v5997
      %v6030 = vmul.f32 %v5856, %v5998
      %v6031 = vmul.f32 %v5858, %v5999
      %v6032 = vmul.f32 %v5860, %v6000
      %v6033 = vmul.f32 %v5862, %v6001
      %v6034 = vmul.f32 %v5864, %v6002
      %v6035 = vmul.f32 %v5866, %v6003
      %v6036 = vmul.f32 %v5868, %v6004
      %v6037 = vmul.f32 %v5870, %v6005
      %v6038 = vmul.f32 %v5872, %v6006
      %v6039 = vmul.f32 %v5874, %v6007
      %v6040 = vmul.f32 %v5876, %v6008
      %v6041 = vmul.f32 %v5878, %v6009
      %v6042 = vmul.f32 %v5880, %v6010
      %v6043 = vmul.f32 %v5882, %v6011
      %v6044 = vmul.f32 %v5884, %v6012
      %v6045 = vpack.c.bf16 %v6013, %v6013
      %v6046 = vpack.c.bf16 %v6014, %v6014
      %v6047 = vpack.c.bf16 %v6015, %v6015
      %v6048 = vpack.c.bf16 %v6016, %v6016
      %v6049 = vpack.c.bf16 %v6017, %v6017
      %v6050 = vpack.c.bf16 %v6018, %v6018
      %v6051 = vpack.c.bf16 %v6019, %v6019
      %v6052 = vpack.c.bf16 %v6020, %v6020
      %v6053 = vpack.c.bf16 %v6021, %v6021
      %v6054 = vpack.c.bf16 %v6022, %v6022
      %v6055 = vpack.c.bf16 %v6023, %v6023
      %v6056 = vpack.c.bf16 %v6024, %v6024
      %v6057 = vpack.c.bf16 %v6025, %v6025
      %v6058 = vpack.c.bf16 %v6026, %v6026
      %v6059 = vpack.c.bf16 %v6027, %v6027
      %v6060 = vpack.c.bf16 %v6028, %v6028
      %v6061 = vpack.c.bf16 %v6029, %v6029
      %v6062 = vpack.c.bf16 %v6030, %v6030
      %v6063 = vpack.c.bf16 %v6031, %v6031
      %v6064 = vpack.c.bf16 %v6032, %v6032
      %v6065 = vpack.c.bf16 %v6033, %v6033
      %v6066 = vpack.c.bf16 %v6034, %v6034
      %v6067 = vpack.c.bf16 %v6035, %v6035
      %v6068 = vpack.c.bf16 %v6036, %v6036
      %v6069 = vpack.c.bf16 %v6037, %v6037
      %v6070 = vpack.c.bf16 %v6038, %v6038
      %v6071 = vpack.c.bf16 %v6039, %v6039
      %v6072 = vpack.c.bf16 %v6040, %v6040
      %v6073 = vpack.c.bf16 %v6041, %v6041
      %v6074 = vpack.c.bf16 %v6042, %v6042
      %v6075 = vpack.c.bf16 %v6043, %v6043
      %v6076 = vpack.c.bf16 %v6044, %v6044
      %v6079 = vunpack.c.l.b16 %v6045
      %v6080 = vunpack.c.l.b16 %v6046
      %v6081 = vpack.c.b16 %v6080, %v6079
      %6082 = vrot.lane.b32.xlu0 %v2029, 116
      %v6083 = vpop.permute.xlu0 %6082
      %v6086 = vsel %vm685, %v6081, 0
      %6088 = vmatpush.bf16.msra.mxu0 0
      %6089 = vmatpush.bf16.msra.mxu0 0
      %6090 = vmatpush.bf16.msra.mxu0 0
      %6091 = vmatpush.bf16.msra.mxu0 0
      %6092 = vmatpush.bf16.msra.mxu0 0
      %6093 = vmatpush.bf16.msra.mxu0 0
      %6094 = vmatpush.bf16.msra.mxu0 0
      %6095 = vmatpush.bf16.msra.mxu0 %v6083
      %6096 = vmatmul.bf16.gmra.mxu0 %v6086
      %v6097 = vpop.f32.mrf.mxu0
      %v6098 = vadd.f32 0.0, %v6097
      %v6099 = vpop.f32.mrf.mxu0
      %v6100 = vadd.f32 0.0, %v6099
      %6101 = vdwg.mxu0
      %v6104 = vunpack.c.l.b16 %v6047
      %v6105 = vunpack.c.l.b16 %v6048
      %v6106 = vpack.c.b16 %v6105, %v6104
      %6107 = vrot.lane.b32.xlu0 %v2057, 116
      %v6108 = vpop.permute.xlu0 %6107
      %v6111 = vsel %vm685, %v6106, 0
      %6113 = vmatpush.bf16.msra.mxu0 0
      %6114 = vmatpush.bf16.msra.mxu0 0
      %6115 = vmatpush.bf16.msra.mxu0 0
      %6116 = vmatpush.bf16.msra.mxu0 0
      %6117 = vmatpush.bf16.msra.mxu0 0
      %6118 = vmatpush.bf16.msra.mxu0 0
      %6119 = vmatpush.bf16.msra.mxu0 0
      %6120 = vmatpush.bf16.msra.mxu0 %v6108
      %6121 = vmatmul.bf16.gmra.mxu0 %v6111
      %v6122 = vpop.f32.mrf.mxu0
      %v6123 = vadd.f32 0.0, %v6122
      %v6124 = vpop.f32.mrf.mxu0
      %v6125 = vadd.f32 0.0, %v6124
      %6126 = vdwg.mxu0
      %v6129 = vunpack.c.l.b16 %v6049
      %v6130 = vunpack.c.l.b16 %v6050
      %v6131 = vpack.c.b16 %v6130, %v6129
      %6132 = vrot.lane.b32.xlu0 %v2085, 116
      %v6133 = vpop.permute.xlu0 %6132
      %v6136 = vsel %vm685, %v6131, 0
      %6138 = vmatpush.bf16.msra.mxu0 0
      %6139 = vmatpush.bf16.msra.mxu0 0
      %6140 = vmatpush.bf16.msra.mxu0 0
      %6141 = vmatpush.bf16.msra.mxu0 0
      %6142 = vmatpush.bf16.msra.mxu0 0
      %6143 = vmatpush.bf16.msra.mxu0 0
      %6144 = vmatpush.bf16.msra.mxu0 0
      %6145 = vmatpush.bf16.msra.mxu0 %v6133
      %6146 = vmatmul.bf16.gmra.mxu0 %v6136
      %v6147 = vpop.f32.mrf.mxu0
      %v6148 = vadd.f32 0.0, %v6147
      %v6149 = vpop.f32.mrf.mxu0
      %v6150 = vadd.f32 0.0, %v6149
      %6151 = vdwg.mxu0
      %v6154 = vunpack.c.l.b16 %v6051
      %v6155 = vunpack.c.l.b16 %v6052
      %v6156 = vpack.c.b16 %v6155, %v6154
      %6157 = vrot.lane.b32.xlu0 %v2113, 116
      %v6158 = vpop.permute.xlu0 %6157
      %v6161 = vsel %vm685, %v6156, 0
      %6163 = vmatpush.bf16.msra.mxu0 0
      %6164 = vmatpush.bf16.msra.mxu0 0
      %6165 = vmatpush.bf16.msra.mxu0 0
      %6166 = vmatpush.bf16.msra.mxu0 0
      %6167 = vmatpush.bf16.msra.mxu0 0
      %6168 = vmatpush.bf16.msra.mxu0 0
      %6169 = vmatpush.bf16.msra.mxu0 0
      %6170 = vmatpush.bf16.msra.mxu0 %v6158
      %6171 = vmatmul.bf16.gmra.mxu0 %v6161
      %v6172 = vpop.f32.mrf.mxu0
      %v6173 = vadd.f32 0.0, %v6172
      %v6174 = vpop.f32.mrf.mxu0
      %v6175 = vadd.f32 0.0, %v6174
      %6176 = vdwg.mxu0
      %v6179 = vunpack.c.l.b16 %v6053
      %v6180 = vunpack.c.l.b16 %v6054
      %v6181 = vpack.c.b16 %v6180, %v6179
      %6182 = vrot.lane.b32.xlu0 %v2141, 116
      %v6183 = vpop.permute.xlu0 %6182
      %v6186 = vsel %vm685, %v6181, 0
      %6188 = vmatpush.bf16.msra.mxu0 0
      %6189 = vmatpush.bf16.msra.mxu0 0
      %6190 = vmatpush.bf16.msra.mxu0 0
      %6191 = vmatpush.bf16.msra.mxu0 0
      %6192 = vmatpush.bf16.msra.mxu0 0
      %6193 = vmatpush.bf16.msra.mxu0 0
      %6194 = vmatpush.bf16.msra.mxu0 0
      %6195 = vmatpush.bf16.msra.mxu0 %v6183
      %6196 = vmatmul.bf16.gmra.mxu0 %v6186
      %v6197 = vpop.f32.mrf.mxu0
      %v6198 = vadd.f32 0.0, %v6197
      %v6199 = vpop.f32.mrf.mxu0
      %v6200 = vadd.f32 0.0, %v6199
      %6201 = vdwg.mxu0
      %v6204 = vunpack.c.l.b16 %v6055
      %v6205 = vunpack.c.l.b16 %v6056
      %v6206 = vpack.c.b16 %v6205, %v6204
      %6207 = vrot.lane.b32.xlu0 %v2169, 116
      %v6208 = vpop.permute.xlu0 %6207
      %v6211 = vsel %vm685, %v6206, 0
      %6213 = vmatpush.bf16.msra.mxu0 0
      %6214 = vmatpush.bf16.msra.mxu0 0
      %6215 = vmatpush.bf16.msra.mxu0 0
      %6216 = vmatpush.bf16.msra.mxu0 0
      %6217 = vmatpush.bf16.msra.mxu0 0
      %6218 = vmatpush.bf16.msra.mxu0 0
      %6219 = vmatpush.bf16.msra.mxu0 0
      %6220 = vmatpush.bf16.msra.mxu0 %v6208
      %6221 = vmatmul.bf16.gmra.mxu0 %v6211
      %v6222 = vpop.f32.mrf.mxu0
      %v6223 = vadd.f32 0.0, %v6222
      %v6224 = vpop.f32.mrf.mxu0
      %v6225 = vadd.f32 0.0, %v6224
      %6226 = vdwg.mxu0
      %v6229 = vunpack.c.l.b16 %v6057
      %v6230 = vunpack.c.l.b16 %v6058
      %v6231 = vpack.c.b16 %v6230, %v6229
      %6232 = vrot.lane.b32.xlu0 %v2197, 116
      %v6233 = vpop.permute.xlu0 %6232
      %v6236 = vsel %vm685, %v6231, 0
      %6238 = vmatpush.bf16.msra.mxu0 0
      %6239 = vmatpush.bf16.msra.mxu0 0
      %6240 = vmatpush.bf16.msra.mxu0 0
      %6241 = vmatpush.bf16.msra.mxu0 0
      %6242 = vmatpush.bf16.msra.mxu0 0
      %6243 = vmatpush.bf16.msra.mxu0 0
      %6244 = vmatpush.bf16.msra.mxu0 0
      %6245 = vmatpush.bf16.msra.mxu0 %v6233
      %6246 = vmatmul.bf16.gmra.mxu0 %v6236
      %v6247 = vpop.f32.mrf.mxu0
      %v6248 = vadd.f32 0.0, %v6247
      %v6249 = vpop.f32.mrf.mxu0
      %v6250 = vadd.f32 0.0, %v6249
      %6251 = vdwg.mxu0
      %v6254 = vunpack.c.l.b16 %v6059
      %v6255 = vunpack.c.l.b16 %v6060
      %v6256 = vpack.c.b16 %v6255, %v6254
      %6257 = vrot.lane.b32.xlu0 %v2225, 116
      %v6258 = vpop.permute.xlu0 %6257
      %v6261 = vsel %vm685, %v6256, 0
      %6263 = vmatpush.bf16.msra.mxu0 0
      %6264 = vmatpush.bf16.msra.mxu0 0
      %6265 = vmatpush.bf16.msra.mxu0 0
      %6266 = vmatpush.bf16.msra.mxu0 0
      %6267 = vmatpush.bf16.msra.mxu0 0
      %6268 = vmatpush.bf16.msra.mxu0 0
      %6269 = vmatpush.bf16.msra.mxu0 0
      %6270 = vmatpush.bf16.msra.mxu0 %v6258
      %6271 = vmatmul.bf16.gmra.mxu0 %v6261
      %v6272 = vpop.f32.mrf.mxu0
      %v6273 = vadd.f32 0.0, %v6272
      %v6274 = vpop.f32.mrf.mxu0
      %v6275 = vadd.f32 0.0, %v6274
      %6276 = vdwg.mxu0
      %v6279 = vunpack.c.l.b16 %v6061
      %v6280 = vunpack.c.l.b16 %v6062
      %v6281 = vpack.c.b16 %v6280, %v6279
      %6282 = vrot.lane.b32.xlu0 %v2253, 116
      %v6283 = vpop.permute.xlu0 %6282
      %v6286 = vsel %vm685, %v6281, 0
      %6288 = vmatpush.bf16.msra.mxu0 0
      %6289 = vmatpush.bf16.msra.mxu0 0
      %6290 = vmatpush.bf16.msra.mxu0 0
      %6291 = vmatpush.bf16.msra.mxu0 0
      %6292 = vmatpush.bf16.msra.mxu0 0
      %6293 = vmatpush.bf16.msra.mxu0 0
      %6294 = vmatpush.bf16.msra.mxu0 0
      %6295 = vmatpush.bf16.msra.mxu0 %v6283
      %6296 = vmatmul.bf16.gmra.mxu0 %v6286
      %v6297 = vpop.f32.mrf.mxu0
      %v6298 = vadd.f32 0.0, %v6297
      %v6299 = vpop.f32.mrf.mxu0
      %v6300 = vadd.f32 0.0, %v6299
      %6301 = vdwg.mxu0
      %v6304 = vunpack.c.l.b16 %v6063
      %v6305 = vunpack.c.l.b16 %v6064
      %v6306 = vpack.c.b16 %v6305, %v6304
      %6307 = vrot.lane.b32.xlu0 %v2281, 116
      %v6308 = vpop.permute.xlu0 %6307
      %v6311 = vsel %vm685, %v6306, 0
      %6313 = vmatpush.bf16.msra.mxu0 0
      %6314 = vmatpush.bf16.msra.mxu0 0
      %6315 = vmatpush.bf16.msra.mxu0 0
      %6316 = vmatpush.bf16.msra.mxu0 0
      %6317 = vmatpush.bf16.msra.mxu0 0
      %6318 = vmatpush.bf16.msra.mxu0 0
      %6319 = vmatpush.bf16.msra.mxu0 0
      %6320 = vmatpush.bf16.msra.mxu0 %v6308
      %6321 = vmatmul.bf16.gmra.mxu0 %v6311
      %v6322 = vpop.f32.mrf.mxu0
      %v6323 = vadd.f32 0.0, %v6322
      %v6324 = vpop.f32.mrf.mxu0
      %v6325 = vadd.f32 0.0, %v6324
      %6326 = vdwg.mxu0
      %v6329 = vunpack.c.l.b16 %v6065
      %v6330 = vunpack.c.l.b16 %v6066
      %v6331 = vpack.c.b16 %v6330, %v6329
      %6332 = vrot.lane.b32.xlu0 %v2309, 116
      %v6333 = vpop.permute.xlu0 %6332
      %v6336 = vsel %vm685, %v6331, 0
      %6338 = vmatpush.bf16.msra.mxu0 0
      %6339 = vmatpush.bf16.msra.mxu0 0
      %6340 = vmatpush.bf16.msra.mxu0 0
      %6341 = vmatpush.bf16.msra.mxu0 0
      %6342 = vmatpush.bf16.msra.mxu0 0
      %6343 = vmatpush.bf16.msra.mxu0 0
      %6344 = vmatpush.bf16.msra.mxu0 0
      %6345 = vmatpush.bf16.msra.mxu0 %v6333
      %6346 = vmatmul.bf16.gmra.mxu0 %v6336
      %v6347 = vpop.f32.mrf.mxu0
      %v6348 = vadd.f32 0.0, %v6347
      %v6349 = vpop.f32.mrf.mxu0
      %v6350 = vadd.f32 0.0, %v6349
      %6351 = vdwg.mxu0
      %v6354 = vunpack.c.l.b16 %v6067
      %v6355 = vunpack.c.l.b16 %v6068
      %v6356 = vpack.c.b16 %v6355, %v6354
      %6357 = vrot.lane.b32.xlu0 %v2337, 116
      %v6358 = vpop.permute.xlu0 %6357
      %v6361 = vsel %vm685, %v6356, 0
      %6363 = vmatpush.bf16.msra.mxu0 0
      %6364 = vmatpush.bf16.msra.mxu0 0
      %6365 = vmatpush.bf16.msra.mxu0 0
      %6366 = vmatpush.bf16.msra.mxu0 0
      %6367 = vmatpush.bf16.msra.mxu0 0
      %6368 = vmatpush.bf16.msra.mxu0 0
      %6369 = vmatpush.bf16.msra.mxu0 0
      %6370 = vmatpush.bf16.msra.mxu0 %v6358
      %6371 = vmatmul.bf16.gmra.mxu0 %v6361
      %v6372 = vpop.f32.mrf.mxu0
      %v6373 = vadd.f32 0.0, %v6372
      %v6374 = vpop.f32.mrf.mxu0
      %v6375 = vadd.f32 0.0, %v6374
      %6376 = vdwg.mxu0
      %v6379 = vunpack.c.l.b16 %v6069
      %v6380 = vunpack.c.l.b16 %v6070
      %v6381 = vpack.c.b16 %v6380, %v6379
      %6382 = vrot.lane.b32.xlu0 %v2365, 116
      %v6383 = vpop.permute.xlu0 %6382
      %v6386 = vsel %vm685, %v6381, 0
      %6388 = vmatpush.bf16.msra.mxu0 0
      %6389 = vmatpush.bf16.msra.mxu0 0
      %6390 = vmatpush.bf16.msra.mxu0 0
      %6391 = vmatpush.bf16.msra.mxu0 0
      %6392 = vmatpush.bf16.msra.mxu0 0
      %6393 = vmatpush.bf16.msra.mxu0 0
      %6394 = vmatpush.bf16.msra.mxu0 0
      %6395 = vmatpush.bf16.msra.mxu0 %v6383
      %6396 = vmatmul.bf16.gmra.mxu0 %v6386
      %v6397 = vpop.f32.mrf.mxu0
      %v6398 = vadd.f32 0.0, %v6397
      %v6399 = vpop.f32.mrf.mxu0
      %v6400 = vadd.f32 0.0, %v6399
      %6401 = vdwg.mxu0
      %v6404 = vunpack.c.l.b16 %v6071
      %v6405 = vunpack.c.l.b16 %v6072
      %v6406 = vpack.c.b16 %v6405, %v6404
      %6407 = vrot.lane.b32.xlu0 %v2393, 116
      %v6408 = vpop.permute.xlu0 %6407
      %v6411 = vsel %vm685, %v6406, 0
      %6413 = vmatpush.bf16.msra.mxu0 0
      %6414 = vmatpush.bf16.msra.mxu0 0
      %6415 = vmatpush.bf16.msra.mxu0 0
      %6416 = vmatpush.bf16.msra.mxu0 0
      %6417 = vmatpush.bf16.msra.mxu0 0
      %6418 = vmatpush.bf16.msra.mxu0 0
      %6419 = vmatpush.bf16.msra.mxu0 0
      %6420 = vmatpush.bf16.msra.mxu0 %v6408
      %6421 = vmatmul.bf16.gmra.mxu0 %v6411
      %v6422 = vpop.f32.mrf.mxu0
      %v6423 = vadd.f32 0.0, %v6422
      %v6424 = vpop.f32.mrf.mxu0
      %v6425 = vadd.f32 0.0, %v6424
      %6426 = vdwg.mxu0
      %v6429 = vunpack.c.l.b16 %v6073
      %v6430 = vunpack.c.l.b16 %v6074
      %v6431 = vpack.c.b16 %v6430, %v6429
      %6432 = vrot.lane.b32.xlu0 %v2421, 116
      %v6433 = vpop.permute.xlu0 %6432
      %v6436 = vsel %vm685, %v6431, 0
      %6438 = vmatpush.bf16.msra.mxu0 0
      %6439 = vmatpush.bf16.msra.mxu0 0
      %6440 = vmatpush.bf16.msra.mxu0 0
      %6441 = vmatpush.bf16.msra.mxu0 0
      %6442 = vmatpush.bf16.msra.mxu0 0
      %6443 = vmatpush.bf16.msra.mxu0 0
      %6444 = vmatpush.bf16.msra.mxu0 0
      %6445 = vmatpush.bf16.msra.mxu0 %v6433
      %6446 = vmatmul.bf16.gmra.mxu0 %v6436
      %v6447 = vpop.f32.mrf.mxu0
      %v6448 = vadd.f32 0.0, %v6447
      %v6449 = vpop.f32.mrf.mxu0
      %v6450 = vadd.f32 0.0, %v6449
      %6451 = vdwg.mxu0
      %v6454 = vunpack.c.l.b16 %v6075
      %v6455 = vunpack.c.l.b16 %v6076
      %v6456 = vpack.c.b16 %v6455, %v6454
      %6457 = vrot.lane.b32.xlu0 %v2449, 116
      %v6458 = vpop.permute.xlu0 %6457
      %v6461 = vsel %vm685, %v6456, 0
      %6463 = vmatpush.bf16.msra.mxu0 0
      %6464 = vmatpush.bf16.msra.mxu0 0
      %6465 = vmatpush.bf16.msra.mxu0 0
      %6466 = vmatpush.bf16.msra.mxu0 0
      %6467 = vmatpush.bf16.msra.mxu0 0
      %6468 = vmatpush.bf16.msra.mxu0 0
      %6469 = vmatpush.bf16.msra.mxu0 0
      %6470 = vmatpush.bf16.msra.mxu0 %v6458
      %6471 = vmatmul.bf16.gmra.mxu0 %v6461
      %v6472 = vpop.f32.mrf.mxu0
      %v6473 = vadd.f32 0.0, %v6472
      %v6474 = vpop.f32.mrf.mxu0
      %v6475 = vadd.f32 0.0, %v6474
      %6476 = vdwg.mxu0
      %v6477 = vpack.c.bf16 %v6100, %v6098
      %v6478 = vpack.c.bf16 %v6125, %v6123
      %v6479 = vpack.c.bf16 %v6150, %v6148
      %v6480 = vpack.c.bf16 %v6175, %v6173
      %v6481 = vpack.c.bf16 %v6200, %v6198
      %v6482 = vpack.c.bf16 %v6225, %v6223
      %v6483 = vpack.c.bf16 %v6250, %v6248
      %v6484 = vpack.c.bf16 %v6275, %v6273
      %v6485 = vpack.c.bf16 %v6300, %v6298
      %v6486 = vpack.c.bf16 %v6325, %v6323
      %v6487 = vpack.c.bf16 %v6350, %v6348
      %v6488 = vpack.c.bf16 %v6375, %v6373
      %v6489 = vpack.c.bf16 %v6400, %v6398
      %v6490 = vpack.c.bf16 %v6425, %v6423
      %v6491 = vpack.c.bf16 %v6450, %v6448
      %v6492 = vpack.c.bf16 %v6475, %v6473
      %v6494 = vunpack.c.l.b16 %v1154
      %v6495 = vpack.c.b16 %v6494, %v6494
      %v6496 = vrot.slane %v6495, 2
      %v6498 = vsel %vm1165, %v6477, 0
      %v6501 = vsel %vm1165, %v6478, 0
      %v6504 = vsel %vm1165, %v6479, 0
      %v6507 = vsel %vm1165, %v6480, 0
      %v6510 = vsel %vm1165, %v6481, 0
      %v6513 = vsel %vm1165, %v6482, 0
      %v6516 = vsel %vm1165, %v6483, 0
      %v6519 = vsel %vm1165, %v6484, 0
      %v6522 = vsel %vm1165, %v6485, 0
      %v6525 = vsel %vm1165, %v6486, 0
      %v6528 = vsel %vm1165, %v6487, 0
      %v6531 = vsel %vm1165, %v6488, 0
      %v6534 = vsel %vm1165, %v6489, 0
      %v6537 = vsel %vm1165, %v6490, 0
      %v6540 = vsel %vm1165, %v6491, 0
      %v6543 = vsel %vm1165, %v6492, 0
      %v6546 = vsel %vm3720, %v6496, 0
      %6548 = vmatpush.bf16.msra.mxu0 0
      %6549 = vmatpush.bf16.msra.mxu0 0
      %6550 = vmatpush.bf16.msra.mxu0 0
      %6551 = vmatpush.bf16.msra.mxu0 0
      %6552 = vmatpush.bf16.msra.mxu0 0
      %6553 = vmatpush.bf16.msra.mxu0 0
      %6554 = vmatpush.bf16.msra.mxu0 0
      %6555 = vmatpush.bf16.msra.mxu0 %v6546
      %6556 = vmatmul.bf16.gmra.mxu0 %v6498
      %v6557 = vpop.f32.mrf.mxu0
      %v6558 = vadd.f32 0.0, %v6557
      %v6559 = vpop.f32.mrf.mxu0
      %v6560 = vadd.f32 0.0, %v6559
      %6561 = vmatmul.bf16.gmra.mxu0 %v6501
      %v6562 = vpop.f32.mrf.mxu0
      %v6563 = vadd.f32 0.0, %v6562
      %v6564 = vpop.f32.mrf.mxu0
      %v6565 = vadd.f32 0.0, %v6564
      %6566 = vmatmul.bf16.gmra.mxu0 %v6504
      %v6567 = vpop.f32.mrf.mxu0
      %v6568 = vadd.f32 0.0, %v6567
      %v6569 = vpop.f32.mrf.mxu0
      %v6570 = vadd.f32 0.0, %v6569
      %6571 = vmatmul.bf16.gmra.mxu0 %v6507
      %v6572 = vpop.f32.mrf.mxu0
      %v6573 = vadd.f32 0.0, %v6572
      %v6574 = vpop.f32.mrf.mxu0
      %v6575 = vadd.f32 0.0, %v6574
      %6576 = vmatmul.bf16.gmra.mxu0 %v6510
      %v6577 = vpop.f32.mrf.mxu0
      %v6578 = vadd.f32 0.0, %v6577
      %v6579 = vpop.f32.mrf.mxu0
      %v6580 = vadd.f32 0.0, %v6579
      %6581 = vmatmul.bf16.gmra.mxu0 %v6513
      %v6582 = vpop.f32.mrf.mxu0
      %v6583 = vadd.f32 0.0, %v6582
      %v6584 = vpop.f32.mrf.mxu0
      %v6585 = vadd.f32 0.0, %v6584
      %6586 = vmatmul.bf16.gmra.mxu0 %v6516
      %v6587 = vpop.f32.mrf.mxu0
      %v6588 = vadd.f32 0.0, %v6587
      %v6589 = vpop.f32.mrf.mxu0
      %v6590 = vadd.f32 0.0, %v6589
      %6591 = vmatmul.bf16.gmra.mxu0 %v6519
      %v6592 = vpop.f32.mrf.mxu0
      %v6593 = vadd.f32 0.0, %v6592
      %v6594 = vpop.f32.mrf.mxu0
      %v6595 = vadd.f32 0.0, %v6594
      %6596 = vmatmul.bf16.gmra.mxu0 %v6522
      %v6597 = vpop.f32.mrf.mxu0
      %v6598 = vadd.f32 0.0, %v6597
      %v6599 = vpop.f32.mrf.mxu0
      %v6600 = vadd.f32 0.0, %v6599
      %6601 = vmatmul.bf16.gmra.mxu0 %v6525
      %v6602 = vpop.f32.mrf.mxu0
      %v6603 = vadd.f32 0.0, %v6602
      %v6604 = vpop.f32.mrf.mxu0
      %v6605 = vadd.f32 0.0, %v6604
      %6606 = vmatmul.bf16.gmra.mxu0 %v6528
      %v6607 = vpop.f32.mrf.mxu0
      %v6608 = vadd.f32 0.0, %v6607
      %v6609 = vpop.f32.mrf.mxu0
      %v6610 = vadd.f32 0.0, %v6609
      %6611 = vmatmul.bf16.gmra.mxu0 %v6531
      %v6612 = vpop.f32.mrf.mxu0
      %v6613 = vadd.f32 0.0, %v6612
      %v6614 = vpop.f32.mrf.mxu0
      %v6615 = vadd.f32 0.0, %v6614
      %6616 = vmatmul.bf16.gmra.mxu0 %v6534
      %v6617 = vpop.f32.mrf.mxu0
      %v6618 = vadd.f32 0.0, %v6617
      %v6619 = vpop.f32.mrf.mxu0
      %v6620 = vadd.f32 0.0, %v6619
      %6621 = vmatmul.bf16.gmra.mxu0 %v6537
      %v6622 = vpop.f32.mrf.mxu0
      %v6623 = vadd.f32 0.0, %v6622
      %v6624 = vpop.f32.mrf.mxu0
      %v6625 = vadd.f32 0.0, %v6624
      %6626 = vmatmul.bf16.gmra.mxu0 %v6540
      %v6627 = vpop.f32.mrf.mxu0
      %v6628 = vadd.f32 0.0, %v6627
      %v6629 = vpop.f32.mrf.mxu0
      %v6630 = vadd.f32 0.0, %v6629
      %6631 = vmatmul.bf16.gmra.mxu0 %v6543
      %v6632 = vpop.f32.mrf.mxu0
      %v6633 = vadd.f32 0.0, %v6632
      %v6634 = vpop.f32.mrf.mxu0
      %v6635 = vadd.f32 0.0, %v6634
      %6636 = vdwg.mxu0
      %v6637 = vadd.f32 %v5277, %v6558
      %v6638 = vadd.f32 %v5278, %v6560
      %v6639 = vadd.f32 %v5279, %v6563
      %v6640 = vadd.f32 %v5280, %v6565
      %v6641 = vadd.f32 %v5281, %v6568
      %v6642 = vadd.f32 %v5282, %v6570
      %v6643 = vadd.f32 %v5283, %v6573
      %v6644 = vadd.f32 %v5284, %v6575
      %v6645 = vadd.f32 %v5285, %v6578
      %v6646 = vadd.f32 %v5286, %v6580
      %v6647 = vadd.f32 %v5287, %v6583
      %v6648 = vadd.f32 %v5288, %v6585
      %v6649 = vadd.f32 %v5289, %v6588
      %v6650 = vadd.f32 %v5290, %v6590
      %v6651 = vadd.f32 %v5291, %v6593
      %v6652 = vadd.f32 %v5292, %v6595
      %v6653 = vadd.f32 %v5293, %v6598
      %v6654 = vadd.f32 %v5294, %v6600
      %v6655 = vadd.f32 %v5295, %v6603
      %v6656 = vadd.f32 %v5296, %v6605
      %v6657 = vadd.f32 %v5297, %v6608
      %v6658 = vadd.f32 %v5298, %v6610
      %v6659 = vadd.f32 %v5299, %v6613
      %v6660 = vadd.f32 %v5300, %v6615
      %v6661 = vadd.f32 %v5301, %v6618
      %v6662 = vadd.f32 %v5302, %v6620
      %v6663 = vadd.f32 %v5303, %v6623
      %v6664 = vadd.f32 %v5304, %v6625
      %v6665 = vadd.f32 %v5305, %v6628
      %v6666 = vadd.f32 %v5306, %v6630
      %v6667 = vadd.f32 %v5307, %v6633
      %v6668 = vadd.f32 %v5308, %v6635
      %v6669 = vadd.f32 %v553, %v6637
      %v6670 = vadd.f32 %v554, %v6638
      %v6671 = vadd.f32 %v555, %v6639
      %v6672 = vadd.f32 %v556, %v6640
      %v6673 = vadd.f32 %v557, %v6641
      %v6674 = vadd.f32 %v558, %v6642
      %v6675 = vadd.f32 %v559, %v6643
      %v6676 = vadd.f32 %v560, %v6644
      %v6677 = vadd.f32 %v561, %v6645
      %v6678 = vadd.f32 %v562, %v6646
      %v6679 = vadd.f32 %v563, %v6647
      %v6680 = vadd.f32 %v564, %v6648
      %v6681 = vadd.f32 %v565, %v6649
      %v6682 = vadd.f32 %v566, %v6650
      %v6683 = vadd.f32 %v567, %v6651
      %v6684 = vadd.f32 %v568, %v6652
      %v6685 = vadd.f32 %v569, %v6653
      %v6686 = vadd.f32 %v570, %v6654
      %v6687 = vadd.f32 %v571, %v6655
      %v6688 = vadd.f32 %v572, %v6656
      %v6689 = vadd.f32 %v573, %v6657
      %v6690 = vadd.f32 %v574, %v6658
      %v6691 = vadd.f32 %v575, %v6659
      %v6692 = vadd.f32 %v576, %v6660
      %v6693 = vadd.f32 %v577, %v6661
      %v6694 = vadd.f32 %v578, %v6662
      %v6695 = vadd.f32 %v579, %v6663
      %v6696 = vadd.f32 %v580, %v6664
      %v6697 = vadd.f32 %v581, %v6665
      %v6698 = vadd.f32 %v582, %v6666
      %v6699 = vadd.f32 %v583, %v6667
      %v6700 = vadd.f32 %v584, %v6668
      %v6701 = vld [vmem:[%s10] sm:$0x1]
      %v6703 = vperm.slane %v6701, 0
      %v6705 = vadd.f32 %v6669, %v6703
      %v6706 = vadd.f32 %v6670, %v6703
      %v6707 = vadd.f32 %v6671, %v6703
      %v6708 = vadd.f32 %v6672, %v6703
      %v6709 = vadd.f32 %v6673, %v6703
      %v6710 = vadd.f32 %v6674, %v6703
      %v6711 = vadd.f32 %v6675, %v6703
      %v6712 = vadd.f32 %v6676, %v6703
      %v6713 = vadd.f32 %v6677, %v6703
      %v6714 = vadd.f32 %v6678, %v6703
      %v6715 = vadd.f32 %v6679, %v6703
      %v6716 = vadd.f32 %v6680, %v6703
      %v6717 = vadd.f32 %v6681, %v6703
      %v6718 = vadd.f32 %v6682, %v6703
      %v6719 = vadd.f32 %v6683, %v6703
      %v6720 = vadd.f32 %v6684, %v6703
      %v6721 = vadd.f32 %v6685, %v6703
      %v6722 = vadd.f32 %v6686, %v6703
      %v6723 = vadd.f32 %v6687, %v6703
      %v6724 = vadd.f32 %v6688, %v6703
      %v6725 = vadd.f32 %v6689, %v6703
      %v6726 = vadd.f32 %v6690, %v6703
      %v6727 = vadd.f32 %v6691, %v6703
      %v6728 = vadd.f32 %v6692, %v6703
      %v6729 = vadd.f32 %v6693, %v6703
      %v6730 = vadd.f32 %v6694, %v6703
      %v6731 = vadd.f32 %v6695, %v6703
      %v6732 = vadd.f32 %v6696, %v6703
      %v6733 = vadd.f32 %v6697, %v6703
      %v6734 = vadd.f32 %v6698, %v6703
      %v6735 = vadd.f32 %v6699, %v6703
      %v6736 = vadd.f32 %v6700, %v6703
      %v6737 = vld [vmem:[%s11] sm:$0x1]
      %v6739 = vperm.slane %v6737, 0
      %v6741 = vmul.f32 %v6705, %v6739
      %v6742 = vmul.f32 %v6706, %v6739
      %v6743 = vmul.f32 %v6707, %v6739
      %v6744 = vmul.f32 %v6708, %v6739
      %v6745 = vmul.f32 %v6709, %v6739
      %v6746 = vmul.f32 %v6710, %v6739
      %v6747 = vmul.f32 %v6711, %v6739
      %v6748 = vmul.f32 %v6712, %v6739
      %v6749 = vmul.f32 %v6713, %v6739
      %v6750 = vmul.f32 %v6714, %v6739
      %v6751 = vmul.f32 %v6715, %v6739
      %v6752 = vmul.f32 %v6716, %v6739
      %v6753 = vmul.f32 %v6717, %v6739
      %v6754 = vmul.f32 %v6718, %v6739
      %v6755 = vmul.f32 %v6719, %v6739
      %v6756 = vmul.f32 %v6720, %v6739
      %v6757 = vmul.f32 %v6721, %v6739
      %v6758 = vmul.f32 %v6722, %v6739
      %v6759 = vmul.f32 %v6723, %v6739
      %v6760 = vmul.f32 %v6724, %v6739
      %v6761 = vmul.f32 %v6725, %v6739
      %v6762 = vmul.f32 %v6726, %v6739
      %v6763 = vmul.f32 %v6727, %v6739
      %v6764 = vmul.f32 %v6728, %v6739
      %v6765 = vmul.f32 %v6729, %v6739
      %v6766 = vmul.f32 %v6730, %v6739
      %v6767 = vmul.f32 %v6731, %v6739
      %v6768 = vmul.f32 %v6732, %v6739
      %v6769 = vmul.f32 %v6733, %v6739
      %v6770 = vmul.f32 %v6734, %v6739
      %v6771 = vmul.f32 %v6735, %v6739
      %v6772 = vmul.f32 %v6736, %v6739
      %v6773 = vld [vmem:[%s12] sm:$0x1]
      %v6775 = vperm.slane %v6773, 0
      %v6777 = vadd.f32 %v6741, %v6775
      %v6778 = vadd.f32 %v6742, %v6775
      %v6779 = vadd.f32 %v6743, %v6775
      %v6780 = vadd.f32 %v6744, %v6775
      %v6781 = vadd.f32 %v6745, %v6775
      %v6782 = vadd.f32 %v6746, %v6775
      %v6783 = vadd.f32 %v6747, %v6775
      %v6784 = vadd.f32 %v6748, %v6775
      %v6785 = vadd.f32 %v6749, %v6775
      %v6786 = vadd.f32 %v6750, %v6775
      %v6787 = vadd.f32 %v6751, %v6775
      %v6788 = vadd.f32 %v6752, %v6775
      %v6789 = vadd.f32 %v6753, %v6775
      %v6790 = vadd.f32 %v6754, %v6775
      %v6791 = vadd.f32 %v6755, %v6775
      %v6792 = vadd.f32 %v6756, %v6775
      %v6793 = vadd.f32 %v6757, %v6775
      %v6794 = vadd.f32 %v6758, %v6775
      %v6795 = vadd.f32 %v6759, %v6775
      %v6796 = vadd.f32 %v6760, %v6775
      %v6797 = vadd.f32 %v6761, %v6775
      %v6798 = vadd.f32 %v6762, %v6775
      %v6799 = vadd.f32 %v6763, %v6775
      %v6800 = vadd.f32 %v6764, %v6775
      %v6801 = vadd.f32 %v6765, %v6775
      %v6802 = vadd.f32 %v6766, %v6775
      %v6803 = vadd.f32 %v6767, %v6775
      %v6804 = vadd.f32 %v6768, %v6775
      %v6805 = vadd.f32 %v6769, %v6775
      %v6806 = vadd.f32 %v6770, %v6775
      %v6807 = vadd.f32 %v6771, %v6775
      %v6808 = vadd.f32 %v6772, %v6775
      %v6809 = vpack.c.bf16 %v6778, %v6777
      %v6810 = vpack.c.bf16 %v6780, %v6779
      %v6811 = vpack.c.bf16 %v6782, %v6781
      %v6812 = vpack.c.bf16 %v6784, %v6783
      %v6813 = vpack.c.bf16 %v6786, %v6785
      %v6814 = vpack.c.bf16 %v6788, %v6787
      %v6815 = vpack.c.bf16 %v6790, %v6789
      %v6816 = vpack.c.bf16 %v6792, %v6791
      %v6817 = vpack.c.bf16 %v6794, %v6793
      %v6818 = vpack.c.bf16 %v6796, %v6795
      %v6819 = vpack.c.bf16 %v6798, %v6797
      %v6820 = vpack.c.bf16 %v6800, %v6799
      %v6821 = vpack.c.bf16 %v6802, %v6801
      %v6822 = vpack.c.bf16 %v6804, %v6803
      %v6823 = vpack.c.bf16 %v6806, %v6805
      %v6824 = vpack.c.bf16 %v6808, %v6807
      %v6825 = vld [vmem:[%s13] sm:$0xf]
      %v6826 = vld [vmem:[%s13 + $0x4] sm:$0xf]
      %v6827 = vld [vmem:[%s14] sm:$0x1]
      %v6829 = vperm.slane %v6827, 0
      %v6833 = vunpack.c.l.b16 %v6825
      %v6834 = vunpack.c.l.b16 %v6826
      %v6835 = vpack.c.b16 %v6834, %v6833
      %v6838 = vsel %vm685, %v6809, 0
      %v6841 = vsel %vm685, %v6810, 0
      %v6844 = vsel %vm685, %v6811, 0
      %v6847 = vsel %vm685, %v6812, 0
      %v6850 = vsel %vm685, %v6813, 0
      %v6853 = vsel %vm685, %v6814, 0
      %v6856 = vsel %vm685, %v6815, 0
      %v6859 = vsel %vm685, %v6816, 0
      %v6862 = vsel %vm685, %v6817, 0
      %v6865 = vsel %vm685, %v6818, 0
      %v6868 = vsel %vm685, %v6819, 0
      %v6871 = vsel %vm685, %v6820, 0
      %v6874 = vsel %vm685, %v6821, 0
      %v6877 = vsel %vm685, %v6822, 0
      %v6880 = vsel %vm685, %v6823, 0
      %v6883 = vsel %vm685, %v6824, 0
      %6885 = vmatpush.bf16.msra.mxu0 0
      %6886 = vmatpush.bf16.msra.mxu0 0
      %6887 = vmatpush.bf16.msra.mxu0 0
      %6888 = vmatpush.bf16.msra.mxu0 0
      %6889 = vmatpush.bf16.msra.mxu0 0
      %6890 = vmatpush.bf16.msra.mxu0 0
      %6891 = vmatpush.bf16.msra.mxu0 0
      %6892 = vmatpush.bf16.msra.mxu0 %v6835
      %6893 = vmatmul.bf16.gmra.mxu0 %v6838
      %v6894 = vpop.f32.mrf.mxu0
      %v6895 = vadd.f32 %v6829, %v6894
      %v6896 = vpop.f32.mrf.mxu0
      %v6897 = vadd.f32 %v6829, %v6896
      %6898 = vmatmul.bf16.gmra.mxu0 %v6841
      %v6899 = vpop.f32.mrf.mxu0
      %v6900 = vadd.f32 %v6829, %v6899
      %v6901 = vpop.f32.mrf.mxu0
      %v6902 = vadd.f32 %v6829, %v6901
      %6903 = vmatmul.bf16.gmra.mxu0 %v6844
      %v6904 = vpop.f32.mrf.mxu0
      %v6905 = vadd.f32 %v6829, %v6904
      %v6906 = vpop.f32.mrf.mxu0
      %v6907 = vadd.f32 %v6829, %v6906
      %6908 = vmatmul.bf16.gmra.mxu0 %v6847
      %v6909 = vpop.f32.mrf.mxu0
      %v6910 = vadd.f32 %v6829, %v6909
      %v6911 = vpop.f32.mrf.mxu0
      %v6912 = vadd.f32 %v6829, %v6911
      %6913 = vmatmul.bf16.gmra.mxu0 %v6850
      %v6914 = vpop.f32.mrf.mxu0
      %v6915 = vadd.f32 %v6829, %v6914
      %v6916 = vpop.f32.mrf.mxu0
      %v6917 = vadd.f32 %v6829, %v6916
      %6918 = vmatmul.bf16.gmra.mxu0 %v6853
      %v6919 = vpop.f32.mrf.mxu0
      %v6920 = vadd.f32 %v6829, %v6919
      %v6921 = vpop.f32.mrf.mxu0
      %v6922 = vadd.f32 %v6829, %v6921
      %6923 = vmatmul.bf16.gmra.mxu0 %v6856
      %v6924 = vpop.f32.mrf.mxu0
      %v6925 = vadd.f32 %v6829, %v6924
      %v6926 = vpop.f32.mrf.mxu0
      %v6927 = vadd.f32 %v6829, %v6926
      %6928 = vmatmul.bf16.gmra.mxu0 %v6859
      %v6929 = vpop.f32.mrf.mxu0
      %v6930 = vadd.f32 %v6829, %v6929
      %v6931 = vpop.f32.mrf.mxu0
      %v6932 = vadd.f32 %v6829, %v6931
      %6933 = vmatmul.bf16.gmra.mxu0 %v6862
      %v6934 = vpop.f32.mrf.mxu0
      %v6935 = vadd.f32 %v6829, %v6934
      %v6936 = vpop.f32.mrf.mxu0
      %v6937 = vadd.f32 %v6829, %v6936
      %6938 = vmatmul.bf16.gmra.mxu0 %v6865
      %v6939 = vpop.f32.mrf.mxu0
      %v6940 = vadd.f32 %v6829, %v6939
      %v6941 = vpop.f32.mrf.mxu0
      %v6942 = vadd.f32 %v6829, %v6941
      %6943 = vmatmul.bf16.gmra.mxu0 %v6868
      %v6944 = vpop.f32.mrf.mxu0
      %v6945 = vadd.f32 %v6829, %v6944
      %v6946 = vpop.f32.mrf.mxu0
      %v6947 = vadd.f32 %v6829, %v6946
      %6948 = vmatmul.bf16.gmra.mxu0 %v6871
      %v6949 = vpop.f32.mrf.mxu0
      %v6950 = vadd.f32 %v6829, %v6949
      %v6951 = vpop.f32.mrf.mxu0
      %v6952 = vadd.f32 %v6829, %v6951
      %6953 = vmatmul.bf16.gmra.mxu0 %v6874
      %v6954 = vpop.f32.mrf.mxu0
      %v6955 = vadd.f32 %v6829, %v6954
      %v6956 = vpop.f32.mrf.mxu0
      %v6957 = vadd.f32 %v6829, %v6956
      %6958 = vmatmul.bf16.gmra.mxu0 %v6877
      %v6959 = vpop.f32.mrf.mxu0
      %v6960 = vadd.f32 %v6829, %v6959
      %v6961 = vpop.f32.mrf.mxu0
      %v6962 = vadd.f32 %v6829, %v6961
      %6963 = vmatmul.bf16.gmra.mxu0 %v6880
      %v6964 = vpop.f32.mrf.mxu0
      %v6965 = vadd.f32 %v6829, %v6964
      %v6966 = vpop.f32.mrf.mxu0
      %v6967 = vadd.f32 %v6829, %v6966
      %6968 = vmatmul.bf16.gmra.mxu0 %v6883
      %v6969 = vpop.f32.mrf.mxu0
      %v6970 = vadd.f32 %v6829, %v6969
      %v6971 = vpop.f32.mrf.mxu0
      %v6972 = vadd.f32 %v6829, %v6971
      %6973 = vdwg.mxu0
      %v6974 = vmax.f32 %v6895, 0.0
      %v6975 = vmax.f32 %v6897, 0.0
      %v6976 = vmax.f32 %v6900, 0.0
      %v6977 = vmax.f32 %v6902, 0.0
      %v6978 = vmax.f32 %v6905, 0.0
      %v6979 = vmax.f32 %v6907, 0.0
      %v6980 = vmax.f32 %v6910, 0.0
      %v6981 = vmax.f32 %v6912, 0.0
      %v6982 = vmax.f32 %v6915, 0.0
      %v6983 = vmax.f32 %v6917, 0.0
      %v6984 = vmax.f32 %v6920, 0.0
      %v6985 = vmax.f32 %v6922, 0.0
      %v6986 = vmax.f32 %v6925, 0.0
      %v6987 = vmax.f32 %v6927, 0.0
      %v6988 = vmax.f32 %v6930, 0.0
      %v6989 = vmax.f32 %v6932, 0.0
      %v6990 = vmax.f32 %v6935, 0.0
      %v6991 = vmax.f32 %v6937, 0.0
      %v6992 = vmax.f32 %v6940, 0.0
      %v6993 = vmax.f32 %v6942, 0.0
      %v6994 = vmax.f32 %v6945, 0.0
      %v6995 = vmax.f32 %v6947, 0.0
      %v6996 = vmax.f32 %v6950, 0.0
      %v6997 = vmax.f32 %v6952, 0.0
      %v6998 = vmax.f32 %v6955, 0.0
      %v6999 = vmax.f32 %v6957, 0.0
      %v7000 = vmax.f32 %v6960, 0.0
      %v7001 = vmax.f32 %v6962, 0.0
      %v7002 = vmax.f32 %v6965, 0.0
      %v7003 = vmax.f32 %v6967, 0.0
      %v7004 = vmax.f32 %v6970, 0.0
      %v7005 = vmax.f32 %v6972, 0.0
      %v7006 = vpack.c.bf16 %v6975, %v6974
      %v7007 = vpack.c.bf16 %v6977, %v6976
      %v7008 = vpack.c.bf16 %v6979, %v6978
      %v7009 = vpack.c.bf16 %v6981, %v6980
      %v7010 = vpack.c.bf16 %v6983, %v6982
      %v7011 = vpack.c.bf16 %v6985, %v6984
      %v7012 = vpack.c.bf16 %v6987, %v6986
      %v7013 = vpack.c.bf16 %v6989, %v6988
      %v7014 = vpack.c.bf16 %v6991, %v6990
      %v7015 = vpack.c.bf16 %v6993, %v6992
      %v7016 = vpack.c.bf16 %v6995, %v6994
      %v7017 = vpack.c.bf16 %v6997, %v6996
      %v7018 = vpack.c.bf16 %v6999, %v6998
      %v7019 = vpack.c.bf16 %v7001, %v7000
      %v7020 = vpack.c.bf16 %v7003, %v7002
      %v7021 = vpack.c.bf16 %v7005, %v7004
      %v7022 = vld [vmem:[%s15] sm:$0xf]
      %v7023 = vld [vmem:[%s15 + $0x4] sm:$0xf]
      %v7024 = vld [vmem:[%s15 + $0x8] sm:$0xf]
      %v7025 = vld [vmem:[%s15 + $0xc] sm:$0xf]
      %v7026 = vld [vmem:[%s15 + $0x10] sm:$0xf]
      %v7027 = vld [vmem:[%s15 + $0x14] sm:$0xf]
      %v7028 = vld [vmem:[%s16] sm:$0x1]
      %v7030 = vperm.slane %v7028, 0
      %v7038 = vunpack.c.l.b16 %v7022
      %v7039 = vunpack.c.l.b16 %v7023
      %v7040 = vunpack.c.l.b16 %v7024
      %v7041 = vunpack.c.l.b16 %v7025
      %v7042 = vunpack.c.l.b16 %v7026
      %v7043 = vunpack.c.l.b16 %v7027
      %v7044 = vpack.c.b16 %v7039, %v7038
      %v7045 = vpack.c.b16 %v7041, %v7040
      %v7046 = vpack.c.b16 %v7043, %v7042
      %vm7050 = vcmask 392192
      %v7052 = vsel %vm7050, %v7006, 0
      %v7055 = vsel %vm7050, %v7007, 0
      %v7058 = vsel %vm7050, %v7008, 0
      %v7061 = vsel %vm7050, %v7009, 0
      %v7064 = vsel %vm7050, %v7010, 0
      %v7067 = vsel %vm7050, %v7011, 0
      %v7070 = vsel %vm7050, %v7012, 0
      %v7073 = vsel %vm7050, %v7013, 0
      %v7076 = vsel %vm7050, %v7014, 0
      %v7079 = vsel %vm7050, %v7015, 0
      %v7082 = vsel %vm7050, %v7016, 0
      %v7085 = vsel %vm7050, %v7017, 0
      %v7088 = vsel %vm7050, %v7018, 0
      %v7091 = vsel %vm7050, %v7019, 0
      %v7094 = vsel %vm7050, %v7020, 0
      %v7097 = vsel %vm7050, %v7021, 0
      %7099 = vmatpush.bf16.msra.mxu0 0
      %7100 = vmatpush.bf16.msra.mxu0 0
      %7101 = vmatpush.bf16.msra.mxu0 0
      %7102 = vmatpush.bf16.msra.mxu0 0
      %7103 = vmatpush.bf16.msra.mxu0 0
      %7104 = vmatpush.bf16.msra.mxu0 %v7046
      %7105 = vmatpush.bf16.msra.mxu0 %v7045
      %7106 = vmatpush.bf16.msra.mxu0 %v7044
      %7107 = vmatmul.bf16.gmra.mxu0 %v7052
      %v7108 = vpop.f32.mrf.mxu0
      %v7109 = vadd.f32 %v7030, %v7108
      %v7110 = vpop.f32.mrf.mxu0
      %v7111 = vadd.f32 %v7030, %v7110
      %7112 = vmatmul.bf16.gmra.mxu0 %v7055
      %v7113 = vpop.f32.mrf.mxu0
      %v7114 = vadd.f32 %v7030, %v7113
      %v7115 = vpop.f32.mrf.mxu0
      %v7116 = vadd.f32 %v7030, %v7115
      %7117 = vmatmul.bf16.gmra.mxu0 %v7058
      %v7118 = vpop.f32.mrf.mxu0
      %v7119 = vadd.f32 %v7030, %v7118
      %v7120 = vpop.f32.mrf.mxu0
      %v7121 = vadd.f32 %v7030, %v7120
      %7122 = vmatmul.bf16.gmra.mxu0 %v7061
      %v7123 = vpop.f32.mrf.mxu0
      %v7124 = vadd.f32 %v7030, %v7123
      %v7125 = vpop.f32.mrf.mxu0
      %v7126 = vadd.f32 %v7030, %v7125
      %7127 = vmatmul.bf16.gmra.mxu0 %v7064
      %v7128 = vpop.f32.mrf.mxu0
      %v7129 = vadd.f32 %v7030, %v7128
      %v7130 = vpop.f32.mrf.mxu0
      %v7131 = vadd.f32 %v7030, %v7130
      %7132 = vmatmul.bf16.gmra.mxu0 %v7067
      %v7133 = vpop.f32.mrf.mxu0
      %v7134 = vadd.f32 %v7030, %v7133
      %v7135 = vpop.f32.mrf.mxu0
      %v7136 = vadd.f32 %v7030, %v7135
      %7137 = vmatmul.bf16.gmra.mxu0 %v7070
      %v7138 = vpop.f32.mrf.mxu0
      %v7139 = vadd.f32 %v7030, %v7138
      %v7140 = vpop.f32.mrf.mxu0
      %v7141 = vadd.f32 %v7030, %v7140
      %7142 = vmatmul.bf16.gmra.mxu0 %v7073
      %v7143 = vpop.f32.mrf.mxu0
      %v7144 = vadd.f32 %v7030, %v7143
      %v7145 = vpop.f32.mrf.mxu0
      %v7146 = vadd.f32 %v7030, %v7145
      %7147 = vmatmul.bf16.gmra.mxu0 %v7076
      %v7148 = vpop.f32.mrf.mxu0
      %v7149 = vadd.f32 %v7030, %v7148
      %v7150 = vpop.f32.mrf.mxu0
      %v7151 = vadd.f32 %v7030, %v7150
      %7152 = vmatmul.bf16.gmra.mxu0 %v7079
      %v7153 = vpop.f32.mrf.mxu0
      %v7154 = vadd.f32 %v7030, %v7153
      %v7155 = vpop.f32.mrf.mxu0
      %v7156 = vadd.f32 %v7030, %v7155
      %7157 = vmatmul.bf16.gmra.mxu0 %v7082
      %v7158 = vpop.f32.mrf.mxu0
      %v7159 = vadd.f32 %v7030, %v7158
      %v7160 = vpop.f32.mrf.mxu0
      %v7161 = vadd.f32 %v7030, %v7160
      %7162 = vmatmul.bf16.gmra.mxu0 %v7085
      %v7163 = vpop.f32.mrf.mxu0
      %v7164 = vadd.f32 %v7030, %v7163
      %v7165 = vpop.f32.mrf.mxu0
      %v7166 = vadd.f32 %v7030, %v7165
      %7167 = vmatmul.bf16.gmra.mxu0 %v7088
      %v7168 = vpop.f32.mrf.mxu0
      %v7169 = vadd.f32 %v7030, %v7168
      %v7170 = vpop.f32.mrf.mxu0
      %v7171 = vadd.f32 %v7030, %v7170
      %7172 = vmatmul.bf16.gmra.mxu0 %v7091
      %v7173 = vpop.f32.mrf.mxu0
      %v7174 = vadd.f32 %v7030, %v7173
      %v7175 = vpop.f32.mrf.mxu0
      %v7176 = vadd.f32 %v7030, %v7175
      %7177 = vmatmul.bf16.gmra.mxu0 %v7094
      %v7178 = vpop.f32.mrf.mxu0
      %v7179 = vadd.f32 %v7030, %v7178
      %v7180 = vpop.f32.mrf.mxu0
      %v7181 = vadd.f32 %v7030, %v7180
      %7182 = vmatmul.bf16.gmra.mxu0 %v7097
      %v7183 = vpop.f32.mrf.mxu0
      %v7184 = vadd.f32 %v7030, %v7183
      %v7185 = vpop.f32.mrf.mxu0
      %v7186 = vadd.f32 %v7030, %v7185
      %7187 = vdwg.mxu0
      %v7188 = vadd.f32 %v6705, %v7109
      %v7189 = vadd.f32 %v6706, %v7111
      %v7190 = vadd.f32 %v6707, %v7114
      %v7191 = vadd.f32 %v6708, %v7116
      %v7192 = vadd.f32 %v6709, %v7119
      %v7193 = vadd.f32 %v6710, %v7121
      %v7194 = vadd.f32 %v6711, %v7124
      %v7195 = vadd.f32 %v6712, %v7126
      %v7196 = vadd.f32 %v6713, %v7129
      %v7197 = vadd.f32 %v6714, %v7131
      %v7198 = vadd.f32 %v6715, %v7134
      %v7199 = vadd.f32 %v6716, %v7136
      %v7200 = vadd.f32 %v6717, %v7139
      %v7201 = vadd.f32 %v6718, %v7141
      %v7202 = vadd.f32 %v6719, %v7144
      %v7203 = vadd.f32 %v6720, %v7146
      %v7204 = vadd.f32 %v6721, %v7149
      %v7205 = vadd.f32 %v6722, %v7151
      %v7206 = vadd.f32 %v6723, %v7154
      %v7207 = vadd.f32 %v6724, %v7156
      %v7208 = vadd.f32 %v6725, %v7159
      %v7209 = vadd.f32 %v6726, %v7161
      %v7210 = vadd.f32 %v6727, %v7164
      %v7211 = vadd.f32 %v6728, %v7166
      %v7212 = vadd.f32 %v6729, %v7169
      %v7213 = vadd.f32 %v6730, %v7171
      %v7214 = vadd.f32 %v6731, %v7174
      %v7215 = vadd.f32 %v6732, %v7176
      %v7216 = vadd.f32 %v6733, %v7179
      %v7217 = vadd.f32 %v6734, %v7181
      %v7218 = vadd.f32 %v6735, %v7184
      %v7219 = vadd.f32 %v6736, %v7186
      %7220 = vst.msk [vmem:[%s550] sm:$0xff] %vm685, %v7188
      %7221 = vst.msk [vmem:[%s550 + $0x8] sm:$0xff] %vm685, %v7189
      %7222 = vst.msk [vmem:[%s550 + $0x10] sm:$0xff] %vm685, %v7190
      %7223 = vst.msk [vmem:[%s550 + $0x18] sm:$0xff] %vm685, %v7191
      %7224 = vst.msk [vmem:[%s550 + $0x20] sm:$0xff] %vm685, %v7192
      %7225 = vst.msk [vmem:[%s550 + $0x28] sm:$0xff] %vm685, %v7193
      %7226 = vst.msk [vmem:[%s550 + $0x30] sm:$0xff] %vm685, %v7194
      %7227 = vst.msk [vmem:[%s550 + $0x38] sm:$0xff] %vm685, %v7195
      %7228 = vst.msk [vmem:[%s550 + $0x40] sm:$0xff] %vm685, %v7196
      %7229 = vst.msk [vmem:[%s550 + $0x48] sm:$0xff] %vm685, %v7197
      %7230 = vst.msk [vmem:[%s550 + $0x50] sm:$0xff] %vm685, %v7198
      %7231 = vst.msk [vmem:[%s550 + $0x58] sm:$0xff] %vm685, %v7199
      %7232 = vst.msk [vmem:[%s550 + $0x60] sm:$0xff] %vm685, %v7200
      %7233 = vst.msk [vmem:[%s550 + $0x68] sm:$0xff] %vm685, %v7201
      %7234 = vst.msk [vmem:[%s550 + $0x70] sm:$0xff] %vm685, %v7202
      %7235 = vst.msk [vmem:[%s550 + $0x78] sm:$0xff] %vm685, %v7203
      %7236 = vst.msk [vmem:[%s550 + $0x80] sm:$0xff] %vm685, %v7204
      %7237 = vst.msk [vmem:[%s550 + $0x88] sm:$0xff] %vm685, %v7205
      %7238 = vst.msk [vmem:[%s550 + $0x90] sm:$0xff] %vm685, %v7206
      %7239 = vst.msk [vmem:[%s550 + $0x98] sm:$0xff] %vm685, %v7207
      %7240 = vst.msk [vmem:[%s550 + $0xa0] sm:$0xff] %vm685, %v7208
      %7241 = vst.msk [vmem:[%s550 + $0xa8] sm:$0xff] %vm685, %v7209
      %7242 = vst.msk [vmem:[%s550 + $0xb0] sm:$0xff] %vm685, %v7210
      %7243 = vst.msk [vmem:[%s550 + $0xb8] sm:$0xff] %vm685, %v7211
      %7244 = vst.msk [vmem:[%s550 + $0xc0] sm:$0xff] %vm685, %v7212
      %7245 = vst.msk [vmem:[%s550 + $0xc8] sm:$0xff] %vm685, %v7213
      %7246 = vst.msk [vmem:[%s550 + $0xd0] sm:$0xff] %vm685, %v7214
      %7247 = vst.msk [vmem:[%s550 + $0xd8] sm:$0xff] %vm685, %v7215
      %7248 = vst.msk [vmem:[%s550 + $0xe0] sm:$0xff] %vm685, %v7216
      %7249 = vst.msk [vmem:[%s550 + $0xe8] sm:$0xff] %vm685, %v7217
      %7250 = vst.msk [vmem:[%s550 + $0xf0] sm:$0xff] %vm685, %v7218
      %7251 = vst.msk [vmem:[%s550 + $0xf8] sm:$0xff] %vm685, %v7219
      %s7252 = smul.u32 32, %s28
      %p7253 = scmp.lt.s32.totalorder %s7252, 63
      %s7254 = scalar_select %p7253, %s7252, 63
      %s7255 = smul.addr %s7254, 8
      %s7256 = scalar_lea.vmem %s17, %s7255
      // Predicated region
      $region89: #{tpu_custom_call.1} parent=87 // pred_check
        %p7257 = pneg %p408
      $region90: #{tpu_custom_call.1} parent=87 // pred_check_branch
        %7259 = sbr.rel (%p7257) target = $region92
      $region91: #{tpu_custom_call.1} parent=87 // pred_region
        %s7260 = smul.u32 32, %s28
      $region92: #{tpu_custom_call.1} parent=87 // pred_fallthru
        _
    $region88: #{tpu_custom_call.1} parent=5 // pred_fallthru
      _
    %p7261 = scmp.le.s32.totalorder 2, %s23
    // Predicated region
    $region93: #{tpu_custom_call.1} parent=5 // pred_check
      %p7262 = pneg %p7261
    $region94: #{tpu_custom_call.1} parent=5 // pred_check_branch
      %7264 = sbr.rel (%p7262) target = $region96
    $region95: #{tpu_custom_call.1} parent=5 // pred_region
      %s7265 = ssub.s32 %s23, 2
      // Predicated region
      $region97: #{tpu_custom_call.1} parent=95 // pred_check
        %p7266 = pneg %p414
      $region98: #{tpu_custom_call.1} parent=95 // pred_check_branch
        %7268 = sbr.rel (%p7266) target = $region100
      $region99: #{tpu_custom_call.1} parent=95 // pred_region
        %s7269 = smul.u32 32, %s29
        %p7270 = scmp.lt.s32.totalorder %s7269, 63
        %s7271 = scalar_select %p7270, %s7269, 63
        %s7272 = smul.addr %s7271, 8
        %s7273 = scalar_lea.vmem %s17, %s7272
      $region100: #{tpu_custom_call.1} parent=95 // pred_fallthru
        _
    $region96: #{tpu_custom_call.1} parent=5 // pred_fallthru
      _
  $region6: #{tpu_custom_call.1} parent=0 // loop_footer
    %s27 = sadd.s32 1, %s23
  $region7: #{tpu_custom_call.1} parent=0 // loop_footer_branch
    %22 = sbr.rel target = $region3
  $region8: #{tpu_custom_call.1} parent=0 // loop_exit
    _

</llo_original>
